<compile_context>
chip_gen: v7x
topology: tpu7x:2x2x1
jax: 0.10.0
libtpu: 0.0.40
codegen_flags: <defaults>
</compile_context>

<pallas_src>
import functools

import jax
import jax.numpy as jnp
from jax.experimental import pallas as pl
from jax.experimental.pallas import tpu as pltpu


def _lstm_student_kernel(x_ref,      # (T*Bp, D)   bf16, time-major rows grouped by t
                         wih0_ref,   # (D, 4H)     bf16, gate cols (i,f,o,g)
                         whh0_ref,   # (H, 4H)     bf16
                         b0_ref,     # (1, 4H)     f32  (b_ih0 + b_hh0)
                         w1_ref,     # (2H, 4H)    bf16 ([w_ih1; w_hh1] fused)
                         b1_ref,     # (1, 4H)     f32  (b_ih1 + b_hh1)
                         wfc_ref,    # (H, Opad)   bf16 (zero-padded to 128 lanes)
                         bfc_ref,    # (1, Opad)   f32
                         out_ref,    # (Bp, Opad)  f32
                         xg_ref):    # (T*Bp, 4H)  f32 VMEM scratch
    TB, _ = x_ref.shape
    H = whh0_ref.shape[0]
    Bp = out_ref.shape[0]
    T = TB // Bp
    H3 = 3 * H

    # ---- Phase 1: hoisted layer-0 input projection (no recurrent dependency) ----
    # One well-shaped MXU dot; b0 is folded in here (single broadcast).
    xg_ref[...] = (jnp.dot(x_ref[...], wih0_ref[...],
                           preferred_element_type=jnp.float32)
                   + b0_ref[...])

    # Hoisted bias broadcast for layer 1 (do it once, not per iteration).
    b1b = jnp.broadcast_to(b1_ref[...], (Bp, 4 * H))

    def gate_update(z, c):
        # z gate layout: (i, f, o, g) -> one contiguous sigmoid + one tanh slice.
        s = jax.nn.sigmoid(z[:, :H3])
        i = s[:, :H]
        f = s[:, H:2 * H]
        o = s[:, 2 * H:H3]
        g = jnp.tanh(z[:, H3:])
        c_new = f * c + i * g
        h_new = o * jnp.tanh(c_new)
        return h_new, c_new

    zeros = jnp.zeros((Bp, H), jnp.float32)

    # ---- t = 0: h, c are zero, so the recurrent matmuls vanish ----
    z0 = xg_ref[0:Bp, :]                                    # already includes b0
    h0, c0 = gate_update(z0, zeros)
    z1 = (jnp.dot(h0.astype(jnp.bfloat16), w1_ref[:H, :],   # only the w_ih1 half
                  preferred_element_type=jnp.float32) + b1b)
    h1, c1 = gate_update(z1, zeros)

    # ---- t = 1 .. T-1: fully unrolled (T is static) ----
    for t in range(1, T):
        # Layer 0: single recurrent dot; x-projection comes from scratch.
        z0 = (xg_ref[t * Bp:(t + 1) * Bp, :]
              + jnp.dot(h0.astype(jnp.bfloat16), whh0_ref[...],
                        preferred_element_type=jnp.float32))
        h0, c0 = gate_update(z0, c0)
        # Layer 1: fused [h0 | h1] @ [w_ih1; w_hh1] -> one dot.
        hcat = jnp.concatenate([h0, h1], axis=1).astype(jnp.bfloat16)  # (Bp, 2H)
        z1 = jnp.dot(hcat, w1_ref[...],
                     preferred_element_type=jnp.float32) + b1b
        h1, c1 = gate_update(z1, c1)

    # ---- fc head on hn[-1], lane-dense (Opad = 128) output store ----
    out_ref[...] = (jnp.dot(h1.astype(jnp.bfloat16), wfc_ref[...],
                            preferred_element_type=jnp.float32)
                    + bfc_ref[...])


def make_params(key, input_dim=768, hidden_dim=256, output_dim=3):
    """Deterministic parameter init, PyTorch-style U(-1/sqrt(H), 1/sqrt(H))."""
    k = 1.0 / jnp.sqrt(jnp.float32(hidden_dim))
    keys = jax.random.split(key, 10)
    u = lambda kk, shape: jax.random.uniform(kk, shape, jnp.float32, -k, k)
    return dict(
        w_ih0=u(keys[0], (4 * hidden_dim, input_dim)),
        w_hh0=u(keys[1], (4 * hidden_dim, hidden_dim)),
        b_ih0=u(keys[2], (4 * hidden_dim,)),
        b_hh0=u(keys[3], (4 * hidden_dim,)),
        w_ih1=u(keys[4], (4 * hidden_dim, hidden_dim)),
        w_hh1=u(keys[5], (4 * hidden_dim, hidden_dim)),
        b_ih1=u(keys[6], (4 * hidden_dim,)),
        b_hh1=u(keys[7], (4 * hidden_dim,)),
        w_fc=u(keys[8], (output_dim, hidden_dim)),
        b_fc=u(keys[9], (output_dim,)),
    )


def _permute_gates(w4h):
    """PyTorch gate order (i, f, g, o) -> (i, f, o, g) along the last axis."""
    i, f, g, o = jnp.split(w4h, 4, axis=-1)
    return jnp.concatenate([i, f, o, g], axis=-1)


@jax.jit
def lstm_student_forward(x, params):
    """x: (B, T, D) batch-first, as in the PyTorch module. Returns (B, O) f32."""
    B, T, D = x.shape
    H = params["w_hh0"].shape[1]
    O = params["w_fc"].shape[0]
    Bp = max(8, ((B + 7) // 8) * 8)            # sublane-aligned batch
    Opad = max(128, ((O + 127) // 128) * 128)  # lane-dense fc head

    # Glue: time-major, batch-padded, flattened to (T*Bp, D) rows grouped by t.
    x_tm = jnp.transpose(x, (1, 0, 2)).astype(jnp.float32)      # (T, B, D)
    x_tm = jnp.pad(x_tm, ((0, 0), (0, Bp - B), (0, 0)))          # (T, Bp, D)
    x2d = x_tm.reshape(T * Bp, D).astype(jnp.bfloat16)           # (T*Bp, D)

    # Weights: transpose to (in, out), permute gates to (i,f,o,g), cast bf16.
    wih0 = _permute_gates(params["w_ih0"].T).astype(jnp.bfloat16)        # (D, 4H)
    whh0 = _permute_gates(params["w_hh0"].T).astype(jnp.bfloat16)        # (H, 4H)
    b0 = _permute_gates((params["b_ih0"] + params["b_hh0"])[None, :])    # (1, 4H) f32
    w1 = jnp.concatenate([_permute_gates(params["w_ih1"].T),
                          _permute_gates(params["w_hh1"].T)],
                         axis=0).astype(jnp.bfloat16)                    # (2H, 4H)
    b1 = _permute_gates((params["b_ih1"] + params["b_hh1"])[None, :])    # (1, 4H) f32
    wfc = jnp.pad(params["w_fc"].T, ((0, 0), (0, Opad - O))).astype(jnp.bfloat16)
    bfc = jnp.pad(params["b_fc"][None, :], ((0, 0), (0, Opad - O)))      # (1, Opad)

    vmem = pl.BlockSpec(memory_space=pltpu.MemorySpace.VMEM)
    out = pl.pallas_call(
        _lstm_student_kernel,
        out_shape=jax.ShapeDtypeStruct((Bp, Opad), jnp.float32),
        in_specs=[vmem] * 8,
        out_specs=vmem,
        scratch_shapes=[pltpu.VMEM((T * Bp, 4 * H), jnp.float32)],
        compiler_params=pltpu.CompilerParams(vmem_limit_bytes=32 << 20),
    )(x2d, wih0, whh0, b0, w1, b1, wfc, bfc)
    return out[:B, :O]


def reference_forward(x, params):
    """Pure-JAX f32 reference (mirrors torch.nn.LSTM eval forward + Linear)."""
    B, T, D = x.shape
    H = params["w_hh0"].shape[1]

    def cell(x_t, h, c, w_ih, w_hh, b_ih, b_hh):
        gates = x_t @ w_ih.T + b_ih + h @ w_hh.T + b_hh
        i = jax.nn.sigmoid(gates[:, 0 * H:1 * H])
        f = jax.nn.sigmoid(gates[:, 1 * H:2 * H])
        g = jnp.tanh(gates[:, 2 * H:3 * H])
        o = jax.nn.sigmoid(gates[:, 3 * H:4 * H])
        c = f * c + i * g
        h = o * jnp.tanh(c)
        return h, c

    h0 = c0 = h1 = c1 = jnp.zeros((B, H), jnp.float32)
    for t in range(T):
        h0, c0 = cell(x[:, t, :], h0, c0, params["w_ih0"], params["w_hh0"],
                      params["b_ih0"], params["b_hh0"])
        h1, c1 = cell(h0, h1, c1, params["w_ih1"], params["w_hh1"],
                      params["b_ih1"], params["b_hh1"])
    return h1 @ params["w_fc"].T + params["b_fc"]


if __name__ == "__main__":
    # Small shapes consistent with the module: batch=2, seq=8, defaults for dims.
    B, T, D, H, O = 2, 8, 768, 256, 3

    key = jax.random.PRNGKey(0)
    kx, kp = jax.random.split(key)
    x = jax.random.normal(kx, (B, T, D), jnp.float32)
    params = make_params(kp, input_dim=D, hidden_dim=H, output_dim=O)

    out = lstm_student_forward(x, params)
    out = jax.block_until_ready(out)

    ref = reference_forward(x, params)
    assert out.shape == (B, O), out.shape
    # Tolerance loosened vs. the pure-f32 version because weights / matmul LHS
    # are bf16 on the MXU (f32 accumulate, f32 gate math).
    assert jnp.allclose(out, ref, rtol=5e-2, atol=5e-2), (out, ref)

    print("KERNEL_OK")
</pallas_src>

<mosaic_0001>
module attributes {stable_mosaic.version = 11 : i64} {
  func.func @_lstm_student_kernel(%arg0: memref<64x768xbf16, #tpu.memory_space<vmem>>, %arg1: memref<768x1024xbf16, #tpu.memory_space<vmem>>, %arg2: memref<256x1024xbf16, #tpu.memory_space<vmem>>, %arg3: memref<1x1024xf32, #tpu.memory_space<vmem>>, %arg4: memref<512x1024xbf16, #tpu.memory_space<vmem>>, %arg5: memref<1x1024xf32, #tpu.memory_space<vmem>>, %arg6: memref<256x128xbf16, #tpu.memory_space<vmem>>, %arg7: memref<1x128xf32, #tpu.memory_space<vmem>>, %arg8: memref<8x128xf32, #tpu.memory_space<vmem>>, %arg9: memref<64x1024xf32, #tpu.memory_space<vmem>>) attributes {dimension_semantics = [], scalar_prefetch = 0 : i64, scratch_operands = 1 : i64, tpu.core_type = #tpu.core_type<tc>} {
    %c0 = arith.constant 0 : index
    %c0_0 = arith.constant 0 : index
    %0 = vector.load %arg0[%c0, %c0_0] : memref<64x768xbf16, #tpu.memory_space<vmem>>, vector<64x768xbf16>
    %c0_1 = arith.constant 0 : index
    %c0_2 = arith.constant 0 : index
    %1 = vector.load %arg1[%c0_1, %c0_2] : memref<768x1024xbf16, #tpu.memory_space<vmem>>, vector<768x1024xbf16>
    %cst = arith.constant dense<0.000000e+00> : vector<64x1024xf32>
    %2 = tpu.matmul %0, %1, %cst {dimension_numbers = #tpu.dot_dimension_numbers<[1], [0], [0], [1], [0, 0, 1, 1], [], []>} : vector<64x768xbf16>, vector<768x1024xbf16>, vector<64x1024xf32> -> vector<64x1024xf32>
    %c0_3 = arith.constant 0 : index
    %c0_4 = arith.constant 0 : index
    %3 = vector.load %arg3[%c0_3, %c0_4] : memref<1x1024xf32, #tpu.memory_space<vmem>>, vector<1x1024xf32>
    %4 = vector.broadcast %3 : vector<1x1024xf32> to vector<64x1024xf32>
    %5 = arith.addf %2, %4 : vector<64x1024xf32>
    %c0_5 = arith.constant 0 : index
    %c0_6 = arith.constant 0 : index
    %6 = vector.load %arg9[%c0_5, %c0_6] : memref<64x1024xf32, #tpu.memory_space<vmem>>, vector<64x1024xf32>
    tpu.vector_store %arg9[%c0_5, %c0_6], %5 {strides = array<i32>} : memref<64x1024xf32, #tpu.memory_space<vmem>>, vector<64x1024xf32>,
    %c0_7 = arith.constant 0 : index
    %c0_8 = arith.constant 0 : index
    %7 = vector.load %arg5[%c0_7, %c0_8] : memref<1x1024xf32, #tpu.memory_space<vmem>>, vector<1x1024xf32>
    %8 = vector.shape_cast %7 : vector<1x1024xf32> to vector<1x1024xf32>
    %9 = vector.broadcast %8 : vector<1x1024xf32> to vector<8x1024xf32>
    %cst_9 = arith.constant 0.000000e+00 : f32
    %10 = vector.broadcast %cst_9 : f32 to vector<8x256xf32>
    %c0_10 = arith.constant 0 : index
    %c0_11 = arith.constant 0 : index
    %11 = vector.load %arg9[%c0_10, %c0_11] : memref<64x1024xf32, #tpu.memory_space<vmem>>, vector<8x1024xf32>
    %12 = vector.extract_strided_slice %11 {offsets = [0, 0], sizes = [8, 768], strides = [1, 1]} : vector<8x1024xf32> to vector<8x768xf32>
    %13 = arith.negf %12 : vector<8x768xf32>
    %14 = math.exp %13 : vector<8x768xf32>
    %cst_12 = arith.constant 1.000000e+00 : f32
    %15 = vector.broadcast %cst_12 : f32 to vector<8x768xf32>
    %16 = arith.addf %15, %14 : vector<8x768xf32>
    %17 = arith.divf %15, %16 : vector<8x768xf32>
    %18 = vector.extract_strided_slice %17 {offsets = [0, 0], sizes = [8, 256], strides = [1, 1]} : vector<8x768xf32> to vector<8x256xf32>
    %19 = vector.extract_strided_slice %17 {offsets = [0, 256], sizes = [8, 256], strides = [1, 1]} : vector<8x768xf32> to vector<8x256xf32>
    %20 = vector.extract_strided_slice %17 {offsets = [0, 512], sizes = [8, 256], strides = [1, 1]} : vector<8x768xf32> to vector<8x256xf32>
    %21 = vector.extract_strided_slice %11 {offsets = [0, 768], sizes = [8, 256], strides = [1, 1]} : vector<8x1024xf32> to vector<8x256xf32>
    %22 = math.tanh %21 : vector<8x256xf32>
    %23 = arith.mulf %19, %10 : vector<8x256xf32>
    %24 = arith.mulf %18, %22 : vector<8x256xf32>
    %25 = arith.addf %23, %24 : vector<8x256xf32>
    %26 = math.tanh %25 : vector<8x256xf32>
    %27 = arith.mulf %20, %26 : vector<8x256xf32>
    %28 = arith.truncf %27 : vector<8x256xf32> to vector<8x256xbf16>
    %c0_13 = arith.constant 0 : index
    %c0_14 = arith.constant 0 : index
    %29 = vector.load %arg4[%c0_13, %c0_14] : memref<512x1024xbf16, #tpu.memory_space<vmem>>, vector<256x1024xbf16>
    %cst_15 = arith.constant dense<0.000000e+00> : vector<8x1024xf32>
    %30 = tpu.matmul %28, %29, %cst_15 {dimension_numbers = #tpu.dot_dimension_numbers<[1], [0], [0], [1], [0, 0, 1, 1], [], []>} : vector<8x256xbf16>, vector<256x1024xbf16>, vector<8x1024xf32> -> vector<8x1024xf32>
    %31 = arith.addf %30, %9 : vector<8x1024xf32>
    %32 = vector.extract_strided_slice %31 {offsets = [0, 0], sizes = [8, 768], strides = [1, 1]} : vector<8x1024xf32> to vector<8x768xf32>
    %33 = arith.negf %32 : vector<8x768xf32>
    %34 = math.exp %33 : vector<8x768xf32>
    %cst_16 = arith.constant 1.000000e+00 : f32
    %35 = vector.broadcast %cst_16 : f32 to vector<8x768xf32>
    %36 = arith.addf %35, %34 : vector<8x768xf32>
    %37 = arith.divf %35, %36 : vector<8x768xf32>
    %38 = vector.extract_strided_slice %37 {offsets = [0, 0], sizes = [8, 256], strides = [1, 1]} : vector<8x768xf32> to vector<8x256xf32>
    %39 = vector.extract_strided_slice %37 {offsets = [0, 256], sizes = [8, 256], strides = [1, 1]} : vector<8x768xf32> to vector<8x256xf32>
    %40 = vector.extract_strided_slice %37 {offsets = [0, 512], sizes = [8, 256], strides = [1, 1]} : vector<8x768xf32> to vector<8x256xf32>
    %41 = vector.extract_strided_slice %31 {offsets = [0, 768], sizes = [8, 256], strides = [1, 1]} : vector<8x1024xf32> to vector<8x256xf32>
    %42 = math.tanh %41 : vector<8x256xf32>
    %43 = arith.mulf %39, %10 : vector<8x256xf32>
    %44 = arith.mulf %38, %42 : vector<8x256xf32>
    %45 = arith.addf %43, %44 : vector<8x256xf32>
    %46 = math.tanh %45 : vector<8x256xf32>
    %47 = arith.mulf %40, %46 : vector<8x256xf32>
    %c8 = arith.constant 8 : index
    %c0_17 = arith.constant 0 : index
    %48 = vector.load %arg9[%c8, %c0_17] : memref<64x1024xf32, #tpu.memory_space<vmem>>, vector<8x1024xf32>
    %49 = arith.truncf %27 : vector<8x256xf32> to vector<8x256xbf16>
    %c0_18 = arith.constant 0 : index
    %c0_19 = arith.constant 0 : index
    %50 = vector.load %arg2[%c0_18, %c0_19] : memref<256x1024xbf16, #tpu.memory_space<vmem>>, vector<256x1024xbf16>
    %cst_20 = arith.constant dense<0.000000e+00> : vector<8x1024xf32>
    %51 = tpu.matmul %49, %50, %cst_20 {dimension_numbers = #tpu.dot_dimension_numbers<[1], [0], [0], [1], [0, 0, 1, 1], [], []>} : vector<8x256xbf16>, vector<256x1024xbf16>, vector<8x1024xf32> -> vector<8x1024xf32>
    %52 = arith.addf %48, %51 : vector<8x1024xf32>
    %53 = vector.extract_strided_slice %52 {offsets = [0, 0], sizes = [8, 768], strides = [1, 1]} : vector<8x1024xf32> to vector<8x768xf32>
    %54 = arith.negf %53 : vector<8x768xf32>
    %55 = math.exp %54 : vector<8x768xf32>
    %cst_21 = arith.constant 1.000000e+00 : f32
    %56 = vector.broadcast %cst_21 : f32 to vector<8x768xf32>
    %57 = arith.addf %56, %55 : vector<8x768xf32>
    %58 = arith.divf %56, %57 : vector<8x768xf32>
    %59 = vector.extract_strided_slice %58 {offsets = [0, 0], sizes = [8, 256], strides = [1, 1]} : vector<8x768xf32> to vector<8x256xf32>
    %60 = vector.extract_strided_slice %58 {offsets = [0, 256], sizes = [8, 256], strides = [1, 1]} : vector<8x768xf32> to vector<8x256xf32>
    %61 = vector.extract_strided_slice %58 {offsets = [0, 512], sizes = [8, 256], strides = [1, 1]} : vector<8x768xf32> to vector<8x256xf32>
    %62 = vector.extract_strided_slice %52 {offsets = [0, 768], sizes = [8, 256], strides = [1, 1]} : vector<8x1024xf32> to vector<8x256xf32>
    %63 = math.tanh %62 : vector<8x256xf32>
    %64 = arith.mulf %60, %25 : vector<8x256xf32>
    %65 = arith.mulf %59, %63 : vector<8x256xf32>
    %66 = arith.addf %64, %65 : vector<8x256xf32>
    %67 = math.tanh %66 : vector<8x256xf32>
    %68 = arith.mulf %61, %67 : vector<8x256xf32>
    %69 = tpu.concatenate %68, %47 in 1 : vector<8x256xf32>, vector<8x256xf32> -> vector<8x512xf32>
    %70 = arith.truncf %69 : vector<8x512xf32> to vector<8x512xbf16>
    %c0_22 = arith.constant 0 : index
    %c0_23 = arith.constant 0 : index
    %71 = vector.load %arg4[%c0_22, %c0_23] : memref<512x1024xbf16, #tpu.memory_space<vmem>>, vector<512x1024xbf16>
    %cst_24 = arith.constant dense<0.000000e+00> : vector<8x1024xf32>
    %72 = tpu.matmul %70, %71, %cst_24 {dimension_numbers = #tpu.dot_dimension_numbers<[1], [0], [0], [1], [0, 0, 1, 1], [], []>} : vector<8x512xbf16>, vector<512x1024xbf16>, vector<8x1024xf32> -> vector<8x1024xf32>
    %73 = arith.addf %72, %9 : vector<8x1024xf32>
    %74 = vector.extract_strided_slice %73 {offsets = [0, 0], sizes = [8, 768], strides = [1, 1]} : vector<8x1024xf32> to vector<8x768xf32>
    %75 = arith.negf %74 : vector<8x768xf32>
    %76 = math.exp %75 : vector<8x768xf32>
    %cst_25 = arith.constant 1.000000e+00 : f32
    %77 = vector.broadcast %cst_25 : f32 to vector<8x768xf32>
    %78 = arith.addf %77, %76 : vector<8x768xf32>
    %79 = arith.divf %77, %78 : vector<8x768xf32>
    %80 = vector.extract_strided_slice %79 {offsets = [0, 0], sizes = [8, 256], strides = [1, 1]} : vector<8x768xf32> to vector<8x256xf32>
    %81 = vector.extract_strided_slice %79 {offsets = [0, 256], sizes = [8, 256], strides = [1, 1]} : vector<8x768xf32> to vector<8x256xf32>
    %82 = vector.extract_strided_slice %79 {offsets = [0, 512], sizes = [8, 256], strides = [1, 1]} : vector<8x768xf32> to vector<8x256xf32>
    %83 = vector.extract_strided_slice %73 {offsets = [0, 768], sizes = [8, 256], strides = [1, 1]} : vector<8x1024xf32> to vector<8x256xf32>
    %84 = math.tanh %83 : vector<8x256xf32>
    %85 = arith.mulf %81, %45 : vector<8x256xf32>
    %86 = arith.mulf %80, %84 : vector<8x256xf32>
    %87 = arith.addf %85, %86 : vector<8x256xf32>
    %88 = math.tanh %87 : vector<8x256xf32>
    %89 = arith.mulf %82, %88 : vector<8x256xf32>
    %c16 = arith.constant 16 : index
    %c0_26 = arith.constant 0 : index
    %90 = vector.load %arg9[%c16, %c0_26] : memref<64x1024xf32, #tpu.memory_space<vmem>>, vector<8x1024xf32>
    %91 = arith.truncf %68 : vector<8x256xf32> to vector<8x256xbf16>
    %c0_27 = arith.constant 0 : index
    %c0_28 = arith.constant 0 : index
    %92 = vector.load %arg2[%c0_27, %c0_28] : memref<256x1024xbf16, #tpu.memory_space<vmem>>, vector<256x1024xbf16>
    %cst_29 = arith.constant dense<0.000000e+00> : vector<8x1024xf32>
    %93 = tpu.matmul %91, %92, %cst_29 {dimension_numbers = #tpu.dot_dimension_numbers<[1], [0], [0], [1], [0, 0, 1, 1], [], []>} : vector<8x256xbf16>, vector<256x1024xbf16>, vector<8x1024xf32> -> vector<8x1024xf32>
    %94 = arith.addf %90, %93 : vector<8x1024xf32>
    %95 = vector.extract_strided_slice %94 {offsets = [0, 0], sizes = [8, 768], strides = [1, 1]} : vector<8x1024xf32> to vector<8x768xf32>
    %96 = arith.negf %95 : vector<8x768xf32>
    %97 = math.exp %96 : vector<8x768xf32>
    %cst_30 = arith.constant 1.000000e+00 : f32
    %98 = vector.broadcast %cst_30 : f32 to vector<8x768xf32>
    %99 = arith.addf %98, %97 : vector<8x768xf32>
    %100 = arith.divf %98, %99 : vector<8x768xf32>
    %101 = vector.extract_strided_slice %100 {offsets = [0, 0], sizes = [8, 256], strides = [1, 1]} : vector<8x768xf32> to vector<8x256xf32>
    %102 = vector.extract_strided_slice %100 {offsets = [0, 256], sizes = [8, 256], strides = [1, 1]} : vector<8x768xf32> to vector<8x256xf32>
    %103 = vector.extract_strided_slice %100 {offsets = [0, 512], sizes = [8, 256], strides = [1, 1]} : vector<8x768xf32> to vector<8x256xf32>
    %104 = vector.extract_strided_slice %94 {offsets = [0, 768], sizes = [8, 256], strides = [1, 1]} : vector<8x1024xf32> to vector<8x256xf32>
    %105 = math.tanh %104 : vector<8x256xf32>
    %106 = arith.mulf %102, %66 : vector<8x256xf32>
    %107 = arith.mulf %101, %105 : vector<8x256xf32>
    %108 = arith.addf %106, %107 : vector<8x256xf32>
    %109 = math.tanh %108 : vector<8x256xf32>
    %110 = arith.mulf %103, %109 : vector<8x256xf32>
    %111 = tpu.concatenate %110, %89 in 1 : vector<8x256xf32>, vector<8x256xf32> -> vector<8x512xf32>
    %112 = arith.truncf %111 : vector<8x512xf32> to vector<8x512xbf16>
    %c0_31 = arith.constant 0 : index
    %c0_32 = arith.constant 0 : index
    %113 = vector.load %arg4[%c0_31, %c0_32] : memref<512x1024xbf16, #tpu.memory_space<vmem>>, vector<512x1024xbf16>
    %cst_33 = arith.constant dense<0.000000e+00> : vector<8x1024xf32>
    %114 = tpu.matmul %112, %113, %cst_33 {dimension_numbers = #tpu.dot_dimension_numbers<[1], [0], [0], [1], [0, 0, 1, 1], [], []>} : vector<8x512xbf16>, vector<512x1024xbf16>, vector<8x1024xf32> -> vector<8x1024xf32>
    %115 = arith.addf %114, %9 : vector<8x1024xf32>
    %116 = vector.extract_strided_slice %115 {offsets = [0, 0], sizes = [8, 768], strides = [1, 1]} : vector<8x1024xf32> to vector<8x768xf32>
    %117 = arith.negf %116 : vector<8x768xf32>
    %118 = math.exp %117 : vector<8x768xf32>
    %cst_34 = arith.constant 1.000000e+00 : f32
    %119 = vector.broadcast %cst_34 : f32 to vector<8x768xf32>
    %120 = arith.addf %119, %118 : vector<8x768xf32>
    %121 = arith.divf %119, %120 : vector<8x768xf32>
    %122 = vector.extract_strided_slice %121 {offsets = [0, 0], sizes = [8, 256], strides = [1, 1]} : vector<8x768xf32> to vector<8x256xf32>
    %123 = vector.extract_strided_slice %121 {offsets = [0, 256], sizes = [8, 256], strides = [1, 1]} : vector<8x768xf32> to vector<8x256xf32>
    %124 = vector.extract_strided_slice %121 {offsets = [0, 512], sizes = [8, 256], strides = [1, 1]} : vector<8x768xf32> to vector<8x256xf32>
    %125 = vector.extract_strided_slice %115 {offsets = [0, 768], sizes = [8, 256], strides = [1, 1]} : vector<8x1024xf32> to vector<8x256xf32>
    %126 = math.tanh %125 : vector<8x256xf32>
    %127 = arith.mulf %123, %87 : vector<8x256xf32>
    %128 = arith.mulf %122, %126 : vector<8x256xf32>
    %129 = arith.addf %127, %128 : vector<8x256xf32>
    %130 = math.tanh %129 : vector<8x256xf32>
    %131 = arith.mulf %124, %130 : vector<8x256xf32>
    %c24 = arith.constant 24 : index
    %c0_35 = arith.constant 0 : index
    %132 = vector.load %arg9[%c24, %c0_35] : memref<64x1024xf32, #tpu.memory_space<vmem>>, vector<8x1024xf32>
    %133 = arith.truncf %110 : vector<8x256xf32> to vector<8x256xbf16>
    %c0_36 = arith.constant 0 : index
    %c0_37 = arith.constant 0 : index
    %134 = vector.load %arg2[%c0_36, %c0_37] : memref<256x1024xbf16, #tpu.memory_space<vmem>>, vector<256x1024xbf16>
    %cst_38 = arith.constant dense<0.000000e+00> : vector<8x1024xf32>
    %135 = tpu.matmul %133, %134, %cst_38 {dimension_numbers = #tpu.dot_dimension_numbers<[1], [0], [0], [1], [0, 0, 1, 1], [], []>} : vector<8x256xbf16>, vector<256x1024xbf16>, vector<8x1024xf32> -> vector<8x1024xf32>
    %136 = arith.addf %132, %135 : vector<8x1024xf32>
    %137 = vector.extract_strided_slice %136 {offsets = [0, 0], sizes = [8, 768], strides = [1, 1]} : vector<8x1024xf32> to vector<8x768xf32>
    %138 = arith.negf %137 : vector<8x768xf32>
    %139 = math.exp %138 : vector<8x768xf32>
    %cst_39 = arith.constant 1.000000e+00 : f32
    %140 = vector.broadcast %cst_39 : f32 to vector<8x768xf32>
    %141 = arith.addf %140, %139 : vector<8x768xf32>
    %142 = arith.divf %140, %141 : vector<8x768xf32>
    %143 = vector.extract_strided_slice %142 {offsets = [0, 0], sizes = [8, 256], strides = [1, 1]} : vector<8x768xf32> to vector<8x256xf32>
    %144 = vector.extract_strided_slice %142 {offsets = [0, 256], sizes = [8, 256], strides = [1, 1]} : vector<8x768xf32> to vector<8x256xf32>
    %145 = vector.extract_strided_slice %142 {offsets = [0, 512], sizes = [8, 256], strides = [1, 1]} : vector<8x768xf32> to vector<8x256xf32>
    %146 = vector.extract_strided_slice %136 {offsets = [0, 768], sizes = [8, 256], strides = [1, 1]} : vector<8x1024xf32> to vector<8x256xf32>
    %147 = math.tanh %146 : vector<8x256xf32>
    %148 = arith.mulf %144, %108 : vector<8x256xf32>
    %149 = arith.mulf %143, %147 : vector<8x256xf32>
    %150 = arith.addf %148, %149 : vector<8x256xf32>
    %151 = math.tanh %150 : vector<8x256xf32>
    %152 = arith.mulf %145, %151 : vector<8x256xf32>
    %153 = tpu.concatenate %152, %131 in 1 : vector<8x256xf32>, vector<8x256xf32> -> vector<8x512xf32>
    %154 = arith.truncf %153 : vector<8x512xf32> to vector<8x512xbf16>
    %c0_40 = arith.constant 0 : index
    %c0_41 = arith.constant 0 : index
    %155 = vector.load %arg4[%c0_40, %c0_41] : memref<512x1024xbf16, #tpu.memory_space<vmem>>, vector<512x1024xbf16>
    %cst_42 = arith.constant dense<0.000000e+00> : vector<8x1024xf32>
    %156 = tpu.matmul %154, %155, %cst_42 {dimension_numbers = #tpu.dot_dimension_numbers<[1], [0], [0], [1], [0, 0, 1, 1], [], []>} : vector<8x512xbf16>, vector<512x1024xbf16>, vector<8x1024xf32> -> vector<8x1024xf32>
    %157 = arith.addf %156, %9 : vector<8x1024xf32>
    %158 = vector.extract_strided_slice %157 {offsets = [0, 0], sizes = [8, 768], strides = [1, 1]} : vector<8x1024xf32> to vector<8x768xf32>
    %159 = arith.negf %158 : vector<8x768xf32>
    %160 = math.exp %159 : vector<8x768xf32>
    %cst_43 = arith.constant 1.000000e+00 : f32
    %161 = vector.broadcast %cst_43 : f32 to vector<8x768xf32>
    %162 = arith.addf %161, %160 : vector<8x768xf32>
    %163 = arith.divf %161, %162 : vector<8x768xf32>
    %164 = vector.extract_strided_slice %163 {offsets = [0, 0], sizes = [8, 256], strides = [1, 1]} : vector<8x768xf32> to vector<8x256xf32>
    %165 = vector.extract_strided_slice %163 {offsets = [0, 256], sizes = [8, 256], strides = [1, 1]} : vector<8x768xf32> to vector<8x256xf32>
    %166 = vector.extract_strided_slice %163 {offsets = [0, 512], sizes = [8, 256], strides = [1, 1]} : vector<8x768xf32> to vector<8x256xf32>
    %167 = vector.extract_strided_slice %157 {offsets = [0, 768], sizes = [8, 256], strides = [1, 1]} : vector<8x1024xf32> to vector<8x256xf32>
    %168 = math.tanh %167 : vector<8x256xf32>
    %169 = arith.mulf %165, %129 : vector<8x256xf32>
    %170 = arith.mulf %164, %168 : vector<8x256xf32>
    %171 = arith.addf %169, %170 : vector<8x256xf32>
    %172 = math.tanh %171 : vector<8x256xf32>
    %173 = arith.mulf %166, %172 : vector<8x256xf32>
    %c32 = arith.constant 32 : index
    %c0_44 = arith.constant 0 : index
    %174 = vector.load %arg9[%c32, %c0_44] : memref<64x1024xf32, #tpu.memory_space<vmem>>, vector<8x1024xf32>
    %175 = arith.truncf %152 : vector<8x256xf32> to vector<8x256xbf16>
    %c0_45 = arith.constant 0 : index
    %c0_46 = arith.constant 0 : index
    %176 = vector.load %arg2[%c0_45, %c0_46] : memref<256x1024xbf16, #tpu.memory_space<vmem>>, vector<256x1024xbf16>
    %cst_47 = arith.constant dense<0.000000e+00> : vector<8x1024xf32>
    %177 = tpu.matmul %175, %176, %cst_47 {dimension_numbers = #tpu.dot_dimension_numbers<[1], [0], [0], [1], [0, 0, 1, 1], [], []>} : vector<8x256xbf16>, vector<256x1024xbf16>, vector<8x1024xf32> -> vector<8x1024xf32>
    %178 = arith.addf %174, %177 : vector<8x1024xf32>
    %179 = vector.extract_strided_slice %178 {offsets = [0, 0], sizes = [8, 768], strides = [1, 1]} : vector<8x1024xf32> to vector<8x768xf32>
    %180 = arith.negf %179 : vector<8x768xf32>
    %181 = math.exp %180 : vector<8x768xf32>
    %cst_48 = arith.constant 1.000000e+00 : f32
    %182 = vector.broadcast %cst_48 : f32 to vector<8x768xf32>
    %183 = arith.addf %182, %181 : vector<8x768xf32>
    %184 = arith.divf %182, %183 : vector<8x768xf32>
    %185 = vector.extract_strided_slice %184 {offsets = [0, 0], sizes = [8, 256], strides = [1, 1]} : vector<8x768xf32> to vector<8x256xf32>
    %186 = vector.extract_strided_slice %184 {offsets = [0, 256], sizes = [8, 256], strides = [1, 1]} : vector<8x768xf32> to vector<8x256xf32>
    %187 = vector.extract_strided_slice %184 {offsets = [0, 512], sizes = [8, 256], strides = [1, 1]} : vector<8x768xf32> to vector<8x256xf32>
    %188 = vector.extract_strided_slice %178 {offsets = [0, 768], sizes = [8, 256], strides = [1, 1]} : vector<8x1024xf32> to vector<8x256xf32>
    %189 = math.tanh %188 : vector<8x256xf32>
    %190 = arith.mulf %186, %150 : vector<8x256xf32>
    %191 = arith.mulf %185, %189 : vector<8x256xf32>
    %192 = arith.addf %190, %191 : vector<8x256xf32>
    %193 = math.tanh %192 : vector<8x256xf32>
    %194 = arith.mulf %187, %193 : vector<8x256xf32>
    %195 = tpu.concatenate %194, %173 in 1 : vector<8x256xf32>, vector<8x256xf32> -> vector<8x512xf32>
    %196 = arith.truncf %195 : vector<8x512xf32> to vector<8x512xbf16>
    %c0_49 = arith.constant 0 : index
    %c0_50 = arith.constant 0 : index
    %197 = vector.load %arg4[%c0_49, %c0_50] : memref<512x1024xbf16, #tpu.memory_space<vmem>>, vector<512x1024xbf16>
    %cst_51 = arith.constant dense<0.000000e+00> : vector<8x1024xf32>
    %198 = tpu.matmul %196, %197, %cst_51 {dimension_numbers = #tpu.dot_dimension_numbers<[1], [0], [0], [1], [0, 0, 1, 1], [], []>} : vector<8x512xbf16>, vector<512x1024xbf16>, vector<8x1024xf32> -> vector<8x1024xf32>
    %199 = arith.addf %198, %9 : vector<8x1024xf32>
    %200 = vector.extract_strided_slice %199 {offsets = [0, 0], sizes = [8, 768], strides = [1, 1]} : vector<8x1024xf32> to vector<8x768xf32>
    %201 = arith.negf %200 : vector<8x768xf32>
    %202 = math.exp %201 : vector<8x768xf32>
    %cst_52 = arith.constant 1.000000e+00 : f32
    %203 = vector.broadcast %cst_52 : f32 to vector<8x768xf32>
    %204 = arith.addf %203, %202 : vector<8x768xf32>
    %205 = arith.divf %203, %204 : vector<8x768xf32>
    %206 = vector.extract_strided_slice %205 {offsets = [0, 0], sizes = [8, 256], strides = [1, 1]} : vector<8x768xf32> to vector<8x256xf32>
    %207 = vector.extract_strided_slice %205 {offsets = [0, 256], sizes = [8, 256], strides = [1, 1]} : vector<8x768xf32> to vector<8x256xf32>
    %208 = vector.extract_strided_slice %205 {offsets = [0, 512], sizes = [8, 256], strides = [1, 1]} : vector<8x768xf32> to vector<8x256xf32>
    %209 = vector.extract_strided_slice %199 {offsets = [0, 768], sizes = [8, 256], strides = [1, 1]} : vector<8x1024xf32> to vector<8x256xf32>
    %210 = math.tanh %209 : vector<8x256xf32>
    %211 = arith.mulf %207, %171 : vector<8x256xf32>
    %212 = arith.mulf %206, %210 : vector<8x256xf32>
    %213 = arith.addf %211, %212 : vector<8x256xf32>
    %214 = math.tanh %213 : vector<8x256xf32>
    %215 = arith.mulf %208, %214 : vector<8x256xf32>
    %c40 = arith.constant 40 : index
    %c0_53 = arith.constant 0 : index
    %216 = vector.load %arg9[%c40, %c0_53] : memref<64x1024xf32, #tpu.memory_space<vmem>>, vector<8x1024xf32>
    %217 = arith.truncf %194 : vector<8x256xf32> to vector<8x256xbf16>
    %c0_54 = arith.constant 0 : index
    %c0_55 = arith.constant 0 : index
    %218 = vector.load %arg2[%c0_54, %c0_55] : memref<256x1024xbf16, #tpu.memory_space<vmem>>, vector<256x1024xbf16>
    %cst_56 = arith.constant dense<0.000000e+00> : vector<8x1024xf32>
    %219 = tpu.matmul %217, %218, %cst_56 {dimension_numbers = #tpu.dot_dimension_numbers<[1], [0], [0], [1], [0, 0, 1, 1], [], []>} : vector<8x256xbf16>, vector<256x1024xbf16>, vector<8x1024xf32> -> vector<8x1024xf32>
    %220 = arith.addf %216, %219 : vector<8x1024xf32>
    %221 = vector.extract_strided_slice %220 {offsets = [0, 0], sizes = [8, 768], strides = [1, 1]} : vector<8x1024xf32> to vector<8x768xf32>
    %222 = arith.negf %221 : vector<8x768xf32>
    %223 = math.exp %222 : vector<8x768xf32>
    %cst_57 = arith.constant 1.000000e+00 : f32
    %224 = vector.broadcast %cst_57 : f32 to vector<8x768xf32>
    %225 = arith.addf %224, %223 : vector<8x768xf32>
    %226 = arith.divf %224, %225 : vector<8x768xf32>
    %227 = vector.extract_strided_slice %226 {offsets = [0, 0], sizes = [8, 256], strides = [1, 1]} : vector<8x768xf32> to vector<8x256xf32>
    %228 = vector.extract_strided_slice %226 {offsets = [0, 256], sizes = [8, 256], strides = [1, 1]} : vector<8x768xf32> to vector<8x256xf32>
    %229 = vector.extract_strided_slice %226 {offsets = [0, 512], sizes = [8, 256], strides = [1, 1]} : vector<8x768xf32> to vector<8x256xf32>
    %230 = vector.extract_strided_slice %220 {offsets = [0, 768], sizes = [8, 256], strides = [1, 1]} : vector<8x1024xf32> to vector<8x256xf32>
    %231 = math.tanh %230 : vector<8x256xf32>
    %232 = arith.mulf %228, %192 : vector<8x256xf32>
    %233 = arith.mulf %227, %231 : vector<8x256xf32>
    %234 = arith.addf %232, %233 : vector<8x256xf32>
    %235 = math.tanh %234 : vector<8x256xf32>
    %236 = arith.mulf %229, %235 : vector<8x256xf32>
    %237 = tpu.concatenate %236, %215 in 1 : vector<8x256xf32>, vector<8x256xf32> -> vector<8x512xf32>
    %238 = arith.truncf %237 : vector<8x512xf32> to vector<8x512xbf16>
    %c0_58 = arith.constant 0 : index
    %c0_59 = arith.constant 0 : index
    %239 = vector.load %arg4[%c0_58, %c0_59] : memref<512x1024xbf16, #tpu.memory_space<vmem>>, vector<512x1024xbf16>
    %cst_60 = arith.constant dense<0.000000e+00> : vector<8x1024xf32>
    %240 = tpu.matmul %238, %239, %cst_60 {dimension_numbers = #tpu.dot_dimension_numbers<[1], [0], [0], [1], [0, 0, 1, 1], [], []>} : vector<8x512xbf16>, vector<512x1024xbf16>, vector<8x1024xf32> -> vector<8x1024xf32>
    %241 = arith.addf %240, %9 : vector<8x1024xf32>
    %242 = vector.extract_strided_slice %241 {offsets = [0, 0], sizes = [8, 768], strides = [1, 1]} : vector<8x1024xf32> to vector<8x768xf32>
    %243 = arith.negf %242 : vector<8x768xf32>
    %244 = math.exp %243 : vector<8x768xf32>
    %cst_61 = arith.constant 1.000000e+00 : f32
    %245 = vector.broadcast %cst_61 : f32 to vector<8x768xf32>
    %246 = arith.addf %245, %244 : vector<8x768xf32>
    %247 = arith.divf %245, %246 : vector<8x768xf32>
    %248 = vector.extract_strided_slice %247 {offsets = [0, 0], sizes = [8, 256], strides = [1, 1]} : vector<8x768xf32> to vector<8x256xf32>
    %249 = vector.extract_strided_slice %247 {offsets = [0, 256], sizes = [8, 256], strides = [1, 1]} : vector<8x768xf32> to vector<8x256xf32>
    %250 = vector.extract_strided_slice %247 {offsets = [0, 512], sizes = [8, 256], strides = [1, 1]} : vector<8x768xf32> to vector<8x256xf32>
    %251 = vector.extract_strided_slice %241 {offsets = [0, 768], sizes = [8, 256], strides = [1, 1]} : vector<8x1024xf32> to vector<8x256xf32>
    %252 = math.tanh %251 : vector<8x256xf32>
    %253 = arith.mulf %249, %213 : vector<8x256xf32>
    %254 = arith.mulf %248, %252 : vector<8x256xf32>
    %255 = arith.addf %253, %254 : vector<8x256xf32>
    %256 = math.tanh %255 : vector<8x256xf32>
    %257 = arith.mulf %250, %256 : vector<8x256xf32>
    %c48 = arith.constant 48 : index
    %c0_62 = arith.constant 0 : index
    %258 = vector.load %arg9[%c48, %c0_62] : memref<64x1024xf32, #tpu.memory_space<vmem>>, vector<8x1024xf32>
    %259 = arith.truncf %236 : vector<8x256xf32> to vector<8x256xbf16>
    %c0_63 = arith.constant 0 : index
    %c0_64 = arith.constant 0 : index
    %260 = vector.load %arg2[%c0_63, %c0_64] : memref<256x1024xbf16, #tpu.memory_space<vmem>>, vector<256x1024xbf16>
    %cst_65 = arith.constant dense<0.000000e+00> : vector<8x1024xf32>
    %261 = tpu.matmul %259, %260, %cst_65 {dimension_numbers = #tpu.dot_dimension_numbers<[1], [0], [0], [1], [0, 0, 1, 1], [], []>} : vector<8x256xbf16>, vector<256x1024xbf16>, vector<8x1024xf32> -> vector<8x1024xf32>
    %262 = arith.addf %258, %261 : vector<8x1024xf32>
    %263 = vector.extract_strided_slice %262 {offsets = [0, 0], sizes = [8, 768], strides = [1, 1]} : vector<8x1024xf32> to vector<8x768xf32>
    %264 = arith.negf %263 : vector<8x768xf32>
    %265 = math.exp %264 : vector<8x768xf32>
    %cst_66 = arith.constant 1.000000e+00 : f32
    %266 = vector.broadcast %cst_66 : f32 to vector<8x768xf32>
    %267 = arith.addf %266, %265 : vector<8x768xf32>
    %268 = arith.divf %266, %267 : vector<8x768xf32>
    %269 = vector.extract_strided_slice %268 {offsets = [0, 0], sizes = [8, 256], strides = [1, 1]} : vector<8x768xf32> to vector<8x256xf32>
    %270 = vector.extract_strided_slice %268 {offsets = [0, 256], sizes = [8, 256], strides = [1, 1]} : vector<8x768xf32> to vector<8x256xf32>
    %271 = vector.extract_strided_slice %268 {offsets = [0, 512], sizes = [8, 256], strides = [1, 1]} : vector<8x768xf32> to vector<8x256xf32>
    %272 = vector.extract_strided_slice %262 {offsets = [0, 768], sizes = [8, 256], strides = [1, 1]} : vector<8x1024xf32> to vector<8x256xf32>
    %273 = math.tanh %272 : vector<8x256xf32>
    %274 = arith.mulf %270, %234 : vector<8x256xf32>
    %275 = arith.mulf %269, %273 : vector<8x256xf32>
    %276 = arith.addf %274, %275 : vector<8x256xf32>
    %277 = math.tanh %276 : vector<8x256xf32>
    %278 = arith.mulf %271, %277 : vector<8x256xf32>
    %279 = tpu.concatenate %278, %257 in 1 : vector<8x256xf32>, vector<8x256xf32> -> vector<8x512xf32>
    %280 = arith.truncf %279 : vector<8x512xf32> to vector<8x512xbf16>
    %c0_67 = arith.constant 0 : index
    %c0_68 = arith.constant 0 : index
    %281 = vector.load %arg4[%c0_67, %c0_68] : memref<512x1024xbf16, #tpu.memory_space<vmem>>, vector<512x1024xbf16>
    %cst_69 = arith.constant dense<0.000000e+00> : vector<8x1024xf32>
    %282 = tpu.matmul %280, %281, %cst_69 {dimension_numbers = #tpu.dot_dimension_numbers<[1], [0], [0], [1], [0, 0, 1, 1], [], []>} : vector<8x512xbf16>, vector<512x1024xbf16>, vector<8x1024xf32> -> vector<8x1024xf32>
    %283 = arith.addf %282, %9 : vector<8x1024xf32>
    %284 = vector.extract_strided_slice %283 {offsets = [0, 0], sizes = [8, 768], strides = [1, 1]} : vector<8x1024xf32> to vector<8x768xf32>
    %285 = arith.negf %284 : vector<8x768xf32>
    %286 = math.exp %285 : vector<8x768xf32>
    %cst_70 = arith.constant 1.000000e+00 : f32
    %287 = vector.broadcast %cst_70 : f32 to vector<8x768xf32>
    %288 = arith.addf %287, %286 : vector<8x768xf32>
    %289 = arith.divf %287, %288 : vector<8x768xf32>
    %290 = vector.extract_strided_slice %289 {offsets = [0, 0], sizes = [8, 256], strides = [1, 1]} : vector<8x768xf32> to vector<8x256xf32>
    %291 = vector.extract_strided_slice %289 {offsets = [0, 256], sizes = [8, 256], strides = [1, 1]} : vector<8x768xf32> to vector<8x256xf32>
    %292 = vector.extract_strided_slice %289 {offsets = [0, 512], sizes = [8, 256], strides = [1, 1]} : vector<8x768xf32> to vector<8x256xf32>
    %293 = vector.extract_strided_slice %283 {offsets = [0, 768], sizes = [8, 256], strides = [1, 1]} : vector<8x1024xf32> to vector<8x256xf32>
    %294 = math.tanh %293 : vector<8x256xf32>
    %295 = arith.mulf %291, %255 : vector<8x256xf32>
    %296 = arith.mulf %290, %294 : vector<8x256xf32>
    %297 = arith.addf %295, %296 : vector<8x256xf32>
    %298 = math.tanh %297 : vector<8x256xf32>
    %299 = arith.mulf %292, %298 : vector<8x256xf32>
    %c56 = arith.constant 56 : index
    %c0_71 = arith.constant 0 : index
    %300 = vector.load %arg9[%c56, %c0_71] : memref<64x1024xf32, #tpu.memory_space<vmem>>, vector<8x1024xf32>
    %301 = arith.truncf %278 : vector<8x256xf32> to vector<8x256xbf16>
    %c0_72 = arith.constant 0 : index
    %c0_73 = arith.constant 0 : index
    %302 = vector.load %arg2[%c0_72, %c0_73] : memref<256x1024xbf16, #tpu.memory_space<vmem>>, vector<256x1024xbf16>
    %cst_74 = arith.constant dense<0.000000e+00> : vector<8x1024xf32>
    %303 = tpu.matmul %301, %302, %cst_74 {dimension_numbers = #tpu.dot_dimension_numbers<[1], [0], [0], [1], [0, 0, 1, 1], [], []>} : vector<8x256xbf16>, vector<256x1024xbf16>, vector<8x1024xf32> -> vector<8x1024xf32>
    %304 = arith.addf %300, %303 : vector<8x1024xf32>
    %305 = vector.extract_strided_slice %304 {offsets = [0, 0], sizes = [8, 768], strides = [1, 1]} : vector<8x1024xf32> to vector<8x768xf32>
    %306 = arith.negf %305 : vector<8x768xf32>
    %307 = math.exp %306 : vector<8x768xf32>
    %cst_75 = arith.constant 1.000000e+00 : f32
    %308 = vector.broadcast %cst_75 : f32 to vector<8x768xf32>
    %309 = arith.addf %308, %307 : vector<8x768xf32>
    %310 = arith.divf %308, %309 : vector<8x768xf32>
    %311 = vector.extract_strided_slice %310 {offsets = [0, 0], sizes = [8, 256], strides = [1, 1]} : vector<8x768xf32> to vector<8x256xf32>
    %312 = vector.extract_strided_slice %310 {offsets = [0, 256], sizes = [8, 256], strides = [1, 1]} : vector<8x768xf32> to vector<8x256xf32>
    %313 = vector.extract_strided_slice %310 {offsets = [0, 512], sizes = [8, 256], strides = [1, 1]} : vector<8x768xf32> to vector<8x256xf32>
    %314 = vector.extract_strided_slice %304 {offsets = [0, 768], sizes = [8, 256], strides = [1, 1]} : vector<8x1024xf32> to vector<8x256xf32>
    %315 = math.tanh %314 : vector<8x256xf32>
    %316 = arith.mulf %312, %276 : vector<8x256xf32>
    %317 = arith.mulf %311, %315 : vector<8x256xf32>
    %318 = arith.addf %316, %317 : vector<8x256xf32>
    %319 = math.tanh %318 : vector<8x256xf32>
    %320 = arith.mulf %313, %319 : vector<8x256xf32>
    %321 = tpu.concatenate %320, %299 in 1 : vector<8x256xf32>, vector<8x256xf32> -> vector<8x512xf32>
    %322 = arith.truncf %321 : vector<8x512xf32> to vector<8x512xbf16>
    %c0_76 = arith.constant 0 : index
    %c0_77 = arith.constant 0 : index
    %323 = vector.load %arg4[%c0_76, %c0_77] : memref<512x1024xbf16, #tpu.memory_space<vmem>>, vector<512x1024xbf16>
    %cst_78 = arith.constant dense<0.000000e+00> : vector<8x1024xf32>
    %324 = tpu.matmul %322, %323, %cst_78 {dimension_numbers = #tpu.dot_dimension_numbers<[1], [0], [0], [1], [0, 0, 1, 1], [], []>} : vector<8x512xbf16>, vector<512x1024xbf16>, vector<8x1024xf32> -> vector<8x1024xf32>
    %325 = arith.addf %324, %9 : vector<8x1024xf32>
    %326 = vector.extract_strided_slice %325 {offsets = [0, 0], sizes = [8, 768], strides = [1, 1]} : vector<8x1024xf32> to vector<8x768xf32>
    %327 = arith.negf %326 : vector<8x768xf32>
    %328 = math.exp %327 : vector<8x768xf32>
    %cst_79 = arith.constant 1.000000e+00 : f32
    %329 = vector.broadcast %cst_79 : f32 to vector<8x768xf32>
    %330 = arith.addf %329, %328 : vector<8x768xf32>
    %331 = arith.divf %329, %330 : vector<8x768xf32>
    %332 = vector.extract_strided_slice %331 {offsets = [0, 0], sizes = [8, 256], strides = [1, 1]} : vector<8x768xf32> to vector<8x256xf32>
    %333 = vector.extract_strided_slice %331 {offsets = [0, 256], sizes = [8, 256], strides = [1, 1]} : vector<8x768xf32> to vector<8x256xf32>
    %334 = vector.extract_strided_slice %331 {offsets = [0, 512], sizes = [8, 256], strides = [1, 1]} : vector<8x768xf32> to vector<8x256xf32>
    %335 = vector.extract_strided_slice %325 {offsets = [0, 768], sizes = [8, 256], strides = [1, 1]} : vector<8x1024xf32> to vector<8x256xf32>
    %336 = math.tanh %335 : vector<8x256xf32>
    %337 = arith.mulf %333, %297 : vector<8x256xf32>
    %338 = arith.mulf %332, %336 : vector<8x256xf32>
    %339 = arith.addf %337, %338 : vector<8x256xf32>
    %340 = math.tanh %339 : vector<8x256xf32>
    %341 = arith.mulf %334, %340 : vector<8x256xf32>
    %342 = arith.truncf %341 : vector<8x256xf32> to vector<8x256xbf16>
    %c0_80 = arith.constant 0 : index
    %c0_81 = arith.constant 0 : index
    %343 = vector.load %arg6[%c0_80, %c0_81] : memref<256x128xbf16, #tpu.memory_space<vmem>>, vector<256x128xbf16>
    %cst_82 = arith.constant dense<0.000000e+00> : vector<8x128xf32>
    %344 = tpu.matmul %342, %343, %cst_82 {dimension_numbers = #tpu.dot_dimension_numbers<[1], [0], [0], [1], [0, 0, 1, 1], [], []>} : vector<8x256xbf16>, vector<256x128xbf16>, vector<8x128xf32> -> vector<8x128xf32>
    %c0_83 = arith.constant 0 : index
    %c0_84 = arith.constant 0 : index
    %345 = vector.load %arg7[%c0_83, %c0_84] : memref<1x128xf32, #tpu.memory_space<vmem>>, vector<1x128xf32>
    %346 = vector.broadcast %345 : vector<1x128xf32> to vector<8x128xf32>
    %347 = arith.addf %344, %346 : vector<8x128xf32>
    %c0_85 = arith.constant 0 : index
    %c0_86 = arith.constant 0 : index
    %348 = vector.load %arg8[%c0_85, %c0_86] : memref<8x128xf32, #tpu.memory_space<vmem>>, vector<8x128xf32>
    tpu.vector_store %arg8[%c0_85, %c0_86], %347 {strides = array<i32>} : memref<8x128xf32, #tpu.memory_space<vmem>>, vector<8x128xf32>,
    return
  }
}

</mosaic_0001>

<llo_original>
// kernel: lstm_student_forward.1
$region0: #{lstm_student_forward.1}
  #allocation0 [shape = 'u32[]', space=smem, size = 0x4, offset = 0x4, fixed_abs, tag = 'smem constant byte address 0x4 - core index']
  #allocation1 [shape = 'u32[144,128]{1,0:T(1,128)}', space=vmem, size = 0x12000, scoped, tag = 'internal scratch']
  #allocation2 [shape = 'f32[64,1024]{1,0:T(8,128)}', space=vmem, size = 0x40000, scoped, tag = 'scratch operand']
  %s0 = inlined_call_operand.vmem [shape: bf16[64,768], index: 0, kind: input, shape index: {}]
  %s1 = inlined_call_operand.vmem [shape: bf16[768,1024], index: 1, kind: input, shape index: {}]
  %s2 = inlined_call_operand.vmem [shape: bf16[256,1024], index: 2, kind: input, shape index: {}]
  %s3 = inlined_call_operand.vmem [shape: f32[1,1024], index: 3, kind: input, shape index: {}]
  %s4 = inlined_call_operand.vmem [shape: bf16[512,1024], index: 4, kind: input, shape index: {}]
  %s5 = inlined_call_operand.vmem [shape: f32[1,1024], index: 5, kind: input, shape index: {}]
  %s6 = inlined_call_operand.vmem [shape: bf16[256,128], index: 6, kind: input, shape index: {}]
  %s7 = inlined_call_operand.vmem [shape: f32[1,128], index: 7, kind: input, shape index: {}]
  %s8 = inlined_call_operand.vmem [shape: f32[8,128], index: 8, kind: output, shape index: {}]
  %s9 = sld [smem:[#allocation0]]
  $region42: #{lstm_student_forward.1} parent=0
    _
  %s11 = ssub.s32 1, %s9
  %s12 = scalar_select 0, %s11, %s9
  // Predicated region
  $region2: #{lstm_student_forward.1} parent=0 // pred_check
    _
  $region3: #{lstm_student_forward.1} parent=0 // pred_check_branch
    %14 = sbr.rel (0) target = $region5
  $region4: #{lstm_student_forward.1} parent=0 // pred_region
    _
  $region5: #{lstm_student_forward.1} parent=0 // pred_fallthru
    _
  // Predicated region
  $region6: #{lstm_student_forward.1} parent=0 // pred_check
    _
  $region7: #{lstm_student_forward.1} parent=0 // pred_check_branch
    %16 = sbr.rel (0) target = $region9
  $region8: #{lstm_student_forward.1} parent=0 // pred_region
    _
  $region9: #{lstm_student_forward.1} parent=0 // pred_fallthru
    _
  // Predicated region
  $region10: #{lstm_student_forward.1} parent=0 // pred_check
    _
  $region11: #{lstm_student_forward.1} parent=0 // pred_check_branch
    %18 = sbr.rel (0) target = $region13
  $region12: #{lstm_student_forward.1} parent=0 // pred_region
    _
  $region13: #{lstm_student_forward.1} parent=0 // pred_fallthru
    _
  // Predicated region
  $region14: #{lstm_student_forward.1} parent=0 // pred_check
    _
  $region15: #{lstm_student_forward.1} parent=0 // pred_check_branch
    %20 = sbr.rel (0) target = $region17
  $region16: #{lstm_student_forward.1} parent=0 // pred_region
    _
  $region17: #{lstm_student_forward.1} parent=0 // pred_fallthru
    _
  // Predicated region
  $region18: #{lstm_student_forward.1} parent=0 // pred_check
    _
  $region19: #{lstm_student_forward.1} parent=0 // pred_check_branch
    %22 = sbr.rel (0) target = $region21
  $region20: #{lstm_student_forward.1} parent=0 // pred_region
    _
  $region21: #{lstm_student_forward.1} parent=0 // pred_fallthru
    _
  // Predicated region
  $region22: #{lstm_student_forward.1} parent=0 // pred_check
    _
  $region23: #{lstm_student_forward.1} parent=0 // pred_check_branch
    %24 = sbr.rel (0) target = $region25
  $region24: #{lstm_student_forward.1} parent=0 // pred_region
    _
  $region25: #{lstm_student_forward.1} parent=0 // pred_fallthru
    _
  // Predicated region
  $region26: #{lstm_student_forward.1} parent=0 // pred_check
    _
  $region27: #{lstm_student_forward.1} parent=0 // pred_check_branch
    %26 = sbr.rel (0) target = $region29
  $region28: #{lstm_student_forward.1} parent=0 // pred_region
    _
  $region29: #{lstm_student_forward.1} parent=0 // pred_fallthru
    _
  // Predicated region
  $region30: #{lstm_student_forward.1} parent=0 // pred_check
    _
  $region31: #{lstm_student_forward.1} parent=0 // pred_check_branch
    %28 = sbr.rel (0) target = $region33
  $region32: #{lstm_student_forward.1} parent=0 // pred_region
    _
  $region33: #{lstm_student_forward.1} parent=0 // pred_fallthru
    _
  %v30 = vld [vmem:[%s0] sm:$0xff]
  %v31 = vld [vmem:[%s0 + $0x8] sm:$0xff]
  %v32 = vld [vmem:[%s0 + $0x10] sm:$0xff]
  %v33 = vld [vmem:[%s0 + $0x18] sm:$0xff]
  %v34 = vld [vmem:[%s0 + $0x20] sm:$0xff]
  %v35 = vld [vmem:[%s0 + $0x28] sm:$0xff]
  %v36 = vld [vmem:[%s0 + $0x30] sm:$0xff]
  %v37 = vld [vmem:[%s0 + $0x38] sm:$0xff]
  %v38 = vld [vmem:[%s0 + $0x40] sm:$0xff]
  %v39 = vld [vmem:[%s0 + $0x48] sm:$0xff]
  %v40 = vld [vmem:[%s0 + $0x50] sm:$0xff]
  %v41 = vld [vmem:[%s0 + $0x58] sm:$0xff]
  %v42 = vld [vmem:[%s0 + $0x60] sm:$0xff]
  %v43 = vld [vmem:[%s0 + $0x68] sm:$0xff]
  %v44 = vld [vmem:[%s0 + $0x70] sm:$0xff]
  %v45 = vld [vmem:[%s0 + $0x78] sm:$0xff]
  %v46 = vld [vmem:[%s0 + $0x80] sm:$0xff]
  %v47 = vld [vmem:[%s0 + $0x88] sm:$0xff]
  %v48 = vld [vmem:[%s0 + $0x90] sm:$0xff]
  %v49 = vld [vmem:[%s0 + $0x98] sm:$0xff]
  %v50 = vld [vmem:[%s0 + $0xa0] sm:$0xff]
  %v51 = vld [vmem:[%s0 + $0xa8] sm:$0xff]
  %v52 = vld [vmem:[%s0 + $0xb0] sm:$0xff]
  %v53 = vld [vmem:[%s0 + $0xb8] sm:$0xff]
  %v54 = vld [vmem:[%s1] sm:$0xff]
  %v55 = vld [vmem:[%s1 + $0x8] sm:$0xff]
  %v56 = vld [vmem:[%s1 + $0x10] sm:$0xff]
  %v57 = vld [vmem:[%s1 + $0x18] sm:$0xff]
  %v58 = vld [vmem:[%s1 + $0x20] sm:$0xff]
  %v59 = vld [vmem:[%s1 + $0x28] sm:$0xff]
  %v60 = vld [vmem:[%s1 + $0x30] sm:$0xff]
  %v61 = vld [vmem:[%s1 + $0x38] sm:$0xff]
  %v62 = vld [vmem:[%s1 + $0x40] sm:$0xff]
  %v63 = vld [vmem:[%s1 + $0x48] sm:$0xff]
  %v64 = vld [vmem:[%s1 + $0x50] sm:$0xff]
  %v65 = vld [vmem:[%s1 + $0x58] sm:$0xff]
  %v66 = vld [vmem:[%s1 + $0x60] sm:$0xff]
  %v67 = vld [vmem:[%s1 + $0x68] sm:$0xff]
  %v68 = vld [vmem:[%s1 + $0x70] sm:$0xff]
  %v69 = vld [vmem:[%s1 + $0x78] sm:$0xff]
  %v70 = vld [vmem:[%s1 + $0x80] sm:$0xff]
  %v71 = vld [vmem:[%s1 + $0x88] sm:$0xff]
  %v72 = vld [vmem:[%s1 + $0x90] sm:$0xff]
  %v73 = vld [vmem:[%s1 + $0x98] sm:$0xff]
  %v74 = vld [vmem:[%s1 + $0xa0] sm:$0xff]
  %v75 = vld [vmem:[%s1 + $0xa8] sm:$0xff]
  %v76 = vld [vmem:[%s1 + $0xb0] sm:$0xff]
  %v77 = vld [vmem:[%s1 + $0xb8] sm:$0xff]
  %v78 = vld [vmem:[%s1 + $0xc0] sm:$0xff]
  %v79 = vld [vmem:[%s1 + $0xc8] sm:$0xff]
  %v80 = vld [vmem:[%s1 + $0xd0] sm:$0xff]
  %v81 = vld [vmem:[%s1 + $0xd8] sm:$0xff]
  %v82 = vld [vmem:[%s1 + $0xe0] sm:$0xff]
  %v83 = vld [vmem:[%s1 + $0xe8] sm:$0xff]
  %v84 = vld [vmem:[%s1 + $0xf0] sm:$0xff]
  %v85 = vld [vmem:[%s1 + $0xf8] sm:$0xff]
  %v86 = vld [vmem:[%s1 + $0x100] sm:$0xff]
  %v87 = vld [vmem:[%s1 + $0x108] sm:$0xff]
  %v88 = vld [vmem:[%s1 + $0x110] sm:$0xff]
  %v89 = vld [vmem:[%s1 + $0x118] sm:$0xff]
  %v90 = vld [vmem:[%s1 + $0x120] sm:$0xff]
  %v91 = vld [vmem:[%s1 + $0x128] sm:$0xff]
  %v92 = vld [vmem:[%s1 + $0x130] sm:$0xff]
  %v93 = vld [vmem:[%s1 + $0x138] sm:$0xff]
  %v94 = vld [vmem:[%s1 + $0x140] sm:$0xff]
  %v95 = vld [vmem:[%s1 + $0x148] sm:$0xff]
  %v96 = vld [vmem:[%s1 + $0x150] sm:$0xff]
  %v97 = vld [vmem:[%s1 + $0x158] sm:$0xff]
  %v98 = vld [vmem:[%s1 + $0x160] sm:$0xff]
  %v99 = vld [vmem:[%s1 + $0x168] sm:$0xff]
  %v100 = vld [vmem:[%s1 + $0x170] sm:$0xff]
  %v101 = vld [vmem:[%s1 + $0x178] sm:$0xff]
  %v102 = vld [vmem:[%s1 + $0x180] sm:$0xff]
  %v103 = vld [vmem:[%s1 + $0x188] sm:$0xff]
  %v104 = vld [vmem:[%s1 + $0x190] sm:$0xff]
  %v105 = vld [vmem:[%s1 + $0x198] sm:$0xff]
  %v106 = vld [vmem:[%s1 + $0x1a0] sm:$0xff]
  %v107 = vld [vmem:[%s1 + $0x1a8] sm:$0xff]
  %v108 = vld [vmem:[%s1 + $0x1b0] sm:$0xff]
  %v109 = vld [vmem:[%s1 + $0x1b8] sm:$0xff]
  %v110 = vld [vmem:[%s1 + $0x1c0] sm:$0xff]
  %v111 = vld [vmem:[%s1 + $0x1c8] sm:$0xff]
  %v112 = vld [vmem:[%s1 + $0x1d0] sm:$0xff]
  %v113 = vld [vmem:[%s1 + $0x1d8] sm:$0xff]
  %v114 = vld [vmem:[%s1 + $0x1e0] sm:$0xff]
  %v115 = vld [vmem:[%s1 + $0x1e8] sm:$0xff]
  %v116 = vld [vmem:[%s1 + $0x1f0] sm:$0xff]
  %v117 = vld [vmem:[%s1 + $0x1f8] sm:$0xff]
  %v118 = vld [vmem:[%s1 + $0x200] sm:$0xff]
  %v119 = vld [vmem:[%s1 + $0x208] sm:$0xff]
  %v120 = vld [vmem:[%s1 + $0x210] sm:$0xff]
  %v121 = vld [vmem:[%s1 + $0x218] sm:$0xff]
  %v122 = vld [vmem:[%s1 + $0x220] sm:$0xff]
  %v123 = vld [vmem:[%s1 + $0x228] sm:$0xff]
  %v124 = vld [vmem:[%s1 + $0x230] sm:$0xff]
  %v125 = vld [vmem:[%s1 + $0x238] sm:$0xff]
  %v126 = vld [vmem:[%s1 + $0x240] sm:$0xff]
  %v127 = vld [vmem:[%s1 + $0x248] sm:$0xff]
  %v128 = vld [vmem:[%s1 + $0x250] sm:$0xff]
  %v129 = vld [vmem:[%s1 + $0x258] sm:$0xff]
  %v130 = vld [vmem:[%s1 + $0x260] sm:$0xff]
  %v131 = vld [vmem:[%s1 + $0x268] sm:$0xff]
  %v132 = vld [vmem:[%s1 + $0x270] sm:$0xff]
  %v133 = vld [vmem:[%s1 + $0x278] sm:$0xff]
  %v134 = vld [vmem:[%s1 + $0x280] sm:$0xff]
  %v135 = vld [vmem:[%s1 + $0x288] sm:$0xff]
  %v136 = vld [vmem:[%s1 + $0x290] sm:$0xff]
  %v137 = vld [vmem:[%s1 + $0x298] sm:$0xff]
  %v138 = vld [vmem:[%s1 + $0x2a0] sm:$0xff]
  %v139 = vld [vmem:[%s1 + $0x2a8] sm:$0xff]
  %v140 = vld [vmem:[%s1 + $0x2b0] sm:$0xff]
  %v141 = vld [vmem:[%s1 + $0x2b8] sm:$0xff]
  %v142 = vld [vmem:[%s1 + $0x2c0] sm:$0xff]
  %v143 = vld [vmem:[%s1 + $0x2c8] sm:$0xff]
  %v144 = vld [vmem:[%s1 + $0x2d0] sm:$0xff]
  %v145 = vld [vmem:[%s1 + $0x2d8] sm:$0xff]
  %v146 = vld [vmem:[%s1 + $0x2e0] sm:$0xff]
  %v147 = vld [vmem:[%s1 + $0x2e8] sm:$0xff]
  %v148 = vld [vmem:[%s1 + $0x2f0] sm:$0xff]
  %v149 = vld [vmem:[%s1 + $0x2f8] sm:$0xff]
  %v150 = vld [vmem:[%s1 + $0x300] sm:$0xff]
  %v151 = vld [vmem:[%s1 + $0x308] sm:$0xff]
  %v152 = vld [vmem:[%s1 + $0x310] sm:$0xff]
  %v153 = vld [vmem:[%s1 + $0x318] sm:$0xff]
  %v154 = vld [vmem:[%s1 + $0x320] sm:$0xff]
  %v155 = vld [vmem:[%s1 + $0x328] sm:$0xff]
  %v156 = vld [vmem:[%s1 + $0x330] sm:$0xff]
  %v157 = vld [vmem:[%s1 + $0x338] sm:$0xff]
  %v158 = vld [vmem:[%s1 + $0x340] sm:$0xff]
  %v159 = vld [vmem:[%s1 + $0x348] sm:$0xff]
  %v160 = vld [vmem:[%s1 + $0x350] sm:$0xff]
  %v161 = vld [vmem:[%s1 + $0x358] sm:$0xff]
  %v162 = vld [vmem:[%s1 + $0x360] sm:$0xff]
  %v163 = vld [vmem:[%s1 + $0x368] sm:$0xff]
  %v164 = vld [vmem:[%s1 + $0x370] sm:$0xff]
  %v165 = vld [vmem:[%s1 + $0x378] sm:$0xff]
  %v166 = vld [vmem:[%s1 + $0x380] sm:$0xff]
  %v167 = vld [vmem:[%s1 + $0x388] sm:$0xff]
  %v168 = vld [vmem:[%s1 + $0x390] sm:$0xff]
  %v169 = vld [vmem:[%s1 + $0x398] sm:$0xff]
  %v170 = vld [vmem:[%s1 + $0x3a0] sm:$0xff]
  %v171 = vld [vmem:[%s1 + $0x3a8] sm:$0xff]
  %v172 = vld [vmem:[%s1 + $0x3b0] sm:$0xff]
  %v173 = vld [vmem:[%s1 + $0x3b8] sm:$0xff]
  %v174 = vld [vmem:[%s1 + $0x3c0] sm:$0xff]
  %v175 = vld [vmem:[%s1 + $0x3c8] sm:$0xff]
  %v176 = vld [vmem:[%s1 + $0x3d0] sm:$0xff]
  %v177 = vld [vmem:[%s1 + $0x3d8] sm:$0xff]
  %v178 = vld [vmem:[%s1 + $0x3e0] sm:$0xff]
  %v179 = vld [vmem:[%s1 + $0x3e8] sm:$0xff]
  %v180 = vld [vmem:[%s1 + $0x3f0] sm:$0xff]
  %v181 = vld [vmem:[%s1 + $0x3f8] sm:$0xff]
  %v182 = vld [vmem:[%s1 + $0x400] sm:$0xff]
  %v183 = vld [vmem:[%s1 + $0x408] sm:$0xff]
  %v184 = vld [vmem:[%s1 + $0x410] sm:$0xff]
  %v185 = vld [vmem:[%s1 + $0x418] sm:$0xff]
  %v186 = vld [vmem:[%s1 + $0x420] sm:$0xff]
  %v187 = vld [vmem:[%s1 + $0x428] sm:$0xff]
  %v188 = vld [vmem:[%s1 + $0x430] sm:$0xff]
  %v189 = vld [vmem:[%s1 + $0x438] sm:$0xff]
  %v190 = vld [vmem:[%s1 + $0x440] sm:$0xff]
  %v191 = vld [vmem:[%s1 + $0x448] sm:$0xff]
  %v192 = vld [vmem:[%s1 + $0x450] sm:$0xff]
  %v193 = vld [vmem:[%s1 + $0x458] sm:$0xff]
  %v194 = vld [vmem:[%s1 + $0x460] sm:$0xff]
  %v195 = vld [vmem:[%s1 + $0x468] sm:$0xff]
  %v196 = vld [vmem:[%s1 + $0x470] sm:$0xff]
  %v197 = vld [vmem:[%s1 + $0x478] sm:$0xff]
  %v198 = vld [vmem:[%s1 + $0x480] sm:$0xff]
  %v199 = vld [vmem:[%s1 + $0x488] sm:$0xff]
  %v200 = vld [vmem:[%s1 + $0x490] sm:$0xff]
  %v201 = vld [vmem:[%s1 + $0x498] sm:$0xff]
  %v202 = vld [vmem:[%s1 + $0x4a0] sm:$0xff]
  %v203 = vld [vmem:[%s1 + $0x4a8] sm:$0xff]
  %v204 = vld [vmem:[%s1 + $0x4b0] sm:$0xff]
  %v205 = vld [vmem:[%s1 + $0x4b8] sm:$0xff]
  %v206 = vld [vmem:[%s1 + $0x4c0] sm:$0xff]
  %v207 = vld [vmem:[%s1 + $0x4c8] sm:$0xff]
  %v208 = vld [vmem:[%s1 + $0x4d0] sm:$0xff]
  %v209 = vld [vmem:[%s1 + $0x4d8] sm:$0xff]
  %v210 = vld [vmem:[%s1 + $0x4e0] sm:$0xff]
  %v211 = vld [vmem:[%s1 + $0x4e8] sm:$0xff]
  %v212 = vld [vmem:[%s1 + $0x4f0] sm:$0xff]
  %v213 = vld [vmem:[%s1 + $0x4f8] sm:$0xff]
  %v214 = vld [vmem:[%s1 + $0x500] sm:$0xff]
  %v215 = vld [vmem:[%s1 + $0x508] sm:$0xff]
  %v216 = vld [vmem:[%s1 + $0x510] sm:$0xff]
  %v217 = vld [vmem:[%s1 + $0x518] sm:$0xff]
  %v218 = vld [vmem:[%s1 + $0x520] sm:$0xff]
  %v219 = vld [vmem:[%s1 + $0x528] sm:$0xff]
  %v220 = vld [vmem:[%s1 + $0x530] sm:$0xff]
  %v221 = vld [vmem:[%s1 + $0x538] sm:$0xff]
  %v222 = vld [vmem:[%s1 + $0x540] sm:$0xff]
  %v223 = vld [vmem:[%s1 + $0x548] sm:$0xff]
  %v224 = vld [vmem:[%s1 + $0x550] sm:$0xff]
  %v225 = vld [vmem:[%s1 + $0x558] sm:$0xff]
  %v226 = vld [vmem:[%s1 + $0x560] sm:$0xff]
  %v227 = vld [vmem:[%s1 + $0x568] sm:$0xff]
  %v228 = vld [vmem:[%s1 + $0x570] sm:$0xff]
  %v229 = vld [vmem:[%s1 + $0x578] sm:$0xff]
  %v230 = vld [vmem:[%s1 + $0x580] sm:$0xff]
  %v231 = vld [vmem:[%s1 + $0x588] sm:$0xff]
  %v232 = vld [vmem:[%s1 + $0x590] sm:$0xff]
  %v233 = vld [vmem:[%s1 + $0x598] sm:$0xff]
  %v234 = vld [vmem:[%s1 + $0x5a0] sm:$0xff]
  %v235 = vld [vmem:[%s1 + $0x5a8] sm:$0xff]
  %v236 = vld [vmem:[%s1 + $0x5b0] sm:$0xff]
  %v237 = vld [vmem:[%s1 + $0x5b8] sm:$0xff]
  %v238 = vld [vmem:[%s1 + $0x5c0] sm:$0xff]
  %v239 = vld [vmem:[%s1 + $0x5c8] sm:$0xff]
  %v240 = vld [vmem:[%s1 + $0x5d0] sm:$0xff]
  %v241 = vld [vmem:[%s1 + $0x5d8] sm:$0xff]
  %v242 = vld [vmem:[%s1 + $0x5e0] sm:$0xff]
  %v243 = vld [vmem:[%s1 + $0x5e8] sm:$0xff]
  %v244 = vld [vmem:[%s1 + $0x5f0] sm:$0xff]
  %v245 = vld [vmem:[%s1 + $0x5f8] sm:$0xff]
  %v246 = vld [vmem:[%s1 + $0x600] sm:$0xff]
  %v247 = vld [vmem:[%s1 + $0x608] sm:$0xff]
  %v248 = vld [vmem:[%s1 + $0x610] sm:$0xff]
  %v249 = vld [vmem:[%s1 + $0x618] sm:$0xff]
  %v250 = vld [vmem:[%s1 + $0x620] sm:$0xff]
  %v251 = vld [vmem:[%s1 + $0x628] sm:$0xff]
  %v252 = vld [vmem:[%s1 + $0x630] sm:$0xff]
  %v253 = vld [vmem:[%s1 + $0x638] sm:$0xff]
  %v254 = vld [vmem:[%s1 + $0x640] sm:$0xff]
  %v255 = vld [vmem:[%s1 + $0x648] sm:$0xff]
  %v256 = vld [vmem:[%s1 + $0x650] sm:$0xff]
  %v257 = vld [vmem:[%s1 + $0x658] sm:$0xff]
  %v258 = vld [vmem:[%s1 + $0x660] sm:$0xff]
  %v259 = vld [vmem:[%s1 + $0x668] sm:$0xff]
  %v260 = vld [vmem:[%s1 + $0x670] sm:$0xff]
  %v261 = vld [vmem:[%s1 + $0x678] sm:$0xff]
  %v262 = vld [vmem:[%s1 + $0x680] sm:$0xff]
  %v263 = vld [vmem:[%s1 + $0x688] sm:$0xff]
  %v264 = vld [vmem:[%s1 + $0x690] sm:$0xff]
  %v265 = vld [vmem:[%s1 + $0x698] sm:$0xff]
  %v266 = vld [vmem:[%s1 + $0x6a0] sm:$0xff]
  %v267 = vld [vmem:[%s1 + $0x6a8] sm:$0xff]
  %v268 = vld [vmem:[%s1 + $0x6b0] sm:$0xff]
  %v269 = vld [vmem:[%s1 + $0x6b8] sm:$0xff]
  %v270 = vld [vmem:[%s1 + $0x6c0] sm:$0xff]
  %v271 = vld [vmem:[%s1 + $0x6c8] sm:$0xff]
  %v272 = vld [vmem:[%s1 + $0x6d0] sm:$0xff]
  %v273 = vld [vmem:[%s1 + $0x6d8] sm:$0xff]
  %v274 = vld [vmem:[%s1 + $0x6e0] sm:$0xff]
  %v275 = vld [vmem:[%s1 + $0x6e8] sm:$0xff]
  %v276 = vld [vmem:[%s1 + $0x6f0] sm:$0xff]
  %v277 = vld [vmem:[%s1 + $0x6f8] sm:$0xff]
  %v278 = vld [vmem:[%s1 + $0x700] sm:$0xff]
  %v279 = vld [vmem:[%s1 + $0x708] sm:$0xff]
  %v280 = vld [vmem:[%s1 + $0x710] sm:$0xff]
  %v281 = vld [vmem:[%s1 + $0x718] sm:$0xff]
  %v282 = vld [vmem:[%s1 + $0x720] sm:$0xff]
  %v283 = vld [vmem:[%s1 + $0x728] sm:$0xff]
  %v284 = vld [vmem:[%s1 + $0x730] sm:$0xff]
  %v285 = vld [vmem:[%s1 + $0x738] sm:$0xff]
  %v286 = vld [vmem:[%s1 + $0x740] sm:$0xff]
  %v287 = vld [vmem:[%s1 + $0x748] sm:$0xff]
  %v288 = vld [vmem:[%s1 + $0x750] sm:$0xff]
  %v289 = vld [vmem:[%s1 + $0x758] sm:$0xff]
  %v290 = vld [vmem:[%s1 + $0x760] sm:$0xff]
  %v291 = vld [vmem:[%s1 + $0x768] sm:$0xff]
  %v292 = vld [vmem:[%s1 + $0x770] sm:$0xff]
  %v293 = vld [vmem:[%s1 + $0x778] sm:$0xff]
  %v294 = vld [vmem:[%s1 + $0x780] sm:$0xff]
  %v295 = vld [vmem:[%s1 + $0x788] sm:$0xff]
  %v296 = vld [vmem:[%s1 + $0x790] sm:$0xff]
  %v297 = vld [vmem:[%s1 + $0x798] sm:$0xff]
  %v298 = vld [vmem:[%s1 + $0x7a0] sm:$0xff]
  %v299 = vld [vmem:[%s1 + $0x7a8] sm:$0xff]
  %v300 = vld [vmem:[%s1 + $0x7b0] sm:$0xff]
  %v301 = vld [vmem:[%s1 + $0x7b8] sm:$0xff]
  %v302 = vld [vmem:[%s1 + $0x7c0] sm:$0xff]
  %v303 = vld [vmem:[%s1 + $0x7c8] sm:$0xff]
  %v304 = vld [vmem:[%s1 + $0x7d0] sm:$0xff]
  %v305 = vld [vmem:[%s1 + $0x7d8] sm:$0xff]
  %v306 = vld [vmem:[%s1 + $0x7e0] sm:$0xff]
  %v307 = vld [vmem:[%s1 + $0x7e8] sm:$0xff]
  %v308 = vld [vmem:[%s1 + $0x7f0] sm:$0xff]
  %v309 = vld [vmem:[%s1 + $0x7f8] sm:$0xff]
  %v310 = vld [vmem:[%s1 + $0x800] sm:$0xff]
  %v311 = vld [vmem:[%s1 + $0x808] sm:$0xff]
  %v312 = vld [vmem:[%s1 + $0x810] sm:$0xff]
  %v313 = vld [vmem:[%s1 + $0x818] sm:$0xff]
  %v314 = vld [vmem:[%s1 + $0x820] sm:$0xff]
  %v315 = vld [vmem:[%s1 + $0x828] sm:$0xff]
  %v316 = vld [vmem:[%s1 + $0x830] sm:$0xff]
  %v317 = vld [vmem:[%s1 + $0x838] sm:$0xff]
  %v318 = vld [vmem:[%s1 + $0x840] sm:$0xff]
  %v319 = vld [vmem:[%s1 + $0x848] sm:$0xff]
  %v320 = vld [vmem:[%s1 + $0x850] sm:$0xff]
  %v321 = vld [vmem:[%s1 + $0x858] sm:$0xff]
  %v322 = vld [vmem:[%s1 + $0x860] sm:$0xff]
  %v323 = vld [vmem:[%s1 + $0x868] sm:$0xff]
  %v324 = vld [vmem:[%s1 + $0x870] sm:$0xff]
  %v325 = vld [vmem:[%s1 + $0x878] sm:$0xff]
  %v326 = vld [vmem:[%s1 + $0x880] sm:$0xff]
  %v327 = vld [vmem:[%s1 + $0x888] sm:$0xff]
  %v328 = vld [vmem:[%s1 + $0x890] sm:$0xff]
  %v329 = vld [vmem:[%s1 + $0x898] sm:$0xff]
  %v330 = vld [vmem:[%s1 + $0x8a0] sm:$0xff]
  %v331 = vld [vmem:[%s1 + $0x8a8] sm:$0xff]
  %v332 = vld [vmem:[%s1 + $0x8b0] sm:$0xff]
  %v333 = vld [vmem:[%s1 + $0x8b8] sm:$0xff]
  %v334 = vld [vmem:[%s1 + $0x8c0] sm:$0xff]
  %v335 = vld [vmem:[%s1 + $0x8c8] sm:$0xff]
  %v336 = vld [vmem:[%s1 + $0x8d0] sm:$0xff]
  %v337 = vld [vmem:[%s1 + $0x8d8] sm:$0xff]
  %v338 = vld [vmem:[%s1 + $0x8e0] sm:$0xff]
  %v339 = vld [vmem:[%s1 + $0x8e8] sm:$0xff]
  %v340 = vld [vmem:[%s1 + $0x8f0] sm:$0xff]
  %v341 = vld [vmem:[%s1 + $0x8f8] sm:$0xff]
  %v342 = vld [vmem:[%s1 + $0x900] sm:$0xff]
  %v343 = vld [vmem:[%s1 + $0x908] sm:$0xff]
  %v344 = vld [vmem:[%s1 + $0x910] sm:$0xff]
  %v345 = vld [vmem:[%s1 + $0x918] sm:$0xff]
  %v346 = vld [vmem:[%s1 + $0x920] sm:$0xff]
  %v347 = vld [vmem:[%s1 + $0x928] sm:$0xff]
  %v348 = vld [vmem:[%s1 + $0x930] sm:$0xff]
  %v349 = vld [vmem:[%s1 + $0x938] sm:$0xff]
  %v350 = vld [vmem:[%s1 + $0x940] sm:$0xff]
  %v351 = vld [vmem:[%s1 + $0x948] sm:$0xff]
  %v352 = vld [vmem:[%s1 + $0x950] sm:$0xff]
  %v353 = vld [vmem:[%s1 + $0x958] sm:$0xff]
  %v354 = vld [vmem:[%s1 + $0x960] sm:$0xff]
  %v355 = vld [vmem:[%s1 + $0x968] sm:$0xff]
  %v356 = vld [vmem:[%s1 + $0x970] sm:$0xff]
  %v357 = vld [vmem:[%s1 + $0x978] sm:$0xff]
  %v358 = vld [vmem:[%s1 + $0x980] sm:$0xff]
  %v359 = vld [vmem:[%s1 + $0x988] sm:$0xff]
  %v360 = vld [vmem:[%s1 + $0x990] sm:$0xff]
  %v361 = vld [vmem:[%s1 + $0x998] sm:$0xff]
  %v362 = vld [vmem:[%s1 + $0x9a0] sm:$0xff]
  %v363 = vld [vmem:[%s1 + $0x9a8] sm:$0xff]
  %v364 = vld [vmem:[%s1 + $0x9b0] sm:$0xff]
  %v365 = vld [vmem:[%s1 + $0x9b8] sm:$0xff]
  %v366 = vld [vmem:[%s1 + $0x9c0] sm:$0xff]
  %v367 = vld [vmem:[%s1 + $0x9c8] sm:$0xff]
  %v368 = vld [vmem:[%s1 + $0x9d0] sm:$0xff]
  %v369 = vld [vmem:[%s1 + $0x9d8] sm:$0xff]
  %v370 = vld [vmem:[%s1 + $0x9e0] sm:$0xff]
  %v371 = vld [vmem:[%s1 + $0x9e8] sm:$0xff]
  %v372 = vld [vmem:[%s1 + $0x9f0] sm:$0xff]
  %v373 = vld [vmem:[%s1 + $0x9f8] sm:$0xff]
  %v374 = vld [vmem:[%s1 + $0xa00] sm:$0xff]
  %v375 = vld [vmem:[%s1 + $0xa08] sm:$0xff]
  %v376 = vld [vmem:[%s1 + $0xa10] sm:$0xff]
  %v377 = vld [vmem:[%s1 + $0xa18] sm:$0xff]
  %v378 = vld [vmem:[%s1 + $0xa20] sm:$0xff]
  %v379 = vld [vmem:[%s1 + $0xa28] sm:$0xff]
  %v380 = vld [vmem:[%s1 + $0xa30] sm:$0xff]
  %v381 = vld [vmem:[%s1 + $0xa38] sm:$0xff]
  %v382 = vld [vmem:[%s1 + $0xa40] sm:$0xff]
  %v383 = vld [vmem:[%s1 + $0xa48] sm:$0xff]
  %v384 = vld [vmem:[%s1 + $0xa50] sm:$0xff]
  %v385 = vld [vmem:[%s1 + $0xa58] sm:$0xff]
  %v386 = vld [vmem:[%s1 + $0xa60] sm:$0xff]
  %v387 = vld [vmem:[%s1 + $0xa68] sm:$0xff]
  %v388 = vld [vmem:[%s1 + $0xa70] sm:$0xff]
  %v389 = vld [vmem:[%s1 + $0xa78] sm:$0xff]
  %v390 = vld [vmem:[%s1 + $0xa80] sm:$0xff]
  %v391 = vld [vmem:[%s1 + $0xa88] sm:$0xff]
  %v392 = vld [vmem:[%s1 + $0xa90] sm:$0xff]
  %v393 = vld [vmem:[%s1 + $0xa98] sm:$0xff]
  %v394 = vld [vmem:[%s1 + $0xaa0] sm:$0xff]
  %v395 = vld [vmem:[%s1 + $0xaa8] sm:$0xff]
  %v396 = vld [vmem:[%s1 + $0xab0] sm:$0xff]
  %v397 = vld [vmem:[%s1 + $0xab8] sm:$0xff]
  %v398 = vld [vmem:[%s1 + $0xac0] sm:$0xff]
  %v399 = vld [vmem:[%s1 + $0xac8] sm:$0xff]
  %v400 = vld [vmem:[%s1 + $0xad0] sm:$0xff]
  %v401 = vld [vmem:[%s1 + $0xad8] sm:$0xff]
  %v402 = vld [vmem:[%s1 + $0xae0] sm:$0xff]
  %v403 = vld [vmem:[%s1 + $0xae8] sm:$0xff]
  %v404 = vld [vmem:[%s1 + $0xaf0] sm:$0xff]
  %v405 = vld [vmem:[%s1 + $0xaf8] sm:$0xff]
  %v406 = vld [vmem:[%s1 + $0xb00] sm:$0xff]
  %v407 = vld [vmem:[%s1 + $0xb08] sm:$0xff]
  %v408 = vld [vmem:[%s1 + $0xb10] sm:$0xff]
  %v409 = vld [vmem:[%s1 + $0xb18] sm:$0xff]
  %v410 = vld [vmem:[%s1 + $0xb20] sm:$0xff]
  %v411 = vld [vmem:[%s1 + $0xb28] sm:$0xff]
  %v412 = vld [vmem:[%s1 + $0xb30] sm:$0xff]
  %v413 = vld [vmem:[%s1 + $0xb38] sm:$0xff]
  %v414 = vld [vmem:[%s1 + $0xb40] sm:$0xff]
  %v415 = vld [vmem:[%s1 + $0xb48] sm:$0xff]
  %v416 = vld [vmem:[%s1 + $0xb50] sm:$0xff]
  %v417 = vld [vmem:[%s1 + $0xb58] sm:$0xff]
  %v418 = vld [vmem:[%s1 + $0xb60] sm:$0xff]
  %v419 = vld [vmem:[%s1 + $0xb68] sm:$0xff]
  %v420 = vld [vmem:[%s1 + $0xb70] sm:$0xff]
  %v421 = vld [vmem:[%s1 + $0xb78] sm:$0xff]
  %v422 = vld [vmem:[%s1 + $0xb80] sm:$0xff]
  %v423 = vld [vmem:[%s1 + $0xb88] sm:$0xff]
  %v424 = vld [vmem:[%s1 + $0xb90] sm:$0xff]
  %v425 = vld [vmem:[%s1 + $0xb98] sm:$0xff]
  %v426 = vld [vmem:[%s1 + $0xba0] sm:$0xff]
  %v427 = vld [vmem:[%s1 + $0xba8] sm:$0xff]
  %v428 = vld [vmem:[%s1 + $0xbb0] sm:$0xff]
  %v429 = vld [vmem:[%s1 + $0xbb8] sm:$0xff]
  %v430 = vld [vmem:[%s1 + $0xbc0] sm:$0xff]
  %v431 = vld [vmem:[%s1 + $0xbc8] sm:$0xff]
  %v432 = vld [vmem:[%s1 + $0xbd0] sm:$0xff]
  %v433 = vld [vmem:[%s1 + $0xbd8] sm:$0xff]
  %v434 = vld [vmem:[%s1 + $0xbe0] sm:$0xff]
  %v435 = vld [vmem:[%s1 + $0xbe8] sm:$0xff]
  %v436 = vld [vmem:[%s1 + $0xbf0] sm:$0xff]
  %v437 = vld [vmem:[%s1 + $0xbf8] sm:$0xff]
  %v438 = vld [vmem:[%s3] sm:$0xff]
  %v440 = vlaneseq
  %v441 = vshrl.u32 %v440, 7
  %v442 = vsub.s32 0, %v441
  %v443 = vrot.slane %v438, %v442
  %v444 = vlaneseq
  %v445 = vshrl.u32 %v444, 7
  %v446 = vsub.s32 1, %v445
  %v447 = vrot.slane %v438, %v446
  %v448 = vlaneseq
  %v449 = vshrl.u32 %v448, 7
  %v450 = vsub.s32 2, %v449
  %v451 = vrot.slane %v438, %v450
  %v452 = vlaneseq
  %v453 = vshrl.u32 %v452, 7
  %v454 = vsub.s32 3, %v453
  %v455 = vrot.slane %v438, %v454
  %v456 = vlaneseq
  %v457 = vshrl.u32 %v456, 7
  %v458 = vsub.s32 4, %v457
  %v459 = vrot.slane %v438, %v458
  %v460 = vlaneseq
  %v461 = vshrl.u32 %v460, 7
  %v462 = vsub.s32 5, %v461
  %v463 = vrot.slane %v438, %v462
  %v464 = vlaneseq
  %v465 = vshrl.u32 %v464, 7
  %v466 = vsub.s32 6, %v465
  %v467 = vrot.slane %v438, %v466
  %v468 = vlaneseq
  %v469 = vshrl.u32 %v468, 7
  %v470 = vsub.s32 7, %v469
  %v471 = vrot.slane %v438, %v470
  %v504 = vunpack.c.l.b16 %v30
  %v505 = vunpack.c.h.b16 %v30
  %v506 = vunpack.c.l.b16 %v31
  %v507 = vunpack.c.h.b16 %v31
  %v508 = vunpack.c.l.b16 %v32
  %v509 = vunpack.c.h.b16 %v32
  %v510 = vunpack.c.l.b16 %v33
  %v511 = vunpack.c.h.b16 %v33
  %v512 = vunpack.c.l.b16 %v34
  %v513 = vunpack.c.h.b16 %v34
  %v514 = vunpack.c.l.b16 %v35
  %v515 = vunpack.c.h.b16 %v35
  %v516 = vunpack.c.l.b16 %v36
  %v517 = vunpack.c.h.b16 %v36
  %v518 = vunpack.c.l.b16 %v37
  %v519 = vunpack.c.h.b16 %v37
  %v520 = vunpack.c.l.b16 %v38
  %v521 = vunpack.c.h.b16 %v38
  %v522 = vunpack.c.l.b16 %v39
  %v523 = vunpack.c.h.b16 %v39
  %v524 = vunpack.c.l.b16 %v40
  %v525 = vunpack.c.h.b16 %v40
  %v526 = vunpack.c.l.b16 %v41
  %v527 = vunpack.c.h.b16 %v41
  %v528 = vunpack.c.l.b16 %v42
  %v529 = vunpack.c.h.b16 %v42
  %v530 = vunpack.c.l.b16 %v43
  %v531 = vunpack.c.h.b16 %v43
  %v532 = vunpack.c.l.b16 %v44
  %v533 = vunpack.c.h.b16 %v44
  %v534 = vunpack.c.l.b16 %v45
  %v535 = vunpack.c.h.b16 %v45
  %v536 = vunpack.c.l.b16 %v46
  %v537 = vunpack.c.h.b16 %v46
  %v538 = vunpack.c.l.b16 %v47
  %v539 = vunpack.c.h.b16 %v47
  %v540 = vunpack.c.l.b16 %v48
  %v541 = vunpack.c.h.b16 %v48
  %v542 = vunpack.c.l.b16 %v49
  %v543 = vunpack.c.h.b16 %v49
  %v544 = vunpack.c.l.b16 %v50
  %v545 = vunpack.c.h.b16 %v50
  %v546 = vunpack.c.l.b16 %v51
  %v547 = vunpack.c.h.b16 %v51
  %v548 = vunpack.c.l.b16 %v52
  %v549 = vunpack.c.h.b16 %v52
  %v550 = vunpack.c.l.b16 %v53
  %v551 = vunpack.c.h.b16 %v53
  %v552 = vpack.c.b16 %v510, %v504
  %v553 = vpack.c.b16 %v511, %v505
  %v554 = vpack.c.b16 %v512, %v506
  %v555 = vpack.c.b16 %v513, %v507
  %v556 = vpack.c.b16 %v514, %v508
  %v557 = vpack.c.b16 %v515, %v509
  %v558 = vpack.c.b16 %v522, %v516
  %v559 = vpack.c.b16 %v523, %v517
  %v560 = vpack.c.b16 %v524, %v518
  %v561 = vpack.c.b16 %v525, %v519
  %v562 = vpack.c.b16 %v526, %v520
  %v563 = vpack.c.b16 %v527, %v521
  %v564 = vpack.c.b16 %v534, %v528
  %v565 = vpack.c.b16 %v535, %v529
  %v566 = vpack.c.b16 %v536, %v530
  %v567 = vpack.c.b16 %v537, %v531
  %v568 = vpack.c.b16 %v538, %v532
  %v569 = vpack.c.b16 %v539, %v533
  %v570 = vpack.c.b16 %v546, %v540
  %v571 = vpack.c.b16 %v547, %v541
  %v572 = vpack.c.b16 %v548, %v542
  %v573 = vpack.c.b16 %v549, %v543
  %v574 = vpack.c.b16 %v550, %v544
  %v575 = vpack.c.b16 %v551, %v545
  %v984 = vunpack.c.l.b16 %v54
  %v985 = vunpack.c.h.b16 %v54
  %v986 = vunpack.c.l.b16 %v55
  %v987 = vunpack.c.h.b16 %v55
  %v988 = vunpack.c.l.b16 %v56
  %v989 = vunpack.c.h.b16 %v56
  %v990 = vunpack.c.l.b16 %v57
  %v991 = vunpack.c.h.b16 %v57
  %v992 = vunpack.c.l.b16 %v58
  %v993 = vunpack.c.h.b16 %v58
  %v994 = vunpack.c.l.b16 %v59
  %v995 = vunpack.c.h.b16 %v59
  %v996 = vunpack.c.l.b16 %v60
  %v997 = vunpack.c.h.b16 %v60
  %v998 = vunpack.c.l.b16 %v61
  %v999 = vunpack.c.h.b16 %v61
  %v1000 = vunpack.c.l.b16 %v62
  %v1001 = vunpack.c.h.b16 %v62
  %v1002 = vunpack.c.l.b16 %v63
  %v1003 = vunpack.c.h.b16 %v63
  %v1004 = vunpack.c.l.b16 %v64
  %v1005 = vunpack.c.h.b16 %v64
  %v1006 = vunpack.c.l.b16 %v65
  %v1007 = vunpack.c.h.b16 %v65
  %v1008 = vunpack.c.l.b16 %v66
  %v1009 = vunpack.c.h.b16 %v66
  %v1010 = vunpack.c.l.b16 %v67
  %v1011 = vunpack.c.h.b16 %v67
  %v1012 = vunpack.c.l.b16 %v68
  %v1013 = vunpack.c.h.b16 %v68
  %v1014 = vunpack.c.l.b16 %v69
  %v1015 = vunpack.c.h.b16 %v69
  %v1016 = vunpack.c.l.b16 %v70
  %v1017 = vunpack.c.h.b16 %v70
  %v1018 = vunpack.c.l.b16 %v71
  %v1019 = vunpack.c.h.b16 %v71
  %v1020 = vunpack.c.l.b16 %v72
  %v1021 = vunpack.c.h.b16 %v72
  %v1022 = vunpack.c.l.b16 %v73
  %v1023 = vunpack.c.h.b16 %v73
  %v1024 = vunpack.c.l.b16 %v74
  %v1025 = vunpack.c.h.b16 %v74
  %v1026 = vunpack.c.l.b16 %v75
  %v1027 = vunpack.c.h.b16 %v75
  %v1028 = vunpack.c.l.b16 %v76
  %v1029 = vunpack.c.h.b16 %v76
  %v1030 = vunpack.c.l.b16 %v77
  %v1031 = vunpack.c.h.b16 %v77
  %v1032 = vunpack.c.l.b16 %v78
  %v1033 = vunpack.c.h.b16 %v78
  %v1034 = vunpack.c.l.b16 %v79
  %v1035 = vunpack.c.h.b16 %v79
  %v1036 = vunpack.c.l.b16 %v80
  %v1037 = vunpack.c.h.b16 %v80
  %v1038 = vunpack.c.l.b16 %v81
  %v1039 = vunpack.c.h.b16 %v81
  %v1040 = vunpack.c.l.b16 %v82
  %v1041 = vunpack.c.h.b16 %v82
  %v1042 = vunpack.c.l.b16 %v83
  %v1043 = vunpack.c.h.b16 %v83
  %v1044 = vunpack.c.l.b16 %v84
  %v1045 = vunpack.c.h.b16 %v84
  %v1046 = vunpack.c.l.b16 %v85
  %v1047 = vunpack.c.h.b16 %v85
  %v1048 = vunpack.c.l.b16 %v86
  %v1049 = vunpack.c.h.b16 %v86
  %v1050 = vunpack.c.l.b16 %v87
  %v1051 = vunpack.c.h.b16 %v87
  %v1052 = vunpack.c.l.b16 %v88
  %v1053 = vunpack.c.h.b16 %v88
  %v1054 = vunpack.c.l.b16 %v89
  %v1055 = vunpack.c.h.b16 %v89
  %v1056 = vunpack.c.l.b16 %v90
  %v1057 = vunpack.c.h.b16 %v90
  %v1058 = vunpack.c.l.b16 %v91
  %v1059 = vunpack.c.h.b16 %v91
  %v1060 = vunpack.c.l.b16 %v92
  %v1061 = vunpack.c.h.b16 %v92
  %v1062 = vunpack.c.l.b16 %v93
  %v1063 = vunpack.c.h.b16 %v93
  %v1064 = vunpack.c.l.b16 %v94
  %v1065 = vunpack.c.h.b16 %v94
  %v1066 = vunpack.c.l.b16 %v95
  %v1067 = vunpack.c.h.b16 %v95
  %v1068 = vunpack.c.l.b16 %v96
  %v1069 = vunpack.c.h.b16 %v96
  %v1070 = vunpack.c.l.b16 %v97
  %v1071 = vunpack.c.h.b16 %v97
  %v1072 = vunpack.c.l.b16 %v98
  %v1073 = vunpack.c.h.b16 %v98
  %v1074 = vunpack.c.l.b16 %v99
  %v1075 = vunpack.c.h.b16 %v99
  %v1076 = vunpack.c.l.b16 %v100
  %v1077 = vunpack.c.h.b16 %v100
  %v1078 = vunpack.c.l.b16 %v101
  %v1079 = vunpack.c.h.b16 %v101
  %v1080 = vunpack.c.l.b16 %v102
  %v1081 = vunpack.c.h.b16 %v102
  %v1082 = vunpack.c.l.b16 %v103
  %v1083 = vunpack.c.h.b16 %v103
  %v1084 = vunpack.c.l.b16 %v104
  %v1085 = vunpack.c.h.b16 %v104
  %v1086 = vunpack.c.l.b16 %v105
  %v1087 = vunpack.c.h.b16 %v105
  %v1088 = vunpack.c.l.b16 %v106
  %v1089 = vunpack.c.h.b16 %v106
  %v1090 = vunpack.c.l.b16 %v107
  %v1091 = vunpack.c.h.b16 %v107
  %v1092 = vunpack.c.l.b16 %v108
  %v1093 = vunpack.c.h.b16 %v108
  %v1094 = vunpack.c.l.b16 %v109
  %v1095 = vunpack.c.h.b16 %v109
  %v1096 = vunpack.c.l.b16 %v110
  %v1097 = vunpack.c.h.b16 %v110
  %v1098 = vunpack.c.l.b16 %v111
  %v1099 = vunpack.c.h.b16 %v111
  %v1100 = vunpack.c.l.b16 %v112
  %v1101 = vunpack.c.h.b16 %v112
  %v1102 = vunpack.c.l.b16 %v113
  %v1103 = vunpack.c.h.b16 %v113
  %v1104 = vunpack.c.l.b16 %v114
  %v1105 = vunpack.c.h.b16 %v114
  %v1106 = vunpack.c.l.b16 %v115
  %v1107 = vunpack.c.h.b16 %v115
  %v1108 = vunpack.c.l.b16 %v116
  %v1109 = vunpack.c.h.b16 %v116
  %v1110 = vunpack.c.l.b16 %v117
  %v1111 = vunpack.c.h.b16 %v117
  %v1112 = vunpack.c.l.b16 %v118
  %v1113 = vunpack.c.h.b16 %v118
  %v1114 = vunpack.c.l.b16 %v119
  %v1115 = vunpack.c.h.b16 %v119
  %v1116 = vunpack.c.l.b16 %v120
  %v1117 = vunpack.c.h.b16 %v120
  %v1118 = vunpack.c.l.b16 %v121
  %v1119 = vunpack.c.h.b16 %v121
  %v1120 = vunpack.c.l.b16 %v122
  %v1121 = vunpack.c.h.b16 %v122
  %v1122 = vunpack.c.l.b16 %v123
  %v1123 = vunpack.c.h.b16 %v123
  %v1124 = vunpack.c.l.b16 %v124
  %v1125 = vunpack.c.h.b16 %v124
  %v1126 = vunpack.c.l.b16 %v125
  %v1127 = vunpack.c.h.b16 %v125
  %v1128 = vunpack.c.l.b16 %v126
  %v1129 = vunpack.c.h.b16 %v126
  %v1130 = vunpack.c.l.b16 %v127
  %v1131 = vunpack.c.h.b16 %v127
  %v1132 = vunpack.c.l.b16 %v128
  %v1133 = vunpack.c.h.b16 %v128
  %v1134 = vunpack.c.l.b16 %v129
  %v1135 = vunpack.c.h.b16 %v129
  %v1136 = vunpack.c.l.b16 %v130
  %v1137 = vunpack.c.h.b16 %v130
  %v1138 = vunpack.c.l.b16 %v131
  %v1139 = vunpack.c.h.b16 %v131
  %v1140 = vunpack.c.l.b16 %v132
  %v1141 = vunpack.c.h.b16 %v132
  %v1142 = vunpack.c.l.b16 %v133
  %v1143 = vunpack.c.h.b16 %v133
  %v1144 = vunpack.c.l.b16 %v134
  %v1145 = vunpack.c.h.b16 %v134
  %v1146 = vunpack.c.l.b16 %v135
  %v1147 = vunpack.c.h.b16 %v135
  %v1148 = vunpack.c.l.b16 %v136
  %v1149 = vunpack.c.h.b16 %v136
  %v1150 = vunpack.c.l.b16 %v137
  %v1151 = vunpack.c.h.b16 %v137
  %v1152 = vunpack.c.l.b16 %v138
  %v1153 = vunpack.c.h.b16 %v138
  %v1154 = vunpack.c.l.b16 %v139
  %v1155 = vunpack.c.h.b16 %v139
  %v1156 = vunpack.c.l.b16 %v140
  %v1157 = vunpack.c.h.b16 %v140
  %v1158 = vunpack.c.l.b16 %v141
  %v1159 = vunpack.c.h.b16 %v141
  %v1160 = vunpack.c.l.b16 %v142
  %v1161 = vunpack.c.h.b16 %v142
  %v1162 = vunpack.c.l.b16 %v143
  %v1163 = vunpack.c.h.b16 %v143
  %v1164 = vunpack.c.l.b16 %v144
  %v1165 = vunpack.c.h.b16 %v144
  %v1166 = vunpack.c.l.b16 %v145
  %v1167 = vunpack.c.h.b16 %v145
  %v1168 = vunpack.c.l.b16 %v146
  %v1169 = vunpack.c.h.b16 %v146
  %v1170 = vunpack.c.l.b16 %v147
  %v1171 = vunpack.c.h.b16 %v147
  %v1172 = vunpack.c.l.b16 %v148
  %v1173 = vunpack.c.h.b16 %v148
  %v1174 = vunpack.c.l.b16 %v149
  %v1175 = vunpack.c.h.b16 %v149
  %v1176 = vunpack.c.l.b16 %v150
  %v1177 = vunpack.c.h.b16 %v150
  %v1178 = vunpack.c.l.b16 %v151
  %v1179 = vunpack.c.h.b16 %v151
  %v1180 = vunpack.c.l.b16 %v152
  %v1181 = vunpack.c.h.b16 %v152
  %v1182 = vunpack.c.l.b16 %v153
  %v1183 = vunpack.c.h.b16 %v153
  %v1184 = vunpack.c.l.b16 %v154
  %v1185 = vunpack.c.h.b16 %v154
  %v1186 = vunpack.c.l.b16 %v155
  %v1187 = vunpack.c.h.b16 %v155
  %v1188 = vunpack.c.l.b16 %v156
  %v1189 = vunpack.c.h.b16 %v156
  %v1190 = vunpack.c.l.b16 %v157
  %v1191 = vunpack.c.h.b16 %v157
  %v1192 = vunpack.c.l.b16 %v158
  %v1193 = vunpack.c.h.b16 %v158
  %v1194 = vunpack.c.l.b16 %v159
  %v1195 = vunpack.c.h.b16 %v159
  %v1196 = vunpack.c.l.b16 %v160
  %v1197 = vunpack.c.h.b16 %v160
  %v1198 = vunpack.c.l.b16 %v161
  %v1199 = vunpack.c.h.b16 %v161
  %v1200 = vunpack.c.l.b16 %v162
  %v1201 = vunpack.c.h.b16 %v162
  %v1202 = vunpack.c.l.b16 %v163
  %v1203 = vunpack.c.h.b16 %v163
  %v1204 = vunpack.c.l.b16 %v164
  %v1205 = vunpack.c.h.b16 %v164
  %v1206 = vunpack.c.l.b16 %v165
  %v1207 = vunpack.c.h.b16 %v165
  %v1208 = vunpack.c.l.b16 %v166
  %v1209 = vunpack.c.h.b16 %v166
  %v1210 = vunpack.c.l.b16 %v167
  %v1211 = vunpack.c.h.b16 %v167
  %v1212 = vunpack.c.l.b16 %v168
  %v1213 = vunpack.c.h.b16 %v168
  %v1214 = vunpack.c.l.b16 %v169
  %v1215 = vunpack.c.h.b16 %v169
  %v1216 = vunpack.c.l.b16 %v170
  %v1217 = vunpack.c.h.b16 %v170
  %v1218 = vunpack.c.l.b16 %v171
  %v1219 = vunpack.c.h.b16 %v171
  %v1220 = vunpack.c.l.b16 %v172
  %v1221 = vunpack.c.h.b16 %v172
  %v1222 = vunpack.c.l.b16 %v173
  %v1223 = vunpack.c.h.b16 %v173
  %v1224 = vunpack.c.l.b16 %v174
  %v1225 = vunpack.c.h.b16 %v174
  %v1226 = vunpack.c.l.b16 %v175
  %v1227 = vunpack.c.h.b16 %v175
  %v1228 = vunpack.c.l.b16 %v176
  %v1229 = vunpack.c.h.b16 %v176
  %v1230 = vunpack.c.l.b16 %v177
  %v1231 = vunpack.c.h.b16 %v177
  %v1232 = vunpack.c.l.b16 %v178
  %v1233 = vunpack.c.h.b16 %v178
  %v1234 = vunpack.c.l.b16 %v179
  %v1235 = vunpack.c.h.b16 %v179
  %v1236 = vunpack.c.l.b16 %v180
  %v1237 = vunpack.c.h.b16 %v180
  %v1238 = vunpack.c.l.b16 %v181
  %v1239 = vunpack.c.h.b16 %v181
  %v1240 = vunpack.c.l.b16 %v182
  %v1241 = vunpack.c.h.b16 %v182
  %v1242 = vunpack.c.l.b16 %v183
  %v1243 = vunpack.c.h.b16 %v183
  %v1244 = vunpack.c.l.b16 %v184
  %v1245 = vunpack.c.h.b16 %v184
  %v1246 = vunpack.c.l.b16 %v185
  %v1247 = vunpack.c.h.b16 %v185
  %v1248 = vunpack.c.l.b16 %v186
  %v1249 = vunpack.c.h.b16 %v186
  %v1250 = vunpack.c.l.b16 %v187
  %v1251 = vunpack.c.h.b16 %v187
  %v1252 = vunpack.c.l.b16 %v188
  %v1253 = vunpack.c.h.b16 %v188
  %v1254 = vunpack.c.l.b16 %v189
  %v1255 = vunpack.c.h.b16 %v189
  %v1256 = vunpack.c.l.b16 %v190
  %v1257 = vunpack.c.h.b16 %v190
  %v1258 = vunpack.c.l.b16 %v191
  %v1259 = vunpack.c.h.b16 %v191
  %v1260 = vunpack.c.l.b16 %v192
  %v1261 = vunpack.c.h.b16 %v192
  %v1262 = vunpack.c.l.b16 %v193
  %v1263 = vunpack.c.h.b16 %v193
  %v1264 = vunpack.c.l.b16 %v194
  %v1265 = vunpack.c.h.b16 %v194
  %v1266 = vunpack.c.l.b16 %v195
  %v1267 = vunpack.c.h.b16 %v195
  %v1268 = vunpack.c.l.b16 %v196
  %v1269 = vunpack.c.h.b16 %v196
  %v1270 = vunpack.c.l.b16 %v197
  %v1271 = vunpack.c.h.b16 %v197
  %v1272 = vunpack.c.l.b16 %v198
  %v1273 = vunpack.c.h.b16 %v198
  %v1274 = vunpack.c.l.b16 %v199
  %v1275 = vunpack.c.h.b16 %v199
  %v1276 = vunpack.c.l.b16 %v200
  %v1277 = vunpack.c.h.b16 %v200
  %v1278 = vunpack.c.l.b16 %v201
  %v1279 = vunpack.c.h.b16 %v201
  %v1280 = vunpack.c.l.b16 %v202
  %v1281 = vunpack.c.h.b16 %v202
  %v1282 = vunpack.c.l.b16 %v203
  %v1283 = vunpack.c.h.b16 %v203
  %v1284 = vunpack.c.l.b16 %v204
  %v1285 = vunpack.c.h.b16 %v204
  %v1286 = vunpack.c.l.b16 %v205
  %v1287 = vunpack.c.h.b16 %v205
  %v1288 = vunpack.c.l.b16 %v206
  %v1289 = vunpack.c.h.b16 %v206
  %v1290 = vunpack.c.l.b16 %v207
  %v1291 = vunpack.c.h.b16 %v207
  %v1292 = vunpack.c.l.b16 %v208
  %v1293 = vunpack.c.h.b16 %v208
  %v1294 = vunpack.c.l.b16 %v209
  %v1295 = vunpack.c.h.b16 %v209
  %v1296 = vunpack.c.l.b16 %v210
  %v1297 = vunpack.c.h.b16 %v210
  %v1298 = vunpack.c.l.b16 %v211
  %v1299 = vunpack.c.h.b16 %v211
  %v1300 = vunpack.c.l.b16 %v212
  %v1301 = vunpack.c.h.b16 %v212
  %v1302 = vunpack.c.l.b16 %v213
  %v1303 = vunpack.c.h.b16 %v213
  %v1304 = vunpack.c.l.b16 %v214
  %v1305 = vunpack.c.h.b16 %v214
  %v1306 = vunpack.c.l.b16 %v215
  %v1307 = vunpack.c.h.b16 %v215
  %v1308 = vunpack.c.l.b16 %v216
  %v1309 = vunpack.c.h.b16 %v216
  %v1310 = vunpack.c.l.b16 %v217
  %v1311 = vunpack.c.h.b16 %v217
  %v1312 = vunpack.c.l.b16 %v218
  %v1313 = vunpack.c.h.b16 %v218
  %v1314 = vunpack.c.l.b16 %v219
  %v1315 = vunpack.c.h.b16 %v219
  %v1316 = vunpack.c.l.b16 %v220
  %v1317 = vunpack.c.h.b16 %v220
  %v1318 = vunpack.c.l.b16 %v221
  %v1319 = vunpack.c.h.b16 %v221
  %v1320 = vunpack.c.l.b16 %v222
  %v1321 = vunpack.c.h.b16 %v222
  %v1322 = vunpack.c.l.b16 %v223
  %v1323 = vunpack.c.h.b16 %v223
  %v1324 = vunpack.c.l.b16 %v224
  %v1325 = vunpack.c.h.b16 %v224
  %v1326 = vunpack.c.l.b16 %v225
  %v1327 = vunpack.c.h.b16 %v225
  %v1328 = vunpack.c.l.b16 %v226
  %v1329 = vunpack.c.h.b16 %v226
  %v1330 = vunpack.c.l.b16 %v227
  %v1331 = vunpack.c.h.b16 %v227
  %v1332 = vunpack.c.l.b16 %v228
  %v1333 = vunpack.c.h.b16 %v228
  %v1334 = vunpack.c.l.b16 %v229
  %v1335 = vunpack.c.h.b16 %v229
  %v1336 = vunpack.c.l.b16 %v230
  %v1337 = vunpack.c.h.b16 %v230
  %v1338 = vunpack.c.l.b16 %v231
  %v1339 = vunpack.c.h.b16 %v231
  %v1340 = vunpack.c.l.b16 %v232
  %v1341 = vunpack.c.h.b16 %v232
  %v1342 = vunpack.c.l.b16 %v233
  %v1343 = vunpack.c.h.b16 %v233
  %v1344 = vunpack.c.l.b16 %v234
  %v1345 = vunpack.c.h.b16 %v234
  %v1346 = vunpack.c.l.b16 %v235
  %v1347 = vunpack.c.h.b16 %v235
  %v1348 = vunpack.c.l.b16 %v236
  %v1349 = vunpack.c.h.b16 %v236
  %v1350 = vunpack.c.l.b16 %v237
  %v1351 = vunpack.c.h.b16 %v237
  %v1352 = vunpack.c.l.b16 %v238
  %v1353 = vunpack.c.h.b16 %v238
  %v1354 = vunpack.c.l.b16 %v239
  %v1355 = vunpack.c.h.b16 %v239
  %v1356 = vunpack.c.l.b16 %v240
  %v1357 = vunpack.c.h.b16 %v240
  %v1358 = vunpack.c.l.b16 %v241
  %v1359 = vunpack.c.h.b16 %v241
  %v1360 = vunpack.c.l.b16 %v242
  %v1361 = vunpack.c.h.b16 %v242
  %v1362 = vunpack.c.l.b16 %v243
  %v1363 = vunpack.c.h.b16 %v243
  %v1364 = vunpack.c.l.b16 %v244
  %v1365 = vunpack.c.h.b16 %v244
  %v1366 = vunpack.c.l.b16 %v245
  %v1367 = vunpack.c.h.b16 %v245
  %v1368 = vunpack.c.l.b16 %v246
  %v1369 = vunpack.c.h.b16 %v246
  %v1370 = vunpack.c.l.b16 %v247
  %v1371 = vunpack.c.h.b16 %v247
  %v1372 = vunpack.c.l.b16 %v248
  %v1373 = vunpack.c.h.b16 %v248
  %v1374 = vunpack.c.l.b16 %v249
  %v1375 = vunpack.c.h.b16 %v249
  %v1376 = vunpack.c.l.b16 %v250
  %v1377 = vunpack.c.h.b16 %v250
  %v1378 = vunpack.c.l.b16 %v251
  %v1379 = vunpack.c.h.b16 %v251
  %v1380 = vunpack.c.l.b16 %v252
  %v1381 = vunpack.c.h.b16 %v252
  %v1382 = vunpack.c.l.b16 %v253
  %v1383 = vunpack.c.h.b16 %v253
  %v1384 = vunpack.c.l.b16 %v254
  %v1385 = vunpack.c.h.b16 %v254
  %v1386 = vunpack.c.l.b16 %v255
  %v1387 = vunpack.c.h.b16 %v255
  %v1388 = vunpack.c.l.b16 %v256
  %v1389 = vunpack.c.h.b16 %v256
  %v1390 = vunpack.c.l.b16 %v257
  %v1391 = vunpack.c.h.b16 %v257
  %v1392 = vunpack.c.l.b16 %v258
  %v1393 = vunpack.c.h.b16 %v258
  %v1394 = vunpack.c.l.b16 %v259
  %v1395 = vunpack.c.h.b16 %v259
  %v1396 = vunpack.c.l.b16 %v260
  %v1397 = vunpack.c.h.b16 %v260
  %v1398 = vunpack.c.l.b16 %v261
  %v1399 = vunpack.c.h.b16 %v261
  %v1400 = vunpack.c.l.b16 %v262
  %v1401 = vunpack.c.h.b16 %v262
  %v1402 = vunpack.c.l.b16 %v263
  %v1403 = vunpack.c.h.b16 %v263
  %v1404 = vunpack.c.l.b16 %v264
  %v1405 = vunpack.c.h.b16 %v264
  %v1406 = vunpack.c.l.b16 %v265
  %v1407 = vunpack.c.h.b16 %v265
  %v1408 = vunpack.c.l.b16 %v266
  %v1409 = vunpack.c.h.b16 %v266
  %v1410 = vunpack.c.l.b16 %v267
  %v1411 = vunpack.c.h.b16 %v267
  %v1412 = vunpack.c.l.b16 %v268
  %v1413 = vunpack.c.h.b16 %v268
  %v1414 = vunpack.c.l.b16 %v269
  %v1415 = vunpack.c.h.b16 %v269
  %v1416 = vunpack.c.l.b16 %v270
  %v1417 = vunpack.c.h.b16 %v270
  %v1418 = vunpack.c.l.b16 %v271
  %v1419 = vunpack.c.h.b16 %v271
  %v1420 = vunpack.c.l.b16 %v272
  %v1421 = vunpack.c.h.b16 %v272
  %v1422 = vunpack.c.l.b16 %v273
  %v1423 = vunpack.c.h.b16 %v273
  %v1424 = vunpack.c.l.b16 %v274
  %v1425 = vunpack.c.h.b16 %v274
  %v1426 = vunpack.c.l.b16 %v275
  %v1427 = vunpack.c.h.b16 %v275
  %v1428 = vunpack.c.l.b16 %v276
  %v1429 = vunpack.c.h.b16 %v276
  %v1430 = vunpack.c.l.b16 %v277
  %v1431 = vunpack.c.h.b16 %v277
  %v1432 = vunpack.c.l.b16 %v278
  %v1433 = vunpack.c.h.b16 %v278
  %v1434 = vunpack.c.l.b16 %v279
  %v1435 = vunpack.c.h.b16 %v279
  %v1436 = vunpack.c.l.b16 %v280
  %v1437 = vunpack.c.h.b16 %v280
  %v1438 = vunpack.c.l.b16 %v281
  %v1439 = vunpack.c.h.b16 %v281
  %v1440 = vunpack.c.l.b16 %v282
  %v1441 = vunpack.c.h.b16 %v282
  %v1442 = vunpack.c.l.b16 %v283
  %v1443 = vunpack.c.h.b16 %v283
  %v1444 = vunpack.c.l.b16 %v284
  %v1445 = vunpack.c.h.b16 %v284
  %v1446 = vunpack.c.l.b16 %v285
  %v1447 = vunpack.c.h.b16 %v285
  %v1448 = vunpack.c.l.b16 %v286
  %v1449 = vunpack.c.h.b16 %v286
  %v1450 = vunpack.c.l.b16 %v287
  %v1451 = vunpack.c.h.b16 %v287
  %v1452 = vunpack.c.l.b16 %v288
  %v1453 = vunpack.c.h.b16 %v288
  %v1454 = vunpack.c.l.b16 %v289
  %v1455 = vunpack.c.h.b16 %v289
  %v1456 = vunpack.c.l.b16 %v290
  %v1457 = vunpack.c.h.b16 %v290
  %v1458 = vunpack.c.l.b16 %v291
  %v1459 = vunpack.c.h.b16 %v291
  %v1460 = vunpack.c.l.b16 %v292
  %v1461 = vunpack.c.h.b16 %v292
  %v1462 = vunpack.c.l.b16 %v293
  %v1463 = vunpack.c.h.b16 %v293
  %v1464 = vunpack.c.l.b16 %v294
  %v1465 = vunpack.c.h.b16 %v294
  %v1466 = vunpack.c.l.b16 %v295
  %v1467 = vunpack.c.h.b16 %v295
  %v1468 = vunpack.c.l.b16 %v296
  %v1469 = vunpack.c.h.b16 %v296
  %v1470 = vunpack.c.l.b16 %v297
  %v1471 = vunpack.c.h.b16 %v297
  %v1472 = vunpack.c.l.b16 %v298
  %v1473 = vunpack.c.h.b16 %v298
  %v1474 = vunpack.c.l.b16 %v299
  %v1475 = vunpack.c.h.b16 %v299
  %v1476 = vunpack.c.l.b16 %v300
  %v1477 = vunpack.c.h.b16 %v300
  %v1478 = vunpack.c.l.b16 %v301
  %v1479 = vunpack.c.h.b16 %v301
  %v1480 = vunpack.c.l.b16 %v302
  %v1481 = vunpack.c.h.b16 %v302
  %v1482 = vunpack.c.l.b16 %v303
  %v1483 = vunpack.c.h.b16 %v303
  %v1484 = vunpack.c.l.b16 %v304
  %v1485 = vunpack.c.h.b16 %v304
  %v1486 = vunpack.c.l.b16 %v305
  %v1487 = vunpack.c.h.b16 %v305
  %v1488 = vunpack.c.l.b16 %v306
  %v1489 = vunpack.c.h.b16 %v306
  %v1490 = vunpack.c.l.b16 %v307
  %v1491 = vunpack.c.h.b16 %v307
  %v1492 = vunpack.c.l.b16 %v308
  %v1493 = vunpack.c.h.b16 %v308
  %v1494 = vunpack.c.l.b16 %v309
  %v1495 = vunpack.c.h.b16 %v309
  %v1496 = vunpack.c.l.b16 %v310
  %v1497 = vunpack.c.h.b16 %v310
  %v1498 = vunpack.c.l.b16 %v311
  %v1499 = vunpack.c.h.b16 %v311
  %v1500 = vunpack.c.l.b16 %v312
  %v1501 = vunpack.c.h.b16 %v312
  %v1502 = vunpack.c.l.b16 %v313
  %v1503 = vunpack.c.h.b16 %v313
  %v1504 = vunpack.c.l.b16 %v314
  %v1505 = vunpack.c.h.b16 %v314
  %v1506 = vunpack.c.l.b16 %v315
  %v1507 = vunpack.c.h.b16 %v315
  %v1508 = vunpack.c.l.b16 %v316
  %v1509 = vunpack.c.h.b16 %v316
  %v1510 = vunpack.c.l.b16 %v317
  %v1511 = vunpack.c.h.b16 %v317
  %v1512 = vunpack.c.l.b16 %v318
  %v1513 = vunpack.c.h.b16 %v318
  %v1514 = vunpack.c.l.b16 %v319
  %v1515 = vunpack.c.h.b16 %v319
  %v1516 = vunpack.c.l.b16 %v320
  %v1517 = vunpack.c.h.b16 %v320
  %v1518 = vunpack.c.l.b16 %v321
  %v1519 = vunpack.c.h.b16 %v321
  %v1520 = vunpack.c.l.b16 %v322
  %v1521 = vunpack.c.h.b16 %v322
  %v1522 = vunpack.c.l.b16 %v323
  %v1523 = vunpack.c.h.b16 %v323
  %v1524 = vunpack.c.l.b16 %v324
  %v1525 = vunpack.c.h.b16 %v324
  %v1526 = vunpack.c.l.b16 %v325
  %v1527 = vunpack.c.h.b16 %v325
  %v1528 = vunpack.c.l.b16 %v326
  %v1529 = vunpack.c.h.b16 %v326
  %v1530 = vunpack.c.l.b16 %v327
  %v1531 = vunpack.c.h.b16 %v327
  %v1532 = vunpack.c.l.b16 %v328
  %v1533 = vunpack.c.h.b16 %v328
  %v1534 = vunpack.c.l.b16 %v329
  %v1535 = vunpack.c.h.b16 %v329
  %v1536 = vunpack.c.l.b16 %v330
  %v1537 = vunpack.c.h.b16 %v330
  %v1538 = vunpack.c.l.b16 %v331
  %v1539 = vunpack.c.h.b16 %v331
  %v1540 = vunpack.c.l.b16 %v332
  %v1541 = vunpack.c.h.b16 %v332
  %v1542 = vunpack.c.l.b16 %v333
  %v1543 = vunpack.c.h.b16 %v333
  %v1544 = vunpack.c.l.b16 %v334
  %v1545 = vunpack.c.h.b16 %v334
  %v1546 = vunpack.c.l.b16 %v335
  %v1547 = vunpack.c.h.b16 %v335
  %v1548 = vunpack.c.l.b16 %v336
  %v1549 = vunpack.c.h.b16 %v336
  %v1550 = vunpack.c.l.b16 %v337
  %v1551 = vunpack.c.h.b16 %v337
  %v1552 = vunpack.c.l.b16 %v338
  %v1553 = vunpack.c.h.b16 %v338
  %v1554 = vunpack.c.l.b16 %v339
  %v1555 = vunpack.c.h.b16 %v339
  %v1556 = vunpack.c.l.b16 %v340
  %v1557 = vunpack.c.h.b16 %v340
  %v1558 = vunpack.c.l.b16 %v341
  %v1559 = vunpack.c.h.b16 %v341
  %v1560 = vunpack.c.l.b16 %v342
  %v1561 = vunpack.c.h.b16 %v342
  %v1562 = vunpack.c.l.b16 %v343
  %v1563 = vunpack.c.h.b16 %v343
  %v1564 = vunpack.c.l.b16 %v344
  %v1565 = vunpack.c.h.b16 %v344
  %v1566 = vunpack.c.l.b16 %v345
  %v1567 = vunpack.c.h.b16 %v345
  %v1568 = vunpack.c.l.b16 %v346
  %v1569 = vunpack.c.h.b16 %v346
  %v1570 = vunpack.c.l.b16 %v347
  %v1571 = vunpack.c.h.b16 %v347
  %v1572 = vunpack.c.l.b16 %v348
  %v1573 = vunpack.c.h.b16 %v348
  %v1574 = vunpack.c.l.b16 %v349
  %v1575 = vunpack.c.h.b16 %v349
  %v1576 = vunpack.c.l.b16 %v350
  %v1577 = vunpack.c.h.b16 %v350
  %v1578 = vunpack.c.l.b16 %v351
  %v1579 = vunpack.c.h.b16 %v351
  %v1580 = vunpack.c.l.b16 %v352
  %v1581 = vunpack.c.h.b16 %v352
  %v1582 = vunpack.c.l.b16 %v353
  %v1583 = vunpack.c.h.b16 %v353
  %v1584 = vunpack.c.l.b16 %v354
  %v1585 = vunpack.c.h.b16 %v354
  %v1586 = vunpack.c.l.b16 %v355
  %v1587 = vunpack.c.h.b16 %v355
  %v1588 = vunpack.c.l.b16 %v356
  %v1589 = vunpack.c.h.b16 %v356
  %v1590 = vunpack.c.l.b16 %v357
  %v1591 = vunpack.c.h.b16 %v357
  %v1592 = vunpack.c.l.b16 %v358
  %v1593 = vunpack.c.h.b16 %v358
  %v1594 = vunpack.c.l.b16 %v359
  %v1595 = vunpack.c.h.b16 %v359
  %v1596 = vunpack.c.l.b16 %v360
  %v1597 = vunpack.c.h.b16 %v360
  %v1598 = vunpack.c.l.b16 %v361
  %v1599 = vunpack.c.h.b16 %v361
  %v1600 = vunpack.c.l.b16 %v362
  %v1601 = vunpack.c.h.b16 %v362
  %v1602 = vunpack.c.l.b16 %v363
  %v1603 = vunpack.c.h.b16 %v363
  %v1604 = vunpack.c.l.b16 %v364
  %v1605 = vunpack.c.h.b16 %v364
  %v1606 = vunpack.c.l.b16 %v365
  %v1607 = vunpack.c.h.b16 %v365
  %v1608 = vunpack.c.l.b16 %v366
  %v1609 = vunpack.c.h.b16 %v366
  %v1610 = vunpack.c.l.b16 %v367
  %v1611 = vunpack.c.h.b16 %v367
  %v1612 = vunpack.c.l.b16 %v368
  %v1613 = vunpack.c.h.b16 %v368
  %v1614 = vunpack.c.l.b16 %v369
  %v1615 = vunpack.c.h.b16 %v369
  %v1616 = vunpack.c.l.b16 %v370
  %v1617 = vunpack.c.h.b16 %v370
  %v1618 = vunpack.c.l.b16 %v371
  %v1619 = vunpack.c.h.b16 %v371
  %v1620 = vunpack.c.l.b16 %v372
  %v1621 = vunpack.c.h.b16 %v372
  %v1622 = vunpack.c.l.b16 %v373
  %v1623 = vunpack.c.h.b16 %v373
  %v1624 = vunpack.c.l.b16 %v374
  %v1625 = vunpack.c.h.b16 %v374
  %v1626 = vunpack.c.l.b16 %v375
  %v1627 = vunpack.c.h.b16 %v375
  %v1628 = vunpack.c.l.b16 %v376
  %v1629 = vunpack.c.h.b16 %v376
  %v1630 = vunpack.c.l.b16 %v377
  %v1631 = vunpack.c.h.b16 %v377
  %v1632 = vunpack.c.l.b16 %v378
  %v1633 = vunpack.c.h.b16 %v378
  %v1634 = vunpack.c.l.b16 %v379
  %v1635 = vunpack.c.h.b16 %v379
  %v1636 = vunpack.c.l.b16 %v380
  %v1637 = vunpack.c.h.b16 %v380
  %v1638 = vunpack.c.l.b16 %v381
  %v1639 = vunpack.c.h.b16 %v381
  %v1640 = vunpack.c.l.b16 %v382
  %v1641 = vunpack.c.h.b16 %v382
  %v1642 = vunpack.c.l.b16 %v383
  %v1643 = vunpack.c.h.b16 %v383
  %v1644 = vunpack.c.l.b16 %v384
  %v1645 = vunpack.c.h.b16 %v384
  %v1646 = vunpack.c.l.b16 %v385
  %v1647 = vunpack.c.h.b16 %v385
  %v1648 = vunpack.c.l.b16 %v386
  %v1649 = vunpack.c.h.b16 %v386
  %v1650 = vunpack.c.l.b16 %v387
  %v1651 = vunpack.c.h.b16 %v387
  %v1652 = vunpack.c.l.b16 %v388
  %v1653 = vunpack.c.h.b16 %v388
  %v1654 = vunpack.c.l.b16 %v389
  %v1655 = vunpack.c.h.b16 %v389
  %v1656 = vunpack.c.l.b16 %v390
  %v1657 = vunpack.c.h.b16 %v390
  %v1658 = vunpack.c.l.b16 %v391
  %v1659 = vunpack.c.h.b16 %v391
  %v1660 = vunpack.c.l.b16 %v392
  %v1661 = vunpack.c.h.b16 %v392
  %v1662 = vunpack.c.l.b16 %v393
  %v1663 = vunpack.c.h.b16 %v393
  %v1664 = vunpack.c.l.b16 %v394
  %v1665 = vunpack.c.h.b16 %v394
  %v1666 = vunpack.c.l.b16 %v395
  %v1667 = vunpack.c.h.b16 %v395
  %v1668 = vunpack.c.l.b16 %v396
  %v1669 = vunpack.c.h.b16 %v396
  %v1670 = vunpack.c.l.b16 %v397
  %v1671 = vunpack.c.h.b16 %v397
  %v1672 = vunpack.c.l.b16 %v398
  %v1673 = vunpack.c.h.b16 %v398
  %v1674 = vunpack.c.l.b16 %v399
  %v1675 = vunpack.c.h.b16 %v399
  %v1676 = vunpack.c.l.b16 %v400
  %v1677 = vunpack.c.h.b16 %v400
  %v1678 = vunpack.c.l.b16 %v401
  %v1679 = vunpack.c.h.b16 %v401
  %v1680 = vunpack.c.l.b16 %v402
  %v1681 = vunpack.c.h.b16 %v402
  %v1682 = vunpack.c.l.b16 %v403
  %v1683 = vunpack.c.h.b16 %v403
  %v1684 = vunpack.c.l.b16 %v404
  %v1685 = vunpack.c.h.b16 %v404
  %v1686 = vunpack.c.l.b16 %v405
  %v1687 = vunpack.c.h.b16 %v405
  %v1688 = vunpack.c.l.b16 %v406
  %v1689 = vunpack.c.h.b16 %v406
  %v1690 = vunpack.c.l.b16 %v407
  %v1691 = vunpack.c.h.b16 %v407
  %v1692 = vunpack.c.l.b16 %v408
  %v1693 = vunpack.c.h.b16 %v408
  %v1694 = vunpack.c.l.b16 %v409
  %v1695 = vunpack.c.h.b16 %v409
  %v1696 = vunpack.c.l.b16 %v410
  %v1697 = vunpack.c.h.b16 %v410
  %v1698 = vunpack.c.l.b16 %v411
  %v1699 = vunpack.c.h.b16 %v411
  %v1700 = vunpack.c.l.b16 %v412
  %v1701 = vunpack.c.h.b16 %v412
  %v1702 = vunpack.c.l.b16 %v413
  %v1703 = vunpack.c.h.b16 %v413
  %v1704 = vunpack.c.l.b16 %v414
  %v1705 = vunpack.c.h.b16 %v414
  %v1706 = vunpack.c.l.b16 %v415
  %v1707 = vunpack.c.h.b16 %v415
  %v1708 = vunpack.c.l.b16 %v416
  %v1709 = vunpack.c.h.b16 %v416
  %v1710 = vunpack.c.l.b16 %v417
  %v1711 = vunpack.c.h.b16 %v417
  %v1712 = vunpack.c.l.b16 %v418
  %v1713 = vunpack.c.h.b16 %v418
  %v1714 = vunpack.c.l.b16 %v419
  %v1715 = vunpack.c.h.b16 %v419
  %v1716 = vunpack.c.l.b16 %v420
  %v1717 = vunpack.c.h.b16 %v420
  %v1718 = vunpack.c.l.b16 %v421
  %v1719 = vunpack.c.h.b16 %v421
  %v1720 = vunpack.c.l.b16 %v422
  %v1721 = vunpack.c.h.b16 %v422
  %v1722 = vunpack.c.l.b16 %v423
  %v1723 = vunpack.c.h.b16 %v423
  %v1724 = vunpack.c.l.b16 %v424
  %v1725 = vunpack.c.h.b16 %v424
  %v1726 = vunpack.c.l.b16 %v425
  %v1727 = vunpack.c.h.b16 %v425
  %v1728 = vunpack.c.l.b16 %v426
  %v1729 = vunpack.c.h.b16 %v426
  %v1730 = vunpack.c.l.b16 %v427
  %v1731 = vunpack.c.h.b16 %v427
  %v1732 = vunpack.c.l.b16 %v428
  %v1733 = vunpack.c.h.b16 %v428
  %v1734 = vunpack.c.l.b16 %v429
  %v1735 = vunpack.c.h.b16 %v429
  %v1736 = vunpack.c.l.b16 %v430
  %v1737 = vunpack.c.h.b16 %v430
  %v1738 = vunpack.c.l.b16 %v431
  %v1739 = vunpack.c.h.b16 %v431
  %v1740 = vunpack.c.l.b16 %v432
  %v1741 = vunpack.c.h.b16 %v432
  %v1742 = vunpack.c.l.b16 %v433
  %v1743 = vunpack.c.h.b16 %v433
  %v1744 = vunpack.c.l.b16 %v434
  %v1745 = vunpack.c.h.b16 %v434
  %v1746 = vunpack.c.l.b16 %v435
  %v1747 = vunpack.c.h.b16 %v435
  %v1748 = vunpack.c.l.b16 %v436
  %v1749 = vunpack.c.h.b16 %v436
  %v1750 = vunpack.c.l.b16 %v437
  %v1751 = vunpack.c.h.b16 %v437
  %v1752 = vpack.c.b16 %v992, %v984
  %v1753 = vpack.c.b16 %v993, %v985
  %v1754 = vpack.c.b16 %v994, %v986
  %v1755 = vpack.c.b16 %v995, %v987
  %v1756 = vpack.c.b16 %v996, %v988
  %v1757 = vpack.c.b16 %v997, %v989
  %v1758 = vpack.c.b16 %v998, %v990
  %v1759 = vpack.c.b16 %v999, %v991
  %v1760 = vpack.c.b16 %v1008, %v1000
  %v1761 = vpack.c.b16 %v1009, %v1001
  %v1762 = vpack.c.b16 %v1010, %v1002
  %v1763 = vpack.c.b16 %v1011, %v1003
  %v1764 = vpack.c.b16 %v1012, %v1004
  %v1765 = vpack.c.b16 %v1013, %v1005
  %v1766 = vpack.c.b16 %v1014, %v1006
  %v1767 = vpack.c.b16 %v1015, %v1007
  %v1768 = vpack.c.b16 %v1024, %v1016
  %v1769 = vpack.c.b16 %v1025, %v1017
  %v1770 = vpack.c.b16 %v1026, %v1018
  %v1771 = vpack.c.b16 %v1027, %v1019
  %v1772 = vpack.c.b16 %v1028, %v1020
  %v1773 = vpack.c.b16 %v1029, %v1021
  %v1774 = vpack.c.b16 %v1030, %v1022
  %v1775 = vpack.c.b16 %v1031, %v1023
  %v1776 = vpack.c.b16 %v1040, %v1032
  %v1777 = vpack.c.b16 %v1041, %v1033
  %v1778 = vpack.c.b16 %v1042, %v1034
  %v1779 = vpack.c.b16 %v1043, %v1035
  %v1780 = vpack.c.b16 %v1044, %v1036
  %v1781 = vpack.c.b16 %v1045, %v1037
  %v1782 = vpack.c.b16 %v1046, %v1038
  %v1783 = vpack.c.b16 %v1047, %v1039
  %v1784 = vpack.c.b16 %v1056, %v1048
  %v1785 = vpack.c.b16 %v1057, %v1049
  %v1786 = vpack.c.b16 %v1058, %v1050
  %v1787 = vpack.c.b16 %v1059, %v1051
  %v1788 = vpack.c.b16 %v1060, %v1052
  %v1789 = vpack.c.b16 %v1061, %v1053
  %v1790 = vpack.c.b16 %v1062, %v1054
  %v1791 = vpack.c.b16 %v1063, %v1055
  %v1792 = vpack.c.b16 %v1072, %v1064
  %v1793 = vpack.c.b16 %v1073, %v1065
  %v1794 = vpack.c.b16 %v1074, %v1066
  %v1795 = vpack.c.b16 %v1075, %v1067
  %v1796 = vpack.c.b16 %v1076, %v1068
  %v1797 = vpack.c.b16 %v1077, %v1069
  %v1798 = vpack.c.b16 %v1078, %v1070
  %v1799 = vpack.c.b16 %v1079, %v1071
  %v1800 = vpack.c.b16 %v1088, %v1080
  %v1801 = vpack.c.b16 %v1089, %v1081
  %v1802 = vpack.c.b16 %v1090, %v1082
  %v1803 = vpack.c.b16 %v1091, %v1083
  %v1804 = vpack.c.b16 %v1092, %v1084
  %v1805 = vpack.c.b16 %v1093, %v1085
  %v1806 = vpack.c.b16 %v1094, %v1086
  %v1807 = vpack.c.b16 %v1095, %v1087
  %v1808 = vpack.c.b16 %v1104, %v1096
  %v1809 = vpack.c.b16 %v1105, %v1097
  %v1810 = vpack.c.b16 %v1106, %v1098
  %v1811 = vpack.c.b16 %v1107, %v1099
  %v1812 = vpack.c.b16 %v1108, %v1100
  %v1813 = vpack.c.b16 %v1109, %v1101
  %v1814 = vpack.c.b16 %v1110, %v1102
  %v1815 = vpack.c.b16 %v1111, %v1103
  %v1816 = vpack.c.b16 %v1120, %v1112
  %v1817 = vpack.c.b16 %v1121, %v1113
  %v1818 = vpack.c.b16 %v1122, %v1114
  %v1819 = vpack.c.b16 %v1123, %v1115
  %v1820 = vpack.c.b16 %v1124, %v1116
  %v1821 = vpack.c.b16 %v1125, %v1117
  %v1822 = vpack.c.b16 %v1126, %v1118
  %v1823 = vpack.c.b16 %v1127, %v1119
  %v1824 = vpack.c.b16 %v1136, %v1128
  %v1825 = vpack.c.b16 %v1137, %v1129
  %v1826 = vpack.c.b16 %v1138, %v1130
  %v1827 = vpack.c.b16 %v1139, %v1131
  %v1828 = vpack.c.b16 %v1140, %v1132
  %v1829 = vpack.c.b16 %v1141, %v1133
  %v1830 = vpack.c.b16 %v1142, %v1134
  %v1831 = vpack.c.b16 %v1143, %v1135
  %v1832 = vpack.c.b16 %v1152, %v1144
  %v1833 = vpack.c.b16 %v1153, %v1145
  %v1834 = vpack.c.b16 %v1154, %v1146
  %v1835 = vpack.c.b16 %v1155, %v1147
  %v1836 = vpack.c.b16 %v1156, %v1148
  %v1837 = vpack.c.b16 %v1157, %v1149
  %v1838 = vpack.c.b16 %v1158, %v1150
  %v1839 = vpack.c.b16 %v1159, %v1151
  %v1840 = vpack.c.b16 %v1168, %v1160
  %v1841 = vpack.c.b16 %v1169, %v1161
  %v1842 = vpack.c.b16 %v1170, %v1162
  %v1843 = vpack.c.b16 %v1171, %v1163
  %v1844 = vpack.c.b16 %v1172, %v1164
  %v1845 = vpack.c.b16 %v1173, %v1165
  %v1846 = vpack.c.b16 %v1174, %v1166
  %v1847 = vpack.c.b16 %v1175, %v1167
  %v1848 = vpack.c.b16 %v1184, %v1176
  %v1849 = vpack.c.b16 %v1185, %v1177
  %v1850 = vpack.c.b16 %v1186, %v1178
  %v1851 = vpack.c.b16 %v1187, %v1179
  %v1852 = vpack.c.b16 %v1188, %v1180
  %v1853 = vpack.c.b16 %v1189, %v1181
  %v1854 = vpack.c.b16 %v1190, %v1182
  %v1855 = vpack.c.b16 %v1191, %v1183
  %v1856 = vpack.c.b16 %v1200, %v1192
  %v1857 = vpack.c.b16 %v1201, %v1193
  %v1858 = vpack.c.b16 %v1202, %v1194
  %v1859 = vpack.c.b16 %v1203, %v1195
  %v1860 = vpack.c.b16 %v1204, %v1196
  %v1861 = vpack.c.b16 %v1205, %v1197
  %v1862 = vpack.c.b16 %v1206, %v1198
  %v1863 = vpack.c.b16 %v1207, %v1199
  %v1864 = vpack.c.b16 %v1216, %v1208
  %v1865 = vpack.c.b16 %v1217, %v1209
  %v1866 = vpack.c.b16 %v1218, %v1210
  %v1867 = vpack.c.b16 %v1219, %v1211
  %v1868 = vpack.c.b16 %v1220, %v1212
  %v1869 = vpack.c.b16 %v1221, %v1213
  %v1870 = vpack.c.b16 %v1222, %v1214
  %v1871 = vpack.c.b16 %v1223, %v1215
  %v1872 = vpack.c.b16 %v1232, %v1224
  %v1873 = vpack.c.b16 %v1233, %v1225
  %v1874 = vpack.c.b16 %v1234, %v1226
  %v1875 = vpack.c.b16 %v1235, %v1227
  %v1876 = vpack.c.b16 %v1236, %v1228
  %v1877 = vpack.c.b16 %v1237, %v1229
  %v1878 = vpack.c.b16 %v1238, %v1230
  %v1879 = vpack.c.b16 %v1239, %v1231
  %v1880 = vpack.c.b16 %v1248, %v1240
  %v1881 = vpack.c.b16 %v1249, %v1241
  %v1882 = vpack.c.b16 %v1250, %v1242
  %v1883 = vpack.c.b16 %v1251, %v1243
  %v1884 = vpack.c.b16 %v1252, %v1244
  %v1885 = vpack.c.b16 %v1253, %v1245
  %v1886 = vpack.c.b16 %v1254, %v1246
  %v1887 = vpack.c.b16 %v1255, %v1247
  %v1888 = vpack.c.b16 %v1264, %v1256
  %v1889 = vpack.c.b16 %v1265, %v1257
  %v1890 = vpack.c.b16 %v1266, %v1258
  %v1891 = vpack.c.b16 %v1267, %v1259
  %v1892 = vpack.c.b16 %v1268, %v1260
  %v1893 = vpack.c.b16 %v1269, %v1261
  %v1894 = vpack.c.b16 %v1270, %v1262
  %v1895 = vpack.c.b16 %v1271, %v1263
  %v1896 = vpack.c.b16 %v1280, %v1272
  %v1897 = vpack.c.b16 %v1281, %v1273
  %v1898 = vpack.c.b16 %v1282, %v1274
  %v1899 = vpack.c.b16 %v1283, %v1275
  %v1900 = vpack.c.b16 %v1284, %v1276
  %v1901 = vpack.c.b16 %v1285, %v1277
  %v1902 = vpack.c.b16 %v1286, %v1278
  %v1903 = vpack.c.b16 %v1287, %v1279
  %v1904 = vpack.c.b16 %v1296, %v1288
  %v1905 = vpack.c.b16 %v1297, %v1289
  %v1906 = vpack.c.b16 %v1298, %v1290
  %v1907 = vpack.c.b16 %v1299, %v1291
  %v1908 = vpack.c.b16 %v1300, %v1292
  %v1909 = vpack.c.b16 %v1301, %v1293
  %v1910 = vpack.c.b16 %v1302, %v1294
  %v1911 = vpack.c.b16 %v1303, %v1295
  %v1912 = vpack.c.b16 %v1312, %v1304
  %v1913 = vpack.c.b16 %v1313, %v1305
  %v1914 = vpack.c.b16 %v1314, %v1306
  %v1915 = vpack.c.b16 %v1315, %v1307
  %v1916 = vpack.c.b16 %v1316, %v1308
  %v1917 = vpack.c.b16 %v1317, %v1309
  %v1918 = vpack.c.b16 %v1318, %v1310
  %v1919 = vpack.c.b16 %v1319, %v1311
  %v1920 = vpack.c.b16 %v1328, %v1320
  %v1921 = vpack.c.b16 %v1329, %v1321
  %v1922 = vpack.c.b16 %v1330, %v1322
  %v1923 = vpack.c.b16 %v1331, %v1323
  %v1924 = vpack.c.b16 %v1332, %v1324
  %v1925 = vpack.c.b16 %v1333, %v1325
  %v1926 = vpack.c.b16 %v1334, %v1326
  %v1927 = vpack.c.b16 %v1335, %v1327
  %v1928 = vpack.c.b16 %v1344, %v1336
  %v1929 = vpack.c.b16 %v1345, %v1337
  %v1930 = vpack.c.b16 %v1346, %v1338
  %v1931 = vpack.c.b16 %v1347, %v1339
  %v1932 = vpack.c.b16 %v1348, %v1340
  %v1933 = vpack.c.b16 %v1349, %v1341
  %v1934 = vpack.c.b16 %v1350, %v1342
  %v1935 = vpack.c.b16 %v1351, %v1343
  %v1936 = vpack.c.b16 %v1360, %v1352
  %v1937 = vpack.c.b16 %v1361, %v1353
  %v1938 = vpack.c.b16 %v1362, %v1354
  %v1939 = vpack.c.b16 %v1363, %v1355
  %v1940 = vpack.c.b16 %v1364, %v1356
  %v1941 = vpack.c.b16 %v1365, %v1357
  %v1942 = vpack.c.b16 %v1366, %v1358
  %v1943 = vpack.c.b16 %v1367, %v1359
  %v1944 = vpack.c.b16 %v1376, %v1368
  %v1945 = vpack.c.b16 %v1377, %v1369
  %v1946 = vpack.c.b16 %v1378, %v1370
  %v1947 = vpack.c.b16 %v1379, %v1371
  %v1948 = vpack.c.b16 %v1380, %v1372
  %v1949 = vpack.c.b16 %v1381, %v1373
  %v1950 = vpack.c.b16 %v1382, %v1374
  %v1951 = vpack.c.b16 %v1383, %v1375
  %v1952 = vpack.c.b16 %v1392, %v1384
  %v1953 = vpack.c.b16 %v1393, %v1385
  %v1954 = vpack.c.b16 %v1394, %v1386
  %v1955 = vpack.c.b16 %v1395, %v1387
  %v1956 = vpack.c.b16 %v1396, %v1388
  %v1957 = vpack.c.b16 %v1397, %v1389
  %v1958 = vpack.c.b16 %v1398, %v1390
  %v1959 = vpack.c.b16 %v1399, %v1391
  %v1960 = vpack.c.b16 %v1408, %v1400
  %v1961 = vpack.c.b16 %v1409, %v1401
  %v1962 = vpack.c.b16 %v1410, %v1402
  %v1963 = vpack.c.b16 %v1411, %v1403
  %v1964 = vpack.c.b16 %v1412, %v1404
  %v1965 = vpack.c.b16 %v1413, %v1405
  %v1966 = vpack.c.b16 %v1414, %v1406
  %v1967 = vpack.c.b16 %v1415, %v1407
  %v1968 = vpack.c.b16 %v1424, %v1416
  %v1969 = vpack.c.b16 %v1425, %v1417
  %v1970 = vpack.c.b16 %v1426, %v1418
  %v1971 = vpack.c.b16 %v1427, %v1419
  %v1972 = vpack.c.b16 %v1428, %v1420
  %v1973 = vpack.c.b16 %v1429, %v1421
  %v1974 = vpack.c.b16 %v1430, %v1422
  %v1975 = vpack.c.b16 %v1431, %v1423
  %v1976 = vpack.c.b16 %v1440, %v1432
  %v1977 = vpack.c.b16 %v1441, %v1433
  %v1978 = vpack.c.b16 %v1442, %v1434
  %v1979 = vpack.c.b16 %v1443, %v1435
  %v1980 = vpack.c.b16 %v1444, %v1436
  %v1981 = vpack.c.b16 %v1445, %v1437
  %v1982 = vpack.c.b16 %v1446, %v1438
  %v1983 = vpack.c.b16 %v1447, %v1439
  %v1984 = vpack.c.b16 %v1456, %v1448
  %v1985 = vpack.c.b16 %v1457, %v1449
  %v1986 = vpack.c.b16 %v1458, %v1450
  %v1987 = vpack.c.b16 %v1459, %v1451
  %v1988 = vpack.c.b16 %v1460, %v1452
  %v1989 = vpack.c.b16 %v1461, %v1453
  %v1990 = vpack.c.b16 %v1462, %v1454
  %v1991 = vpack.c.b16 %v1463, %v1455
  %v1992 = vpack.c.b16 %v1472, %v1464
  %v1993 = vpack.c.b16 %v1473, %v1465
  %v1994 = vpack.c.b16 %v1474, %v1466
  %v1995 = vpack.c.b16 %v1475, %v1467
  %v1996 = vpack.c.b16 %v1476, %v1468
  %v1997 = vpack.c.b16 %v1477, %v1469
  %v1998 = vpack.c.b16 %v1478, %v1470
  %v1999 = vpack.c.b16 %v1479, %v1471
  %v2000 = vpack.c.b16 %v1488, %v1480
  %v2001 = vpack.c.b16 %v1489, %v1481
  %v2002 = vpack.c.b16 %v1490, %v1482
  %v2003 = vpack.c.b16 %v1491, %v1483
  %v2004 = vpack.c.b16 %v1492, %v1484
  %v2005 = vpack.c.b16 %v1493, %v1485
  %v2006 = vpack.c.b16 %v1494, %v1486
  %v2007 = vpack.c.b16 %v1495, %v1487
  %v2008 = vpack.c.b16 %v1504, %v1496
  %v2009 = vpack.c.b16 %v1505, %v1497
  %v2010 = vpack.c.b16 %v1506, %v1498
  %v2011 = vpack.c.b16 %v1507, %v1499
  %v2012 = vpack.c.b16 %v1508, %v1500
  %v2013 = vpack.c.b16 %v1509, %v1501
  %v2014 = vpack.c.b16 %v1510, %v1502
  %v2015 = vpack.c.b16 %v1511, %v1503
  %v2016 = vpack.c.b16 %v1520, %v1512
  %v2017 = vpack.c.b16 %v1521, %v1513
  %v2018 = vpack.c.b16 %v1522, %v1514
  %v2019 = vpack.c.b16 %v1523, %v1515
  %v2020 = vpack.c.b16 %v1524, %v1516
  %v2021 = vpack.c.b16 %v1525, %v1517
  %v2022 = vpack.c.b16 %v1526, %v1518
  %v2023 = vpack.c.b16 %v1527, %v1519
  %v2024 = vpack.c.b16 %v1536, %v1528
  %v2025 = vpack.c.b16 %v1537, %v1529
  %v2026 = vpack.c.b16 %v1538, %v1530
  %v2027 = vpack.c.b16 %v1539, %v1531
  %v2028 = vpack.c.b16 %v1540, %v1532
  %v2029 = vpack.c.b16 %v1541, %v1533
  %v2030 = vpack.c.b16 %v1542, %v1534
  %v2031 = vpack.c.b16 %v1543, %v1535
  %v2032 = vpack.c.b16 %v1552, %v1544
  %v2033 = vpack.c.b16 %v1553, %v1545
  %v2034 = vpack.c.b16 %v1554, %v1546
  %v2035 = vpack.c.b16 %v1555, %v1547
  %v2036 = vpack.c.b16 %v1556, %v1548
  %v2037 = vpack.c.b16 %v1557, %v1549
  %v2038 = vpack.c.b16 %v1558, %v1550
  %v2039 = vpack.c.b16 %v1559, %v1551
  %v2040 = vpack.c.b16 %v1568, %v1560
  %v2041 = vpack.c.b16 %v1569, %v1561
  %v2042 = vpack.c.b16 %v1570, %v1562
  %v2043 = vpack.c.b16 %v1571, %v1563
  %v2044 = vpack.c.b16 %v1572, %v1564
  %v2045 = vpack.c.b16 %v1573, %v1565
  %v2046 = vpack.c.b16 %v1574, %v1566
  %v2047 = vpack.c.b16 %v1575, %v1567
  %v2048 = vpack.c.b16 %v1584, %v1576
  %v2049 = vpack.c.b16 %v1585, %v1577
  %v2050 = vpack.c.b16 %v1586, %v1578
  %v2051 = vpack.c.b16 %v1587, %v1579
  %v2052 = vpack.c.b16 %v1588, %v1580
  %v2053 = vpack.c.b16 %v1589, %v1581
  %v2054 = vpack.c.b16 %v1590, %v1582
  %v2055 = vpack.c.b16 %v1591, %v1583
  %v2056 = vpack.c.b16 %v1600, %v1592
  %v2057 = vpack.c.b16 %v1601, %v1593
  %v2058 = vpack.c.b16 %v1602, %v1594
  %v2059 = vpack.c.b16 %v1603, %v1595
  %v2060 = vpack.c.b16 %v1604, %v1596
  %v2061 = vpack.c.b16 %v1605, %v1597
  %v2062 = vpack.c.b16 %v1606, %v1598
  %v2063 = vpack.c.b16 %v1607, %v1599
  %v2064 = vpack.c.b16 %v1616, %v1608
  %v2065 = vpack.c.b16 %v1617, %v1609
  %v2066 = vpack.c.b16 %v1618, %v1610
  %v2067 = vpack.c.b16 %v1619, %v1611
  %v2068 = vpack.c.b16 %v1620, %v1612
  %v2069 = vpack.c.b16 %v1621, %v1613
  %v2070 = vpack.c.b16 %v1622, %v1614
  %v2071 = vpack.c.b16 %v1623, %v1615
  %v2072 = vpack.c.b16 %v1632, %v1624
  %v2073 = vpack.c.b16 %v1633, %v1625
  %v2074 = vpack.c.b16 %v1634, %v1626
  %v2075 = vpack.c.b16 %v1635, %v1627
  %v2076 = vpack.c.b16 %v1636, %v1628
  %v2077 = vpack.c.b16 %v1637, %v1629
  %v2078 = vpack.c.b16 %v1638, %v1630
  %v2079 = vpack.c.b16 %v1639, %v1631
  %v2080 = vpack.c.b16 %v1648, %v1640
  %v2081 = vpack.c.b16 %v1649, %v1641
  %v2082 = vpack.c.b16 %v1650, %v1642
  %v2083 = vpack.c.b16 %v1651, %v1643
  %v2084 = vpack.c.b16 %v1652, %v1644
  %v2085 = vpack.c.b16 %v1653, %v1645
  %v2086 = vpack.c.b16 %v1654, %v1646
  %v2087 = vpack.c.b16 %v1655, %v1647
  %v2088 = vpack.c.b16 %v1664, %v1656
  %v2089 = vpack.c.b16 %v1665, %v1657
  %v2090 = vpack.c.b16 %v1666, %v1658
  %v2091 = vpack.c.b16 %v1667, %v1659
  %v2092 = vpack.c.b16 %v1668, %v1660
  %v2093 = vpack.c.b16 %v1669, %v1661
  %v2094 = vpack.c.b16 %v1670, %v1662
  %v2095 = vpack.c.b16 %v1671, %v1663
  %v2096 = vpack.c.b16 %v1680, %v1672
  %v2097 = vpack.c.b16 %v1681, %v1673
  %v2098 = vpack.c.b16 %v1682, %v1674
  %v2099 = vpack.c.b16 %v1683, %v1675
  %v2100 = vpack.c.b16 %v1684, %v1676
  %v2101 = vpack.c.b16 %v1685, %v1677
  %v2102 = vpack.c.b16 %v1686, %v1678
  %v2103 = vpack.c.b16 %v1687, %v1679
  %v2104 = vpack.c.b16 %v1696, %v1688
  %v2105 = vpack.c.b16 %v1697, %v1689
  %v2106 = vpack.c.b16 %v1698, %v1690
  %v2107 = vpack.c.b16 %v1699, %v1691
  %v2108 = vpack.c.b16 %v1700, %v1692
  %v2109 = vpack.c.b16 %v1701, %v1693
  %v2110 = vpack.c.b16 %v1702, %v1694
  %v2111 = vpack.c.b16 %v1703, %v1695
  %v2112 = vpack.c.b16 %v1712, %v1704
  %v2113 = vpack.c.b16 %v1713, %v1705
  %v2114 = vpack.c.b16 %v1714, %v1706
  %v2115 = vpack.c.b16 %v1715, %v1707
  %v2116 = vpack.c.b16 %v1716, %v1708
  %v2117 = vpack.c.b16 %v1717, %v1709
  %v2118 = vpack.c.b16 %v1718, %v1710
  %v2119 = vpack.c.b16 %v1719, %v1711
  %v2120 = vpack.c.b16 %v1728, %v1720
  %v2121 = vpack.c.b16 %v1729, %v1721
  %v2122 = vpack.c.b16 %v1730, %v1722
  %v2123 = vpack.c.b16 %v1731, %v1723
  %v2124 = vpack.c.b16 %v1732, %v1724
  %v2125 = vpack.c.b16 %v1733, %v1725
  %v2126 = vpack.c.b16 %v1734, %v1726
  %v2127 = vpack.c.b16 %v1735, %v1727
  %v2128 = vpack.c.b16 %v1744, %v1736
  %v2129 = vpack.c.b16 %v1745, %v1737
  %v2130 = vpack.c.b16 %v1746, %v1738
  %v2131 = vpack.c.b16 %v1747, %v1739
  %v2132 = vpack.c.b16 %v1748, %v1740
  %v2133 = vpack.c.b16 %v1749, %v1741
  %v2134 = vpack.c.b16 %v1750, %v1742
  %v2135 = vpack.c.b16 %v1751, %v1743
  %2520 = vmatprep.subr.bf16.mxu0 %v1753
  %2521 = vmatpush1.bf16.msra.mxu0 %v1752
  %2522 = vmatprep.subr.bf16.mxu0 %v1761
  %2523 = vmatpush1.bf16.msra.mxu0 %v1760
  %2524 = vmatprep.subr.bf16.mxu0 %v1769
  %2525 = vmatpush1.bf16.msra.mxu0 %v1768
  %2526 = vmatprep.subr.bf16.mxu0 %v1777
  %2527 = vmatpush1.bf16.msra.mxu0 %v1776
  %2528 = vmatprep.subr.bf16.mxu0 %v1785
  %2529 = vmatpush1.bf16.msra.mxu0 %v1784
  %2530 = vmatprep.subr.bf16.mxu0 %v1793
  %2531 = vmatpush1.bf16.msra.mxu0 %v1792
  %2532 = vmatprep.subr.bf16.mxu0 %v1801
  %2533 = vmatpush1.bf16.msra.mxu0 %v1800
  %2534 = vmatprep.subr.bf16.mxu0 %v1809
  %2535 = vmatpush1.bf16.msra.mxu0 %v1808
  %2536 = vmatprep.subr.bf16.mxu0 %v1817
  %2537 = vmatpush1.bf16.msra.mxu0 %v1816
  %2538 = vmatprep.subr.bf16.mxu0 %v1825
  %2539 = vmatpush1.bf16.msra.mxu0 %v1824
  %2540 = vmatprep.subr.bf16.mxu0 %v1833
  %2541 = vmatpush1.bf16.msra.mxu0 %v1832
  %2542 = vmatprep.subr.bf16.mxu0 %v1841
  %2543 = vmatpush1.bf16.msra.mxu0 %v1840
  %2544 = vmatprep.subr.bf16.mxu0 %v1849
  %2545 = vmatpush1.bf16.msra.mxu0 %v1848
  %2546 = vmatprep.subr.bf16.mxu0 %v1857
  %2547 = vmatpush1.bf16.msra.mxu0 %v1856
  %2548 = vmatprep.subr.bf16.mxu0 %v1865
  %2549 = vmatpush1.bf16.msra.mxu0 %v1864
  %2550 = vmatprep.subr.bf16.mxu0 %v1873
  %2551 = vmatpush1.bf16.msra.mxu0 %v1872
  %2552 = vmatprep.mubr.bf16.mxu0 %v553
  %2553 = vmatmul.mubr.bf16.gmra.mrb[0].mxu0 %v552
  %v2554 = vpop.f32.mrb[0].mxu0
  %v2555 = vadd.f32 %v443, %v2554
  %v2556 = vpop.f32.mrb[0].mxu0
  %v2557 = vadd.f32 %v447, %v2556
  %v2558 = vpop.f32.mrb[0].mxu0
  %v2559 = vadd.f32 %v443, %v2558
  %v2560 = vpop.f32.mrb[0].mxu0
  %v2561 = vadd.f32 %v447, %v2560
  %2562 = vmatprep.mubr.bf16.mxu0 %v559
  %2563 = vmatmul.mubr.bf16.gmra.mrb[0].mxu0 %v558
  %v2564 = vpop.f32.mrb[0].mxu0
  %v2565 = vadd.f32 %v443, %v2564
  %v2566 = vpop.f32.mrb[0].mxu0
  %v2567 = vadd.f32 %v447, %v2566
  %v2568 = vpop.f32.mrb[0].mxu0
  %v2569 = vadd.f32 %v443, %v2568
  %v2570 = vpop.f32.mrb[0].mxu0
  %v2571 = vadd.f32 %v447, %v2570
  %2572 = vmatprep.mubr.bf16.mxu0 %v565
  %2573 = vmatmul.mubr.bf16.gmra.mrb[0].mxu0 %v564
  %v2574 = vpop.f32.mrb[0].mxu0
  %v2575 = vadd.f32 %v443, %v2574
  %v2576 = vpop.f32.mrb[0].mxu0
  %v2577 = vadd.f32 %v447, %v2576
  %v2578 = vpop.f32.mrb[0].mxu0
  %v2579 = vadd.f32 %v443, %v2578
  %v2580 = vpop.f32.mrb[0].mxu0
  %v2581 = vadd.f32 %v447, %v2580
  %2582 = vmatprep.mubr.bf16.mxu0 %v571
  %2583 = vmatmul.mubr.bf16.gmra.mrb[0].mxu0 %v570
  %v2584 = vpop.f32.mrb[0].mxu0
  %v2585 = vadd.f32 %v443, %v2584
  %v2586 = vpop.f32.mrb[0].mxu0
  %v2587 = vadd.f32 %v447, %v2586
  %v2588 = vpop.f32.mrb[0].mxu0
  %v2589 = vadd.f32 %v443, %v2588
  %v2590 = vpop.f32.mrb[0].mxu0
  %v2591 = vadd.f32 %v447, %v2590
  %2592 = vdwg.mxu0
  %2593 = vmatprep.subr.bf16.mxu0 %v1881
  %2594 = vmatpush1.bf16.msra.mxu0 %v1880
  %2595 = vmatprep.subr.bf16.mxu0 %v1889
  %2596 = vmatpush1.bf16.msra.mxu0 %v1888
  %2597 = vmatprep.subr.bf16.mxu0 %v1897
  %2598 = vmatpush1.bf16.msra.mxu0 %v1896
  %2599 = vmatprep.subr.bf16.mxu0 %v1905
  %2600 = vmatpush1.bf16.msra.mxu0 %v1904
  %2601 = vmatprep.subr.bf16.mxu0 %v1913
  %2602 = vmatpush1.bf16.msra.mxu0 %v1912
  %2603 = vmatprep.subr.bf16.mxu0 %v1921
  %2604 = vmatpush1.bf16.msra.mxu0 %v1920
  %2605 = vmatprep.subr.bf16.mxu0 %v1929
  %2606 = vmatpush1.bf16.msra.mxu0 %v1928
  %2607 = vmatprep.subr.bf16.mxu0 %v1937
  %2608 = vmatpush1.bf16.msra.mxu0 %v1936
  %2609 = vmatprep.subr.bf16.mxu0 %v1945
  %2610 = vmatpush1.bf16.msra.mxu0 %v1944
  %2611 = vmatprep.subr.bf16.mxu0 %v1953
  %2612 = vmatpush1.bf16.msra.mxu0 %v1952
  %2613 = vmatprep.subr.bf16.mxu0 %v1961
  %2614 = vmatpush1.bf16.msra.mxu0 %v1960
  %2615 = vmatprep.subr.bf16.mxu0 %v1969
  %2616 = vmatpush1.bf16.msra.mxu0 %v1968
  %2617 = vmatprep.subr.bf16.mxu0 %v1977
  %2618 = vmatpush1.bf16.msra.mxu0 %v1976
  %2619 = vmatprep.subr.bf16.mxu0 %v1985
  %2620 = vmatpush1.bf16.msra.mxu0 %v1984
  %2621 = vmatprep.subr.bf16.mxu0 %v1993
  %2622 = vmatpush1.bf16.msra.mxu0 %v1992
  %2623 = vmatprep.subr.bf16.mxu0 %v2001
  %2624 = vmatpush1.bf16.msra.mxu0 %v2000
  %2625 = vmatprep.mubr.bf16.mxu0 %v555
  %2626 = vmatmul.mubr.bf16.gmra.mrb[0].mxu0 %v554
  %v2627 = vpop.f32.mrb[0].mxu0
  %v2628 = vadd.f32 %v2555, %v2627
  %v2629 = vpop.f32.mrb[0].mxu0
  %v2630 = vadd.f32 %v2557, %v2629
  %v2631 = vpop.f32.mrb[0].mxu0
  %v2632 = vadd.f32 %v2559, %v2631
  %v2633 = vpop.f32.mrb[0].mxu0
  %v2634 = vadd.f32 %v2561, %v2633
  %2635 = vmatprep.mubr.bf16.mxu0 %v561
  %2636 = vmatmul.mubr.bf16.gmra.mrb[0].mxu0 %v560
  %v2637 = vpop.f32.mrb[0].mxu0
  %v2638 = vadd.f32 %v2565, %v2637
  %v2639 = vpop.f32.mrb[0].mxu0
  %v2640 = vadd.f32 %v2567, %v2639
  %v2641 = vpop.f32.mrb[0].mxu0
  %v2642 = vadd.f32 %v2569, %v2641
  %v2643 = vpop.f32.mrb[0].mxu0
  %v2644 = vadd.f32 %v2571, %v2643
  %2645 = vmatprep.mubr.bf16.mxu0 %v567
  %2646 = vmatmul.mubr.bf16.gmra.mrb[0].mxu0 %v566
  %v2647 = vpop.f32.mrb[0].mxu0
  %v2648 = vadd.f32 %v2575, %v2647
  %v2649 = vpop.f32.mrb[0].mxu0
  %v2650 = vadd.f32 %v2577, %v2649
  %v2651 = vpop.f32.mrb[0].mxu0
  %v2652 = vadd.f32 %v2579, %v2651
  %v2653 = vpop.f32.mrb[0].mxu0
  %v2654 = vadd.f32 %v2581, %v2653
  %2655 = vmatprep.mubr.bf16.mxu0 %v573
  %2656 = vmatmul.mubr.bf16.gmra.mrb[0].mxu0 %v572
  %v2657 = vpop.f32.mrb[0].mxu0
  %v2658 = vadd.f32 %v2585, %v2657
  %v2659 = vpop.f32.mrb[0].mxu0
  %v2660 = vadd.f32 %v2587, %v2659
  %v2661 = vpop.f32.mrb[0].mxu0
  %v2662 = vadd.f32 %v2589, %v2661
  %v2663 = vpop.f32.mrb[0].mxu0
  %v2664 = vadd.f32 %v2591, %v2663
  %2665 = vdwg.mxu0
  %2666 = vmatprep.subr.bf16.mxu0 %v2009
  %2667 = vmatpush1.bf16.msra.mxu0 %v2008
  %2668 = vmatprep.subr.bf16.mxu0 %v2017
  %2669 = vmatpush1.bf16.msra.mxu0 %v2016
  %2670 = vmatprep.subr.bf16.mxu0 %v2025
  %2671 = vmatpush1.bf16.msra.mxu0 %v2024
  %2672 = vmatprep.subr.bf16.mxu0 %v2033
  %2673 = vmatpush1.bf16.msra.mxu0 %v2032
  %2674 = vmatprep.subr.bf16.mxu0 %v2041
  %2675 = vmatpush1.bf16.msra.mxu0 %v2040
  %2676 = vmatprep.subr.bf16.mxu0 %v2049
  %2677 = vmatpush1.bf16.msra.mxu0 %v2048
  %2678 = vmatprep.subr.bf16.mxu0 %v2057
  %2679 = vmatpush1.bf16.msra.mxu0 %v2056
  %2680 = vmatprep.subr.bf16.mxu0 %v2065
  %2681 = vmatpush1.bf16.msra.mxu0 %v2064
  %2682 = vmatprep.subr.bf16.mxu0 %v2073
  %2683 = vmatpush1.bf16.msra.mxu0 %v2072
  %2684 = vmatprep.subr.bf16.mxu0 %v2081
  %2685 = vmatpush1.bf16.msra.mxu0 %v2080
  %2686 = vmatprep.subr.bf16.mxu0 %v2089
  %2687 = vmatpush1.bf16.msra.mxu0 %v2088
  %2688 = vmatprep.subr.bf16.mxu0 %v2097
  %2689 = vmatpush1.bf16.msra.mxu0 %v2096
  %2690 = vmatprep.subr.bf16.mxu0 %v2105
  %2691 = vmatpush1.bf16.msra.mxu0 %v2104
  %2692 = vmatprep.subr.bf16.mxu0 %v2113
  %2693 = vmatpush1.bf16.msra.mxu0 %v2112
  %2694 = vmatprep.subr.bf16.mxu0 %v2121
  %2695 = vmatpush1.bf16.msra.mxu0 %v2120
  %2696 = vmatprep.subr.bf16.mxu0 %v2129
  %2697 = vmatpush1.bf16.msra.mxu0 %v2128
  %2698 = vmatprep.mubr.bf16.mxu0 %v557
  %2699 = vmatmul.mubr.bf16.gmra.mrb[0].mxu0 %v556
  %v2700 = vpop.f32.mrb[0].mxu0
  %v2701 = vadd.f32 %v2628, %v2700
  %v2702 = vpop.f32.mrb[0].mxu0
  %v2703 = vadd.f32 %v2630, %v2702
  %v2704 = vpop.f32.mrb[0].mxu0
  %v2705 = vadd.f32 %v2632, %v2704
  %v2706 = vpop.f32.mrb[0].mxu0
  %v2707 = vadd.f32 %v2634, %v2706
  %2708 = vmatprep.mubr.bf16.mxu0 %v563
  %2709 = vmatmul.mubr.bf16.gmra.mrb[0].mxu0 %v562
  %v2710 = vpop.f32.mrb[0].mxu0
  %v2711 = vadd.f32 %v2638, %v2710
  %v2712 = vpop.f32.mrb[0].mxu0
  %v2713 = vadd.f32 %v2640, %v2712
  %v2714 = vpop.f32.mrb[0].mxu0
  %v2715 = vadd.f32 %v2642, %v2714
  %v2716 = vpop.f32.mrb[0].mxu0
  %v2717 = vadd.f32 %v2644, %v2716
  %2718 = vmatprep.mubr.bf16.mxu0 %v569
  %2719 = vmatmul.mubr.bf16.gmra.mrb[0].mxu0 %v568
  %v2720 = vpop.f32.mrb[0].mxu0
  %v2721 = vadd.f32 %v2648, %v2720
  %v2722 = vpop.f32.mrb[0].mxu0
  %v2723 = vadd.f32 %v2650, %v2722
  %v2724 = vpop.f32.mrb[0].mxu0
  %v2725 = vadd.f32 %v2652, %v2724
  %v2726 = vpop.f32.mrb[0].mxu0
  %v2727 = vadd.f32 %v2654, %v2726
  %2728 = vmatprep.mubr.bf16.mxu0 %v575
  %2729 = vmatmul.mubr.bf16.gmra.mrb[0].mxu0 %v574
  %v2730 = vpop.f32.mrb[0].mxu0
  %v2731 = vadd.f32 %v2658, %v2730
  %v2732 = vpop.f32.mrb[0].mxu0
  %v2733 = vadd.f32 %v2660, %v2732
  %v2734 = vpop.f32.mrb[0].mxu0
  %v2735 = vadd.f32 %v2662, %v2734
  %v2736 = vpop.f32.mrb[0].mxu0
  %v2737 = vadd.f32 %v2664, %v2736
  %2738 = vdwg.mxu0
  %2739 = vmatprep.subr.bf16.mxu0 %v1755
  %2740 = vmatpush1.bf16.msra.mxu0 %v1754
  %2741 = vmatprep.subr.bf16.mxu0 %v1763
  %2742 = vmatpush1.bf16.msra.mxu0 %v1762
  %2743 = vmatprep.subr.bf16.mxu0 %v1771
  %2744 = vmatpush1.bf16.msra.mxu0 %v1770
  %2745 = vmatprep.subr.bf16.mxu0 %v1779
  %2746 = vmatpush1.bf16.msra.mxu0 %v1778
  %2747 = vmatprep.subr.bf16.mxu0 %v1787
  %2748 = vmatpush1.bf16.msra.mxu0 %v1786
  %2749 = vmatprep.subr.bf16.mxu0 %v1795
  %2750 = vmatpush1.bf16.msra.mxu0 %v1794
  %2751 = vmatprep.subr.bf16.mxu0 %v1803
  %2752 = vmatpush1.bf16.msra.mxu0 %v1802
  %2753 = vmatprep.subr.bf16.mxu0 %v1811
  %2754 = vmatpush1.bf16.msra.mxu0 %v1810
  %2755 = vmatprep.subr.bf16.mxu0 %v1819
  %2756 = vmatpush1.bf16.msra.mxu0 %v1818
  %2757 = vmatprep.subr.bf16.mxu0 %v1827
  %2758 = vmatpush1.bf16.msra.mxu0 %v1826
  %2759 = vmatprep.subr.bf16.mxu0 %v1835
  %2760 = vmatpush1.bf16.msra.mxu0 %v1834
  %2761 = vmatprep.subr.bf16.mxu0 %v1843
  %2762 = vmatpush1.bf16.msra.mxu0 %v1842
  %2763 = vmatprep.subr.bf16.mxu0 %v1851
  %2764 = vmatpush1.bf16.msra.mxu0 %v1850
  %2765 = vmatprep.subr.bf16.mxu0 %v1859
  %2766 = vmatpush1.bf16.msra.mxu0 %v1858
  %2767 = vmatprep.subr.bf16.mxu0 %v1867
  %2768 = vmatpush1.bf16.msra.mxu0 %v1866
  %2769 = vmatprep.subr.bf16.mxu0 %v1875
  %2770 = vmatpush1.bf16.msra.mxu0 %v1874
  %2771 = vmatprep.mubr.bf16.mxu0 %v553
  %2772 = vmatmul.mubr.bf16.gmra.mrb[0].mxu0 %v552
  %v2773 = vpop.f32.mrb[0].mxu0
  %v2774 = vadd.f32 %v451, %v2773
  %v2775 = vpop.f32.mrb[0].mxu0
  %v2776 = vadd.f32 %v455, %v2775
  %v2777 = vpop.f32.mrb[0].mxu0
  %v2778 = vadd.f32 %v451, %v2777
  %v2779 = vpop.f32.mrb[0].mxu0
  %v2780 = vadd.f32 %v455, %v2779
  %2781 = vmatprep.mubr.bf16.mxu0 %v559
  %2782 = vmatmul.mubr.bf16.gmra.mrb[0].mxu0 %v558
  %v2783 = vpop.f32.mrb[0].mxu0
  %v2784 = vadd.f32 %v451, %v2783
  %v2785 = vpop.f32.mrb[0].mxu0
  %v2786 = vadd.f32 %v455, %v2785
  %v2787 = vpop.f32.mrb[0].mxu0
  %v2788 = vadd.f32 %v451, %v2787
  %v2789 = vpop.f32.mrb[0].mxu0
  %v2790 = vadd.f32 %v455, %v2789
  %2791 = vmatprep.mubr.bf16.mxu0 %v565
  %2792 = vmatmul.mubr.bf16.gmra.mrb[0].mxu0 %v564
  %v2793 = vpop.f32.mrb[0].mxu0
  %v2794 = vadd.f32 %v451, %v2793
  %v2795 = vpop.f32.mrb[0].mxu0
  %v2796 = vadd.f32 %v455, %v2795
  %v2797 = vpop.f32.mrb[0].mxu0
  %v2798 = vadd.f32 %v451, %v2797
  %v2799 = vpop.f32.mrb[0].mxu0
  %v2800 = vadd.f32 %v455, %v2799
  %2801 = vmatprep.mubr.bf16.mxu0 %v571
  %2802 = vmatmul.mubr.bf16.gmra.mrb[0].mxu0 %v570
  %v2803 = vpop.f32.mrb[0].mxu0
  %v2804 = vadd.f32 %v451, %v2803
  %v2805 = vpop.f32.mrb[0].mxu0
  %v2806 = vadd.f32 %v455, %v2805
  %v2807 = vpop.f32.mrb[0].mxu0
  %v2808 = vadd.f32 %v451, %v2807
  %v2809 = vpop.f32.mrb[0].mxu0
  %v2810 = vadd.f32 %v455, %v2809
  %2811 = vdwg.mxu0
  %2812 = vmatprep.subr.bf16.mxu0 %v1883
  %2813 = vmatpush1.bf16.msra.mxu0 %v1882
  %2814 = vmatprep.subr.bf16.mxu0 %v1891
  %2815 = vmatpush1.bf16.msra.mxu0 %v1890
  %2816 = vmatprep.subr.bf16.mxu0 %v1899
  %2817 = vmatpush1.bf16.msra.mxu0 %v1898
  %2818 = vmatprep.subr.bf16.mxu0 %v1907
  %2819 = vmatpush1.bf16.msra.mxu0 %v1906
  %2820 = vmatprep.subr.bf16.mxu0 %v1915
  %2821 = vmatpush1.bf16.msra.mxu0 %v1914
  %2822 = vmatprep.subr.bf16.mxu0 %v1923
  %2823 = vmatpush1.bf16.msra.mxu0 %v1922
  %2824 = vmatprep.subr.bf16.mxu0 %v1931
  %2825 = vmatpush1.bf16.msra.mxu0 %v1930
  %2826 = vmatprep.subr.bf16.mxu0 %v1939
  %2827 = vmatpush1.bf16.msra.mxu0 %v1938
  %2828 = vmatprep.subr.bf16.mxu0 %v1947
  %2829 = vmatpush1.bf16.msra.mxu0 %v1946
  %2830 = vmatprep.subr.bf16.mxu0 %v1955
  %2831 = vmatpush1.bf16.msra.mxu0 %v1954
  %2832 = vmatprep.subr.bf16.mxu0 %v1963
  %2833 = vmatpush1.bf16.msra.mxu0 %v1962
  %2834 = vmatprep.subr.bf16.mxu0 %v1971
  %2835 = vmatpush1.bf16.msra.mxu0 %v1970
  %2836 = vmatprep.subr.bf16.mxu0 %v1979
  %2837 = vmatpush1.bf16.msra.mxu0 %v1978
  %2838 = vmatprep.subr.bf16.mxu0 %v1987
  %2839 = vmatpush1.bf16.msra.mxu0 %v1986
  %2840 = vmatprep.subr.bf16.mxu0 %v1995
  %2841 = vmatpush1.bf16.msra.mxu0 %v1994
  %2842 = vmatprep.subr.bf16.mxu0 %v2003
  %2843 = vmatpush1.bf16.msra.mxu0 %v2002
  %2844 = vmatprep.mubr.bf16.mxu0 %v555
  %2845 = vmatmul.mubr.bf16.gmra.mrb[0].mxu0 %v554
  %v2846 = vpop.f32.mrb[0].mxu0
  %v2847 = vadd.f32 %v2774, %v2846
  %v2848 = vpop.f32.mrb[0].mxu0
  %v2849 = vadd.f32 %v2776, %v2848
  %v2850 = vpop.f32.mrb[0].mxu0
  %v2851 = vadd.f32 %v2778, %v2850
  %v2852 = vpop.f32.mrb[0].mxu0
  %v2853 = vadd.f32 %v2780, %v2852
  %2854 = vmatprep.mubr.bf16.mxu0 %v561
  %2855 = vmatmul.mubr.bf16.gmra.mrb[0].mxu0 %v560
  %v2856 = vpop.f32.mrb[0].mxu0
  %v2857 = vadd.f32 %v2784, %v2856
  %v2858 = vpop.f32.mrb[0].mxu0
  %v2859 = vadd.f32 %v2786, %v2858
  %v2860 = vpop.f32.mrb[0].mxu0
  %v2861 = vadd.f32 %v2788, %v2860
  %v2862 = vpop.f32.mrb[0].mxu0
  %v2863 = vadd.f32 %v2790, %v2862
  %2864 = vmatprep.mubr.bf16.mxu0 %v567
  %2865 = vmatmul.mubr.bf16.gmra.mrb[0].mxu0 %v566
  %v2866 = vpop.f32.mrb[0].mxu0
  %v2867 = vadd.f32 %v2794, %v2866
  %v2868 = vpop.f32.mrb[0].mxu0
  %v2869 = vadd.f32 %v2796, %v2868
  %v2870 = vpop.f32.mrb[0].mxu0
  %v2871 = vadd.f32 %v2798, %v2870
  %v2872 = vpop.f32.mrb[0].mxu0
  %v2873 = vadd.f32 %v2800, %v2872
  %2874 = vmatprep.mubr.bf16.mxu0 %v573
  %2875 = vmatmul.mubr.bf16.gmra.mrb[0].mxu0 %v572
  %v2876 = vpop.f32.mrb[0].mxu0
  %v2877 = vadd.f32 %v2804, %v2876
  %v2878 = vpop.f32.mrb[0].mxu0
  %v2879 = vadd.f32 %v2806, %v2878
  %v2880 = vpop.f32.mrb[0].mxu0
  %v2881 = vadd.f32 %v2808, %v2880
  %v2882 = vpop.f32.mrb[0].mxu0
  %v2883 = vadd.f32 %v2810, %v2882
  %2884 = vdwg.mxu0
  %2885 = vmatprep.subr.bf16.mxu0 %v2011
  %2886 = vmatpush1.bf16.msra.mxu0 %v2010
  %2887 = vmatprep.subr.bf16.mxu0 %v2019
  %2888 = vmatpush1.bf16.msra.mxu0 %v2018
  %2889 = vmatprep.subr.bf16.mxu0 %v2027
  %2890 = vmatpush1.bf16.msra.mxu0 %v2026
  %2891 = vmatprep.subr.bf16.mxu0 %v2035
  %2892 = vmatpush1.bf16.msra.mxu0 %v2034
  %2893 = vmatprep.subr.bf16.mxu0 %v2043
  %2894 = vmatpush1.bf16.msra.mxu0 %v2042
  %2895 = vmatprep.subr.bf16.mxu0 %v2051
  %2896 = vmatpush1.bf16.msra.mxu0 %v2050
  %2897 = vmatprep.subr.bf16.mxu0 %v2059
  %2898 = vmatpush1.bf16.msra.mxu0 %v2058
  %2899 = vmatprep.subr.bf16.mxu0 %v2067
  %2900 = vmatpush1.bf16.msra.mxu0 %v2066
  %2901 = vmatprep.subr.bf16.mxu0 %v2075
  %2902 = vmatpush1.bf16.msra.mxu0 %v2074
  %2903 = vmatprep.subr.bf16.mxu0 %v2083
  %2904 = vmatpush1.bf16.msra.mxu0 %v2082
  %2905 = vmatprep.subr.bf16.mxu0 %v2091
  %2906 = vmatpush1.bf16.msra.mxu0 %v2090
  %2907 = vmatprep.subr.bf16.mxu0 %v2099
  %2908 = vmatpush1.bf16.msra.mxu0 %v2098
  %2909 = vmatprep.subr.bf16.mxu0 %v2107
  %2910 = vmatpush1.bf16.msra.mxu0 %v2106
  %2911 = vmatprep.subr.bf16.mxu0 %v2115
  %2912 = vmatpush1.bf16.msra.mxu0 %v2114
  %2913 = vmatprep.subr.bf16.mxu0 %v2123
  %2914 = vmatpush1.bf16.msra.mxu0 %v2122
  %2915 = vmatprep.subr.bf16.mxu0 %v2131
  %2916 = vmatpush1.bf16.msra.mxu0 %v2130
  %2917 = vmatprep.mubr.bf16.mxu0 %v557
  %2918 = vmatmul.mubr.bf16.gmra.mrb[0].mxu0 %v556
  %v2919 = vpop.f32.mrb[0].mxu0
  %v2920 = vadd.f32 %v2847, %v2919
  %v2921 = vpop.f32.mrb[0].mxu0
  %v2922 = vadd.f32 %v2849, %v2921
  %v2923 = vpop.f32.mrb[0].mxu0
  %v2924 = vadd.f32 %v2851, %v2923
  %v2925 = vpop.f32.mrb[0].mxu0
  %v2926 = vadd.f32 %v2853, %v2925
  %2927 = vmatprep.mubr.bf16.mxu0 %v563
  %2928 = vmatmul.mubr.bf16.gmra.mrb[0].mxu0 %v562
  %v2929 = vpop.f32.mrb[0].mxu0
  %v2930 = vadd.f32 %v2857, %v2929
  %v2931 = vpop.f32.mrb[0].mxu0
  %v2932 = vadd.f32 %v2859, %v2931
  %v2933 = vpop.f32.mrb[0].mxu0
  %v2934 = vadd.f32 %v2861, %v2933
  %v2935 = vpop.f32.mrb[0].mxu0
  %v2936 = vadd.f32 %v2863, %v2935
  %2937 = vmatprep.mubr.bf16.mxu0 %v569
  %2938 = vmatmul.mubr.bf16.gmra.mrb[0].mxu0 %v568
  %v2939 = vpop.f32.mrb[0].mxu0
  %v2940 = vadd.f32 %v2867, %v2939
  %v2941 = vpop.f32.mrb[0].mxu0
  %v2942 = vadd.f32 %v2869, %v2941
  %v2943 = vpop.f32.mrb[0].mxu0
  %v2944 = vadd.f32 %v2871, %v2943
  %v2945 = vpop.f32.mrb[0].mxu0
  %v2946 = vadd.f32 %v2873, %v2945
  %2947 = vmatprep.mubr.bf16.mxu0 %v575
  %2948 = vmatmul.mubr.bf16.gmra.mrb[0].mxu0 %v574
  %v2949 = vpop.f32.mrb[0].mxu0
  %v2950 = vadd.f32 %v2877, %v2949
  %v2951 = vpop.f32.mrb[0].mxu0
  %v2952 = vadd.f32 %v2879, %v2951
  %v2953 = vpop.f32.mrb[0].mxu0
  %v2954 = vadd.f32 %v2881, %v2953
  %v2955 = vpop.f32.mrb[0].mxu0
  %v2956 = vadd.f32 %v2883, %v2955
  %2957 = vdwg.mxu0
  %2958 = vmatprep.subr.bf16.mxu0 %v1757
  %2959 = vmatpush1.bf16.msra.mxu0 %v1756
  %2960 = vmatprep.subr.bf16.mxu0 %v1765
  %2961 = vmatpush1.bf16.msra.mxu0 %v1764
  %2962 = vmatprep.subr.bf16.mxu0 %v1773
  %2963 = vmatpush1.bf16.msra.mxu0 %v1772
  %2964 = vmatprep.subr.bf16.mxu0 %v1781
  %2965 = vmatpush1.bf16.msra.mxu0 %v1780
  %2966 = vmatprep.subr.bf16.mxu0 %v1789
  %2967 = vmatpush1.bf16.msra.mxu0 %v1788
  %2968 = vmatprep.subr.bf16.mxu0 %v1797
  %2969 = vmatpush1.bf16.msra.mxu0 %v1796
  %2970 = vmatprep.subr.bf16.mxu0 %v1805
  %2971 = vmatpush1.bf16.msra.mxu0 %v1804
  %2972 = vmatprep.subr.bf16.mxu0 %v1813
  %2973 = vmatpush1.bf16.msra.mxu0 %v1812
  %2974 = vmatprep.subr.bf16.mxu0 %v1821
  %2975 = vmatpush1.bf16.msra.mxu0 %v1820
  %2976 = vmatprep.subr.bf16.mxu0 %v1829
  %2977 = vmatpush1.bf16.msra.mxu0 %v1828
  %2978 = vmatprep.subr.bf16.mxu0 %v1837
  %2979 = vmatpush1.bf16.msra.mxu0 %v1836
  %2980 = vmatprep.subr.bf16.mxu0 %v1845
  %2981 = vmatpush1.bf16.msra.mxu0 %v1844
  %2982 = vmatprep.subr.bf16.mxu0 %v1853
  %2983 = vmatpush1.bf16.msra.mxu0 %v1852
  %2984 = vmatprep.subr.bf16.mxu0 %v1861
  %2985 = vmatpush1.bf16.msra.mxu0 %v1860
  %2986 = vmatprep.subr.bf16.mxu0 %v1869
  %2987 = vmatpush1.bf16.msra.mxu0 %v1868
  %2988 = vmatprep.subr.bf16.mxu0 %v1877
  %2989 = vmatpush1.bf16.msra.mxu0 %v1876
  %2990 = vmatprep.mubr.bf16.mxu0 %v553
  %2991 = vmatmul.mubr.bf16.gmra.mrb[0].mxu0 %v552
  %v2992 = vpop.f32.mrb[0].mxu0
  %v2993 = vadd.f32 %v459, %v2992
  %v2994 = vpop.f32.mrb[0].mxu0
  %v2995 = vadd.f32 %v463, %v2994
  %v2996 = vpop.f32.mrb[0].mxu0
  %v2997 = vadd.f32 %v459, %v2996
  %v2998 = vpop.f32.mrb[0].mxu0
  %v2999 = vadd.f32 %v463, %v2998
  %3000 = vmatprep.mubr.bf16.mxu0 %v559
  %3001 = vmatmul.mubr.bf16.gmra.mrb[0].mxu0 %v558
  %v3002 = vpop.f32.mrb[0].mxu0
  %v3003 = vadd.f32 %v459, %v3002
  %v3004 = vpop.f32.mrb[0].mxu0
  %v3005 = vadd.f32 %v463, %v3004
  %v3006 = vpop.f32.mrb[0].mxu0
  %v3007 = vadd.f32 %v459, %v3006
  %v3008 = vpop.f32.mrb[0].mxu0
  %v3009 = vadd.f32 %v463, %v3008
  %3010 = vmatprep.mubr.bf16.mxu0 %v565
  %3011 = vmatmul.mubr.bf16.gmra.mrb[0].mxu0 %v564
  %v3012 = vpop.f32.mrb[0].mxu0
  %v3013 = vadd.f32 %v459, %v3012
  %v3014 = vpop.f32.mrb[0].mxu0
  %v3015 = vadd.f32 %v463, %v3014
  %v3016 = vpop.f32.mrb[0].mxu0
  %v3017 = vadd.f32 %v459, %v3016
  %v3018 = vpop.f32.mrb[0].mxu0
  %v3019 = vadd.f32 %v463, %v3018
  %3020 = vmatprep.mubr.bf16.mxu0 %v571
  %3021 = vmatmul.mubr.bf16.gmra.mrb[0].mxu0 %v570
  %v3022 = vpop.f32.mrb[0].mxu0
  %v3023 = vadd.f32 %v459, %v3022
  %v3024 = vpop.f32.mrb[0].mxu0
  %v3025 = vadd.f32 %v463, %v3024
  %v3026 = vpop.f32.mrb[0].mxu0
  %v3027 = vadd.f32 %v459, %v3026
  %v3028 = vpop.f32.mrb[0].mxu0
  %v3029 = vadd.f32 %v463, %v3028
  %3030 = vdwg.mxu0
  %3031 = vmatprep.subr.bf16.mxu0 %v1885
  %3032 = vmatpush1.bf16.msra.mxu0 %v1884
  %3033 = vmatprep.subr.bf16.mxu0 %v1893
  %3034 = vmatpush1.bf16.msra.mxu0 %v1892
  %3035 = vmatprep.subr.bf16.mxu0 %v1901
  %3036 = vmatpush1.bf16.msra.mxu0 %v1900
  %3037 = vmatprep.subr.bf16.mxu0 %v1909
  %3038 = vmatpush1.bf16.msra.mxu0 %v1908
  %3039 = vmatprep.subr.bf16.mxu0 %v1917
  %3040 = vmatpush1.bf16.msra.mxu0 %v1916
  %3041 = vmatprep.subr.bf16.mxu0 %v1925
  %3042 = vmatpush1.bf16.msra.mxu0 %v1924
  %3043 = vmatprep.subr.bf16.mxu0 %v1933
  %3044 = vmatpush1.bf16.msra.mxu0 %v1932
  %3045 = vmatprep.subr.bf16.mxu0 %v1941
  %3046 = vmatpush1.bf16.msra.mxu0 %v1940
  %3047 = vmatprep.subr.bf16.mxu0 %v1949
  %3048 = vmatpush1.bf16.msra.mxu0 %v1948
  %3049 = vmatprep.subr.bf16.mxu0 %v1957
  %3050 = vmatpush1.bf16.msra.mxu0 %v1956
  %3051 = vmatprep.subr.bf16.mxu0 %v1965
  %3052 = vmatpush1.bf16.msra.mxu0 %v1964
  %3053 = vmatprep.subr.bf16.mxu0 %v1973
  %3054 = vmatpush1.bf16.msra.mxu0 %v1972
  %3055 = vmatprep.subr.bf16.mxu0 %v1981
  %3056 = vmatpush1.bf16.msra.mxu0 %v1980
  %3057 = vmatprep.subr.bf16.mxu0 %v1989
  %3058 = vmatpush1.bf16.msra.mxu0 %v1988
  %3059 = vmatprep.subr.bf16.mxu0 %v1997
  %3060 = vmatpush1.bf16.msra.mxu0 %v1996
  %3061 = vmatprep.subr.bf16.mxu0 %v2005
  %3062 = vmatpush1.bf16.msra.mxu0 %v2004
  %3063 = vmatprep.mubr.bf16.mxu0 %v555
  %3064 = vmatmul.mubr.bf16.gmra.mrb[0].mxu0 %v554
  %v3065 = vpop.f32.mrb[0].mxu0
  %v3066 = vadd.f32 %v2993, %v3065
  %v3067 = vpop.f32.mrb[0].mxu0
  %v3068 = vadd.f32 %v2995, %v3067
  %v3069 = vpop.f32.mrb[0].mxu0
  %v3070 = vadd.f32 %v2997, %v3069
  %v3071 = vpop.f32.mrb[0].mxu0
  %v3072 = vadd.f32 %v2999, %v3071
  %3073 = vmatprep.mubr.bf16.mxu0 %v561
  %3074 = vmatmul.mubr.bf16.gmra.mrb[0].mxu0 %v560
  %v3075 = vpop.f32.mrb[0].mxu0
  %v3076 = vadd.f32 %v3003, %v3075
  %v3077 = vpop.f32.mrb[0].mxu0
  %v3078 = vadd.f32 %v3005, %v3077
  %v3079 = vpop.f32.mrb[0].mxu0
  %v3080 = vadd.f32 %v3007, %v3079
  %v3081 = vpop.f32.mrb[0].mxu0
  %v3082 = vadd.f32 %v3009, %v3081
  %3083 = vmatprep.mubr.bf16.mxu0 %v567
  %3084 = vmatmul.mubr.bf16.gmra.mrb[0].mxu0 %v566
  %v3085 = vpop.f32.mrb[0].mxu0
  %v3086 = vadd.f32 %v3013, %v3085
  %v3087 = vpop.f32.mrb[0].mxu0
  %v3088 = vadd.f32 %v3015, %v3087
  %v3089 = vpop.f32.mrb[0].mxu0
  %v3090 = vadd.f32 %v3017, %v3089
  %v3091 = vpop.f32.mrb[0].mxu0
  %v3092 = vadd.f32 %v3019, %v3091
  %3093 = vmatprep.mubr.bf16.mxu0 %v573
  %3094 = vmatmul.mubr.bf16.gmra.mrb[0].mxu0 %v572
  %v3095 = vpop.f32.mrb[0].mxu0
  %v3096 = vadd.f32 %v3023, %v3095
  %v3097 = vpop.f32.mrb[0].mxu0
  %v3098 = vadd.f32 %v3025, %v3097
  %v3099 = vpop.f32.mrb[0].mxu0
  %v3100 = vadd.f32 %v3027, %v3099
  %v3101 = vpop.f32.mrb[0].mxu0
  %v3102 = vadd.f32 %v3029, %v3101
  %3103 = vdwg.mxu0
  %3104 = vmatprep.subr.bf16.mxu0 %v2013
  %3105 = vmatpush1.bf16.msra.mxu0 %v2012
  %3106 = vmatprep.subr.bf16.mxu0 %v2021
  %3107 = vmatpush1.bf16.msra.mxu0 %v2020
  %3108 = vmatprep.subr.bf16.mxu0 %v2029
  %3109 = vmatpush1.bf16.msra.mxu0 %v2028
  %3110 = vmatprep.subr.bf16.mxu0 %v2037
  %3111 = vmatpush1.bf16.msra.mxu0 %v2036
  %3112 = vmatprep.subr.bf16.mxu0 %v2045
  %3113 = vmatpush1.bf16.msra.mxu0 %v2044
  %3114 = vmatprep.subr.bf16.mxu0 %v2053
  %3115 = vmatpush1.bf16.msra.mxu0 %v2052
  %3116 = vmatprep.subr.bf16.mxu0 %v2061
  %3117 = vmatpush1.bf16.msra.mxu0 %v2060
  %3118 = vmatprep.subr.bf16.mxu0 %v2069
  %3119 = vmatpush1.bf16.msra.mxu0 %v2068
  %3120 = vmatprep.subr.bf16.mxu0 %v2077
  %3121 = vmatpush1.bf16.msra.mxu0 %v2076
  %3122 = vmatprep.subr.bf16.mxu0 %v2085
  %3123 = vmatpush1.bf16.msra.mxu0 %v2084
  %3124 = vmatprep.subr.bf16.mxu0 %v2093
  %3125 = vmatpush1.bf16.msra.mxu0 %v2092
  %3126 = vmatprep.subr.bf16.mxu0 %v2101
  %3127 = vmatpush1.bf16.msra.mxu0 %v2100
  %3128 = vmatprep.subr.bf16.mxu0 %v2109
  %3129 = vmatpush1.bf16.msra.mxu0 %v2108
  %3130 = vmatprep.subr.bf16.mxu0 %v2117
  %3131 = vmatpush1.bf16.msra.mxu0 %v2116
  %3132 = vmatprep.subr.bf16.mxu0 %v2125
  %3133 = vmatpush1.bf16.msra.mxu0 %v2124
  %3134 = vmatprep.subr.bf16.mxu0 %v2133
  %3135 = vmatpush1.bf16.msra.mxu0 %v2132
  %3136 = vmatprep.mubr.bf16.mxu0 %v557
  %3137 = vmatmul.mubr.bf16.gmra.mrb[0].mxu0 %v556
  %v3138 = vpop.f32.mrb[0].mxu0
  %v3139 = vadd.f32 %v3066, %v3138
  %v3140 = vpop.f32.mrb[0].mxu0
  %v3141 = vadd.f32 %v3068, %v3140
  %v3142 = vpop.f32.mrb[0].mxu0
  %v3143 = vadd.f32 %v3070, %v3142
  %v3144 = vpop.f32.mrb[0].mxu0
  %v3145 = vadd.f32 %v3072, %v3144
  %3146 = vmatprep.mubr.bf16.mxu0 %v563
  %3147 = vmatmul.mubr.bf16.gmra.mrb[0].mxu0 %v562
  %v3148 = vpop.f32.mrb[0].mxu0
  %v3149 = vadd.f32 %v3076, %v3148
  %v3150 = vpop.f32.mrb[0].mxu0
  %v3151 = vadd.f32 %v3078, %v3150
  %v3152 = vpop.f32.mrb[0].mxu0
  %v3153 = vadd.f32 %v3080, %v3152
  %v3154 = vpop.f32.mrb[0].mxu0
  %v3155 = vadd.f32 %v3082, %v3154
  %3156 = vmatprep.mubr.bf16.mxu0 %v569
  %3157 = vmatmul.mubr.bf16.gmra.mrb[0].mxu0 %v568
  %v3158 = vpop.f32.mrb[0].mxu0
  %v3159 = vadd.f32 %v3086, %v3158
  %v3160 = vpop.f32.mrb[0].mxu0
  %v3161 = vadd.f32 %v3088, %v3160
  %v3162 = vpop.f32.mrb[0].mxu0
  %v3163 = vadd.f32 %v3090, %v3162
  %v3164 = vpop.f32.mrb[0].mxu0
  %v3165 = vadd.f32 %v3092, %v3164
  %3166 = vmatprep.mubr.bf16.mxu0 %v575
  %3167 = vmatmul.mubr.bf16.gmra.mrb[0].mxu0 %v574
  %v3168 = vpop.f32.mrb[0].mxu0
  %v3169 = vadd.f32 %v3096, %v3168
  %v3170 = vpop.f32.mrb[0].mxu0
  %v3171 = vadd.f32 %v3098, %v3170
  %v3172 = vpop.f32.mrb[0].mxu0
  %v3173 = vadd.f32 %v3100, %v3172
  %v3174 = vpop.f32.mrb[0].mxu0
  %v3175 = vadd.f32 %v3102, %v3174
  %3176 = vdwg.mxu0
  %3177 = vmatprep.subr.bf16.mxu0 %v1759
  %3178 = vmatpush1.bf16.msra.mxu0 %v1758
  %3179 = vmatprep.subr.bf16.mxu0 %v1767
  %3180 = vmatpush1.bf16.msra.mxu0 %v1766
  %3181 = vmatprep.subr.bf16.mxu0 %v1775
  %3182 = vmatpush1.bf16.msra.mxu0 %v1774
  %3183 = vmatprep.subr.bf16.mxu0 %v1783
  %3184 = vmatpush1.bf16.msra.mxu0 %v1782
  %3185 = vmatprep.subr.bf16.mxu0 %v1791
  %3186 = vmatpush1.bf16.msra.mxu0 %v1790
  %3187 = vmatprep.subr.bf16.mxu0 %v1799
  %3188 = vmatpush1.bf16.msra.mxu0 %v1798
  %3189 = vmatprep.subr.bf16.mxu0 %v1807
  %3190 = vmatpush1.bf16.msra.mxu0 %v1806
  %3191 = vmatprep.subr.bf16.mxu0 %v1815
  %3192 = vmatpush1.bf16.msra.mxu0 %v1814
  %3193 = vmatprep.subr.bf16.mxu0 %v1823
  %3194 = vmatpush1.bf16.msra.mxu0 %v1822
  %3195 = vmatprep.subr.bf16.mxu0 %v1831
  %3196 = vmatpush1.bf16.msra.mxu0 %v1830
  %3197 = vmatprep.subr.bf16.mxu0 %v1839
  %3198 = vmatpush1.bf16.msra.mxu0 %v1838
  %3199 = vmatprep.subr.bf16.mxu0 %v1847
  %3200 = vmatpush1.bf16.msra.mxu0 %v1846
  %3201 = vmatprep.subr.bf16.mxu0 %v1855
  %3202 = vmatpush1.bf16.msra.mxu0 %v1854
  %3203 = vmatprep.subr.bf16.mxu0 %v1863
  %3204 = vmatpush1.bf16.msra.mxu0 %v1862
  %3205 = vmatprep.subr.bf16.mxu0 %v1871
  %3206 = vmatpush1.bf16.msra.mxu0 %v1870
  %3207 = vmatprep.subr.bf16.mxu0 %v1879
  %3208 = vmatpush1.bf16.msra.mxu0 %v1878
  %3209 = vmatprep.mubr.bf16.mxu0 %v553
  %3210 = vmatmul.mubr.bf16.gmra.mrb[0].mxu0 %v552
  %v3211 = vpop.f32.mrb[0].mxu0
  %v3212 = vadd.f32 %v467, %v3211
  %v3213 = vpop.f32.mrb[0].mxu0
  %v3214 = vadd.f32 %v471, %v3213
  %v3215 = vpop.f32.mrb[0].mxu0
  %v3216 = vadd.f32 %v467, %v3215
  %v3217 = vpop.f32.mrb[0].mxu0
  %v3218 = vadd.f32 %v471, %v3217
  %3219 = vmatprep.mubr.bf16.mxu0 %v559
  %3220 = vmatmul.mubr.bf16.gmra.mrb[0].mxu0 %v558
  %v3221 = vpop.f32.mrb[0].mxu0
  %v3222 = vadd.f32 %v467, %v3221
  %v3223 = vpop.f32.mrb[0].mxu0
  %v3224 = vadd.f32 %v471, %v3223
  %v3225 = vpop.f32.mrb[0].mxu0
  %v3226 = vadd.f32 %v467, %v3225
  %v3227 = vpop.f32.mrb[0].mxu0
  %v3228 = vadd.f32 %v471, %v3227
  %3229 = vmatprep.mubr.bf16.mxu0 %v565
  %3230 = vmatmul.mubr.bf16.gmra.mrb[0].mxu0 %v564
  %v3231 = vpop.f32.mrb[0].mxu0
  %v3232 = vadd.f32 %v467, %v3231
  %v3233 = vpop.f32.mrb[0].mxu0
  %v3234 = vadd.f32 %v471, %v3233
  %v3235 = vpop.f32.mrb[0].mxu0
  %v3236 = vadd.f32 %v467, %v3235
  %v3237 = vpop.f32.mrb[0].mxu0
  %v3238 = vadd.f32 %v471, %v3237
  %3239 = vmatprep.mubr.bf16.mxu0 %v571
  %3240 = vmatmul.mubr.bf16.gmra.mrb[0].mxu0 %v570
  %v3241 = vpop.f32.mrb[0].mxu0
  %v3242 = vadd.f32 %v467, %v3241
  %v3243 = vpop.f32.mrb[0].mxu0
  %v3244 = vadd.f32 %v471, %v3243
  %v3245 = vpop.f32.mrb[0].mxu0
  %v3246 = vadd.f32 %v467, %v3245
  %v3247 = vpop.f32.mrb[0].mxu0
  %v3248 = vadd.f32 %v471, %v3247
  %3249 = vdwg.mxu0
  %3250 = vmatprep.subr.bf16.mxu0 %v1887
  %3251 = vmatpush1.bf16.msra.mxu0 %v1886
  %3252 = vmatprep.subr.bf16.mxu0 %v1895
  %3253 = vmatpush1.bf16.msra.mxu0 %v1894
  %3254 = vmatprep.subr.bf16.mxu0 %v1903
  %3255 = vmatpush1.bf16.msra.mxu0 %v1902
  %3256 = vmatprep.subr.bf16.mxu0 %v1911
  %3257 = vmatpush1.bf16.msra.mxu0 %v1910
  %3258 = vmatprep.subr.bf16.mxu0 %v1919
  %3259 = vmatpush1.bf16.msra.mxu0 %v1918
  %3260 = vmatprep.subr.bf16.mxu0 %v1927
  %3261 = vmatpush1.bf16.msra.mxu0 %v1926
  %3262 = vmatprep.subr.bf16.mxu0 %v1935
  %3263 = vmatpush1.bf16.msra.mxu0 %v1934
  %3264 = vmatprep.subr.bf16.mxu0 %v1943
  %3265 = vmatpush1.bf16.msra.mxu0 %v1942
  %3266 = vmatprep.subr.bf16.mxu0 %v1951
  %3267 = vmatpush1.bf16.msra.mxu0 %v1950
  %3268 = vmatprep.subr.bf16.mxu0 %v1959
  %3269 = vmatpush1.bf16.msra.mxu0 %v1958
  %3270 = vmatprep.subr.bf16.mxu0 %v1967
  %3271 = vmatpush1.bf16.msra.mxu0 %v1966
  %3272 = vmatprep.subr.bf16.mxu0 %v1975
  %3273 = vmatpush1.bf16.msra.mxu0 %v1974
  %3274 = vmatprep.subr.bf16.mxu0 %v1983
  %3275 = vmatpush1.bf16.msra.mxu0 %v1982
  %3276 = vmatprep.subr.bf16.mxu0 %v1991
  %3277 = vmatpush1.bf16.msra.mxu0 %v1990
  %3278 = vmatprep.subr.bf16.mxu0 %v1999
  %3279 = vmatpush1.bf16.msra.mxu0 %v1998
  %3280 = vmatprep.subr.bf16.mxu0 %v2007
  %3281 = vmatpush1.bf16.msra.mxu0 %v2006
  %3282 = vmatprep.mubr.bf16.mxu0 %v555
  %3283 = vmatmul.mubr.bf16.gmra.mrb[0].mxu0 %v554
  %v3284 = vpop.f32.mrb[0].mxu0
  %v3285 = vadd.f32 %v3212, %v3284
  %v3286 = vpop.f32.mrb[0].mxu0
  %v3287 = vadd.f32 %v3214, %v3286
  %v3288 = vpop.f32.mrb[0].mxu0
  %v3289 = vadd.f32 %v3216, %v3288
  %v3290 = vpop.f32.mrb[0].mxu0
  %v3291 = vadd.f32 %v3218, %v3290
  %3292 = vmatprep.mubr.bf16.mxu0 %v561
  %3293 = vmatmul.mubr.bf16.gmra.mrb[0].mxu0 %v560
  %v3294 = vpop.f32.mrb[0].mxu0
  %v3295 = vadd.f32 %v3222, %v3294
  %v3296 = vpop.f32.mrb[0].mxu0
  %v3297 = vadd.f32 %v3224, %v3296
  %v3298 = vpop.f32.mrb[0].mxu0
  %v3299 = vadd.f32 %v3226, %v3298
  %v3300 = vpop.f32.mrb[0].mxu0
  %v3301 = vadd.f32 %v3228, %v3300
  %3302 = vmatprep.mubr.bf16.mxu0 %v567
  %3303 = vmatmul.mubr.bf16.gmra.mrb[0].mxu0 %v566
  %v3304 = vpop.f32.mrb[0].mxu0
  %v3305 = vadd.f32 %v3232, %v3304
  %v3306 = vpop.f32.mrb[0].mxu0
  %v3307 = vadd.f32 %v3234, %v3306
  %v3308 = vpop.f32.mrb[0].mxu0
  %v3309 = vadd.f32 %v3236, %v3308
  %v3310 = vpop.f32.mrb[0].mxu0
  %v3311 = vadd.f32 %v3238, %v3310
  %3312 = vmatprep.mubr.bf16.mxu0 %v573
  %3313 = vmatmul.mubr.bf16.gmra.mrb[0].mxu0 %v572
  %v3314 = vpop.f32.mrb[0].mxu0
  %v3315 = vadd.f32 %v3242, %v3314
  %v3316 = vpop.f32.mrb[0].mxu0
  %v3317 = vadd.f32 %v3244, %v3316
  %v3318 = vpop.f32.mrb[0].mxu0
  %v3319 = vadd.f32 %v3246, %v3318
  %v3320 = vpop.f32.mrb[0].mxu0
  %v3321 = vadd.f32 %v3248, %v3320
  %3322 = vdwg.mxu0
  %3323 = vmatprep.subr.bf16.mxu0 %v2015
  %3324 = vmatpush1.bf16.msra.mxu0 %v2014
  %3325 = vmatprep.subr.bf16.mxu0 %v2023
  %3326 = vmatpush1.bf16.msra.mxu0 %v2022
  %3327 = vmatprep.subr.bf16.mxu0 %v2031
  %3328 = vmatpush1.bf16.msra.mxu0 %v2030
  %3329 = vmatprep.subr.bf16.mxu0 %v2039
  %3330 = vmatpush1.bf16.msra.mxu0 %v2038
  %3331 = vmatprep.subr.bf16.mxu0 %v2047
  %3332 = vmatpush1.bf16.msra.mxu0 %v2046
  %3333 = vmatprep.subr.bf16.mxu0 %v2055
  %3334 = vmatpush1.bf16.msra.mxu0 %v2054
  %3335 = vmatprep.subr.bf16.mxu0 %v2063
  %3336 = vmatpush1.bf16.msra.mxu0 %v2062
  %3337 = vmatprep.subr.bf16.mxu0 %v2071
  %3338 = vmatpush1.bf16.msra.mxu0 %v2070
  %3339 = vmatprep.subr.bf16.mxu0 %v2079
  %3340 = vmatpush1.bf16.msra.mxu0 %v2078
  %3341 = vmatprep.subr.bf16.mxu0 %v2087
  %3342 = vmatpush1.bf16.msra.mxu0 %v2086
  %3343 = vmatprep.subr.bf16.mxu0 %v2095
  %3344 = vmatpush1.bf16.msra.mxu0 %v2094
  %3345 = vmatprep.subr.bf16.mxu0 %v2103
  %3346 = vmatpush1.bf16.msra.mxu0 %v2102
  %3347 = vmatprep.subr.bf16.mxu0 %v2111
  %3348 = vmatpush1.bf16.msra.mxu0 %v2110
  %3349 = vmatprep.subr.bf16.mxu0 %v2119
  %3350 = vmatpush1.bf16.msra.mxu0 %v2118
  %3351 = vmatprep.subr.bf16.mxu0 %v2127
  %3352 = vmatpush1.bf16.msra.mxu0 %v2126
  %3353 = vmatprep.subr.bf16.mxu0 %v2135
  %3354 = vmatpush1.bf16.msra.mxu0 %v2134
  %3355 = vmatprep.mubr.bf16.mxu0 %v557
  %3356 = vmatmul.mubr.bf16.gmra.mrb[0].mxu0 %v556
  %v3357 = vpop.f32.mrb[0].mxu0
  %v3358 = vadd.f32 %v3285, %v3357
  %v3359 = vpop.f32.mrb[0].mxu0
  %v3360 = vadd.f32 %v3287, %v3359
  %v3361 = vpop.f32.mrb[0].mxu0
  %v3362 = vadd.f32 %v3289, %v3361
  %v3363 = vpop.f32.mrb[0].mxu0
  %v3364 = vadd.f32 %v3291, %v3363
  %3365 = vmatprep.mubr.bf16.mxu0 %v563
  %3366 = vmatmul.mubr.bf16.gmra.mrb[0].mxu0 %v562
  %v3367 = vpop.f32.mrb[0].mxu0
  %v3368 = vadd.f32 %v3295, %v3367
  %v3369 = vpop.f32.mrb[0].mxu0
  %v3370 = vadd.f32 %v3297, %v3369
  %v3371 = vpop.f32.mrb[0].mxu0
  %v3372 = vadd.f32 %v3299, %v3371
  %v3373 = vpop.f32.mrb[0].mxu0
  %v3374 = vadd.f32 %v3301, %v3373
  %3375 = vmatprep.mubr.bf16.mxu0 %v569
  %3376 = vmatmul.mubr.bf16.gmra.mrb[0].mxu0 %v568
  %v3377 = vpop.f32.mrb[0].mxu0
  %v3378 = vadd.f32 %v3305, %v3377
  %v3379 = vpop.f32.mrb[0].mxu0
  %v3380 = vadd.f32 %v3307, %v3379
  %v3381 = vpop.f32.mrb[0].mxu0
  %v3382 = vadd.f32 %v3309, %v3381
  %v3383 = vpop.f32.mrb[0].mxu0
  %v3384 = vadd.f32 %v3311, %v3383
  %3385 = vmatprep.mubr.bf16.mxu0 %v575
  %3386 = vmatmul.mubr.bf16.gmra.mrb[0].mxu0 %v574
  %v3387 = vpop.f32.mrb[0].mxu0
  %v3388 = vadd.f32 %v3315, %v3387
  %v3389 = vpop.f32.mrb[0].mxu0
  %v3390 = vadd.f32 %v3317, %v3389
  %v3391 = vpop.f32.mrb[0].mxu0
  %v3392 = vadd.f32 %v3319, %v3391
  %v3393 = vpop.f32.mrb[0].mxu0
  %v3394 = vadd.f32 %v3321, %v3393
  %3395 = vdwg.mxu0
  %3396 = vst [vmem:[#allocation2] sm:$0xff] %v2701
  %3397 = vst [vmem:[#allocation2 + $0x8] sm:$0xff] %v2703
  %3398 = vst [vmem:[#allocation2 + $0x10] sm:$0xff] %v2920
  %3399 = vst [vmem:[#allocation2 + $0x18] sm:$0xff] %v2922
  %3400 = vst [vmem:[#allocation2 + $0x20] sm:$0xff] %v3139
  %3401 = vst [vmem:[#allocation2 + $0x28] sm:$0xff] %v3141
  %3402 = vst [vmem:[#allocation2 + $0x30] sm:$0xff] %v3358
  %3403 = vst [vmem:[#allocation2 + $0x38] sm:$0xff] %v3360
  %3404 = vst [vmem:[#allocation2 + $0x40] sm:$0xff] %v2705
  %3405 = vst [vmem:[#allocation2 + $0x48] sm:$0xff] %v2707
  %3406 = vst [vmem:[#allocation2 + $0x50] sm:$0xff] %v2924
  %3407 = vst [vmem:[#allocation2 + $0x58] sm:$0xff] %v2926
  %3408 = vst [vmem:[#allocation2 + $0x60] sm:$0xff] %v3143
  %3409 = vst [vmem:[#allocation2 + $0x68] sm:$0xff] %v3145
  %3410 = vst [vmem:[#allocation2 + $0x70] sm:$0xff] %v3362
  %3411 = vst [vmem:[#allocation2 + $0x78] sm:$0xff] %v3364
  %3412 = vst [vmem:[#allocation2 + $0x80] sm:$0xff] %v2711
  %3413 = vst [vmem:[#allocation2 + $0x88] sm:$0xff] %v2713
  %3414 = vst [vmem:[#allocation2 + $0x90] sm:$0xff] %v2930
  %3415 = vst [vmem:[#allocation2 + $0x98] sm:$0xff] %v2932
  %3416 = vst [vmem:[#allocation2 + $0xa0] sm:$0xff] %v3149
  %3417 = vst [vmem:[#allocation2 + $0xa8] sm:$0xff] %v3151
  %3418 = vst [vmem:[#allocation2 + $0xb0] sm:$0xff] %v3368
  %3419 = vst [vmem:[#allocation2 + $0xb8] sm:$0xff] %v3370
  %3420 = vst [vmem:[#allocation2 + $0xc0] sm:$0xff] %v2715
  %3421 = vst [vmem:[#allocation2 + $0xc8] sm:$0xff] %v2717
  %3422 = vst [vmem:[#allocation2 + $0xd0] sm:$0xff] %v2934
  %3423 = vst [vmem:[#allocation2 + $0xd8] sm:$0xff] %v2936
  %3424 = vst [vmem:[#allocation2 + $0xe0] sm:$0xff] %v3153
  %3425 = vst [vmem:[#allocation2 + $0xe8] sm:$0xff] %v3155
  %3426 = vst [vmem:[#allocation2 + $0xf0] sm:$0xff] %v3372
  %3427 = vst [vmem:[#allocation2 + $0xf8] sm:$0xff] %v3374
  %3428 = vst [vmem:[#allocation2 + $0x100] sm:$0xff] %v2721
  %3429 = vst [vmem:[#allocation2 + $0x108] sm:$0xff] %v2723
  %3430 = vst [vmem:[#allocation2 + $0x110] sm:$0xff] %v2940
  %3431 = vst [vmem:[#allocation2 + $0x118] sm:$0xff] %v2942
  %3432 = vst [vmem:[#allocation2 + $0x120] sm:$0xff] %v3159
  %3433 = vst [vmem:[#allocation2 + $0x128] sm:$0xff] %v3161
  %3434 = vst [vmem:[#allocation2 + $0x130] sm:$0xff] %v3378
  %3435 = vst [vmem:[#allocation2 + $0x138] sm:$0xff] %v3380
  %3436 = vst [vmem:[#allocation2 + $0x140] sm:$0xff] %v2725
  %3437 = vst [vmem:[#allocation2 + $0x148] sm:$0xff] %v2727
  %3438 = vst [vmem:[#allocation2 + $0x150] sm:$0xff] %v2944
  %3439 = vst [vmem:[#allocation2 + $0x158] sm:$0xff] %v2946
  %3440 = vst [vmem:[#allocation2 + $0x160] sm:$0xff] %v3163
  %3441 = vst [vmem:[#allocation2 + $0x168] sm:$0xff] %v3165
  %3442 = vst [vmem:[#allocation2 + $0x170] sm:$0xff] %v3382
  %3443 = vst [vmem:[#allocation2 + $0x178] sm:$0xff] %v3384
  %3444 = vst [vmem:[#allocation2 + $0x180] sm:$0xff] %v2731
  %3445 = vst [vmem:[#allocation2 + $0x188] sm:$0xff] %v2733
  %3446 = vst [vmem:[#allocation2 + $0x190] sm:$0xff] %v2950
  %3447 = vst [vmem:[#allocation2 + $0x198] sm:$0xff] %v2952
  %3448 = vst [vmem:[#allocation2 + $0x1a0] sm:$0xff] %v3169
  %3449 = vst [vmem:[#allocation2 + $0x1a8] sm:$0xff] %v3171
  %3450 = vst [vmem:[#allocation2 + $0x1b0] sm:$0xff] %v3388
  %3451 = vst [vmem:[#allocation2 + $0x1b8] sm:$0xff] %v3390
  %3452 = vst [vmem:[#allocation2 + $0x1c0] sm:$0xff] %v2735
  %3453 = vst [vmem:[#allocation2 + $0x1c8] sm:$0xff] %v2737
  %3454 = vst [vmem:[#allocation2 + $0x1d0] sm:$0xff] %v2954
  %3455 = vst [vmem:[#allocation2 + $0x1d8] sm:$0xff] %v2956
  %3456 = vst [vmem:[#allocation2 + $0x1e0] sm:$0xff] %v3173
  %3457 = vst [vmem:[#allocation2 + $0x1e8] sm:$0xff] %v3175
  %3458 = vst [vmem:[#allocation2 + $0x1f0] sm:$0xff] %v3392
  %3459 = vst [vmem:[#allocation2 + $0x1f8] sm:$0xff] %v3394
  %v3460 = vld [vmem:[%s5] sm:$0xff]
  %v3462 = vlaneseq
  %v3463 = vshrl.u32 %v3462, 7
  %v3464 = vsub.s32 0, %v3463
  %v3465 = vrot.slane %v3460, %v3464
  %v3466 = vlaneseq
  %v3467 = vshrl.u32 %v3466, 7
  %v3468 = vsub.s32 1, %v3467
  %v3469 = vrot.slane %v3460, %v3468
  %v3470 = vlaneseq
  %v3471 = vshrl.u32 %v3470, 7
  %v3472 = vsub.s32 2, %v3471
  %v3473 = vrot.slane %v3460, %v3472
  %v3474 = vlaneseq
  %v3475 = vshrl.u32 %v3474, 7
  %v3476 = vsub.s32 3, %v3475
  %v3477 = vrot.slane %v3460, %v3476
  %v3478 = vlaneseq
  %v3479 = vshrl.u32 %v3478, 7
  %v3480 = vsub.s32 4, %v3479
  %v3481 = vrot.slane %v3460, %v3480
  %v3482 = vlaneseq
  %v3483 = vshrl.u32 %v3482, 7
  %v3484 = vsub.s32 5, %v3483
  %v3485 = vrot.slane %v3460, %v3484
  %v3486 = vlaneseq
  %v3487 = vshrl.u32 %v3486, 7
  %v3488 = vsub.s32 6, %v3487
  %v3489 = vrot.slane %v3460, %v3488
  %v3490 = vlaneseq
  %v3491 = vshrl.u32 %v3490, 7
  %v3492 = vsub.s32 7, %v3491
  %v3493 = vrot.slane %v3460, %v3492
  %v3502 = vld [vmem:[#allocation2] sm:$0xff]
  %v3503 = vld [vmem:[#allocation2 + $0x8] sm:$0xff]
  %v3504 = vld [vmem:[#allocation2 + $0x10] sm:$0xff]
  %v3505 = vld [vmem:[#allocation2 + $0x18] sm:$0xff]
  %v3506 = vld [vmem:[#allocation2 + $0x20] sm:$0xff]
  %v3507 = vld [vmem:[#allocation2 + $0x28] sm:$0xff]
  %v3508 = vld [vmem:[#allocation2 + $0x30] sm:$0xff]
  %v3509 = vld [vmem:[#allocation2 + $0x38] sm:$0xff]
  %v3510 = vxor.u32 %v3502, 2147483648
  %v3511 = vxor.u32 %v3503, 2147483648
  %v3512 = vxor.u32 %v3504, 2147483648
  %v3513 = vxor.u32 %v3505, 2147483648
  %v3514 = vxor.u32 %v3506, 2147483648
  %v3515 = vxor.u32 %v3507, 2147483648
  %v3516 = vmul.f32 %v3510, 1.442695
  %v3517 = vpow.pop %v3516
  %v3518 = vmul.f32 %v3511, 1.442695
  %v3519 = vpow.pop %v3518
  %v3520 = vmul.f32 %v3512, 1.442695
  %v3521 = vpow.pop %v3520
  %v3522 = vmul.f32 %v3513, 1.442695
  %v3523 = vpow.pop %v3522
  %v3524 = vmul.f32 %v3514, 1.442695
  %v3525 = vpow.pop %v3524
  %v3526 = vmul.f32 %v3515, 1.442695
  %v3527 = vpow.pop %v3526
  %v3528 = vadd.f32 %v3517, 1.0
  %v3529 = vadd.f32 %v3519, 1.0
  %v3530 = vadd.f32 %v3521, 1.0
  %v3531 = vadd.f32 %v3523, 1.0
  %v3532 = vadd.f32 %v3525, 1.0
  %v3533 = vadd.f32 %v3527, 1.0
  %v3534 = vrcp.pop %v3528
  %v3535 = vmul.f32 1.0, %v3534
  %v3536 = vrcp.pop %v3529
  %v3537 = vmul.f32 1.0, %v3536
  %v3538 = vrcp.pop %v3530
  %v3539 = vmul.f32 1.0, %v3538
  %v3540 = vrcp.pop %v3531
  %v3541 = vmul.f32 1.0, %v3540
  %v3542 = vrcp.pop %v3532
  %v3543 = vmul.f32 1.0, %v3542
  %v3544 = vrcp.pop %v3533
  %v3545 = vmul.f32 1.0, %v3544
  %v3546 = vtanh.pop %v3508
  %v3547 = vtanh.pop %v3509
  %v3548 = vmul.f32 %v3539, 0.0
  %v3549 = vmul.f32 %v3541, 0.0
  %v3550 = vmul.f32 %v3535, %v3546
  %v3551 = vmul.f32 %v3537, %v3547
  %v3552 = vadd.f32 %v3548, %v3550
  %v3553 = vadd.f32 %v3549, %v3551
  %v3554 = vtanh.pop %v3552
  %v3555 = vtanh.pop %v3553
  %v3556 = vmul.f32 %v3543, %v3554
  %v3557 = vmul.f32 %v3545, %v3555
  %v3558 = vpack.c.bf16 %v3556, %v3556
  %v3559 = vpack.c.bf16 %v3557, %v3557
  %v3560 = vld [vmem:[%s4] sm:$0xff]
  %v3561 = vld [vmem:[%s4 + $0x8] sm:$0xff]
  %v3562 = vld [vmem:[%s4 + $0x10] sm:$0xff]
  %v3563 = vld [vmem:[%s4 + $0x18] sm:$0xff]
  %v3564 = vld [vmem:[%s4 + $0x20] sm:$0xff]
  %v3565 = vld [vmem:[%s4 + $0x28] sm:$0xff]
  %v3566 = vld [vmem:[%s4 + $0x30] sm:$0xff]
  %v3567 = vld [vmem:[%s4 + $0x38] sm:$0xff]
  %v3568 = vld [vmem:[%s4 + $0x40] sm:$0xff]
  %v3569 = vld [vmem:[%s4 + $0x48] sm:$0xff]
  %v3570 = vld [vmem:[%s4 + $0x50] sm:$0xff]
  %v3571 = vld [vmem:[%s4 + $0x58] sm:$0xff]
  %v3572 = vld [vmem:[%s4 + $0x60] sm:$0xff]
  %v3573 = vld [vmem:[%s4 + $0x68] sm:$0xff]
  %v3574 = vld [vmem:[%s4 + $0x70] sm:$0xff]
  %v3575 = vld [vmem:[%s4 + $0x78] sm:$0xff]
  %v3576 = vld [vmem:[%s4 + $0x80] sm:$0xff]
  %v3577 = vld [vmem:[%s4 + $0x88] sm:$0xff]
  %v3578 = vld [vmem:[%s4 + $0x90] sm:$0xff]
  %v3579 = vld [vmem:[%s4 + $0x98] sm:$0xff]
  %v3580 = vld [vmem:[%s4 + $0xa0] sm:$0xff]
  %v3581 = vld [vmem:[%s4 + $0xa8] sm:$0xff]
  %v3582 = vld [vmem:[%s4 + $0xb0] sm:$0xff]
  %v3583 = vld [vmem:[%s4 + $0xb8] sm:$0xff]
  %v3584 = vld [vmem:[%s4 + $0xc0] sm:$0xff]
  %v3585 = vld [vmem:[%s4 + $0xc8] sm:$0xff]
  %v3586 = vld [vmem:[%s4 + $0xd0] sm:$0xff]
  %v3587 = vld [vmem:[%s4 + $0xd8] sm:$0xff]
  %v3588 = vld [vmem:[%s4 + $0xe0] sm:$0xff]
  %v3589 = vld [vmem:[%s4 + $0xe8] sm:$0xff]
  %v3590 = vld [vmem:[%s4 + $0xf0] sm:$0xff]
  %v3591 = vld [vmem:[%s4 + $0xf8] sm:$0xff]
  %v3592 = vld [vmem:[%s4 + $0x100] sm:$0xff]
  %v3593 = vld [vmem:[%s4 + $0x108] sm:$0xff]
  %v3594 = vld [vmem:[%s4 + $0x110] sm:$0xff]
  %v3595 = vld [vmem:[%s4 + $0x118] sm:$0xff]
  %v3596 = vld [vmem:[%s4 + $0x120] sm:$0xff]
  %v3597 = vld [vmem:[%s4 + $0x128] sm:$0xff]
  %v3598 = vld [vmem:[%s4 + $0x130] sm:$0xff]
  %v3599 = vld [vmem:[%s4 + $0x138] sm:$0xff]
  %v3600 = vld [vmem:[%s4 + $0x140] sm:$0xff]
  %v3601 = vld [vmem:[%s4 + $0x148] sm:$0xff]
  %v3602 = vld [vmem:[%s4 + $0x150] sm:$0xff]
  %v3603 = vld [vmem:[%s4 + $0x158] sm:$0xff]
  %v3604 = vld [vmem:[%s4 + $0x160] sm:$0xff]
  %v3605 = vld [vmem:[%s4 + $0x168] sm:$0xff]
  %v3606 = vld [vmem:[%s4 + $0x170] sm:$0xff]
  %v3607 = vld [vmem:[%s4 + $0x178] sm:$0xff]
  %v3608 = vld [vmem:[%s4 + $0x180] sm:$0xff]
  %v3609 = vld [vmem:[%s4 + $0x188] sm:$0xff]
  %v3610 = vld [vmem:[%s4 + $0x190] sm:$0xff]
  %v3611 = vld [vmem:[%s4 + $0x198] sm:$0xff]
  %v3612 = vld [vmem:[%s4 + $0x1a0] sm:$0xff]
  %v3613 = vld [vmem:[%s4 + $0x1a8] sm:$0xff]
  %v3614 = vld [vmem:[%s4 + $0x1b0] sm:$0xff]
  %v3615 = vld [vmem:[%s4 + $0x1b8] sm:$0xff]
  %v3616 = vld [vmem:[%s4 + $0x1c0] sm:$0xff]
  %v3617 = vld [vmem:[%s4 + $0x1c8] sm:$0xff]
  %v3618 = vld [vmem:[%s4 + $0x1d0] sm:$0xff]
  %v3619 = vld [vmem:[%s4 + $0x1d8] sm:$0xff]
  %v3620 = vld [vmem:[%s4 + $0x1e0] sm:$0xff]
  %v3621 = vld [vmem:[%s4 + $0x1e8] sm:$0xff]
  %v3622 = vld [vmem:[%s4 + $0x1f0] sm:$0xff]
  %v3623 = vld [vmem:[%s4 + $0x1f8] sm:$0xff]
  %v3624 = vld [vmem:[%s4 + $0x200] sm:$0xff]
  %v3625 = vld [vmem:[%s4 + $0x208] sm:$0xff]
  %v3626 = vld [vmem:[%s4 + $0x210] sm:$0xff]
  %v3627 = vld [vmem:[%s4 + $0x218] sm:$0xff]
  %v3628 = vld [vmem:[%s4 + $0x220] sm:$0xff]
  %v3629 = vld [vmem:[%s4 + $0x228] sm:$0xff]
  %v3630 = vld [vmem:[%s4 + $0x230] sm:$0xff]
  %v3631 = vld [vmem:[%s4 + $0x238] sm:$0xff]
  %v3632 = vld [vmem:[%s4 + $0x240] sm:$0xff]
  %v3633 = vld [vmem:[%s4 + $0x248] sm:$0xff]
  %v3634 = vld [vmem:[%s4 + $0x250] sm:$0xff]
  %v3635 = vld [vmem:[%s4 + $0x258] sm:$0xff]
  %v3636 = vld [vmem:[%s4 + $0x260] sm:$0xff]
  %v3637 = vld [vmem:[%s4 + $0x268] sm:$0xff]
  %v3638 = vld [vmem:[%s4 + $0x270] sm:$0xff]
  %v3639 = vld [vmem:[%s4 + $0x278] sm:$0xff]
  %v3640 = vld [vmem:[%s4 + $0x280] sm:$0xff]
  %v3641 = vld [vmem:[%s4 + $0x288] sm:$0xff]
  %v3642 = vld [vmem:[%s4 + $0x290] sm:$0xff]
  %v3643 = vld [vmem:[%s4 + $0x298] sm:$0xff]
  %v3644 = vld [vmem:[%s4 + $0x2a0] sm:$0xff]
  %v3645 = vld [vmem:[%s4 + $0x2a8] sm:$0xff]
  %v3646 = vld [vmem:[%s4 + $0x2b0] sm:$0xff]
  %v3647 = vld [vmem:[%s4 + $0x2b8] sm:$0xff]
  %v3648 = vld [vmem:[%s4 + $0x2c0] sm:$0xff]
  %v3649 = vld [vmem:[%s4 + $0x2c8] sm:$0xff]
  %v3650 = vld [vmem:[%s4 + $0x2d0] sm:$0xff]
  %v3651 = vld [vmem:[%s4 + $0x2d8] sm:$0xff]
  %v3652 = vld [vmem:[%s4 + $0x2e0] sm:$0xff]
  %v3653 = vld [vmem:[%s4 + $0x2e8] sm:$0xff]
  %v3654 = vld [vmem:[%s4 + $0x2f0] sm:$0xff]
  %v3655 = vld [vmem:[%s4 + $0x2f8] sm:$0xff]
  %v3656 = vld [vmem:[%s4 + $0x300] sm:$0xff]
  %v3657 = vld [vmem:[%s4 + $0x308] sm:$0xff]
  %v3658 = vld [vmem:[%s4 + $0x310] sm:$0xff]
  %v3659 = vld [vmem:[%s4 + $0x318] sm:$0xff]
  %v3660 = vld [vmem:[%s4 + $0x320] sm:$0xff]
  %v3661 = vld [vmem:[%s4 + $0x328] sm:$0xff]
  %v3662 = vld [vmem:[%s4 + $0x330] sm:$0xff]
  %v3663 = vld [vmem:[%s4 + $0x338] sm:$0xff]
  %v3664 = vld [vmem:[%s4 + $0x340] sm:$0xff]
  %v3665 = vld [vmem:[%s4 + $0x348] sm:$0xff]
  %v3666 = vld [vmem:[%s4 + $0x350] sm:$0xff]
  %v3667 = vld [vmem:[%s4 + $0x358] sm:$0xff]
  %v3668 = vld [vmem:[%s4 + $0x360] sm:$0xff]
  %v3669 = vld [vmem:[%s4 + $0x368] sm:$0xff]
  %v3670 = vld [vmem:[%s4 + $0x370] sm:$0xff]
  %v3671 = vld [vmem:[%s4 + $0x378] sm:$0xff]
  %v3672 = vld [vmem:[%s4 + $0x380] sm:$0xff]
  %v3673 = vld [vmem:[%s4 + $0x388] sm:$0xff]
  %v3674 = vld [vmem:[%s4 + $0x390] sm:$0xff]
  %v3675 = vld [vmem:[%s4 + $0x398] sm:$0xff]
  %v3676 = vld [vmem:[%s4 + $0x3a0] sm:$0xff]
  %v3677 = vld [vmem:[%s4 + $0x3a8] sm:$0xff]
  %v3678 = vld [vmem:[%s4 + $0x3b0] sm:$0xff]
  %v3679 = vld [vmem:[%s4 + $0x3b8] sm:$0xff]
  %v3680 = vld [vmem:[%s4 + $0x3c0] sm:$0xff]
  %v3681 = vld [vmem:[%s4 + $0x3c8] sm:$0xff]
  %v3682 = vld [vmem:[%s4 + $0x3d0] sm:$0xff]
  %v3683 = vld [vmem:[%s4 + $0x3d8] sm:$0xff]
  %v3684 = vld [vmem:[%s4 + $0x3e0] sm:$0xff]
  %v3685 = vld [vmem:[%s4 + $0x3e8] sm:$0xff]
  %v3686 = vld [vmem:[%s4 + $0x3f0] sm:$0xff]
  %v3687 = vld [vmem:[%s4 + $0x3f8] sm:$0xff]
  %v3816 = vunpack.c.l.b16 %v3560
  %v3817 = vunpack.c.h.b16 %v3560
  %v3818 = vunpack.c.l.b16 %v3561
  %v3819 = vunpack.c.h.b16 %v3561
  %v3820 = vunpack.c.l.b16 %v3562
  %v3821 = vunpack.c.h.b16 %v3562
  %v3822 = vunpack.c.l.b16 %v3563
  %v3823 = vunpack.c.h.b16 %v3563
  %v3824 = vunpack.c.l.b16 %v3564
  %v3825 = vunpack.c.h.b16 %v3564
  %v3826 = vunpack.c.l.b16 %v3565
  %v3827 = vunpack.c.h.b16 %v3565
  %v3828 = vunpack.c.l.b16 %v3566
  %v3829 = vunpack.c.h.b16 %v3566
  %v3830 = vunpack.c.l.b16 %v3567
  %v3831 = vunpack.c.h.b16 %v3567
  %v3832 = vunpack.c.l.b16 %v3568
  %v3833 = vunpack.c.h.b16 %v3568
  %v3834 = vunpack.c.l.b16 %v3569
  %v3835 = vunpack.c.h.b16 %v3569
  %v3836 = vunpack.c.l.b16 %v3570
  %v3837 = vunpack.c.h.b16 %v3570
  %v3838 = vunpack.c.l.b16 %v3571
  %v3839 = vunpack.c.h.b16 %v3571
  %v3840 = vunpack.c.l.b16 %v3572
  %v3841 = vunpack.c.h.b16 %v3572
  %v3842 = vunpack.c.l.b16 %v3573
  %v3843 = vunpack.c.h.b16 %v3573
  %v3844 = vunpack.c.l.b16 %v3574
  %v3845 = vunpack.c.h.b16 %v3574
  %v3846 = vunpack.c.l.b16 %v3575
  %v3847 = vunpack.c.h.b16 %v3575
  %v3848 = vunpack.c.l.b16 %v3576
  %v3849 = vunpack.c.h.b16 %v3576
  %v3850 = vunpack.c.l.b16 %v3577
  %v3851 = vunpack.c.h.b16 %v3577
  %v3852 = vunpack.c.l.b16 %v3578
  %v3853 = vunpack.c.h.b16 %v3578
  %v3854 = vunpack.c.l.b16 %v3579
  %v3855 = vunpack.c.h.b16 %v3579
  %v3856 = vunpack.c.l.b16 %v3580
  %v3857 = vunpack.c.h.b16 %v3580
  %v3858 = vunpack.c.l.b16 %v3581
  %v3859 = vunpack.c.h.b16 %v3581
  %v3860 = vunpack.c.l.b16 %v3582
  %v3861 = vunpack.c.h.b16 %v3582
  %v3862 = vunpack.c.l.b16 %v3583
  %v3863 = vunpack.c.h.b16 %v3583
  %v3864 = vunpack.c.l.b16 %v3584
  %v3865 = vunpack.c.h.b16 %v3584
  %v3866 = vunpack.c.l.b16 %v3585
  %v3867 = vunpack.c.h.b16 %v3585
  %v3868 = vunpack.c.l.b16 %v3586
  %v3869 = vunpack.c.h.b16 %v3586
  %v3870 = vunpack.c.l.b16 %v3587
  %v3871 = vunpack.c.h.b16 %v3587
  %v3872 = vunpack.c.l.b16 %v3588
  %v3873 = vunpack.c.h.b16 %v3588
  %v3874 = vunpack.c.l.b16 %v3589
  %v3875 = vunpack.c.h.b16 %v3589
  %v3876 = vunpack.c.l.b16 %v3590
  %v3877 = vunpack.c.h.b16 %v3590
  %v3878 = vunpack.c.l.b16 %v3591
  %v3879 = vunpack.c.h.b16 %v3591
  %v3880 = vunpack.c.l.b16 %v3592
  %v3881 = vunpack.c.h.b16 %v3592
  %v3882 = vunpack.c.l.b16 %v3593
  %v3883 = vunpack.c.h.b16 %v3593
  %v3884 = vunpack.c.l.b16 %v3594
  %v3885 = vunpack.c.h.b16 %v3594
  %v3886 = vunpack.c.l.b16 %v3595
  %v3887 = vunpack.c.h.b16 %v3595
  %v3888 = vunpack.c.l.b16 %v3596
  %v3889 = vunpack.c.h.b16 %v3596
  %v3890 = vunpack.c.l.b16 %v3597
  %v3891 = vunpack.c.h.b16 %v3597
  %v3892 = vunpack.c.l.b16 %v3598
  %v3893 = vunpack.c.h.b16 %v3598
  %v3894 = vunpack.c.l.b16 %v3599
  %v3895 = vunpack.c.h.b16 %v3599
  %v3896 = vunpack.c.l.b16 %v3600
  %v3897 = vunpack.c.h.b16 %v3600
  %v3898 = vunpack.c.l.b16 %v3601
  %v3899 = vunpack.c.h.b16 %v3601
  %v3900 = vunpack.c.l.b16 %v3602
  %v3901 = vunpack.c.h.b16 %v3602
  %v3902 = vunpack.c.l.b16 %v3603
  %v3903 = vunpack.c.h.b16 %v3603
  %v3904 = vunpack.c.l.b16 %v3604
  %v3905 = vunpack.c.h.b16 %v3604
  %v3906 = vunpack.c.l.b16 %v3605
  %v3907 = vunpack.c.h.b16 %v3605
  %v3908 = vunpack.c.l.b16 %v3606
  %v3909 = vunpack.c.h.b16 %v3606
  %v3910 = vunpack.c.l.b16 %v3607
  %v3911 = vunpack.c.h.b16 %v3607
  %v3912 = vunpack.c.l.b16 %v3608
  %v3913 = vunpack.c.h.b16 %v3608
  %v3914 = vunpack.c.l.b16 %v3609
  %v3915 = vunpack.c.h.b16 %v3609
  %v3916 = vunpack.c.l.b16 %v3610
  %v3917 = vunpack.c.h.b16 %v3610
  %v3918 = vunpack.c.l.b16 %v3611
  %v3919 = vunpack.c.h.b16 %v3611
  %v3920 = vunpack.c.l.b16 %v3612
  %v3921 = vunpack.c.h.b16 %v3612
  %v3922 = vunpack.c.l.b16 %v3613
  %v3923 = vunpack.c.h.b16 %v3613
  %v3924 = vunpack.c.l.b16 %v3614
  %v3925 = vunpack.c.h.b16 %v3614
  %v3926 = vunpack.c.l.b16 %v3615
  %v3927 = vunpack.c.h.b16 %v3615
  %v3928 = vunpack.c.l.b16 %v3616
  %v3929 = vunpack.c.h.b16 %v3616
  %v3930 = vunpack.c.l.b16 %v3617
  %v3931 = vunpack.c.h.b16 %v3617
  %v3932 = vunpack.c.l.b16 %v3618
  %v3933 = vunpack.c.h.b16 %v3618
  %v3934 = vunpack.c.l.b16 %v3619
  %v3935 = vunpack.c.h.b16 %v3619
  %v3936 = vunpack.c.l.b16 %v3620
  %v3937 = vunpack.c.h.b16 %v3620
  %v3938 = vunpack.c.l.b16 %v3621
  %v3939 = vunpack.c.h.b16 %v3621
  %v3940 = vunpack.c.l.b16 %v3622
  %v3941 = vunpack.c.h.b16 %v3622
  %v3942 = vunpack.c.l.b16 %v3623
  %v3943 = vunpack.c.h.b16 %v3623
  %v3944 = vunpack.c.l.b16 %v3624
  %v3945 = vunpack.c.h.b16 %v3624
  %v3946 = vunpack.c.l.b16 %v3625
  %v3947 = vunpack.c.h.b16 %v3625
  %v3948 = vunpack.c.l.b16 %v3626
  %v3949 = vunpack.c.h.b16 %v3626
  %v3950 = vunpack.c.l.b16 %v3627
  %v3951 = vunpack.c.h.b16 %v3627
  %v3952 = vunpack.c.l.b16 %v3628
  %v3953 = vunpack.c.h.b16 %v3628
  %v3954 = vunpack.c.l.b16 %v3629
  %v3955 = vunpack.c.h.b16 %v3629
  %v3956 = vunpack.c.l.b16 %v3630
  %v3957 = vunpack.c.h.b16 %v3630
  %v3958 = vunpack.c.l.b16 %v3631
  %v3959 = vunpack.c.h.b16 %v3631
  %v3960 = vunpack.c.l.b16 %v3632
  %v3961 = vunpack.c.h.b16 %v3632
  %v3962 = vunpack.c.l.b16 %v3633
  %v3963 = vunpack.c.h.b16 %v3633
  %v3964 = vunpack.c.l.b16 %v3634
  %v3965 = vunpack.c.h.b16 %v3634
  %v3966 = vunpack.c.l.b16 %v3635
  %v3967 = vunpack.c.h.b16 %v3635
  %v3968 = vunpack.c.l.b16 %v3636
  %v3969 = vunpack.c.h.b16 %v3636
  %v3970 = vunpack.c.l.b16 %v3637
  %v3971 = vunpack.c.h.b16 %v3637
  %v3972 = vunpack.c.l.b16 %v3638
  %v3973 = vunpack.c.h.b16 %v3638
  %v3974 = vunpack.c.l.b16 %v3639
  %v3975 = vunpack.c.h.b16 %v3639
  %v3976 = vunpack.c.l.b16 %v3640
  %v3977 = vunpack.c.h.b16 %v3640
  %v3978 = vunpack.c.l.b16 %v3641
  %v3979 = vunpack.c.h.b16 %v3641
  %v3980 = vunpack.c.l.b16 %v3642
  %v3981 = vunpack.c.h.b16 %v3642
  %v3982 = vunpack.c.l.b16 %v3643
  %v3983 = vunpack.c.h.b16 %v3643
  %v3984 = vunpack.c.l.b16 %v3644
  %v3985 = vunpack.c.h.b16 %v3644
  %v3986 = vunpack.c.l.b16 %v3645
  %v3987 = vunpack.c.h.b16 %v3645
  %v3988 = vunpack.c.l.b16 %v3646
  %v3989 = vunpack.c.h.b16 %v3646
  %v3990 = vunpack.c.l.b16 %v3647
  %v3991 = vunpack.c.h.b16 %v3647
  %v3992 = vunpack.c.l.b16 %v3648
  %v3993 = vunpack.c.h.b16 %v3648
  %v3994 = vunpack.c.l.b16 %v3649
  %v3995 = vunpack.c.h.b16 %v3649
  %v3996 = vunpack.c.l.b16 %v3650
  %v3997 = vunpack.c.h.b16 %v3650
  %v3998 = vunpack.c.l.b16 %v3651
  %v3999 = vunpack.c.h.b16 %v3651
  %v4000 = vunpack.c.l.b16 %v3652
  %v4001 = vunpack.c.h.b16 %v3652
  %v4002 = vunpack.c.l.b16 %v3653
  %v4003 = vunpack.c.h.b16 %v3653
  %v4004 = vunpack.c.l.b16 %v3654
  %v4005 = vunpack.c.h.b16 %v3654
  %v4006 = vunpack.c.l.b16 %v3655
  %v4007 = vunpack.c.h.b16 %v3655
  %v4008 = vunpack.c.l.b16 %v3656
  %v4009 = vunpack.c.h.b16 %v3656
  %v4010 = vunpack.c.l.b16 %v3657
  %v4011 = vunpack.c.h.b16 %v3657
  %v4012 = vunpack.c.l.b16 %v3658
  %v4013 = vunpack.c.h.b16 %v3658
  %v4014 = vunpack.c.l.b16 %v3659
  %v4015 = vunpack.c.h.b16 %v3659
  %v4016 = vunpack.c.l.b16 %v3660
  %v4017 = vunpack.c.h.b16 %v3660
  %v4018 = vunpack.c.l.b16 %v3661
  %v4019 = vunpack.c.h.b16 %v3661
  %v4020 = vunpack.c.l.b16 %v3662
  %v4021 = vunpack.c.h.b16 %v3662
  %v4022 = vunpack.c.l.b16 %v3663
  %v4023 = vunpack.c.h.b16 %v3663
  %v4024 = vunpack.c.l.b16 %v3664
  %v4025 = vunpack.c.h.b16 %v3664
  %v4026 = vunpack.c.l.b16 %v3665
  %v4027 = vunpack.c.h.b16 %v3665
  %v4028 = vunpack.c.l.b16 %v3666
  %v4029 = vunpack.c.h.b16 %v3666
  %v4030 = vunpack.c.l.b16 %v3667
  %v4031 = vunpack.c.h.b16 %v3667
  %v4032 = vunpack.c.l.b16 %v3668
  %v4033 = vunpack.c.h.b16 %v3668
  %v4034 = vunpack.c.l.b16 %v3669
  %v4035 = vunpack.c.h.b16 %v3669
  %v4036 = vunpack.c.l.b16 %v3670
  %v4037 = vunpack.c.h.b16 %v3670
  %v4038 = vunpack.c.l.b16 %v3671
  %v4039 = vunpack.c.h.b16 %v3671
  %v4040 = vunpack.c.l.b16 %v3672
  %v4041 = vunpack.c.h.b16 %v3672
  %v4042 = vunpack.c.l.b16 %v3673
  %v4043 = vunpack.c.h.b16 %v3673
  %v4044 = vunpack.c.l.b16 %v3674
  %v4045 = vunpack.c.h.b16 %v3674
  %v4046 = vunpack.c.l.b16 %v3675
  %v4047 = vunpack.c.h.b16 %v3675
  %v4048 = vunpack.c.l.b16 %v3676
  %v4049 = vunpack.c.h.b16 %v3676
  %v4050 = vunpack.c.l.b16 %v3677
  %v4051 = vunpack.c.h.b16 %v3677
  %v4052 = vunpack.c.l.b16 %v3678
  %v4053 = vunpack.c.h.b16 %v3678
  %v4054 = vunpack.c.l.b16 %v3679
  %v4055 = vunpack.c.h.b16 %v3679
  %v4056 = vunpack.c.l.b16 %v3680
  %v4057 = vunpack.c.h.b16 %v3680
  %v4058 = vunpack.c.l.b16 %v3681
  %v4059 = vunpack.c.h.b16 %v3681
  %v4060 = vunpack.c.l.b16 %v3682
  %v4061 = vunpack.c.h.b16 %v3682
  %v4062 = vunpack.c.l.b16 %v3683
  %v4063 = vunpack.c.h.b16 %v3683
  %v4064 = vunpack.c.l.b16 %v3684
  %v4065 = vunpack.c.h.b16 %v3684
  %v4066 = vunpack.c.l.b16 %v3685
  %v4067 = vunpack.c.h.b16 %v3685
  %v4068 = vunpack.c.l.b16 %v3686
  %v4069 = vunpack.c.h.b16 %v3686
  %v4070 = vunpack.c.l.b16 %v3687
  %v4071 = vunpack.c.h.b16 %v3687
  %v4072 = vpack.c.b16 %v3824, %v3816
  %v4073 = vpack.c.b16 %v3825, %v3817
  %v4074 = vpack.c.b16 %v3826, %v3818
  %v4075 = vpack.c.b16 %v3827, %v3819
  %v4076 = vpack.c.b16 %v3828, %v3820
  %v4077 = vpack.c.b16 %v3829, %v3821
  %v4078 = vpack.c.b16 %v3830, %v3822
  %v4079 = vpack.c.b16 %v3831, %v3823
  %v4080 = vpack.c.b16 %v3840, %v3832
  %v4081 = vpack.c.b16 %v3841, %v3833
  %v4082 = vpack.c.b16 %v3842, %v3834
  %v4083 = vpack.c.b16 %v3843, %v3835
  %v4084 = vpack.c.b16 %v3844, %v3836
  %v4085 = vpack.c.b16 %v3845, %v3837
  %v4086 = vpack.c.b16 %v3846, %v3838
  %v4087 = vpack.c.b16 %v3847, %v3839
  %v4088 = vpack.c.b16 %v3856, %v3848
  %v4089 = vpack.c.b16 %v3857, %v3849
  %v4090 = vpack.c.b16 %v3858, %v3850
  %v4091 = vpack.c.b16 %v3859, %v3851
  %v4092 = vpack.c.b16 %v3860, %v3852
  %v4093 = vpack.c.b16 %v3861, %v3853
  %v4094 = vpack.c.b16 %v3862, %v3854
  %v4095 = vpack.c.b16 %v3863, %v3855
  %v4096 = vpack.c.b16 %v3872, %v3864
  %v4097 = vpack.c.b16 %v3873, %v3865
  %v4098 = vpack.c.b16 %v3874, %v3866
  %v4099 = vpack.c.b16 %v3875, %v3867
  %v4100 = vpack.c.b16 %v3876, %v3868
  %v4101 = vpack.c.b16 %v3877, %v3869
  %v4102 = vpack.c.b16 %v3878, %v3870
  %v4103 = vpack.c.b16 %v3879, %v3871
  %v4104 = vpack.c.b16 %v3888, %v3880
  %v4105 = vpack.c.b16 %v3889, %v3881
  %v4106 = vpack.c.b16 %v3890, %v3882
  %v4107 = vpack.c.b16 %v3891, %v3883
  %v4108 = vpack.c.b16 %v3892, %v3884
  %v4109 = vpack.c.b16 %v3893, %v3885
  %v4110 = vpack.c.b16 %v3894, %v3886
  %v4111 = vpack.c.b16 %v3895, %v3887
  %v4112 = vpack.c.b16 %v3904, %v3896
  %v4113 = vpack.c.b16 %v3905, %v3897
  %v4114 = vpack.c.b16 %v3906, %v3898
  %v4115 = vpack.c.b16 %v3907, %v3899
  %v4116 = vpack.c.b16 %v3908, %v3900
  %v4117 = vpack.c.b16 %v3909, %v3901
  %v4118 = vpack.c.b16 %v3910, %v3902
  %v4119 = vpack.c.b16 %v3911, %v3903
  %v4120 = vpack.c.b16 %v3920, %v3912
  %v4121 = vpack.c.b16 %v3921, %v3913
  %v4122 = vpack.c.b16 %v3922, %v3914
  %v4123 = vpack.c.b16 %v3923, %v3915
  %v4124 = vpack.c.b16 %v3924, %v3916
  %v4125 = vpack.c.b16 %v3925, %v3917
  %v4126 = vpack.c.b16 %v3926, %v3918
  %v4127 = vpack.c.b16 %v3927, %v3919
  %v4128 = vpack.c.b16 %v3936, %v3928
  %v4129 = vpack.c.b16 %v3937, %v3929
  %v4130 = vpack.c.b16 %v3938, %v3930
  %v4131 = vpack.c.b16 %v3939, %v3931
  %v4132 = vpack.c.b16 %v3940, %v3932
  %v4133 = vpack.c.b16 %v3941, %v3933
  %v4134 = vpack.c.b16 %v3942, %v3934
  %v4135 = vpack.c.b16 %v3943, %v3935
  %v4136 = vpack.c.b16 %v3952, %v3944
  %v4137 = vpack.c.b16 %v3953, %v3945
  %v4138 = vpack.c.b16 %v3954, %v3946
  %v4139 = vpack.c.b16 %v3955, %v3947
  %v4140 = vpack.c.b16 %v3956, %v3948
  %v4141 = vpack.c.b16 %v3957, %v3949
  %v4142 = vpack.c.b16 %v3958, %v3950
  %v4143 = vpack.c.b16 %v3959, %v3951
  %v4144 = vpack.c.b16 %v3968, %v3960
  %v4145 = vpack.c.b16 %v3969, %v3961
  %v4146 = vpack.c.b16 %v3970, %v3962
  %v4147 = vpack.c.b16 %v3971, %v3963
  %v4148 = vpack.c.b16 %v3972, %v3964
  %v4149 = vpack.c.b16 %v3973, %v3965
  %v4150 = vpack.c.b16 %v3974, %v3966
  %v4151 = vpack.c.b16 %v3975, %v3967
  %v4152 = vpack.c.b16 %v3984, %v3976
  %v4153 = vpack.c.b16 %v3985, %v3977
  %v4154 = vpack.c.b16 %v3986, %v3978
  %v4155 = vpack.c.b16 %v3987, %v3979
  %v4156 = vpack.c.b16 %v3988, %v3980
  %v4157 = vpack.c.b16 %v3989, %v3981
  %v4158 = vpack.c.b16 %v3990, %v3982
  %v4159 = vpack.c.b16 %v3991, %v3983
  %v4160 = vpack.c.b16 %v4000, %v3992
  %v4161 = vpack.c.b16 %v4001, %v3993
  %v4162 = vpack.c.b16 %v4002, %v3994
  %v4163 = vpack.c.b16 %v4003, %v3995
  %v4164 = vpack.c.b16 %v4004, %v3996
  %v4165 = vpack.c.b16 %v4005, %v3997
  %v4166 = vpack.c.b16 %v4006, %v3998
  %v4167 = vpack.c.b16 %v4007, %v3999
  %v4168 = vpack.c.b16 %v4016, %v4008
  %v4169 = vpack.c.b16 %v4017, %v4009
  %v4170 = vpack.c.b16 %v4018, %v4010
  %v4171 = vpack.c.b16 %v4019, %v4011
  %v4172 = vpack.c.b16 %v4020, %v4012
  %v4173 = vpack.c.b16 %v4021, %v4013
  %v4174 = vpack.c.b16 %v4022, %v4014
  %v4175 = vpack.c.b16 %v4023, %v4015
  %v4176 = vpack.c.b16 %v4032, %v4024
  %v4177 = vpack.c.b16 %v4033, %v4025
  %v4178 = vpack.c.b16 %v4034, %v4026
  %v4179 = vpack.c.b16 %v4035, %v4027
  %v4180 = vpack.c.b16 %v4036, %v4028
  %v4181 = vpack.c.b16 %v4037, %v4029
  %v4182 = vpack.c.b16 %v4038, %v4030
  %v4183 = vpack.c.b16 %v4039, %v4031
  %v4184 = vpack.c.b16 %v4048, %v4040
  %v4185 = vpack.c.b16 %v4049, %v4041
  %v4186 = vpack.c.b16 %v4050, %v4042
  %v4187 = vpack.c.b16 %v4051, %v4043
  %v4188 = vpack.c.b16 %v4052, %v4044
  %v4189 = vpack.c.b16 %v4053, %v4045
  %v4190 = vpack.c.b16 %v4054, %v4046
  %v4191 = vpack.c.b16 %v4055, %v4047
  %v4192 = vpack.c.b16 %v4064, %v4056
  %v4193 = vpack.c.b16 %v4065, %v4057
  %v4194 = vpack.c.b16 %v4066, %v4058
  %v4195 = vpack.c.b16 %v4067, %v4059
  %v4196 = vpack.c.b16 %v4068, %v4060
  %v4197 = vpack.c.b16 %v4069, %v4061
  %v4198 = vpack.c.b16 %v4070, %v4062
  %v4199 = vpack.c.b16 %v4071, %v4063
  %4328 = vmatprep.subr.bf16.mxu0 %v4073
  %4329 = vmatpush1.bf16.msra.mxu0 %v4072
  %4330 = vmatprep.subr.bf16.mxu0 %v4081
  %4331 = vmatpush1.bf16.msra.mxu0 %v4080
  %4332 = vmatprep.subr.bf16.mxu0 %v4089
  %4333 = vmatpush1.bf16.msra.mxu0 %v4088
  %4334 = vmatprep.subr.bf16.mxu0 %v4097
  %4335 = vmatpush1.bf16.msra.mxu0 %v4096
  %4336 = vmatprep.subr.bf16.mxu0 %v4105
  %4337 = vmatpush1.bf16.msra.mxu0 %v4104
  %4338 = vmatprep.subr.bf16.mxu0 %v4113
  %4339 = vmatpush1.bf16.msra.mxu0 %v4112
  %4340 = vmatprep.subr.bf16.mxu0 %v4121
  %4341 = vmatpush1.bf16.msra.mxu0 %v4120
  %4342 = vmatprep.subr.bf16.mxu0 %v4129
  %4343 = vmatpush1.bf16.msra.mxu0 %v4128
  %4344 = vmatprep.subr.bf16.mxu0 %v4137
  %4345 = vmatpush1.bf16.msra.mxu0 %v4136
  %4346 = vmatprep.subr.bf16.mxu0 %v4145
  %4347 = vmatpush1.bf16.msra.mxu0 %v4144
  %4348 = vmatprep.subr.bf16.mxu0 %v4153
  %4349 = vmatpush1.bf16.msra.mxu0 %v4152
  %4350 = vmatprep.subr.bf16.mxu0 %v4161
  %4351 = vmatpush1.bf16.msra.mxu0 %v4160
  %4352 = vmatprep.subr.bf16.mxu0 %v4169
  %4353 = vmatpush1.bf16.msra.mxu0 %v4168
  %4354 = vmatprep.subr.bf16.mxu0 %v4177
  %4355 = vmatpush1.bf16.msra.mxu0 %v4176
  %4356 = vmatprep.subr.bf16.mxu0 %v4185
  %4357 = vmatpush1.bf16.msra.mxu0 %v4184
  %4358 = vmatprep.subr.bf16.mxu0 %v4193
  %4359 = vmatpush1.bf16.msra.mxu0 %v4192
  %4360 = vmatprep.mubr.bf16.mxu0 %v3559
  %4361 = vmatmul.mubr.bf16.gmra.mrb[0].mxu0 %v3558
  %v4362 = vpop.f32.mrb[0].mxu0
  %v4363 = vadd.f32 %v3465, %v4362
  %v4364 = vpop.f32.mrb[0].mxu0
  %v4365 = vadd.f32 %v3469, %v4364
  %v4366 = vpop.f32.mrb[0].mxu0
  %v4367 = vpop.f32.mrb[0].mxu0
  %4368 = vdwg.mxu0
  %4369 = vmatprep.subr.bf16.mxu0 %v4075
  %4370 = vmatpush1.bf16.msra.mxu0 %v4074
  %4371 = vmatprep.subr.bf16.mxu0 %v4083
  %4372 = vmatpush1.bf16.msra.mxu0 %v4082
  %4373 = vmatprep.subr.bf16.mxu0 %v4091
  %4374 = vmatpush1.bf16.msra.mxu0 %v4090
  %4375 = vmatprep.subr.bf16.mxu0 %v4099
  %4376 = vmatpush1.bf16.msra.mxu0 %v4098
  %4377 = vmatprep.subr.bf16.mxu0 %v4107
  %4378 = vmatpush1.bf16.msra.mxu0 %v4106
  %4379 = vmatprep.subr.bf16.mxu0 %v4115
  %4380 = vmatpush1.bf16.msra.mxu0 %v4114
  %4381 = vmatprep.subr.bf16.mxu0 %v4123
  %4382 = vmatpush1.bf16.msra.mxu0 %v4122
  %4383 = vmatprep.subr.bf16.mxu0 %v4131
  %4384 = vmatpush1.bf16.msra.mxu0 %v4130
  %4385 = vmatprep.subr.bf16.mxu0 %v4139
  %4386 = vmatpush1.bf16.msra.mxu0 %v4138
  %4387 = vmatprep.subr.bf16.mxu0 %v4147
  %4388 = vmatpush1.bf16.msra.mxu0 %v4146
  %4389 = vmatprep.subr.bf16.mxu0 %v4155
  %4390 = vmatpush1.bf16.msra.mxu0 %v4154
  %4391 = vmatprep.subr.bf16.mxu0 %v4163
  %4392 = vmatpush1.bf16.msra.mxu0 %v4162
  %4393 = vmatprep.subr.bf16.mxu0 %v4171
  %4394 = vmatpush1.bf16.msra.mxu0 %v4170
  %4395 = vmatprep.subr.bf16.mxu0 %v4179
  %4396 = vmatpush1.bf16.msra.mxu0 %v4178
  %4397 = vmatprep.subr.bf16.mxu0 %v4187
  %4398 = vmatpush1.bf16.msra.mxu0 %v4186
  %4399 = vmatprep.subr.bf16.mxu0 %v4195
  %4400 = vmatpush1.bf16.msra.mxu0 %v4194
  %4401 = vmatprep.mubr.bf16.mxu0 %v3559
  %4402 = vmatmul.mubr.bf16.gmra.mrb[0].mxu0 %v3558
  %v4403 = vpop.f32.mrb[0].mxu0
  %v4404 = vadd.f32 %v3473, %v4403
  %v4405 = vpop.f32.mrb[0].mxu0
  %v4406 = vadd.f32 %v3477, %v4405
  %v4407 = vpop.f32.mrb[0].mxu0
  %v4408 = vpop.f32.mrb[0].mxu0
  %4409 = vdwg.mxu0
  %4410 = vmatprep.subr.bf16.mxu0 %v4077
  %4411 = vmatpush1.bf16.msra.mxu0 %v4076
  %4412 = vmatprep.subr.bf16.mxu0 %v4085
  %4413 = vmatpush1.bf16.msra.mxu0 %v4084
  %4414 = vmatprep.subr.bf16.mxu0 %v4093
  %4415 = vmatpush1.bf16.msra.mxu0 %v4092
  %4416 = vmatprep.subr.bf16.mxu0 %v4101
  %4417 = vmatpush1.bf16.msra.mxu0 %v4100
  %4418 = vmatprep.subr.bf16.mxu0 %v4109
  %4419 = vmatpush1.bf16.msra.mxu0 %v4108
  %4420 = vmatprep.subr.bf16.mxu0 %v4117
  %4421 = vmatpush1.bf16.msra.mxu0 %v4116
  %4422 = vmatprep.subr.bf16.mxu0 %v4125
  %4423 = vmatpush1.bf16.msra.mxu0 %v4124
  %4424 = vmatprep.subr.bf16.mxu0 %v4133
  %4425 = vmatpush1.bf16.msra.mxu0 %v4132
  %4426 = vmatprep.subr.bf16.mxu0 %v4141
  %4427 = vmatpush1.bf16.msra.mxu0 %v4140
  %4428 = vmatprep.subr.bf16.mxu0 %v4149
  %4429 = vmatpush1.bf16.msra.mxu0 %v4148
  %4430 = vmatprep.subr.bf16.mxu0 %v4157
  %4431 = vmatpush1.bf16.msra.mxu0 %v4156
  %4432 = vmatprep.subr.bf16.mxu0 %v4165
  %4433 = vmatpush1.bf16.msra.mxu0 %v4164
  %4434 = vmatprep.subr.bf16.mxu0 %v4173
  %4435 = vmatpush1.bf16.msra.mxu0 %v4172
  %4436 = vmatprep.subr.bf16.mxu0 %v4181
  %4437 = vmatpush1.bf16.msra.mxu0 %v4180
  %4438 = vmatprep.subr.bf16.mxu0 %v4189
  %4439 = vmatpush1.bf16.msra.mxu0 %v4188
  %4440 = vmatprep.subr.bf16.mxu0 %v4197
  %4441 = vmatpush1.bf16.msra.mxu0 %v4196
  %4442 = vmatprep.mubr.bf16.mxu0 %v3559
  %4443 = vmatmul.mubr.bf16.gmra.mrb[0].mxu0 %v3558
  %v4444 = vpop.f32.mrb[0].mxu0
  %v4445 = vadd.f32 %v3481, %v4444
  %v4446 = vpop.f32.mrb[0].mxu0
  %v4447 = vadd.f32 %v3485, %v4446
  %v4448 = vpop.f32.mrb[0].mxu0
  %v4449 = vpop.f32.mrb[0].mxu0
  %4450 = vdwg.mxu0
  %4451 = vmatprep.subr.bf16.mxu0 %v4079
  %4452 = vmatpush1.bf16.msra.mxu0 %v4078
  %4453 = vmatprep.subr.bf16.mxu0 %v4087
  %4454 = vmatpush1.bf16.msra.mxu0 %v4086
  %4455 = vmatprep.subr.bf16.mxu0 %v4095
  %4456 = vmatpush1.bf16.msra.mxu0 %v4094
  %4457 = vmatprep.subr.bf16.mxu0 %v4103
  %4458 = vmatpush1.bf16.msra.mxu0 %v4102
  %4459 = vmatprep.subr.bf16.mxu0 %v4111
  %4460 = vmatpush1.bf16.msra.mxu0 %v4110
  %4461 = vmatprep.subr.bf16.mxu0 %v4119
  %4462 = vmatpush1.bf16.msra.mxu0 %v4118
  %4463 = vmatprep.subr.bf16.mxu0 %v4127
  %4464 = vmatpush1.bf16.msra.mxu0 %v4126
  %4465 = vmatprep.subr.bf16.mxu0 %v4135
  %4466 = vmatpush1.bf16.msra.mxu0 %v4134
  %4467 = vmatprep.subr.bf16.mxu0 %v4143
  %4468 = vmatpush1.bf16.msra.mxu0 %v4142
  %4469 = vmatprep.subr.bf16.mxu0 %v4151
  %4470 = vmatpush1.bf16.msra.mxu0 %v4150
  %4471 = vmatprep.subr.bf16.mxu0 %v4159
  %4472 = vmatpush1.bf16.msra.mxu0 %v4158
  %4473 = vmatprep.subr.bf16.mxu0 %v4167
  %4474 = vmatpush1.bf16.msra.mxu0 %v4166
  %4475 = vmatprep.subr.bf16.mxu0 %v4175
  %4476 = vmatpush1.bf16.msra.mxu0 %v4174
  %4477 = vmatprep.subr.bf16.mxu0 %v4183
  %4478 = vmatpush1.bf16.msra.mxu0 %v4182
  %4479 = vmatprep.subr.bf16.mxu0 %v4191
  %4480 = vmatpush1.bf16.msra.mxu0 %v4190
  %4481 = vmatprep.subr.bf16.mxu0 %v4199
  %4482 = vmatpush1.bf16.msra.mxu0 %v4198
  %4483 = vmatprep.mubr.bf16.mxu0 %v3559
  %4484 = vmatmul.mubr.bf16.gmra.mrb[0].mxu0 %v3558
  %v4485 = vpop.f32.mrb[0].mxu0
  %v4486 = vadd.f32 %v3489, %v4485
  %v4487 = vpop.f32.mrb[0].mxu0
  %v4488 = vadd.f32 %v3493, %v4487
  %v4489 = vpop.f32.mrb[0].mxu0
  %v4490 = vpop.f32.mrb[0].mxu0
  %4491 = vdwg.mxu0
  %v4492 = vxor.u32 %v4363, 2147483648
  %v4493 = vxor.u32 %v4365, 2147483648
  %v4494 = vxor.u32 %v4404, 2147483648
  %v4495 = vxor.u32 %v4406, 2147483648
  %v4496 = vxor.u32 %v4445, 2147483648
  %v4497 = vxor.u32 %v4447, 2147483648
  %v4498 = vmul.f32 %v4492, 1.442695
  %v4499 = vpow.pop %v4498
  %v4500 = vmul.f32 %v4493, 1.442695
  %v4501 = vpow.pop %v4500
  %v4502 = vmul.f32 %v4494, 1.442695
  %v4503 = vpow.pop %v4502
  %v4504 = vmul.f32 %v4495, 1.442695
  %v4505 = vpow.pop %v4504
  %v4506 = vmul.f32 %v4496, 1.442695
  %v4507 = vpow.pop %v4506
  %v4508 = vmul.f32 %v4497, 1.442695
  %v4509 = vpow.pop %v4508
  %v4510 = vadd.f32 %v4499, 1.0
  %v4511 = vadd.f32 %v4501, 1.0
  %v4512 = vadd.f32 %v4503, 1.0
  %v4513 = vadd.f32 %v4505, 1.0
  %v4514 = vadd.f32 %v4507, 1.0
  %v4515 = vadd.f32 %v4509, 1.0
  %v4516 = vrcp.pop %v4510
  %v4517 = vmul.f32 1.0, %v4516
  %v4518 = vrcp.pop %v4511
  %v4519 = vmul.f32 1.0, %v4518
  %v4520 = vrcp.pop %v4512
  %v4521 = vmul.f32 1.0, %v4520
  %v4522 = vrcp.pop %v4513
  %v4523 = vmul.f32 1.0, %v4522
  %v4524 = vrcp.pop %v4514
  %v4525 = vmul.f32 1.0, %v4524
  %v4526 = vrcp.pop %v4515
  %v4527 = vmul.f32 1.0, %v4526
  %v4528 = vtanh.pop %v4486
  %v4529 = vtanh.pop %v4488
  %v4530 = vmul.f32 %v4521, 0.0
  %v4531 = vmul.f32 %v4523, 0.0
  %v4532 = vmul.f32 %v4517, %v4528
  %v4533 = vmul.f32 %v4519, %v4529
  %v4534 = vadd.f32 %v4530, %v4532
  %v4535 = vadd.f32 %v4531, %v4533
  %v4536 = vtanh.pop %v4534
  %v4537 = vtanh.pop %v4535
  %v4538 = vmul.f32 %v4525, %v4536
  %v4539 = vmul.f32 %v4527, %v4537
  %v4540 = vld [vmem:[#allocation2 + $0x40] sm:$0xff]
  %v4541 = vld [vmem:[#allocation2 + $0x48] sm:$0xff]
  %v4542 = vld [vmem:[#allocation2 + $0x50] sm:$0xff]
  %v4543 = vld [vmem:[#allocation2 + $0x58] sm:$0xff]
  %v4544 = vld [vmem:[#allocation2 + $0x60] sm:$0xff]
  %v4545 = vld [vmem:[#allocation2 + $0x68] sm:$0xff]
  %v4546 = vld [vmem:[#allocation2 + $0x70] sm:$0xff]
  %v4547 = vld [vmem:[#allocation2 + $0x78] sm:$0xff]
  %v4548 = vld [vmem:[%s2] sm:$0xff]
  %v4549 = vld [vmem:[%s2 + $0x8] sm:$0xff]
  %v4550 = vld [vmem:[%s2 + $0x10] sm:$0xff]
  %v4551 = vld [vmem:[%s2 + $0x18] sm:$0xff]
  %v4552 = vld [vmem:[%s2 + $0x20] sm:$0xff]
  %v4553 = vld [vmem:[%s2 + $0x28] sm:$0xff]
  %v4554 = vld [vmem:[%s2 + $0x30] sm:$0xff]
  %v4555 = vld [vmem:[%s2 + $0x38] sm:$0xff]
  %v4556 = vld [vmem:[%s2 + $0x40] sm:$0xff]
  %v4557 = vld [vmem:[%s2 + $0x48] sm:$0xff]
  %v4558 = vld [vmem:[%s2 + $0x50] sm:$0xff]
  %v4559 = vld [vmem:[%s2 + $0x58] sm:$0xff]
  %v4560 = vld [vmem:[%s2 + $0x60] sm:$0xff]
  %v4561 = vld [vmem:[%s2 + $0x68] sm:$0xff]
  %v4562 = vld [vmem:[%s2 + $0x70] sm:$0xff]
  %v4563 = vld [vmem:[%s2 + $0x78] sm:$0xff]
  %v4564 = vld [vmem:[%s2 + $0x80] sm:$0xff]
  %v4565 = vld [vmem:[%s2 + $0x88] sm:$0xff]
  %v4566 = vld [vmem:[%s2 + $0x90] sm:$0xff]
  %v4567 = vld [vmem:[%s2 + $0x98] sm:$0xff]
  %v4568 = vld [vmem:[%s2 + $0xa0] sm:$0xff]
  %v4569 = vld [vmem:[%s2 + $0xa8] sm:$0xff]
  %v4570 = vld [vmem:[%s2 + $0xb0] sm:$0xff]
  %v4571 = vld [vmem:[%s2 + $0xb8] sm:$0xff]
  %v4572 = vld [vmem:[%s2 + $0xc0] sm:$0xff]
  %v4573 = vld [vmem:[%s2 + $0xc8] sm:$0xff]
  %v4574 = vld [vmem:[%s2 + $0xd0] sm:$0xff]
  %v4575 = vld [vmem:[%s2 + $0xd8] sm:$0xff]
  %v4576 = vld [vmem:[%s2 + $0xe0] sm:$0xff]
  %v4577 = vld [vmem:[%s2 + $0xe8] sm:$0xff]
  %v4578 = vld [vmem:[%s2 + $0xf0] sm:$0xff]
  %v4579 = vld [vmem:[%s2 + $0xf8] sm:$0xff]
  %v4580 = vld [vmem:[%s2 + $0x100] sm:$0xff]
  %v4581 = vld [vmem:[%s2 + $0x108] sm:$0xff]
  %v4582 = vld [vmem:[%s2 + $0x110] sm:$0xff]
  %v4583 = vld [vmem:[%s2 + $0x118] sm:$0xff]
  %v4584 = vld [vmem:[%s2 + $0x120] sm:$0xff]
  %v4585 = vld [vmem:[%s2 + $0x128] sm:$0xff]
  %v4586 = vld [vmem:[%s2 + $0x130] sm:$0xff]
  %v4587 = vld [vmem:[%s2 + $0x138] sm:$0xff]
  %v4588 = vld [vmem:[%s2 + $0x140] sm:$0xff]
  %v4589 = vld [vmem:[%s2 + $0x148] sm:$0xff]
  %v4590 = vld [vmem:[%s2 + $0x150] sm:$0xff]
  %v4591 = vld [vmem:[%s2 + $0x158] sm:$0xff]
  %v4592 = vld [vmem:[%s2 + $0x160] sm:$0xff]
  %v4593 = vld [vmem:[%s2 + $0x168] sm:$0xff]
  %v4594 = vld [vmem:[%s2 + $0x170] sm:$0xff]
  %v4595 = vld [vmem:[%s2 + $0x178] sm:$0xff]
  %v4596 = vld [vmem:[%s2 + $0x180] sm:$0xff]
  %v4597 = vld [vmem:[%s2 + $0x188] sm:$0xff]
  %v4598 = vld [vmem:[%s2 + $0x190] sm:$0xff]
  %v4599 = vld [vmem:[%s2 + $0x198] sm:$0xff]
  %v4600 = vld [vmem:[%s2 + $0x1a0] sm:$0xff]
  %v4601 = vld [vmem:[%s2 + $0x1a8] sm:$0xff]
  %v4602 = vld [vmem:[%s2 + $0x1b0] sm:$0xff]
  %v4603 = vld [vmem:[%s2 + $0x1b8] sm:$0xff]
  %v4604 = vld [vmem:[%s2 + $0x1c0] sm:$0xff]
  %v4605 = vld [vmem:[%s2 + $0x1c8] sm:$0xff]
  %v4606 = vld [vmem:[%s2 + $0x1d0] sm:$0xff]
  %v4607 = vld [vmem:[%s2 + $0x1d8] sm:$0xff]
  %v4608 = vld [vmem:[%s2 + $0x1e0] sm:$0xff]
  %v4609 = vld [vmem:[%s2 + $0x1e8] sm:$0xff]
  %v4610 = vld [vmem:[%s2 + $0x1f0] sm:$0xff]
  %v4611 = vld [vmem:[%s2 + $0x1f8] sm:$0xff]
  %v4612 = vld [vmem:[%s2 + $0x200] sm:$0xff]
  %v4613 = vld [vmem:[%s2 + $0x208] sm:$0xff]
  %v4614 = vld [vmem:[%s2 + $0x210] sm:$0xff]
  %v4615 = vld [vmem:[%s2 + $0x218] sm:$0xff]
  %v4616 = vld [vmem:[%s2 + $0x220] sm:$0xff]
  %v4617 = vld [vmem:[%s2 + $0x228] sm:$0xff]
  %v4618 = vld [vmem:[%s2 + $0x230] sm:$0xff]
  %v4619 = vld [vmem:[%s2 + $0x238] sm:$0xff]
  %v4620 = vld [vmem:[%s2 + $0x240] sm:$0xff]
  %v4621 = vld [vmem:[%s2 + $0x248] sm:$0xff]
  %v4622 = vld [vmem:[%s2 + $0x250] sm:$0xff]
  %v4623 = vld [vmem:[%s2 + $0x258] sm:$0xff]
  %v4624 = vld [vmem:[%s2 + $0x260] sm:$0xff]
  %v4625 = vld [vmem:[%s2 + $0x268] sm:$0xff]
  %v4626 = vld [vmem:[%s2 + $0x270] sm:$0xff]
  %v4627 = vld [vmem:[%s2 + $0x278] sm:$0xff]
  %v4628 = vld [vmem:[%s2 + $0x280] sm:$0xff]
  %v4629 = vld [vmem:[%s2 + $0x288] sm:$0xff]
  %v4630 = vld [vmem:[%s2 + $0x290] sm:$0xff]
  %v4631 = vld [vmem:[%s2 + $0x298] sm:$0xff]
  %v4632 = vld [vmem:[%s2 + $0x2a0] sm:$0xff]
  %v4633 = vld [vmem:[%s2 + $0x2a8] sm:$0xff]
  %v4634 = vld [vmem:[%s2 + $0x2b0] sm:$0xff]
  %v4635 = vld [vmem:[%s2 + $0x2b8] sm:$0xff]
  %v4636 = vld [vmem:[%s2 + $0x2c0] sm:$0xff]
  %v4637 = vld [vmem:[%s2 + $0x2c8] sm:$0xff]
  %v4638 = vld [vmem:[%s2 + $0x2d0] sm:$0xff]
  %v4639 = vld [vmem:[%s2 + $0x2d8] sm:$0xff]
  %v4640 = vld [vmem:[%s2 + $0x2e0] sm:$0xff]
  %v4641 = vld [vmem:[%s2 + $0x2e8] sm:$0xff]
  %v4642 = vld [vmem:[%s2 + $0x2f0] sm:$0xff]
  %v4643 = vld [vmem:[%s2 + $0x2f8] sm:$0xff]
  %v4644 = vld [vmem:[%s2 + $0x300] sm:$0xff]
  %v4645 = vld [vmem:[%s2 + $0x308] sm:$0xff]
  %v4646 = vld [vmem:[%s2 + $0x310] sm:$0xff]
  %v4647 = vld [vmem:[%s2 + $0x318] sm:$0xff]
  %v4648 = vld [vmem:[%s2 + $0x320] sm:$0xff]
  %v4649 = vld [vmem:[%s2 + $0x328] sm:$0xff]
  %v4650 = vld [vmem:[%s2 + $0x330] sm:$0xff]
  %v4651 = vld [vmem:[%s2 + $0x338] sm:$0xff]
  %v4652 = vld [vmem:[%s2 + $0x340] sm:$0xff]
  %v4653 = vld [vmem:[%s2 + $0x348] sm:$0xff]
  %v4654 = vld [vmem:[%s2 + $0x350] sm:$0xff]
  %v4655 = vld [vmem:[%s2 + $0x358] sm:$0xff]
  %v4656 = vld [vmem:[%s2 + $0x360] sm:$0xff]
  %v4657 = vld [vmem:[%s2 + $0x368] sm:$0xff]
  %v4658 = vld [vmem:[%s2 + $0x370] sm:$0xff]
  %v4659 = vld [vmem:[%s2 + $0x378] sm:$0xff]
  %v4660 = vld [vmem:[%s2 + $0x380] sm:$0xff]
  %v4661 = vld [vmem:[%s2 + $0x388] sm:$0xff]
  %v4662 = vld [vmem:[%s2 + $0x390] sm:$0xff]
  %v4663 = vld [vmem:[%s2 + $0x398] sm:$0xff]
  %v4664 = vld [vmem:[%s2 + $0x3a0] sm:$0xff]
  %v4665 = vld [vmem:[%s2 + $0x3a8] sm:$0xff]
  %v4666 = vld [vmem:[%s2 + $0x3b0] sm:$0xff]
  %v4667 = vld [vmem:[%s2 + $0x3b8] sm:$0xff]
  %v4668 = vld [vmem:[%s2 + $0x3c0] sm:$0xff]
  %v4669 = vld [vmem:[%s2 + $0x3c8] sm:$0xff]
  %v4670 = vld [vmem:[%s2 + $0x3d0] sm:$0xff]
  %v4671 = vld [vmem:[%s2 + $0x3d8] sm:$0xff]
  %v4672 = vld [vmem:[%s2 + $0x3e0] sm:$0xff]
  %v4673 = vld [vmem:[%s2 + $0x3e8] sm:$0xff]
  %v4674 = vld [vmem:[%s2 + $0x3f0] sm:$0xff]
  %v4675 = vld [vmem:[%s2 + $0x3f8] sm:$0xff]
  %v4804 = vunpack.c.l.b16 %v4548
  %v4805 = vunpack.c.h.b16 %v4548
  %v4806 = vunpack.c.l.b16 %v4549
  %v4807 = vunpack.c.h.b16 %v4549
  %v4808 = vunpack.c.l.b16 %v4550
  %v4809 = vunpack.c.h.b16 %v4550
  %v4810 = vunpack.c.l.b16 %v4551
  %v4811 = vunpack.c.h.b16 %v4551
  %v4812 = vunpack.c.l.b16 %v4552
  %v4813 = vunpack.c.h.b16 %v4552
  %v4814 = vunpack.c.l.b16 %v4553
  %v4815 = vunpack.c.h.b16 %v4553
  %v4816 = vunpack.c.l.b16 %v4554
  %v4817 = vunpack.c.h.b16 %v4554
  %v4818 = vunpack.c.l.b16 %v4555
  %v4819 = vunpack.c.h.b16 %v4555
  %v4820 = vunpack.c.l.b16 %v4556
  %v4821 = vunpack.c.h.b16 %v4556
  %v4822 = vunpack.c.l.b16 %v4557
  %v4823 = vunpack.c.h.b16 %v4557
  %v4824 = vunpack.c.l.b16 %v4558
  %v4825 = vunpack.c.h.b16 %v4558
  %v4826 = vunpack.c.l.b16 %v4559
  %v4827 = vunpack.c.h.b16 %v4559
  %v4828 = vunpack.c.l.b16 %v4560
  %v4829 = vunpack.c.h.b16 %v4560
  %v4830 = vunpack.c.l.b16 %v4561
  %v4831 = vunpack.c.h.b16 %v4561
  %v4832 = vunpack.c.l.b16 %v4562
  %v4833 = vunpack.c.h.b16 %v4562
  %v4834 = vunpack.c.l.b16 %v4563
  %v4835 = vunpack.c.h.b16 %v4563
  %v4836 = vunpack.c.l.b16 %v4564
  %v4837 = vunpack.c.h.b16 %v4564
  %v4838 = vunpack.c.l.b16 %v4565
  %v4839 = vunpack.c.h.b16 %v4565
  %v4840 = vunpack.c.l.b16 %v4566
  %v4841 = vunpack.c.h.b16 %v4566
  %v4842 = vunpack.c.l.b16 %v4567
  %v4843 = vunpack.c.h.b16 %v4567
  %v4844 = vunpack.c.l.b16 %v4568
  %v4845 = vunpack.c.h.b16 %v4568
  %v4846 = vunpack.c.l.b16 %v4569
  %v4847 = vunpack.c.h.b16 %v4569
  %v4848 = vunpack.c.l.b16 %v4570
  %v4849 = vunpack.c.h.b16 %v4570
  %v4850 = vunpack.c.l.b16 %v4571
  %v4851 = vunpack.c.h.b16 %v4571
  %v4852 = vunpack.c.l.b16 %v4572
  %v4853 = vunpack.c.h.b16 %v4572
  %v4854 = vunpack.c.l.b16 %v4573
  %v4855 = vunpack.c.h.b16 %v4573
  %v4856 = vunpack.c.l.b16 %v4574
  %v4857 = vunpack.c.h.b16 %v4574
  %v4858 = vunpack.c.l.b16 %v4575
  %v4859 = vunpack.c.h.b16 %v4575
  %v4860 = vunpack.c.l.b16 %v4576
  %v4861 = vunpack.c.h.b16 %v4576
  %v4862 = vunpack.c.l.b16 %v4577
  %v4863 = vunpack.c.h.b16 %v4577
  %v4864 = vunpack.c.l.b16 %v4578
  %v4865 = vunpack.c.h.b16 %v4578
  %v4866 = vunpack.c.l.b16 %v4579
  %v4867 = vunpack.c.h.b16 %v4579
  %v4868 = vunpack.c.l.b16 %v4580
  %v4869 = vunpack.c.h.b16 %v4580
  %v4870 = vunpack.c.l.b16 %v4581
  %v4871 = vunpack.c.h.b16 %v4581
  %v4872 = vunpack.c.l.b16 %v4582
  %v4873 = vunpack.c.h.b16 %v4582
  %v4874 = vunpack.c.l.b16 %v4583
  %v4875 = vunpack.c.h.b16 %v4583
  %v4876 = vunpack.c.l.b16 %v4584
  %v4877 = vunpack.c.h.b16 %v4584
  %v4878 = vunpack.c.l.b16 %v4585
  %v4879 = vunpack.c.h.b16 %v4585
  %v4880 = vunpack.c.l.b16 %v4586
  %v4881 = vunpack.c.h.b16 %v4586
  %v4882 = vunpack.c.l.b16 %v4587
  %v4883 = vunpack.c.h.b16 %v4587
  %v4884 = vunpack.c.l.b16 %v4588
  %v4885 = vunpack.c.h.b16 %v4588
  %v4886 = vunpack.c.l.b16 %v4589
  %v4887 = vunpack.c.h.b16 %v4589
  %v4888 = vunpack.c.l.b16 %v4590
  %v4889 = vunpack.c.h.b16 %v4590
  %v4890 = vunpack.c.l.b16 %v4591
  %v4891 = vunpack.c.h.b16 %v4591
  %v4892 = vunpack.c.l.b16 %v4592
  %v4893 = vunpack.c.h.b16 %v4592
  %v4894 = vunpack.c.l.b16 %v4593
  %v4895 = vunpack.c.h.b16 %v4593
  %v4896 = vunpack.c.l.b16 %v4594
  %v4897 = vunpack.c.h.b16 %v4594
  %v4898 = vunpack.c.l.b16 %v4595
  %v4899 = vunpack.c.h.b16 %v4595
  %v4900 = vunpack.c.l.b16 %v4596
  %v4901 = vunpack.c.h.b16 %v4596
  %v4902 = vunpack.c.l.b16 %v4597
  %v4903 = vunpack.c.h.b16 %v4597
  %v4904 = vunpack.c.l.b16 %v4598
  %v4905 = vunpack.c.h.b16 %v4598
  %v4906 = vunpack.c.l.b16 %v4599
  %v4907 = vunpack.c.h.b16 %v4599
  %v4908 = vunpack.c.l.b16 %v4600
  %v4909 = vunpack.c.h.b16 %v4600
  %v4910 = vunpack.c.l.b16 %v4601
  %v4911 = vunpack.c.h.b16 %v4601
  %v4912 = vunpack.c.l.b16 %v4602
  %v4913 = vunpack.c.h.b16 %v4602
  %v4914 = vunpack.c.l.b16 %v4603
  %v4915 = vunpack.c.h.b16 %v4603
  %v4916 = vunpack.c.l.b16 %v4604
  %v4917 = vunpack.c.h.b16 %v4604
  %v4918 = vunpack.c.l.b16 %v4605
  %v4919 = vunpack.c.h.b16 %v4605
  %v4920 = vunpack.c.l.b16 %v4606
  %v4921 = vunpack.c.h.b16 %v4606
  %v4922 = vunpack.c.l.b16 %v4607
  %v4923 = vunpack.c.h.b16 %v4607
  %v4924 = vunpack.c.l.b16 %v4608
  %v4925 = vunpack.c.h.b16 %v4608
  %v4926 = vunpack.c.l.b16 %v4609
  %v4927 = vunpack.c.h.b16 %v4609
  %v4928 = vunpack.c.l.b16 %v4610
  %v4929 = vunpack.c.h.b16 %v4610
  %v4930 = vunpack.c.l.b16 %v4611
  %v4931 = vunpack.c.h.b16 %v4611
  %v4932 = vunpack.c.l.b16 %v4612
  %v4933 = vunpack.c.h.b16 %v4612
  %v4934 = vunpack.c.l.b16 %v4613
  %v4935 = vunpack.c.h.b16 %v4613
  %v4936 = vunpack.c.l.b16 %v4614
  %v4937 = vunpack.c.h.b16 %v4614
  %v4938 = vunpack.c.l.b16 %v4615
  %v4939 = vunpack.c.h.b16 %v4615
  %v4940 = vunpack.c.l.b16 %v4616
  %v4941 = vunpack.c.h.b16 %v4616
  %v4942 = vunpack.c.l.b16 %v4617
  %v4943 = vunpack.c.h.b16 %v4617
  %v4944 = vunpack.c.l.b16 %v4618
  %v4945 = vunpack.c.h.b16 %v4618
  %v4946 = vunpack.c.l.b16 %v4619
  %v4947 = vunpack.c.h.b16 %v4619
  %v4948 = vunpack.c.l.b16 %v4620
  %v4949 = vunpack.c.h.b16 %v4620
  %v4950 = vunpack.c.l.b16 %v4621
  %v4951 = vunpack.c.h.b16 %v4621
  %v4952 = vunpack.c.l.b16 %v4622
  %v4953 = vunpack.c.h.b16 %v4622
  %v4954 = vunpack.c.l.b16 %v4623
  %v4955 = vunpack.c.h.b16 %v4623
  %v4956 = vunpack.c.l.b16 %v4624
  %v4957 = vunpack.c.h.b16 %v4624
  %v4958 = vunpack.c.l.b16 %v4625
  %v4959 = vunpack.c.h.b16 %v4625
  %v4960 = vunpack.c.l.b16 %v4626
  %v4961 = vunpack.c.h.b16 %v4626
  %v4962 = vunpack.c.l.b16 %v4627
  %v4963 = vunpack.c.h.b16 %v4627
  %v4964 = vunpack.c.l.b16 %v4628
  %v4965 = vunpack.c.h.b16 %v4628
  %v4966 = vunpack.c.l.b16 %v4629
  %v4967 = vunpack.c.h.b16 %v4629
  %v4968 = vunpack.c.l.b16 %v4630
  %v4969 = vunpack.c.h.b16 %v4630
  %v4970 = vunpack.c.l.b16 %v4631
  %v4971 = vunpack.c.h.b16 %v4631
  %v4972 = vunpack.c.l.b16 %v4632
  %v4973 = vunpack.c.h.b16 %v4632
  %v4974 = vunpack.c.l.b16 %v4633
  %v4975 = vunpack.c.h.b16 %v4633
  %v4976 = vunpack.c.l.b16 %v4634
  %v4977 = vunpack.c.h.b16 %v4634
  %v4978 = vunpack.c.l.b16 %v4635
  %v4979 = vunpack.c.h.b16 %v4635
  %v4980 = vunpack.c.l.b16 %v4636
  %v4981 = vunpack.c.h.b16 %v4636
  %v4982 = vunpack.c.l.b16 %v4637
  %v4983 = vunpack.c.h.b16 %v4637
  %v4984 = vunpack.c.l.b16 %v4638
  %v4985 = vunpack.c.h.b16 %v4638
  %v4986 = vunpack.c.l.b16 %v4639
  %v4987 = vunpack.c.h.b16 %v4639
  %v4988 = vunpack.c.l.b16 %v4640
  %v4989 = vunpack.c.h.b16 %v4640
  %v4990 = vunpack.c.l.b16 %v4641
  %v4991 = vunpack.c.h.b16 %v4641
  %v4992 = vunpack.c.l.b16 %v4642
  %v4993 = vunpack.c.h.b16 %v4642
  %v4994 = vunpack.c.l.b16 %v4643
  %v4995 = vunpack.c.h.b16 %v4643
  %v4996 = vunpack.c.l.b16 %v4644
  %v4997 = vunpack.c.h.b16 %v4644
  %v4998 = vunpack.c.l.b16 %v4645
  %v4999 = vunpack.c.h.b16 %v4645
  %v5000 = vunpack.c.l.b16 %v4646
  %v5001 = vunpack.c.h.b16 %v4646
  %v5002 = vunpack.c.l.b16 %v4647
  %v5003 = vunpack.c.h.b16 %v4647
  %v5004 = vunpack.c.l.b16 %v4648
  %v5005 = vunpack.c.h.b16 %v4648
  %v5006 = vunpack.c.l.b16 %v4649
  %v5007 = vunpack.c.h.b16 %v4649
  %v5008 = vunpack.c.l.b16 %v4650
  %v5009 = vunpack.c.h.b16 %v4650
  %v5010 = vunpack.c.l.b16 %v4651
  %v5011 = vunpack.c.h.b16 %v4651
  %v5012 = vunpack.c.l.b16 %v4652
  %v5013 = vunpack.c.h.b16 %v4652
  %v5014 = vunpack.c.l.b16 %v4653
  %v5015 = vunpack.c.h.b16 %v4653
  %v5016 = vunpack.c.l.b16 %v4654
  %v5017 = vunpack.c.h.b16 %v4654
  %v5018 = vunpack.c.l.b16 %v4655
  %v5019 = vunpack.c.h.b16 %v4655
  %v5020 = vunpack.c.l.b16 %v4656
  %v5021 = vunpack.c.h.b16 %v4656
  %v5022 = vunpack.c.l.b16 %v4657
  %v5023 = vunpack.c.h.b16 %v4657
  %v5024 = vunpack.c.l.b16 %v4658
  %v5025 = vunpack.c.h.b16 %v4658
  %v5026 = vunpack.c.l.b16 %v4659
  %v5027 = vunpack.c.h.b16 %v4659
  %v5028 = vunpack.c.l.b16 %v4660
  %v5029 = vunpack.c.h.b16 %v4660
  %v5030 = vunpack.c.l.b16 %v4661
  %v5031 = vunpack.c.h.b16 %v4661
  %v5032 = vunpack.c.l.b16 %v4662
  %v5033 = vunpack.c.h.b16 %v4662
  %v5034 = vunpack.c.l.b16 %v4663
  %v5035 = vunpack.c.h.b16 %v4663
  %v5036 = vunpack.c.l.b16 %v4664
  %v5037 = vunpack.c.h.b16 %v4664
  %v5038 = vunpack.c.l.b16 %v4665
  %v5039 = vunpack.c.h.b16 %v4665
  %v5040 = vunpack.c.l.b16 %v4666
  %v5041 = vunpack.c.h.b16 %v4666
  %v5042 = vunpack.c.l.b16 %v4667
  %v5043 = vunpack.c.h.b16 %v4667
  %v5044 = vunpack.c.l.b16 %v4668
  %v5045 = vunpack.c.h.b16 %v4668
  %v5046 = vunpack.c.l.b16 %v4669
  %v5047 = vunpack.c.h.b16 %v4669
  %v5048 = vunpack.c.l.b16 %v4670
  %v5049 = vunpack.c.h.b16 %v4670
  %v5050 = vunpack.c.l.b16 %v4671
  %v5051 = vunpack.c.h.b16 %v4671
  %v5052 = vunpack.c.l.b16 %v4672
  %v5053 = vunpack.c.h.b16 %v4672
  %v5054 = vunpack.c.l.b16 %v4673
  %v5055 = vunpack.c.h.b16 %v4673
  %v5056 = vunpack.c.l.b16 %v4674
  %v5057 = vunpack.c.h.b16 %v4674
  %v5058 = vunpack.c.l.b16 %v4675
  %v5059 = vunpack.c.h.b16 %v4675
  %v5060 = vpack.c.b16 %v4812, %v4804
  %v5061 = vpack.c.b16 %v4813, %v4805
  %v5062 = vpack.c.b16 %v4814, %v4806
  %v5063 = vpack.c.b16 %v4815, %v4807
  %v5064 = vpack.c.b16 %v4816, %v4808
  %v5065 = vpack.c.b16 %v4817, %v4809
  %v5066 = vpack.c.b16 %v4818, %v4810
  %v5067 = vpack.c.b16 %v4819, %v4811
  %v5068 = vpack.c.b16 %v4828, %v4820
  %v5069 = vpack.c.b16 %v4829, %v4821
  %v5070 = vpack.c.b16 %v4830, %v4822
  %v5071 = vpack.c.b16 %v4831, %v4823
  %v5072 = vpack.c.b16 %v4832, %v4824
  %v5073 = vpack.c.b16 %v4833, %v4825
  %v5074 = vpack.c.b16 %v4834, %v4826
  %v5075 = vpack.c.b16 %v4835, %v4827
  %v5076 = vpack.c.b16 %v4844, %v4836
  %v5077 = vpack.c.b16 %v4845, %v4837
  %v5078 = vpack.c.b16 %v4846, %v4838
  %v5079 = vpack.c.b16 %v4847, %v4839
  %v5080 = vpack.c.b16 %v4848, %v4840
  %v5081 = vpack.c.b16 %v4849, %v4841
  %v5082 = vpack.c.b16 %v4850, %v4842
  %v5083 = vpack.c.b16 %v4851, %v4843
  %v5084 = vpack.c.b16 %v4860, %v4852
  %v5085 = vpack.c.b16 %v4861, %v4853
  %v5086 = vpack.c.b16 %v4862, %v4854
  %v5087 = vpack.c.b16 %v4863, %v4855
  %v5088 = vpack.c.b16 %v4864, %v4856
  %v5089 = vpack.c.b16 %v4865, %v4857
  %v5090 = vpack.c.b16 %v4866, %v4858
  %v5091 = vpack.c.b16 %v4867, %v4859
  %v5092 = vpack.c.b16 %v4876, %v4868
  %v5093 = vpack.c.b16 %v4877, %v4869
  %v5094 = vpack.c.b16 %v4878, %v4870
  %v5095 = vpack.c.b16 %v4879, %v4871
  %v5096 = vpack.c.b16 %v4880, %v4872
  %v5097 = vpack.c.b16 %v4881, %v4873
  %v5098 = vpack.c.b16 %v4882, %v4874
  %v5099 = vpack.c.b16 %v4883, %v4875
  %v5100 = vpack.c.b16 %v4892, %v4884
  %v5101 = vpack.c.b16 %v4893, %v4885
  %v5102 = vpack.c.b16 %v4894, %v4886
  %v5103 = vpack.c.b16 %v4895, %v4887
  %v5104 = vpack.c.b16 %v4896, %v4888
  %v5105 = vpack.c.b16 %v4897, %v4889
  %v5106 = vpack.c.b16 %v4898, %v4890
  %v5107 = vpack.c.b16 %v4899, %v4891
  %v5108 = vpack.c.b16 %v4908, %v4900
  %v5109 = vpack.c.b16 %v4909, %v4901
  %v5110 = vpack.c.b16 %v4910, %v4902
  %v5111 = vpack.c.b16 %v4911, %v4903
  %v5112 = vpack.c.b16 %v4912, %v4904
  %v5113 = vpack.c.b16 %v4913, %v4905
  %v5114 = vpack.c.b16 %v4914, %v4906
  %v5115 = vpack.c.b16 %v4915, %v4907
  %v5116 = vpack.c.b16 %v4924, %v4916
  %v5117 = vpack.c.b16 %v4925, %v4917
  %v5118 = vpack.c.b16 %v4926, %v4918
  %v5119 = vpack.c.b16 %v4927, %v4919
  %v5120 = vpack.c.b16 %v4928, %v4920
  %v5121 = vpack.c.b16 %v4929, %v4921
  %v5122 = vpack.c.b16 %v4930, %v4922
  %v5123 = vpack.c.b16 %v4931, %v4923
  %v5124 = vpack.c.b16 %v4940, %v4932
  %v5125 = vpack.c.b16 %v4941, %v4933
  %v5126 = vpack.c.b16 %v4942, %v4934
  %v5127 = vpack.c.b16 %v4943, %v4935
  %v5128 = vpack.c.b16 %v4944, %v4936
  %v5129 = vpack.c.b16 %v4945, %v4937
  %v5130 = vpack.c.b16 %v4946, %v4938
  %v5131 = vpack.c.b16 %v4947, %v4939
  %v5132 = vpack.c.b16 %v4956, %v4948
  %v5133 = vpack.c.b16 %v4957, %v4949
  %v5134 = vpack.c.b16 %v4958, %v4950
  %v5135 = vpack.c.b16 %v4959, %v4951
  %v5136 = vpack.c.b16 %v4960, %v4952
  %v5137 = vpack.c.b16 %v4961, %v4953
  %v5138 = vpack.c.b16 %v4962, %v4954
  %v5139 = vpack.c.b16 %v4963, %v4955
  %v5140 = vpack.c.b16 %v4972, %v4964
  %v5141 = vpack.c.b16 %v4973, %v4965
  %v5142 = vpack.c.b16 %v4974, %v4966
  %v5143 = vpack.c.b16 %v4975, %v4967
  %v5144 = vpack.c.b16 %v4976, %v4968
  %v5145 = vpack.c.b16 %v4977, %v4969
  %v5146 = vpack.c.b16 %v4978, %v4970
  %v5147 = vpack.c.b16 %v4979, %v4971
  %v5148 = vpack.c.b16 %v4988, %v4980
  %v5149 = vpack.c.b16 %v4989, %v4981
  %v5150 = vpack.c.b16 %v4990, %v4982
  %v5151 = vpack.c.b16 %v4991, %v4983
  %v5152 = vpack.c.b16 %v4992, %v4984
  %v5153 = vpack.c.b16 %v4993, %v4985
  %v5154 = vpack.c.b16 %v4994, %v4986
  %v5155 = vpack.c.b16 %v4995, %v4987
  %v5156 = vpack.c.b16 %v5004, %v4996
  %v5157 = vpack.c.b16 %v5005, %v4997
  %v5158 = vpack.c.b16 %v5006, %v4998
  %v5159 = vpack.c.b16 %v5007, %v4999
  %v5160 = vpack.c.b16 %v5008, %v5000
  %v5161 = vpack.c.b16 %v5009, %v5001
  %v5162 = vpack.c.b16 %v5010, %v5002
  %v5163 = vpack.c.b16 %v5011, %v5003
  %v5164 = vpack.c.b16 %v5020, %v5012
  %v5165 = vpack.c.b16 %v5021, %v5013
  %v5166 = vpack.c.b16 %v5022, %v5014
  %v5167 = vpack.c.b16 %v5023, %v5015
  %v5168 = vpack.c.b16 %v5024, %v5016
  %v5169 = vpack.c.b16 %v5025, %v5017
  %v5170 = vpack.c.b16 %v5026, %v5018
  %v5171 = vpack.c.b16 %v5027, %v5019
  %v5172 = vpack.c.b16 %v5036, %v5028
  %v5173 = vpack.c.b16 %v5037, %v5029
  %v5174 = vpack.c.b16 %v5038, %v5030
  %v5175 = vpack.c.b16 %v5039, %v5031
  %v5176 = vpack.c.b16 %v5040, %v5032
  %v5177 = vpack.c.b16 %v5041, %v5033
  %v5178 = vpack.c.b16 %v5042, %v5034
  %v5179 = vpack.c.b16 %v5043, %v5035
  %v5180 = vpack.c.b16 %v5052, %v5044
  %v5181 = vpack.c.b16 %v5053, %v5045
  %v5182 = vpack.c.b16 %v5054, %v5046
  %v5183 = vpack.c.b16 %v5055, %v5047
  %v5184 = vpack.c.b16 %v5056, %v5048
  %v5185 = vpack.c.b16 %v5057, %v5049
  %v5186 = vpack.c.b16 %v5058, %v5050
  %v5187 = vpack.c.b16 %v5059, %v5051
  %5316 = vmatprep.subr.bf16.mxu0 %v5061
  %5317 = vmatpush1.bf16.msra.mxu0 %v5060
  %5318 = vmatprep.subr.bf16.mxu0 %v5069
  %5319 = vmatpush1.bf16.msra.mxu0 %v5068
  %5320 = vmatprep.subr.bf16.mxu0 %v5077
  %5321 = vmatpush1.bf16.msra.mxu0 %v5076
  %5322 = vmatprep.subr.bf16.mxu0 %v5085
  %5323 = vmatpush1.bf16.msra.mxu0 %v5084
  %5324 = vmatprep.subr.bf16.mxu0 %v5093
  %5325 = vmatpush1.bf16.msra.mxu0 %v5092
  %5326 = vmatprep.subr.bf16.mxu0 %v5101
  %5327 = vmatpush1.bf16.msra.mxu0 %v5100
  %5328 = vmatprep.subr.bf16.mxu0 %v5109
  %5329 = vmatpush1.bf16.msra.mxu0 %v5108
  %5330 = vmatprep.subr.bf16.mxu0 %v5117
  %5331 = vmatpush1.bf16.msra.mxu0 %v5116
  %5332 = vmatprep.subr.bf16.mxu0 %v5125
  %5333 = vmatpush1.bf16.msra.mxu0 %v5124
  %5334 = vmatprep.subr.bf16.mxu0 %v5133
  %5335 = vmatpush1.bf16.msra.mxu0 %v5132
  %5336 = vmatprep.subr.bf16.mxu0 %v5141
  %5337 = vmatpush1.bf16.msra.mxu0 %v5140
  %5338 = vmatprep.subr.bf16.mxu0 %v5149
  %5339 = vmatpush1.bf16.msra.mxu0 %v5148
  %5340 = vmatprep.subr.bf16.mxu0 %v5157
  %5341 = vmatpush1.bf16.msra.mxu0 %v5156
  %5342 = vmatprep.subr.bf16.mxu0 %v5165
  %5343 = vmatpush1.bf16.msra.mxu0 %v5164
  %5344 = vmatprep.subr.bf16.mxu0 %v5173
  %5345 = vmatpush1.bf16.msra.mxu0 %v5172
  %5346 = vmatprep.subr.bf16.mxu0 %v5181
  %5347 = vmatpush1.bf16.msra.mxu0 %v5180
  %5348 = vmatprep.mubr.bf16.mxu0 %v3559
  %5349 = vmatmul.mubr.bf16.gmra.mrb[0].mxu0 %v3558
  %v5350 = vpop.f32.mrb[0].mxu0
  %v5351 = vadd.f32 0.0, %v5350
  %v5352 = vpop.f32.mrb[0].mxu0
  %v5353 = vadd.f32 0.0, %v5352
  %v5354 = vpop.f32.mrb[0].mxu0
  %v5355 = vpop.f32.mrb[0].mxu0
  %5356 = vdwg.mxu0
  %5357 = vmatprep.subr.bf16.mxu0 %v5063
  %5358 = vmatpush1.bf16.msra.mxu0 %v5062
  %5359 = vmatprep.subr.bf16.mxu0 %v5071
  %5360 = vmatpush1.bf16.msra.mxu0 %v5070
  %5361 = vmatprep.subr.bf16.mxu0 %v5079
  %5362 = vmatpush1.bf16.msra.mxu0 %v5078
  %5363 = vmatprep.subr.bf16.mxu0 %v5087
  %5364 = vmatpush1.bf16.msra.mxu0 %v5086
  %5365 = vmatprep.subr.bf16.mxu0 %v5095
  %5366 = vmatpush1.bf16.msra.mxu0 %v5094
  %5367 = vmatprep.subr.bf16.mxu0 %v5103
  %5368 = vmatpush1.bf16.msra.mxu0 %v5102
  %5369 = vmatprep.subr.bf16.mxu0 %v5111
  %5370 = vmatpush1.bf16.msra.mxu0 %v5110
  %5371 = vmatprep.subr.bf16.mxu0 %v5119
  %5372 = vmatpush1.bf16.msra.mxu0 %v5118
  %5373 = vmatprep.subr.bf16.mxu0 %v5127
  %5374 = vmatpush1.bf16.msra.mxu0 %v5126
  %5375 = vmatprep.subr.bf16.mxu0 %v5135
  %5376 = vmatpush1.bf16.msra.mxu0 %v5134
  %5377 = vmatprep.subr.bf16.mxu0 %v5143
  %5378 = vmatpush1.bf16.msra.mxu0 %v5142
  %5379 = vmatprep.subr.bf16.mxu0 %v5151
  %5380 = vmatpush1.bf16.msra.mxu0 %v5150
  %5381 = vmatprep.subr.bf16.mxu0 %v5159
  %5382 = vmatpush1.bf16.msra.mxu0 %v5158
  %5383 = vmatprep.subr.bf16.mxu0 %v5167
  %5384 = vmatpush1.bf16.msra.mxu0 %v5166
  %5385 = vmatprep.subr.bf16.mxu0 %v5175
  %5386 = vmatpush1.bf16.msra.mxu0 %v5174
  %5387 = vmatprep.subr.bf16.mxu0 %v5183
  %5388 = vmatpush1.bf16.msra.mxu0 %v5182
  %5389 = vmatprep.mubr.bf16.mxu0 %v3559
  %5390 = vmatmul.mubr.bf16.gmra.mrb[0].mxu0 %v3558
  %v5391 = vpop.f32.mrb[0].mxu0
  %v5392 = vadd.f32 0.0, %v5391
  %v5393 = vpop.f32.mrb[0].mxu0
  %v5394 = vadd.f32 0.0, %v5393
  %v5395 = vpop.f32.mrb[0].mxu0
  %v5396 = vpop.f32.mrb[0].mxu0
  %5397 = vdwg.mxu0
  %5398 = vmatprep.subr.bf16.mxu0 %v5065
  %5399 = vmatpush1.bf16.msra.mxu0 %v5064
  %5400 = vmatprep.subr.bf16.mxu0 %v5073
  %5401 = vmatpush1.bf16.msra.mxu0 %v5072
  %5402 = vmatprep.subr.bf16.mxu0 %v5081
  %5403 = vmatpush1.bf16.msra.mxu0 %v5080
  %5404 = vmatprep.subr.bf16.mxu0 %v5089
  %5405 = vmatpush1.bf16.msra.mxu0 %v5088
  %5406 = vmatprep.subr.bf16.mxu0 %v5097
  %5407 = vmatpush1.bf16.msra.mxu0 %v5096
  %5408 = vmatprep.subr.bf16.mxu0 %v5105
  %5409 = vmatpush1.bf16.msra.mxu0 %v5104
  %5410 = vmatprep.subr.bf16.mxu0 %v5113
  %5411 = vmatpush1.bf16.msra.mxu0 %v5112
  %5412 = vmatprep.subr.bf16.mxu0 %v5121
  %5413 = vmatpush1.bf16.msra.mxu0 %v5120
  %5414 = vmatprep.subr.bf16.mxu0 %v5129
  %5415 = vmatpush1.bf16.msra.mxu0 %v5128
  %5416 = vmatprep.subr.bf16.mxu0 %v5137
  %5417 = vmatpush1.bf16.msra.mxu0 %v5136
  %5418 = vmatprep.subr.bf16.mxu0 %v5145
  %5419 = vmatpush1.bf16.msra.mxu0 %v5144
  %5420 = vmatprep.subr.bf16.mxu0 %v5153
  %5421 = vmatpush1.bf16.msra.mxu0 %v5152
  %5422 = vmatprep.subr.bf16.mxu0 %v5161
  %5423 = vmatpush1.bf16.msra.mxu0 %v5160
  %5424 = vmatprep.subr.bf16.mxu0 %v5169
  %5425 = vmatpush1.bf16.msra.mxu0 %v5168
  %5426 = vmatprep.subr.bf16.mxu0 %v5177
  %5427 = vmatpush1.bf16.msra.mxu0 %v5176
  %5428 = vmatprep.subr.bf16.mxu0 %v5185
  %5429 = vmatpush1.bf16.msra.mxu0 %v5184
  %5430 = vmatprep.mubr.bf16.mxu0 %v3559
  %5431 = vmatmul.mubr.bf16.gmra.mrb[0].mxu0 %v3558
  %v5432 = vpop.f32.mrb[0].mxu0
  %v5433 = vadd.f32 0.0, %v5432
  %v5434 = vpop.f32.mrb[0].mxu0
  %v5435 = vadd.f32 0.0, %v5434
  %v5436 = vpop.f32.mrb[0].mxu0
  %v5437 = vpop.f32.mrb[0].mxu0
  %5438 = vdwg.mxu0
  %5439 = vmatprep.subr.bf16.mxu0 %v5067
  %5440 = vmatpush1.bf16.msra.mxu0 %v5066
  %5441 = vmatprep.subr.bf16.mxu0 %v5075
  %5442 = vmatpush1.bf16.msra.mxu0 %v5074
  %5443 = vmatprep.subr.bf16.mxu0 %v5083
  %5444 = vmatpush1.bf16.msra.mxu0 %v5082
  %5445 = vmatprep.subr.bf16.mxu0 %v5091
  %5446 = vmatpush1.bf16.msra.mxu0 %v5090
  %5447 = vmatprep.subr.bf16.mxu0 %v5099
  %5448 = vmatpush1.bf16.msra.mxu0 %v5098
  %5449 = vmatprep.subr.bf16.mxu0 %v5107
  %5450 = vmatpush1.bf16.msra.mxu0 %v5106
  %5451 = vmatprep.subr.bf16.mxu0 %v5115
  %5452 = vmatpush1.bf16.msra.mxu0 %v5114
  %5453 = vmatprep.subr.bf16.mxu0 %v5123
  %5454 = vmatpush1.bf16.msra.mxu0 %v5122
  %5455 = vmatprep.subr.bf16.mxu0 %v5131
  %5456 = vmatpush1.bf16.msra.mxu0 %v5130
  %5457 = vmatprep.subr.bf16.mxu0 %v5139
  %5458 = vmatpush1.bf16.msra.mxu0 %v5138
  %5459 = vmatprep.subr.bf16.mxu0 %v5147
  %5460 = vmatpush1.bf16.msra.mxu0 %v5146
  %5461 = vmatprep.subr.bf16.mxu0 %v5155
  %5462 = vmatpush1.bf16.msra.mxu0 %v5154
  %5463 = vmatprep.subr.bf16.mxu0 %v5163
  %5464 = vmatpush1.bf16.msra.mxu0 %v5162
  %5465 = vmatprep.subr.bf16.mxu0 %v5171
  %5466 = vmatpush1.bf16.msra.mxu0 %v5170
  %5467 = vmatprep.subr.bf16.mxu0 %v5179
  %5468 = vmatpush1.bf16.msra.mxu0 %v5178
  %5469 = vmatprep.subr.bf16.mxu0 %v5187
  %5470 = vmatpush1.bf16.msra.mxu0 %v5186
  %5471 = vmatprep.mubr.bf16.mxu0 %v3559
  %5472 = vmatmul.mubr.bf16.gmra.mrb[0].mxu0 %v3558
  %v5473 = vpop.f32.mrb[0].mxu0
  %v5474 = vadd.f32 0.0, %v5473
  %v5475 = vpop.f32.mrb[0].mxu0
  %v5476 = vadd.f32 0.0, %v5475
  %v5477 = vpop.f32.mrb[0].mxu0
  %v5478 = vpop.f32.mrb[0].mxu0
  %5479 = vdwg.mxu0
  %v5480 = vadd.f32 %v4540, %v5351
  %v5481 = vadd.f32 %v4541, %v5353
  %v5482 = vadd.f32 %v4542, %v5392
  %v5483 = vadd.f32 %v4543, %v5394
  %v5484 = vadd.f32 %v4544, %v5433
  %v5485 = vadd.f32 %v4545, %v5435
  %v5486 = vadd.f32 %v4546, %v5474
  %v5487 = vadd.f32 %v4547, %v5476
  %v5488 = vxor.u32 %v5480, 2147483648
  %v5489 = vxor.u32 %v5481, 2147483648
  %v5490 = vxor.u32 %v5482, 2147483648
  %v5491 = vxor.u32 %v5483, 2147483648
  %v5492 = vxor.u32 %v5484, 2147483648
  %v5493 = vxor.u32 %v5485, 2147483648
  %v5494 = vmul.f32 %v5488, 1.442695
  %v5495 = vpow.pop %v5494
  %v5496 = vmul.f32 %v5489, 1.442695
  %v5497 = vpow.pop %v5496
  %v5498 = vmul.f32 %v5490, 1.442695
  %v5499 = vpow.pop %v5498
  %v5500 = vmul.f32 %v5491, 1.442695
  %v5501 = vpow.pop %v5500
  %v5502 = vmul.f32 %v5492, 1.442695
  %v5503 = vpow.pop %v5502
  %v5504 = vmul.f32 %v5493, 1.442695
  %v5505 = vpow.pop %v5504
  %v5506 = vadd.f32 %v5495, 1.0
  %v5507 = vadd.f32 %v5497, 1.0
  %v5508 = vadd.f32 %v5499, 1.0
  %v5509 = vadd.f32 %v5501, 1.0
  %v5510 = vadd.f32 %v5503, 1.0
  %v5511 = vadd.f32 %v5505, 1.0
  %v5512 = vrcp.pop %v5506
  %v5513 = vmul.f32 1.0, %v5512
  %v5514 = vrcp.pop %v5507
  %v5515 = vmul.f32 1.0, %v5514
  %v5516 = vrcp.pop %v5508
  %v5517 = vmul.f32 1.0, %v5516
  %v5518 = vrcp.pop %v5509
  %v5519 = vmul.f32 1.0, %v5518
  %v5520 = vrcp.pop %v5510
  %v5521 = vmul.f32 1.0, %v5520
  %v5522 = vrcp.pop %v5511
  %v5523 = vmul.f32 1.0, %v5522
  %v5524 = vtanh.pop %v5486
  %v5525 = vtanh.pop %v5487
  %v5526 = vmul.f32 %v5517, %v3552
  %v5527 = vmul.f32 %v5519, %v3553
  %v5528 = vmul.f32 %v5513, %v5524
  %v5529 = vmul.f32 %v5515, %v5525
  %v5530 = vadd.f32 %v5526, %v5528
  %v5531 = vadd.f32 %v5527, %v5529
  %v5532 = vtanh.pop %v5530
  %v5533 = vtanh.pop %v5531
  %v5534 = vmul.f32 %v5521, %v5532
  %v5535 = vmul.f32 %v5523, %v5533
  %v5536 = vpack.c.bf16 %v5534, %v5534
  %v5537 = vpack.c.bf16 %v5535, %v5535
  %v5538 = vpack.c.bf16 %v4538, %v4538
  %v5539 = vpack.c.bf16 %v4539, %v4539
  %v5540 = vld [vmem:[%s4] sm:$0xff]
  %v5541 = vld [vmem:[%s4 + $0x8] sm:$0xff]
  %v5542 = vld [vmem:[%s4 + $0x10] sm:$0xff]
  %v5543 = vld [vmem:[%s4 + $0x18] sm:$0xff]
  %v5544 = vld [vmem:[%s4 + $0x20] sm:$0xff]
  %v5545 = vld [vmem:[%s4 + $0x28] sm:$0xff]
  %v5546 = vld [vmem:[%s4 + $0x30] sm:$0xff]
  %v5547 = vld [vmem:[%s4 + $0x38] sm:$0xff]
  %v5548 = vld [vmem:[%s4 + $0x40] sm:$0xff]
  %v5549 = vld [vmem:[%s4 + $0x48] sm:$0xff]
  %v5550 = vld [vmem:[%s4 + $0x50] sm:$0xff]
  %v5551 = vld [vmem:[%s4 + $0x58] sm:$0xff]
  %v5552 = vld [vmem:[%s4 + $0x60] sm:$0xff]
  %v5553 = vld [vmem:[%s4 + $0x68] sm:$0xff]
  %v5554 = vld [vmem:[%s4 + $0x70] sm:$0xff]
  %v5555 = vld [vmem:[%s4 + $0x78] sm:$0xff]
  %v5556 = vld [vmem:[%s4 + $0x80] sm:$0xff]
  %v5557 = vld [vmem:[%s4 + $0x88] sm:$0xff]
  %v5558 = vld [vmem:[%s4 + $0x90] sm:$0xff]
  %v5559 = vld [vmem:[%s4 + $0x98] sm:$0xff]
  %v5560 = vld [vmem:[%s4 + $0xa0] sm:$0xff]
  %v5561 = vld [vmem:[%s4 + $0xa8] sm:$0xff]
  %v5562 = vld [vmem:[%s4 + $0xb0] sm:$0xff]
  %v5563 = vld [vmem:[%s4 + $0xb8] sm:$0xff]
  %v5564 = vld [vmem:[%s4 + $0xc0] sm:$0xff]
  %v5565 = vld [vmem:[%s4 + $0xc8] sm:$0xff]
  %v5566 = vld [vmem:[%s4 + $0xd0] sm:$0xff]
  %v5567 = vld [vmem:[%s4 + $0xd8] sm:$0xff]
  %v5568 = vld [vmem:[%s4 + $0xe0] sm:$0xff]
  %v5569 = vld [vmem:[%s4 + $0xe8] sm:$0xff]
  %v5570 = vld [vmem:[%s4 + $0xf0] sm:$0xff]
  %v5571 = vld [vmem:[%s4 + $0xf8] sm:$0xff]
  %v5572 = vld [vmem:[%s4 + $0x100] sm:$0xff]
  %v5573 = vld [vmem:[%s4 + $0x108] sm:$0xff]
  %v5574 = vld [vmem:[%s4 + $0x110] sm:$0xff]
  %v5575 = vld [vmem:[%s4 + $0x118] sm:$0xff]
  %v5576 = vld [vmem:[%s4 + $0x120] sm:$0xff]
  %v5577 = vld [vmem:[%s4 + $0x128] sm:$0xff]
  %v5578 = vld [vmem:[%s4 + $0x130] sm:$0xff]
  %v5579 = vld [vmem:[%s4 + $0x138] sm:$0xff]
  %v5580 = vld [vmem:[%s4 + $0x140] sm:$0xff]
  %v5581 = vld [vmem:[%s4 + $0x148] sm:$0xff]
  %v5582 = vld [vmem:[%s4 + $0x150] sm:$0xff]
  %v5583 = vld [vmem:[%s4 + $0x158] sm:$0xff]
  %v5584 = vld [vmem:[%s4 + $0x160] sm:$0xff]
  %v5585 = vld [vmem:[%s4 + $0x168] sm:$0xff]
  %v5586 = vld [vmem:[%s4 + $0x170] sm:$0xff]
  %v5587 = vld [vmem:[%s4 + $0x178] sm:$0xff]
  %v5588 = vld [vmem:[%s4 + $0x180] sm:$0xff]
  %v5589 = vld [vmem:[%s4 + $0x188] sm:$0xff]
  %v5590 = vld [vmem:[%s4 + $0x190] sm:$0xff]
  %v5591 = vld [vmem:[%s4 + $0x198] sm:$0xff]
  %v5592 = vld [vmem:[%s4 + $0x1a0] sm:$0xff]
  %v5593 = vld [vmem:[%s4 + $0x1a8] sm:$0xff]
  %v5594 = vld [vmem:[%s4 + $0x1b0] sm:$0xff]
  %v5595 = vld [vmem:[%s4 + $0x1b8] sm:$0xff]
  %v5596 = vld [vmem:[%s4 + $0x1c0] sm:$0xff]
  %v5597 = vld [vmem:[%s4 + $0x1c8] sm:$0xff]
  %v5598 = vld [vmem:[%s4 + $0x1d0] sm:$0xff]
  %v5599 = vld [vmem:[%s4 + $0x1d8] sm:$0xff]
  %v5600 = vld [vmem:[%s4 + $0x1e0] sm:$0xff]
  %v5601 = vld [vmem:[%s4 + $0x1e8] sm:$0xff]
  %v5602 = vld [vmem:[%s4 + $0x1f0] sm:$0xff]
  %v5603 = vld [vmem:[%s4 + $0x1f8] sm:$0xff]
  %v5604 = vld [vmem:[%s4 + $0x200] sm:$0xff]
  %v5605 = vld [vmem:[%s4 + $0x208] sm:$0xff]
  %v5606 = vld [vmem:[%s4 + $0x210] sm:$0xff]
  %v5607 = vld [vmem:[%s4 + $0x218] sm:$0xff]
  %v5608 = vld [vmem:[%s4 + $0x220] sm:$0xff]
  %v5609 = vld [vmem:[%s4 + $0x228] sm:$0xff]
  %v5610 = vld [vmem:[%s4 + $0x230] sm:$0xff]
  %v5611 = vld [vmem:[%s4 + $0x238] sm:$0xff]
  %v5612 = vld [vmem:[%s4 + $0x240] sm:$0xff]
  %v5613 = vld [vmem:[%s4 + $0x248] sm:$0xff]
  %v5614 = vld [vmem:[%s4 + $0x250] sm:$0xff]
  %v5615 = vld [vmem:[%s4 + $0x258] sm:$0xff]
  %v5616 = vld [vmem:[%s4 + $0x260] sm:$0xff]
  %v5617 = vld [vmem:[%s4 + $0x268] sm:$0xff]
  %v5618 = vld [vmem:[%s4 + $0x270] sm:$0xff]
  %v5619 = vld [vmem:[%s4 + $0x278] sm:$0xff]
  %v5620 = vld [vmem:[%s4 + $0x280] sm:$0xff]
  %v5621 = vld [vmem:[%s4 + $0x288] sm:$0xff]
  %v5622 = vld [vmem:[%s4 + $0x290] sm:$0xff]
  %v5623 = vld [vmem:[%s4 + $0x298] sm:$0xff]
  %v5624 = vld [vmem:[%s4 + $0x2a0] sm:$0xff]
  %v5625 = vld [vmem:[%s4 + $0x2a8] sm:$0xff]
  %v5626 = vld [vmem:[%s4 + $0x2b0] sm:$0xff]
  %v5627 = vld [vmem:[%s4 + $0x2b8] sm:$0xff]
  %v5628 = vld [vmem:[%s4 + $0x2c0] sm:$0xff]
  %v5629 = vld [vmem:[%s4 + $0x2c8] sm:$0xff]
  %v5630 = vld [vmem:[%s4 + $0x2d0] sm:$0xff]
  %v5631 = vld [vmem:[%s4 + $0x2d8] sm:$0xff]
  %v5632 = vld [vmem:[%s4 + $0x2e0] sm:$0xff]
  %v5633 = vld [vmem:[%s4 + $0x2e8] sm:$0xff]
  %v5634 = vld [vmem:[%s4 + $0x2f0] sm:$0xff]
  %v5635 = vld [vmem:[%s4 + $0x2f8] sm:$0xff]
  %v5636 = vld [vmem:[%s4 + $0x300] sm:$0xff]
  %v5637 = vld [vmem:[%s4 + $0x308] sm:$0xff]
  %v5638 = vld [vmem:[%s4 + $0x310] sm:$0xff]
  %v5639 = vld [vmem:[%s4 + $0x318] sm:$0xff]
  %v5640 = vld [vmem:[%s4 + $0x320] sm:$0xff]
  %v5641 = vld [vmem:[%s4 + $0x328] sm:$0xff]
  %v5642 = vld [vmem:[%s4 + $0x330] sm:$0xff]
  %v5643 = vld [vmem:[%s4 + $0x338] sm:$0xff]
  %v5644 = vld [vmem:[%s4 + $0x340] sm:$0xff]
  %v5645 = vld [vmem:[%s4 + $0x348] sm:$0xff]
  %v5646 = vld [vmem:[%s4 + $0x350] sm:$0xff]
  %v5647 = vld [vmem:[%s4 + $0x358] sm:$0xff]
  %v5648 = vld [vmem:[%s4 + $0x360] sm:$0xff]
  %v5649 = vld [vmem:[%s4 + $0x368] sm:$0xff]
  %v5650 = vld [vmem:[%s4 + $0x370] sm:$0xff]
  %v5651 = vld [vmem:[%s4 + $0x378] sm:$0xff]
  %v5652 = vld [vmem:[%s4 + $0x380] sm:$0xff]
  %v5653 = vld [vmem:[%s4 + $0x388] sm:$0xff]
  %v5654 = vld [vmem:[%s4 + $0x390] sm:$0xff]
  %v5655 = vld [vmem:[%s4 + $0x398] sm:$0xff]
  %v5656 = vld [vmem:[%s4 + $0x3a0] sm:$0xff]
  %v5657 = vld [vmem:[%s4 + $0x3a8] sm:$0xff]
  %v5658 = vld [vmem:[%s4 + $0x3b0] sm:$0xff]
  %v5659 = vld [vmem:[%s4 + $0x3b8] sm:$0xff]
  %v5660 = vld [vmem:[%s4 + $0x3c0] sm:$0xff]
  %v5661 = vld [vmem:[%s4 + $0x3c8] sm:$0xff]
  %v5662 = vld [vmem:[%s4 + $0x3d0] sm:$0xff]
  %v5663 = vld [vmem:[%s4 + $0x3d8] sm:$0xff]
  %v5664 = vld [vmem:[%s4 + $0x3e0] sm:$0xff]
  %v5665 = vld [vmem:[%s4 + $0x3e8] sm:$0xff]
  %v5666 = vld [vmem:[%s4 + $0x3f0] sm:$0xff]
  %v5667 = vld [vmem:[%s4 + $0x3f8] sm:$0xff]
  %v5668 = vld [vmem:[%s4 + $0x400] sm:$0xff]
  %v5669 = vld [vmem:[%s4 + $0x408] sm:$0xff]
  %v5670 = vld [vmem:[%s4 + $0x410] sm:$0xff]
  %v5671 = vld [vmem:[%s4 + $0x418] sm:$0xff]
  %v5672 = vld [vmem:[%s4 + $0x420] sm:$0xff]
  %v5673 = vld [vmem:[%s4 + $0x428] sm:$0xff]
  %v5674 = vld [vmem:[%s4 + $0x430] sm:$0xff]
  %v5675 = vld [vmem:[%s4 + $0x438] sm:$0xff]
  %v5676 = vld [vmem:[%s4 + $0x440] sm:$0xff]
  %v5677 = vld [vmem:[%s4 + $0x448] sm:$0xff]
  %v5678 = vld [vmem:[%s4 + $0x450] sm:$0xff]
  %v5679 = vld [vmem:[%s4 + $0x458] sm:$0xff]
  %v5680 = vld [vmem:[%s4 + $0x460] sm:$0xff]
  %v5681 = vld [vmem:[%s4 + $0x468] sm:$0xff]
  %v5682 = vld [vmem:[%s4 + $0x470] sm:$0xff]
  %v5683 = vld [vmem:[%s4 + $0x478] sm:$0xff]
  %v5684 = vld [vmem:[%s4 + $0x480] sm:$0xff]
  %v5685 = vld [vmem:[%s4 + $0x488] sm:$0xff]
  %v5686 = vld [vmem:[%s4 + $0x490] sm:$0xff]
  %v5687 = vld [vmem:[%s4 + $0x498] sm:$0xff]
  %v5688 = vld [vmem:[%s4 + $0x4a0] sm:$0xff]
  %v5689 = vld [vmem:[%s4 + $0x4a8] sm:$0xff]
  %v5690 = vld [vmem:[%s4 + $0x4b0] sm:$0xff]
  %v5691 = vld [vmem:[%s4 + $0x4b8] sm:$0xff]
  %v5692 = vld [vmem:[%s4 + $0x4c0] sm:$0xff]
  %v5693 = vld [vmem:[%s4 + $0x4c8] sm:$0xff]
  %v5694 = vld [vmem:[%s4 + $0x4d0] sm:$0xff]
  %v5695 = vld [vmem:[%s4 + $0x4d8] sm:$0xff]
  %v5696 = vld [vmem:[%s4 + $0x4e0] sm:$0xff]
  %v5697 = vld [vmem:[%s4 + $0x4e8] sm:$0xff]
  %v5698 = vld [vmem:[%s4 + $0x4f0] sm:$0xff]
  %v5699 = vld [vmem:[%s4 + $0x4f8] sm:$0xff]
  %v5700 = vld [vmem:[%s4 + $0x500] sm:$0xff]
  %v5701 = vld [vmem:[%s4 + $0x508] sm:$0xff]
  %v5702 = vld [vmem:[%s4 + $0x510] sm:$0xff]
  %v5703 = vld [vmem:[%s4 + $0x518] sm:$0xff]
  %v5704 = vld [vmem:[%s4 + $0x520] sm:$0xff]
  %v5705 = vld [vmem:[%s4 + $0x528] sm:$0xff]
  %v5706 = vld [vmem:[%s4 + $0x530] sm:$0xff]
  %v5707 = vld [vmem:[%s4 + $0x538] sm:$0xff]
  %v5708 = vld [vmem:[%s4 + $0x540] sm:$0xff]
  %v5709 = vld [vmem:[%s4 + $0x548] sm:$0xff]
  %v5710 = vld [vmem:[%s4 + $0x550] sm:$0xff]
  %v5711 = vld [vmem:[%s4 + $0x558] sm:$0xff]
  %v5712 = vld [vmem:[%s4 + $0x560] sm:$0xff]
  %v5713 = vld [vmem:[%s4 + $0x568] sm:$0xff]
  %v5714 = vld [vmem:[%s4 + $0x570] sm:$0xff]
  %v5715 = vld [vmem:[%s4 + $0x578] sm:$0xff]
  %v5716 = vld [vmem:[%s4 + $0x580] sm:$0xff]
  %v5717 = vld [vmem:[%s4 + $0x588] sm:$0xff]
  %v5718 = vld [vmem:[%s4 + $0x590] sm:$0xff]
  %v5719 = vld [vmem:[%s4 + $0x598] sm:$0xff]
  %v5720 = vld [vmem:[%s4 + $0x5a0] sm:$0xff]
  %v5721 = vld [vmem:[%s4 + $0x5a8] sm:$0xff]
  %v5722 = vld [vmem:[%s4 + $0x5b0] sm:$0xff]
  %v5723 = vld [vmem:[%s4 + $0x5b8] sm:$0xff]
  %v5724 = vld [vmem:[%s4 + $0x5c0] sm:$0xff]
  %v5725 = vld [vmem:[%s4 + $0x5c8] sm:$0xff]
  %v5726 = vld [vmem:[%s4 + $0x5d0] sm:$0xff]
  %v5727 = vld [vmem:[%s4 + $0x5d8] sm:$0xff]
  %v5728 = vld [vmem:[%s4 + $0x5e0] sm:$0xff]
  %v5729 = vld [vmem:[%s4 + $0x5e8] sm:$0xff]
  %v5730 = vld [vmem:[%s4 + $0x5f0] sm:$0xff]
  %v5731 = vld [vmem:[%s4 + $0x5f8] sm:$0xff]
  %v5732 = vld [vmem:[%s4 + $0x600] sm:$0xff]
  %v5733 = vld [vmem:[%s4 + $0x608] sm:$0xff]
  %v5734 = vld [vmem:[%s4 + $0x610] sm:$0xff]
  %v5735 = vld [vmem:[%s4 + $0x618] sm:$0xff]
  %v5736 = vld [vmem:[%s4 + $0x620] sm:$0xff]
  %v5737 = vld [vmem:[%s4 + $0x628] sm:$0xff]
  %v5738 = vld [vmem:[%s4 + $0x630] sm:$0xff]
  %v5739 = vld [vmem:[%s4 + $0x638] sm:$0xff]
  %v5740 = vld [vmem:[%s4 + $0x640] sm:$0xff]
  %v5741 = vld [vmem:[%s4 + $0x648] sm:$0xff]
  %v5742 = vld [vmem:[%s4 + $0x650] sm:$0xff]
  %v5743 = vld [vmem:[%s4 + $0x658] sm:$0xff]
  %v5744 = vld [vmem:[%s4 + $0x660] sm:$0xff]
  %v5745 = vld [vmem:[%s4 + $0x668] sm:$0xff]
  %v5746 = vld [vmem:[%s4 + $0x670] sm:$0xff]
  %v5747 = vld [vmem:[%s4 + $0x678] sm:$0xff]
  %v5748 = vld [vmem:[%s4 + $0x680] sm:$0xff]
  %v5749 = vld [vmem:[%s4 + $0x688] sm:$0xff]
  %v5750 = vld [vmem:[%s4 + $0x690] sm:$0xff]
  %v5751 = vld [vmem:[%s4 + $0x698] sm:$0xff]
  %v5752 = vld [vmem:[%s4 + $0x6a0] sm:$0xff]
  %v5753 = vld [vmem:[%s4 + $0x6a8] sm:$0xff]
  %v5754 = vld [vmem:[%s4 + $0x6b0] sm:$0xff]
  %v5755 = vld [vmem:[%s4 + $0x6b8] sm:$0xff]
  %v5756 = vld [vmem:[%s4 + $0x6c0] sm:$0xff]
  %v5757 = vld [vmem:[%s4 + $0x6c8] sm:$0xff]
  %v5758 = vld [vmem:[%s4 + $0x6d0] sm:$0xff]
  %v5759 = vld [vmem:[%s4 + $0x6d8] sm:$0xff]
  %v5760 = vld [vmem:[%s4 + $0x6e0] sm:$0xff]
  %v5761 = vld [vmem:[%s4 + $0x6e8] sm:$0xff]
  %v5762 = vld [vmem:[%s4 + $0x6f0] sm:$0xff]
  %v5763 = vld [vmem:[%s4 + $0x6f8] sm:$0xff]
  %v5764 = vld [vmem:[%s4 + $0x700] sm:$0xff]
  %v5765 = vld [vmem:[%s4 + $0x708] sm:$0xff]
  %v5766 = vld [vmem:[%s4 + $0x710] sm:$0xff]
  %v5767 = vld [vmem:[%s4 + $0x718] sm:$0xff]
  %v5768 = vld [vmem:[%s4 + $0x720] sm:$0xff]
  %v5769 = vld [vmem:[%s4 + $0x728] sm:$0xff]
  %v5770 = vld [vmem:[%s4 + $0x730] sm:$0xff]
  %v5771 = vld [vmem:[%s4 + $0x738] sm:$0xff]
  %v5772 = vld [vmem:[%s4 + $0x740] sm:$0xff]
  %v5773 = vld [vmem:[%s4 + $0x748] sm:$0xff]
  %v5774 = vld [vmem:[%s4 + $0x750] sm:$0xff]
  %v5775 = vld [vmem:[%s4 + $0x758] sm:$0xff]
  %v5776 = vld [vmem:[%s4 + $0x760] sm:$0xff]
  %v5777 = vld [vmem:[%s4 + $0x768] sm:$0xff]
  %v5778 = vld [vmem:[%s4 + $0x770] sm:$0xff]
  %v5779 = vld [vmem:[%s4 + $0x778] sm:$0xff]
  %v5780 = vld [vmem:[%s4 + $0x780] sm:$0xff]
  %v5781 = vld [vmem:[%s4 + $0x788] sm:$0xff]
  %v5782 = vld [vmem:[%s4 + $0x790] sm:$0xff]
  %v5783 = vld [vmem:[%s4 + $0x798] sm:$0xff]
  %v5784 = vld [vmem:[%s4 + $0x7a0] sm:$0xff]
  %v5785 = vld [vmem:[%s4 + $0x7a8] sm:$0xff]
  %v5786 = vld [vmem:[%s4 + $0x7b0] sm:$0xff]
  %v5787 = vld [vmem:[%s4 + $0x7b8] sm:$0xff]
  %v5788 = vld [vmem:[%s4 + $0x7c0] sm:$0xff]
  %v5789 = vld [vmem:[%s4 + $0x7c8] sm:$0xff]
  %v5790 = vld [vmem:[%s4 + $0x7d0] sm:$0xff]
  %v5791 = vld [vmem:[%s4 + $0x7d8] sm:$0xff]
  %v5792 = vld [vmem:[%s4 + $0x7e0] sm:$0xff]
  %v5793 = vld [vmem:[%s4 + $0x7e8] sm:$0xff]
  %v5794 = vld [vmem:[%s4 + $0x7f0] sm:$0xff]
  %v5795 = vld [vmem:[%s4 + $0x7f8] sm:$0xff]
  %v6052 = vunpack.c.l.b16 %v5540
  %v6053 = vunpack.c.h.b16 %v5540
  %v6054 = vunpack.c.l.b16 %v5541
  %v6055 = vunpack.c.h.b16 %v5541
  %v6056 = vunpack.c.l.b16 %v5542
  %v6057 = vunpack.c.h.b16 %v5542
  %v6058 = vunpack.c.l.b16 %v5543
  %v6059 = vunpack.c.h.b16 %v5543
  %v6060 = vunpack.c.l.b16 %v5544
  %v6061 = vunpack.c.h.b16 %v5544
  %v6062 = vunpack.c.l.b16 %v5545
  %v6063 = vunpack.c.h.b16 %v5545
  %v6064 = vunpack.c.l.b16 %v5546
  %v6065 = vunpack.c.h.b16 %v5546
  %v6066 = vunpack.c.l.b16 %v5547
  %v6067 = vunpack.c.h.b16 %v5547
  %v6068 = vunpack.c.l.b16 %v5548
  %v6069 = vunpack.c.h.b16 %v5548
  %v6070 = vunpack.c.l.b16 %v5549
  %v6071 = vunpack.c.h.b16 %v5549
  %v6072 = vunpack.c.l.b16 %v5550
  %v6073 = vunpack.c.h.b16 %v5550
  %v6074 = vunpack.c.l.b16 %v5551
  %v6075 = vunpack.c.h.b16 %v5551
  %v6076 = vunpack.c.l.b16 %v5552
  %v6077 = vunpack.c.h.b16 %v5552
  %v6078 = vunpack.c.l.b16 %v5553
  %v6079 = vunpack.c.h.b16 %v5553
  %v6080 = vunpack.c.l.b16 %v5554
  %v6081 = vunpack.c.h.b16 %v5554
  %v6082 = vunpack.c.l.b16 %v5555
  %v6083 = vunpack.c.h.b16 %v5555
  %v6084 = vunpack.c.l.b16 %v5556
  %v6085 = vunpack.c.h.b16 %v5556
  %v6086 = vunpack.c.l.b16 %v5557
  %v6087 = vunpack.c.h.b16 %v5557
  %v6088 = vunpack.c.l.b16 %v5558
  %v6089 = vunpack.c.h.b16 %v5558
  %v6090 = vunpack.c.l.b16 %v5559
  %v6091 = vunpack.c.h.b16 %v5559
  %v6092 = vunpack.c.l.b16 %v5560
  %v6093 = vunpack.c.h.b16 %v5560
  %v6094 = vunpack.c.l.b16 %v5561
  %v6095 = vunpack.c.h.b16 %v5561
  %v6096 = vunpack.c.l.b16 %v5562
  %v6097 = vunpack.c.h.b16 %v5562
  %v6098 = vunpack.c.l.b16 %v5563
  %v6099 = vunpack.c.h.b16 %v5563
  %v6100 = vunpack.c.l.b16 %v5564
  %v6101 = vunpack.c.h.b16 %v5564
  %v6102 = vunpack.c.l.b16 %v5565
  %v6103 = vunpack.c.h.b16 %v5565
  %v6104 = vunpack.c.l.b16 %v5566
  %v6105 = vunpack.c.h.b16 %v5566
  %v6106 = vunpack.c.l.b16 %v5567
  %v6107 = vunpack.c.h.b16 %v5567
  %v6108 = vunpack.c.l.b16 %v5568
  %v6109 = vunpack.c.h.b16 %v5568
  %v6110 = vunpack.c.l.b16 %v5569
  %v6111 = vunpack.c.h.b16 %v5569
  %v6112 = vunpack.c.l.b16 %v5570
  %v6113 = vunpack.c.h.b16 %v5570
  %v6114 = vunpack.c.l.b16 %v5571
  %v6115 = vunpack.c.h.b16 %v5571
  %v6116 = vunpack.c.l.b16 %v5572
  %v6117 = vunpack.c.h.b16 %v5572
  %v6118 = vunpack.c.l.b16 %v5573
  %v6119 = vunpack.c.h.b16 %v5573
  %v6120 = vunpack.c.l.b16 %v5574
  %v6121 = vunpack.c.h.b16 %v5574
  %v6122 = vunpack.c.l.b16 %v5575
  %v6123 = vunpack.c.h.b16 %v5575
  %v6124 = vunpack.c.l.b16 %v5576
  %v6125 = vunpack.c.h.b16 %v5576
  %v6126 = vunpack.c.l.b16 %v5577
  %v6127 = vunpack.c.h.b16 %v5577
  %v6128 = vunpack.c.l.b16 %v5578
  %v6129 = vunpack.c.h.b16 %v5578
  %v6130 = vunpack.c.l.b16 %v5579
  %v6131 = vunpack.c.h.b16 %v5579
  %v6132 = vunpack.c.l.b16 %v5580
  %v6133 = vunpack.c.h.b16 %v5580
  %v6134 = vunpack.c.l.b16 %v5581
  %v6135 = vunpack.c.h.b16 %v5581
  %v6136 = vunpack.c.l.b16 %v5582
  %v6137 = vunpack.c.h.b16 %v5582
  %v6138 = vunpack.c.l.b16 %v5583
  %v6139 = vunpack.c.h.b16 %v5583
  %v6140 = vunpack.c.l.b16 %v5584
  %v6141 = vunpack.c.h.b16 %v5584
  %v6142 = vunpack.c.l.b16 %v5585
  %v6143 = vunpack.c.h.b16 %v5585
  %v6144 = vunpack.c.l.b16 %v5586
  %v6145 = vunpack.c.h.b16 %v5586
  %v6146 = vunpack.c.l.b16 %v5587
  %v6147 = vunpack.c.h.b16 %v5587
  %v6148 = vunpack.c.l.b16 %v5588
  %v6149 = vunpack.c.h.b16 %v5588
  %v6150 = vunpack.c.l.b16 %v5589
  %v6151 = vunpack.c.h.b16 %v5589
  %v6152 = vunpack.c.l.b16 %v5590
  %v6153 = vunpack.c.h.b16 %v5590
  %v6154 = vunpack.c.l.b16 %v5591
  %v6155 = vunpack.c.h.b16 %v5591
  %v6156 = vunpack.c.l.b16 %v5592
  %v6157 = vunpack.c.h.b16 %v5592
  %v6158 = vunpack.c.l.b16 %v5593
  %v6159 = vunpack.c.h.b16 %v5593
  %v6160 = vunpack.c.l.b16 %v5594
  %v6161 = vunpack.c.h.b16 %v5594
  %v6162 = vunpack.c.l.b16 %v5595
  %v6163 = vunpack.c.h.b16 %v5595
  %v6164 = vunpack.c.l.b16 %v5596
  %v6165 = vunpack.c.h.b16 %v5596
  %v6166 = vunpack.c.l.b16 %v5597
  %v6167 = vunpack.c.h.b16 %v5597
  %v6168 = vunpack.c.l.b16 %v5598
  %v6169 = vunpack.c.h.b16 %v5598
  %v6170 = vunpack.c.l.b16 %v5599
  %v6171 = vunpack.c.h.b16 %v5599
  %v6172 = vunpack.c.l.b16 %v5600
  %v6173 = vunpack.c.h.b16 %v5600
  %v6174 = vunpack.c.l.b16 %v5601
  %v6175 = vunpack.c.h.b16 %v5601
  %v6176 = vunpack.c.l.b16 %v5602
  %v6177 = vunpack.c.h.b16 %v5602
  %v6178 = vunpack.c.l.b16 %v5603
  %v6179 = vunpack.c.h.b16 %v5603
  %v6180 = vunpack.c.l.b16 %v5604
  %v6181 = vunpack.c.h.b16 %v5604
  %v6182 = vunpack.c.l.b16 %v5605
  %v6183 = vunpack.c.h.b16 %v5605
  %v6184 = vunpack.c.l.b16 %v5606
  %v6185 = vunpack.c.h.b16 %v5606
  %v6186 = vunpack.c.l.b16 %v5607
  %v6187 = vunpack.c.h.b16 %v5607
  %v6188 = vunpack.c.l.b16 %v5608
  %v6189 = vunpack.c.h.b16 %v5608
  %v6190 = vunpack.c.l.b16 %v5609
  %v6191 = vunpack.c.h.b16 %v5609
  %v6192 = vunpack.c.l.b16 %v5610
  %v6193 = vunpack.c.h.b16 %v5610
  %v6194 = vunpack.c.l.b16 %v5611
  %v6195 = vunpack.c.h.b16 %v5611
  %v6196 = vunpack.c.l.b16 %v5612
  %v6197 = vunpack.c.h.b16 %v5612
  %v6198 = vunpack.c.l.b16 %v5613
  %v6199 = vunpack.c.h.b16 %v5613
  %v6200 = vunpack.c.l.b16 %v5614
  %v6201 = vunpack.c.h.b16 %v5614
  %v6202 = vunpack.c.l.b16 %v5615
  %v6203 = vunpack.c.h.b16 %v5615
  %v6204 = vunpack.c.l.b16 %v5616
  %v6205 = vunpack.c.h.b16 %v5616
  %v6206 = vunpack.c.l.b16 %v5617
  %v6207 = vunpack.c.h.b16 %v5617
  %v6208 = vunpack.c.l.b16 %v5618
  %v6209 = vunpack.c.h.b16 %v5618
  %v6210 = vunpack.c.l.b16 %v5619
  %v6211 = vunpack.c.h.b16 %v5619
  %v6212 = vunpack.c.l.b16 %v5620
  %v6213 = vunpack.c.h.b16 %v5620
  %v6214 = vunpack.c.l.b16 %v5621
  %v6215 = vunpack.c.h.b16 %v5621
  %v6216 = vunpack.c.l.b16 %v5622
  %v6217 = vunpack.c.h.b16 %v5622
  %v6218 = vunpack.c.l.b16 %v5623
  %v6219 = vunpack.c.h.b16 %v5623
  %v6220 = vunpack.c.l.b16 %v5624
  %v6221 = vunpack.c.h.b16 %v5624
  %v6222 = vunpack.c.l.b16 %v5625
  %v6223 = vunpack.c.h.b16 %v5625
  %v6224 = vunpack.c.l.b16 %v5626
  %v6225 = vunpack.c.h.b16 %v5626
  %v6226 = vunpack.c.l.b16 %v5627
  %v6227 = vunpack.c.h.b16 %v5627
  %v6228 = vunpack.c.l.b16 %v5628
  %v6229 = vunpack.c.h.b16 %v5628
  %v6230 = vunpack.c.l.b16 %v5629
  %v6231 = vunpack.c.h.b16 %v5629
  %v6232 = vunpack.c.l.b16 %v5630
  %v6233 = vunpack.c.h.b16 %v5630
  %v6234 = vunpack.c.l.b16 %v5631
  %v6235 = vunpack.c.h.b16 %v5631
  %v6236 = vunpack.c.l.b16 %v5632
  %v6237 = vunpack.c.h.b16 %v5632
  %v6238 = vunpack.c.l.b16 %v5633
  %v6239 = vunpack.c.h.b16 %v5633
  %v6240 = vunpack.c.l.b16 %v5634
  %v6241 = vunpack.c.h.b16 %v5634
  %v6242 = vunpack.c.l.b16 %v5635
  %v6243 = vunpack.c.h.b16 %v5635
  %v6244 = vunpack.c.l.b16 %v5636
  %v6245 = vunpack.c.h.b16 %v5636
  %v6246 = vunpack.c.l.b16 %v5637
  %v6247 = vunpack.c.h.b16 %v5637
  %v6248 = vunpack.c.l.b16 %v5638
  %v6249 = vunpack.c.h.b16 %v5638
  %v6250 = vunpack.c.l.b16 %v5639
  %v6251 = vunpack.c.h.b16 %v5639
  %v6252 = vunpack.c.l.b16 %v5640
  %v6253 = vunpack.c.h.b16 %v5640
  %v6254 = vunpack.c.l.b16 %v5641
  %v6255 = vunpack.c.h.b16 %v5641
  %v6256 = vunpack.c.l.b16 %v5642
  %v6257 = vunpack.c.h.b16 %v5642
  %v6258 = vunpack.c.l.b16 %v5643
  %v6259 = vunpack.c.h.b16 %v5643
  %v6260 = vunpack.c.l.b16 %v5644
  %v6261 = vunpack.c.h.b16 %v5644
  %v6262 = vunpack.c.l.b16 %v5645
  %v6263 = vunpack.c.h.b16 %v5645
  %v6264 = vunpack.c.l.b16 %v5646
  %v6265 = vunpack.c.h.b16 %v5646
  %v6266 = vunpack.c.l.b16 %v5647
  %v6267 = vunpack.c.h.b16 %v5647
  %v6268 = vunpack.c.l.b16 %v5648
  %v6269 = vunpack.c.h.b16 %v5648
  %v6270 = vunpack.c.l.b16 %v5649
  %v6271 = vunpack.c.h.b16 %v5649
  %v6272 = vunpack.c.l.b16 %v5650
  %v6273 = vunpack.c.h.b16 %v5650
  %v6274 = vunpack.c.l.b16 %v5651
  %v6275 = vunpack.c.h.b16 %v5651
  %v6276 = vunpack.c.l.b16 %v5652
  %v6277 = vunpack.c.h.b16 %v5652
  %v6278 = vunpack.c.l.b16 %v5653
  %v6279 = vunpack.c.h.b16 %v5653
  %v6280 = vunpack.c.l.b16 %v5654
  %v6281 = vunpack.c.h.b16 %v5654
  %v6282 = vunpack.c.l.b16 %v5655
  %v6283 = vunpack.c.h.b16 %v5655
  %v6284 = vunpack.c.l.b16 %v5656
  %v6285 = vunpack.c.h.b16 %v5656
  %v6286 = vunpack.c.l.b16 %v5657
  %v6287 = vunpack.c.h.b16 %v5657
  %v6288 = vunpack.c.l.b16 %v5658
  %v6289 = vunpack.c.h.b16 %v5658
  %v6290 = vunpack.c.l.b16 %v5659
  %v6291 = vunpack.c.h.b16 %v5659
  %v6292 = vunpack.c.l.b16 %v5660
  %v6293 = vunpack.c.h.b16 %v5660
  %v6294 = vunpack.c.l.b16 %v5661
  %v6295 = vunpack.c.h.b16 %v5661
  %v6296 = vunpack.c.l.b16 %v5662
  %v6297 = vunpack.c.h.b16 %v5662
  %v6298 = vunpack.c.l.b16 %v5663
  %v6299 = vunpack.c.h.b16 %v5663
  %v6300 = vunpack.c.l.b16 %v5664
  %v6301 = vunpack.c.h.b16 %v5664
  %v6302 = vunpack.c.l.b16 %v5665
  %v6303 = vunpack.c.h.b16 %v5665
  %v6304 = vunpack.c.l.b16 %v5666
  %v6305 = vunpack.c.h.b16 %v5666
  %v6306 = vunpack.c.l.b16 %v5667
  %v6307 = vunpack.c.h.b16 %v5667
  %v6308 = vunpack.c.l.b16 %v5668
  %v6309 = vunpack.c.h.b16 %v5668
  %v6310 = vunpack.c.l.b16 %v5669
  %v6311 = vunpack.c.h.b16 %v5669
  %v6312 = vunpack.c.l.b16 %v5670
  %v6313 = vunpack.c.h.b16 %v5670
  %v6314 = vunpack.c.l.b16 %v5671
  %v6315 = vunpack.c.h.b16 %v5671
  %v6316 = vunpack.c.l.b16 %v5672
  %v6317 = vunpack.c.h.b16 %v5672
  %v6318 = vunpack.c.l.b16 %v5673
  %v6319 = vunpack.c.h.b16 %v5673
  %v6320 = vunpack.c.l.b16 %v5674
  %v6321 = vunpack.c.h.b16 %v5674
  %v6322 = vunpack.c.l.b16 %v5675
  %v6323 = vunpack.c.h.b16 %v5675
  %v6324 = vunpack.c.l.b16 %v5676
  %v6325 = vunpack.c.h.b16 %v5676
  %v6326 = vunpack.c.l.b16 %v5677
  %v6327 = vunpack.c.h.b16 %v5677
  %v6328 = vunpack.c.l.b16 %v5678
  %v6329 = vunpack.c.h.b16 %v5678
  %v6330 = vunpack.c.l.b16 %v5679
  %v6331 = vunpack.c.h.b16 %v5679
  %v6332 = vunpack.c.l.b16 %v5680
  %v6333 = vunpack.c.h.b16 %v5680
  %v6334 = vunpack.c.l.b16 %v5681
  %v6335 = vunpack.c.h.b16 %v5681
  %v6336 = vunpack.c.l.b16 %v5682
  %v6337 = vunpack.c.h.b16 %v5682
  %v6338 = vunpack.c.l.b16 %v5683
  %v6339 = vunpack.c.h.b16 %v5683
  %v6340 = vunpack.c.l.b16 %v5684
  %v6341 = vunpack.c.h.b16 %v5684
  %v6342 = vunpack.c.l.b16 %v5685
  %v6343 = vunpack.c.h.b16 %v5685
  %v6344 = vunpack.c.l.b16 %v5686
  %v6345 = vunpack.c.h.b16 %v5686
  %v6346 = vunpack.c.l.b16 %v5687
  %v6347 = vunpack.c.h.b16 %v5687
  %v6348 = vunpack.c.l.b16 %v5688
  %v6349 = vunpack.c.h.b16 %v5688
  %v6350 = vunpack.c.l.b16 %v5689
  %v6351 = vunpack.c.h.b16 %v5689
  %v6352 = vunpack.c.l.b16 %v5690
  %v6353 = vunpack.c.h.b16 %v5690
  %v6354 = vunpack.c.l.b16 %v5691
  %v6355 = vunpack.c.h.b16 %v5691
  %v6356 = vunpack.c.l.b16 %v5692
  %v6357 = vunpack.c.h.b16 %v5692
  %v6358 = vunpack.c.l.b16 %v5693
  %v6359 = vunpack.c.h.b16 %v5693
  %v6360 = vunpack.c.l.b16 %v5694
  %v6361 = vunpack.c.h.b16 %v5694
  %v6362 = vunpack.c.l.b16 %v5695
  %v6363 = vunpack.c.h.b16 %v5695
  %v6364 = vunpack.c.l.b16 %v5696
  %v6365 = vunpack.c.h.b16 %v5696
  %v6366 = vunpack.c.l.b16 %v5697
  %v6367 = vunpack.c.h.b16 %v5697
  %v6368 = vunpack.c.l.b16 %v5698
  %v6369 = vunpack.c.h.b16 %v5698
  %v6370 = vunpack.c.l.b16 %v5699
  %v6371 = vunpack.c.h.b16 %v5699
  %v6372 = vunpack.c.l.b16 %v5700
  %v6373 = vunpack.c.h.b16 %v5700
  %v6374 = vunpack.c.l.b16 %v5701
  %v6375 = vunpack.c.h.b16 %v5701
  %v6376 = vunpack.c.l.b16 %v5702
  %v6377 = vunpack.c.h.b16 %v5702
  %v6378 = vunpack.c.l.b16 %v5703
  %v6379 = vunpack.c.h.b16 %v5703
  %v6380 = vunpack.c.l.b16 %v5704
  %v6381 = vunpack.c.h.b16 %v5704
  %v6382 = vunpack.c.l.b16 %v5705
  %v6383 = vunpack.c.h.b16 %v5705
  %v6384 = vunpack.c.l.b16 %v5706
  %v6385 = vunpack.c.h.b16 %v5706
  %v6386 = vunpack.c.l.b16 %v5707
  %v6387 = vunpack.c.h.b16 %v5707
  %v6388 = vunpack.c.l.b16 %v5708
  %v6389 = vunpack.c.h.b16 %v5708
  %v6390 = vunpack.c.l.b16 %v5709
  %v6391 = vunpack.c.h.b16 %v5709
  %v6392 = vunpack.c.l.b16 %v5710
  %v6393 = vunpack.c.h.b16 %v5710
  %v6394 = vunpack.c.l.b16 %v5711
  %v6395 = vunpack.c.h.b16 %v5711
  %v6396 = vunpack.c.l.b16 %v5712
  %v6397 = vunpack.c.h.b16 %v5712
  %v6398 = vunpack.c.l.b16 %v5713
  %v6399 = vunpack.c.h.b16 %v5713
  %v6400 = vunpack.c.l.b16 %v5714
  %v6401 = vunpack.c.h.b16 %v5714
  %v6402 = vunpack.c.l.b16 %v5715
  %v6403 = vunpack.c.h.b16 %v5715
  %v6404 = vunpack.c.l.b16 %v5716
  %v6405 = vunpack.c.h.b16 %v5716
  %v6406 = vunpack.c.l.b16 %v5717
  %v6407 = vunpack.c.h.b16 %v5717
  %v6408 = vunpack.c.l.b16 %v5718
  %v6409 = vunpack.c.h.b16 %v5718
  %v6410 = vunpack.c.l.b16 %v5719
  %v6411 = vunpack.c.h.b16 %v5719
  %v6412 = vunpack.c.l.b16 %v5720
  %v6413 = vunpack.c.h.b16 %v5720
  %v6414 = vunpack.c.l.b16 %v5721
  %v6415 = vunpack.c.h.b16 %v5721
  %v6416 = vunpack.c.l.b16 %v5722
  %v6417 = vunpack.c.h.b16 %v5722
  %v6418 = vunpack.c.l.b16 %v5723
  %v6419 = vunpack.c.h.b16 %v5723
  %v6420 = vunpack.c.l.b16 %v5724
  %v6421 = vunpack.c.h.b16 %v5724
  %v6422 = vunpack.c.l.b16 %v5725
  %v6423 = vunpack.c.h.b16 %v5725
  %v6424 = vunpack.c.l.b16 %v5726
  %v6425 = vunpack.c.h.b16 %v5726
  %v6426 = vunpack.c.l.b16 %v5727
  %v6427 = vunpack.c.h.b16 %v5727
  %v6428 = vunpack.c.l.b16 %v5728
  %v6429 = vunpack.c.h.b16 %v5728
  %v6430 = vunpack.c.l.b16 %v5729
  %v6431 = vunpack.c.h.b16 %v5729
  %v6432 = vunpack.c.l.b16 %v5730
  %v6433 = vunpack.c.h.b16 %v5730
  %v6434 = vunpack.c.l.b16 %v5731
  %v6435 = vunpack.c.h.b16 %v5731
  %v6436 = vunpack.c.l.b16 %v5732
  %v6437 = vunpack.c.h.b16 %v5732
  %v6438 = vunpack.c.l.b16 %v5733
  %v6439 = vunpack.c.h.b16 %v5733
  %v6440 = vunpack.c.l.b16 %v5734
  %v6441 = vunpack.c.h.b16 %v5734
  %v6442 = vunpack.c.l.b16 %v5735
  %v6443 = vunpack.c.h.b16 %v5735
  %v6444 = vunpack.c.l.b16 %v5736
  %v6445 = vunpack.c.h.b16 %v5736
  %v6446 = vunpack.c.l.b16 %v5737
  %v6447 = vunpack.c.h.b16 %v5737
  %v6448 = vunpack.c.l.b16 %v5738
  %v6449 = vunpack.c.h.b16 %v5738
  %v6450 = vunpack.c.l.b16 %v5739
  %v6451 = vunpack.c.h.b16 %v5739
  %v6452 = vunpack.c.l.b16 %v5740
  %v6453 = vunpack.c.h.b16 %v5740
  %v6454 = vunpack.c.l.b16 %v5741
  %v6455 = vunpack.c.h.b16 %v5741
  %v6456 = vunpack.c.l.b16 %v5742
  %v6457 = vunpack.c.h.b16 %v5742
  %v6458 = vunpack.c.l.b16 %v5743
  %v6459 = vunpack.c.h.b16 %v5743
  %v6460 = vunpack.c.l.b16 %v5744
  %v6461 = vunpack.c.h.b16 %v5744
  %v6462 = vunpack.c.l.b16 %v5745
  %v6463 = vunpack.c.h.b16 %v5745
  %v6464 = vunpack.c.l.b16 %v5746
  %v6465 = vunpack.c.h.b16 %v5746
  %v6466 = vunpack.c.l.b16 %v5747
  %v6467 = vunpack.c.h.b16 %v5747
  %v6468 = vunpack.c.l.b16 %v5748
  %v6469 = vunpack.c.h.b16 %v5748
  %v6470 = vunpack.c.l.b16 %v5749
  %v6471 = vunpack.c.h.b16 %v5749
  %v6472 = vunpack.c.l.b16 %v5750
  %v6473 = vunpack.c.h.b16 %v5750
  %v6474 = vunpack.c.l.b16 %v5751
  %v6475 = vunpack.c.h.b16 %v5751
  %v6476 = vunpack.c.l.b16 %v5752
  %v6477 = vunpack.c.h.b16 %v5752
  %v6478 = vunpack.c.l.b16 %v5753
  %v6479 = vunpack.c.h.b16 %v5753
  %v6480 = vunpack.c.l.b16 %v5754
  %v6481 = vunpack.c.h.b16 %v5754
  %v6482 = vunpack.c.l.b16 %v5755
  %v6483 = vunpack.c.h.b16 %v5755
  %v6484 = vunpack.c.l.b16 %v5756
  %v6485 = vunpack.c.h.b16 %v5756
  %v6486 = vunpack.c.l.b16 %v5757
  %v6487 = vunpack.c.h.b16 %v5757
  %v6488 = vunpack.c.l.b16 %v5758
  %v6489 = vunpack.c.h.b16 %v5758
  %v6490 = vunpack.c.l.b16 %v5759
  %v6491 = vunpack.c.h.b16 %v5759
  %v6492 = vunpack.c.l.b16 %v5760
  %v6493 = vunpack.c.h.b16 %v5760
  %v6494 = vunpack.c.l.b16 %v5761
  %v6495 = vunpack.c.h.b16 %v5761
  %v6496 = vunpack.c.l.b16 %v5762
  %v6497 = vunpack.c.h.b16 %v5762
  %v6498 = vunpack.c.l.b16 %v5763
  %v6499 = vunpack.c.h.b16 %v5763
  %v6500 = vunpack.c.l.b16 %v5764
  %v6501 = vunpack.c.h.b16 %v5764
  %v6502 = vunpack.c.l.b16 %v5765
  %v6503 = vunpack.c.h.b16 %v5765
  %v6504 = vunpack.c.l.b16 %v5766
  %v6505 = vunpack.c.h.b16 %v5766
  %v6506 = vunpack.c.l.b16 %v5767
  %v6507 = vunpack.c.h.b16 %v5767
  %v6508 = vunpack.c.l.b16 %v5768
  %v6509 = vunpack.c.h.b16 %v5768
  %v6510 = vunpack.c.l.b16 %v5769
  %v6511 = vunpack.c.h.b16 %v5769
  %v6512 = vunpack.c.l.b16 %v5770
  %v6513 = vunpack.c.h.b16 %v5770
  %v6514 = vunpack.c.l.b16 %v5771
  %v6515 = vunpack.c.h.b16 %v5771
  %v6516 = vunpack.c.l.b16 %v5772
  %v6517 = vunpack.c.h.b16 %v5772
  %v6518 = vunpack.c.l.b16 %v5773
  %v6519 = vunpack.c.h.b16 %v5773
  %v6520 = vunpack.c.l.b16 %v5774
  %v6521 = vunpack.c.h.b16 %v5774
  %v6522 = vunpack.c.l.b16 %v5775
  %v6523 = vunpack.c.h.b16 %v5775
  %v6524 = vunpack.c.l.b16 %v5776
  %v6525 = vunpack.c.h.b16 %v5776
  %v6526 = vunpack.c.l.b16 %v5777
  %v6527 = vunpack.c.h.b16 %v5777
  %v6528 = vunpack.c.l.b16 %v5778
  %v6529 = vunpack.c.h.b16 %v5778
  %v6530 = vunpack.c.l.b16 %v5779
  %v6531 = vunpack.c.h.b16 %v5779
  %v6532 = vunpack.c.l.b16 %v5780
  %v6533 = vunpack.c.h.b16 %v5780
  %v6534 = vunpack.c.l.b16 %v5781
  %v6535 = vunpack.c.h.b16 %v5781
  %v6536 = vunpack.c.l.b16 %v5782
  %v6537 = vunpack.c.h.b16 %v5782
  %v6538 = vunpack.c.l.b16 %v5783
  %v6539 = vunpack.c.h.b16 %v5783
  %v6540 = vunpack.c.l.b16 %v5784
  %v6541 = vunpack.c.h.b16 %v5784
  %v6542 = vunpack.c.l.b16 %v5785
  %v6543 = vunpack.c.h.b16 %v5785
  %v6544 = vunpack.c.l.b16 %v5786
  %v6545 = vunpack.c.h.b16 %v5786
  %v6546 = vunpack.c.l.b16 %v5787
  %v6547 = vunpack.c.h.b16 %v5787
  %v6548 = vunpack.c.l.b16 %v5788
  %v6549 = vunpack.c.h.b16 %v5788
  %v6550 = vunpack.c.l.b16 %v5789
  %v6551 = vunpack.c.h.b16 %v5789
  %v6552 = vunpack.c.l.b16 %v5790
  %v6553 = vunpack.c.h.b16 %v5790
  %v6554 = vunpack.c.l.b16 %v5791
  %v6555 = vunpack.c.h.b16 %v5791
  %v6556 = vunpack.c.l.b16 %v5792
  %v6557 = vunpack.c.h.b16 %v5792
  %v6558 = vunpack.c.l.b16 %v5793
  %v6559 = vunpack.c.h.b16 %v5793
  %v6560 = vunpack.c.l.b16 %v5794
  %v6561 = vunpack.c.h.b16 %v5794
  %v6562 = vunpack.c.l.b16 %v5795
  %v6563 = vunpack.c.h.b16 %v5795
  %v6564 = vpack.c.b16 %v6060, %v6052
  %v6565 = vpack.c.b16 %v6061, %v6053
  %v6566 = vpack.c.b16 %v6062, %v6054
  %v6567 = vpack.c.b16 %v6063, %v6055
  %v6568 = vpack.c.b16 %v6064, %v6056
  %v6569 = vpack.c.b16 %v6065, %v6057
  %v6570 = vpack.c.b16 %v6066, %v6058
  %v6571 = vpack.c.b16 %v6067, %v6059
  %v6572 = vpack.c.b16 %v6076, %v6068
  %v6573 = vpack.c.b16 %v6077, %v6069
  %v6574 = vpack.c.b16 %v6078, %v6070
  %v6575 = vpack.c.b16 %v6079, %v6071
  %v6576 = vpack.c.b16 %v6080, %v6072
  %v6577 = vpack.c.b16 %v6081, %v6073
  %v6578 = vpack.c.b16 %v6082, %v6074
  %v6579 = vpack.c.b16 %v6083, %v6075
  %v6580 = vpack.c.b16 %v6092, %v6084
  %v6581 = vpack.c.b16 %v6093, %v6085
  %v6582 = vpack.c.b16 %v6094, %v6086
  %v6583 = vpack.c.b16 %v6095, %v6087
  %v6584 = vpack.c.b16 %v6096, %v6088
  %v6585 = vpack.c.b16 %v6097, %v6089
  %v6586 = vpack.c.b16 %v6098, %v6090
  %v6587 = vpack.c.b16 %v6099, %v6091
  %v6588 = vpack.c.b16 %v6108, %v6100
  %v6589 = vpack.c.b16 %v6109, %v6101
  %v6590 = vpack.c.b16 %v6110, %v6102
  %v6591 = vpack.c.b16 %v6111, %v6103
  %v6592 = vpack.c.b16 %v6112, %v6104
  %v6593 = vpack.c.b16 %v6113, %v6105
  %v6594 = vpack.c.b16 %v6114, %v6106
  %v6595 = vpack.c.b16 %v6115, %v6107
  %v6596 = vpack.c.b16 %v6124, %v6116
  %v6597 = vpack.c.b16 %v6125, %v6117
  %v6598 = vpack.c.b16 %v6126, %v6118
  %v6599 = vpack.c.b16 %v6127, %v6119
  %v6600 = vpack.c.b16 %v6128, %v6120
  %v6601 = vpack.c.b16 %v6129, %v6121
  %v6602 = vpack.c.b16 %v6130, %v6122
  %v6603 = vpack.c.b16 %v6131, %v6123
  %v6604 = vpack.c.b16 %v6140, %v6132
  %v6605 = vpack.c.b16 %v6141, %v6133
  %v6606 = vpack.c.b16 %v6142, %v6134
  %v6607 = vpack.c.b16 %v6143, %v6135
  %v6608 = vpack.c.b16 %v6144, %v6136
  %v6609 = vpack.c.b16 %v6145, %v6137
  %v6610 = vpack.c.b16 %v6146, %v6138
  %v6611 = vpack.c.b16 %v6147, %v6139
  %v6612 = vpack.c.b16 %v6156, %v6148
  %v6613 = vpack.c.b16 %v6157, %v6149
  %v6614 = vpack.c.b16 %v6158, %v6150
  %v6615 = vpack.c.b16 %v6159, %v6151
  %v6616 = vpack.c.b16 %v6160, %v6152
  %v6617 = vpack.c.b16 %v6161, %v6153
  %v6618 = vpack.c.b16 %v6162, %v6154
  %v6619 = vpack.c.b16 %v6163, %v6155
  %v6620 = vpack.c.b16 %v6172, %v6164
  %v6621 = vpack.c.b16 %v6173, %v6165
  %v6622 = vpack.c.b16 %v6174, %v6166
  %v6623 = vpack.c.b16 %v6175, %v6167
  %v6624 = vpack.c.b16 %v6176, %v6168
  %v6625 = vpack.c.b16 %v6177, %v6169
  %v6626 = vpack.c.b16 %v6178, %v6170
  %v6627 = vpack.c.b16 %v6179, %v6171
  %v6628 = vpack.c.b16 %v6188, %v6180
  %v6629 = vpack.c.b16 %v6189, %v6181
  %v6630 = vpack.c.b16 %v6190, %v6182
  %v6631 = vpack.c.b16 %v6191, %v6183
  %v6632 = vpack.c.b16 %v6192, %v6184
  %v6633 = vpack.c.b16 %v6193, %v6185
  %v6634 = vpack.c.b16 %v6194, %v6186
  %v6635 = vpack.c.b16 %v6195, %v6187
  %v6636 = vpack.c.b16 %v6204, %v6196
  %v6637 = vpack.c.b16 %v6205, %v6197
  %v6638 = vpack.c.b16 %v6206, %v6198
  %v6639 = vpack.c.b16 %v6207, %v6199
  %v6640 = vpack.c.b16 %v6208, %v6200
  %v6641 = vpack.c.b16 %v6209, %v6201
  %v6642 = vpack.c.b16 %v6210, %v6202
  %v6643 = vpack.c.b16 %v6211, %v6203
  %v6644 = vpack.c.b16 %v6220, %v6212
  %v6645 = vpack.c.b16 %v6221, %v6213
  %v6646 = vpack.c.b16 %v6222, %v6214
  %v6647 = vpack.c.b16 %v6223, %v6215
  %v6648 = vpack.c.b16 %v6224, %v6216
  %v6649 = vpack.c.b16 %v6225, %v6217
  %v6650 = vpack.c.b16 %v6226, %v6218
  %v6651 = vpack.c.b16 %v6227, %v6219
  %v6652 = vpack.c.b16 %v6236, %v6228
  %v6653 = vpack.c.b16 %v6237, %v6229
  %v6654 = vpack.c.b16 %v6238, %v6230
  %v6655 = vpack.c.b16 %v6239, %v6231
  %v6656 = vpack.c.b16 %v6240, %v6232
  %v6657 = vpack.c.b16 %v6241, %v6233
  %v6658 = vpack.c.b16 %v6242, %v6234
  %v6659 = vpack.c.b16 %v6243, %v6235
  %v6660 = vpack.c.b16 %v6252, %v6244
  %v6661 = vpack.c.b16 %v6253, %v6245
  %v6662 = vpack.c.b16 %v6254, %v6246
  %v6663 = vpack.c.b16 %v6255, %v6247
  %v6664 = vpack.c.b16 %v6256, %v6248
  %v6665 = vpack.c.b16 %v6257, %v6249
  %v6666 = vpack.c.b16 %v6258, %v6250
  %v6667 = vpack.c.b16 %v6259, %v6251
  %v6668 = vpack.c.b16 %v6268, %v6260
  %v6669 = vpack.c.b16 %v6269, %v6261
  %v6670 = vpack.c.b16 %v6270, %v6262
  %v6671 = vpack.c.b16 %v6271, %v6263
  %v6672 = vpack.c.b16 %v6272, %v6264
  %v6673 = vpack.c.b16 %v6273, %v6265
  %v6674 = vpack.c.b16 %v6274, %v6266
  %v6675 = vpack.c.b16 %v6275, %v6267
  %v6676 = vpack.c.b16 %v6284, %v6276
  %v6677 = vpack.c.b16 %v6285, %v6277
  %v6678 = vpack.c.b16 %v6286, %v6278
  %v6679 = vpack.c.b16 %v6287, %v6279
  %v6680 = vpack.c.b16 %v6288, %v6280
  %v6681 = vpack.c.b16 %v6289, %v6281
  %v6682 = vpack.c.b16 %v6290, %v6282
  %v6683 = vpack.c.b16 %v6291, %v6283
  %v6684 = vpack.c.b16 %v6300, %v6292
  %v6685 = vpack.c.b16 %v6301, %v6293
  %v6686 = vpack.c.b16 %v6302, %v6294
  %v6687 = vpack.c.b16 %v6303, %v6295
  %v6688 = vpack.c.b16 %v6304, %v6296
  %v6689 = vpack.c.b16 %v6305, %v6297
  %v6690 = vpack.c.b16 %v6306, %v6298
  %v6691 = vpack.c.b16 %v6307, %v6299
  %v6692 = vpack.c.b16 %v6316, %v6308
  %v6693 = vpack.c.b16 %v6317, %v6309
  %v6694 = vpack.c.b16 %v6318, %v6310
  %v6695 = vpack.c.b16 %v6319, %v6311
  %v6696 = vpack.c.b16 %v6320, %v6312
  %v6697 = vpack.c.b16 %v6321, %v6313
  %v6698 = vpack.c.b16 %v6322, %v6314
  %v6699 = vpack.c.b16 %v6323, %v6315
  %v6700 = vpack.c.b16 %v6332, %v6324
  %v6701 = vpack.c.b16 %v6333, %v6325
  %v6702 = vpack.c.b16 %v6334, %v6326
  %v6703 = vpack.c.b16 %v6335, %v6327
  %v6704 = vpack.c.b16 %v6336, %v6328
  %v6705 = vpack.c.b16 %v6337, %v6329
  %v6706 = vpack.c.b16 %v6338, %v6330
  %v6707 = vpack.c.b16 %v6339, %v6331
  %v6708 = vpack.c.b16 %v6348, %v6340
  %v6709 = vpack.c.b16 %v6349, %v6341
  %v6710 = vpack.c.b16 %v6350, %v6342
  %v6711 = vpack.c.b16 %v6351, %v6343
  %v6712 = vpack.c.b16 %v6352, %v6344
  %v6713 = vpack.c.b16 %v6353, %v6345
  %v6714 = vpack.c.b16 %v6354, %v6346
  %v6715 = vpack.c.b16 %v6355, %v6347
  %v6716 = vpack.c.b16 %v6364, %v6356
  %v6717 = vpack.c.b16 %v6365, %v6357
  %v6718 = vpack.c.b16 %v6366, %v6358
  %v6719 = vpack.c.b16 %v6367, %v6359
  %v6720 = vpack.c.b16 %v6368, %v6360
  %v6721 = vpack.c.b16 %v6369, %v6361
  %v6722 = vpack.c.b16 %v6370, %v6362
  %v6723 = vpack.c.b16 %v6371, %v6363
  %v6724 = vpack.c.b16 %v6380, %v6372
  %v6725 = vpack.c.b16 %v6381, %v6373
  %v6726 = vpack.c.b16 %v6382, %v6374
  %v6727 = vpack.c.b16 %v6383, %v6375
  %v6728 = vpack.c.b16 %v6384, %v6376
  %v6729 = vpack.c.b16 %v6385, %v6377
  %v6730 = vpack.c.b16 %v6386, %v6378
  %v6731 = vpack.c.b16 %v6387, %v6379
  %v6732 = vpack.c.b16 %v6396, %v6388
  %v6733 = vpack.c.b16 %v6397, %v6389
  %v6734 = vpack.c.b16 %v6398, %v6390
  %v6735 = vpack.c.b16 %v6399, %v6391
  %v6736 = vpack.c.b16 %v6400, %v6392
  %v6737 = vpack.c.b16 %v6401, %v6393
  %v6738 = vpack.c.b16 %v6402, %v6394
  %v6739 = vpack.c.b16 %v6403, %v6395
  %v6740 = vpack.c.b16 %v6412, %v6404
  %v6741 = vpack.c.b16 %v6413, %v6405
  %v6742 = vpack.c.b16 %v6414, %v6406
  %v6743 = vpack.c.b16 %v6415, %v6407
  %v6744 = vpack.c.b16 %v6416, %v6408
  %v6745 = vpack.c.b16 %v6417, %v6409
  %v6746 = vpack.c.b16 %v6418, %v6410
  %v6747 = vpack.c.b16 %v6419, %v6411
  %v6748 = vpack.c.b16 %v6428, %v6420
  %v6749 = vpack.c.b16 %v6429, %v6421
  %v6750 = vpack.c.b16 %v6430, %v6422
  %v6751 = vpack.c.b16 %v6431, %v6423
  %v6752 = vpack.c.b16 %v6432, %v6424
  %v6753 = vpack.c.b16 %v6433, %v6425
  %v6754 = vpack.c.b16 %v6434, %v6426
  %v6755 = vpack.c.b16 %v6435, %v6427
  %v6756 = vpack.c.b16 %v6444, %v6436
  %v6757 = vpack.c.b16 %v6445, %v6437
  %v6758 = vpack.c.b16 %v6446, %v6438
  %v6759 = vpack.c.b16 %v6447, %v6439
  %v6760 = vpack.c.b16 %v6448, %v6440
  %v6761 = vpack.c.b16 %v6449, %v6441
  %v6762 = vpack.c.b16 %v6450, %v6442
  %v6763 = vpack.c.b16 %v6451, %v6443
  %v6764 = vpack.c.b16 %v6460, %v6452
  %v6765 = vpack.c.b16 %v6461, %v6453
  %v6766 = vpack.c.b16 %v6462, %v6454
  %v6767 = vpack.c.b16 %v6463, %v6455
  %v6768 = vpack.c.b16 %v6464, %v6456
  %v6769 = vpack.c.b16 %v6465, %v6457
  %v6770 = vpack.c.b16 %v6466, %v6458
  %v6771 = vpack.c.b16 %v6467, %v6459
  %v6772 = vpack.c.b16 %v6476, %v6468
  %v6773 = vpack.c.b16 %v6477, %v6469
  %v6774 = vpack.c.b16 %v6478, %v6470
  %v6775 = vpack.c.b16 %v6479, %v6471
  %v6776 = vpack.c.b16 %v6480, %v6472
  %v6777 = vpack.c.b16 %v6481, %v6473
  %v6778 = vpack.c.b16 %v6482, %v6474
  %v6779 = vpack.c.b16 %v6483, %v6475
  %v6780 = vpack.c.b16 %v6492, %v6484
  %v6781 = vpack.c.b16 %v6493, %v6485
  %v6782 = vpack.c.b16 %v6494, %v6486
  %v6783 = vpack.c.b16 %v6495, %v6487
  %v6784 = vpack.c.b16 %v6496, %v6488
  %v6785 = vpack.c.b16 %v6497, %v6489
  %v6786 = vpack.c.b16 %v6498, %v6490
  %v6787 = vpack.c.b16 %v6499, %v6491
  %v6788 = vpack.c.b16 %v6508, %v6500
  %v6789 = vpack.c.b16 %v6509, %v6501
  %v6790 = vpack.c.b16 %v6510, %v6502
  %v6791 = vpack.c.b16 %v6511, %v6503
  %v6792 = vpack.c.b16 %v6512, %v6504
  %v6793 = vpack.c.b16 %v6513, %v6505
  %v6794 = vpack.c.b16 %v6514, %v6506
  %v6795 = vpack.c.b16 %v6515, %v6507
  %v6796 = vpack.c.b16 %v6524, %v6516
  %v6797 = vpack.c.b16 %v6525, %v6517
  %v6798 = vpack.c.b16 %v6526, %v6518
  %v6799 = vpack.c.b16 %v6527, %v6519
  %v6800 = vpack.c.b16 %v6528, %v6520
  %v6801 = vpack.c.b16 %v6529, %v6521
  %v6802 = vpack.c.b16 %v6530, %v6522
  %v6803 = vpack.c.b16 %v6531, %v6523
  %v6804 = vpack.c.b16 %v6540, %v6532
  %v6805 = vpack.c.b16 %v6541, %v6533
  %v6806 = vpack.c.b16 %v6542, %v6534
  %v6807 = vpack.c.b16 %v6543, %v6535
  %v6808 = vpack.c.b16 %v6544, %v6536
  %v6809 = vpack.c.b16 %v6545, %v6537
  %v6810 = vpack.c.b16 %v6546, %v6538
  %v6811 = vpack.c.b16 %v6547, %v6539
  %v6812 = vpack.c.b16 %v6556, %v6548
  %v6813 = vpack.c.b16 %v6557, %v6549
  %v6814 = vpack.c.b16 %v6558, %v6550
  %v6815 = vpack.c.b16 %v6559, %v6551
  %v6816 = vpack.c.b16 %v6560, %v6552
  %v6817 = vpack.c.b16 %v6561, %v6553
  %v6818 = vpack.c.b16 %v6562, %v6554
  %v6819 = vpack.c.b16 %v6563, %v6555
  %7076 = vmatprep.subr.bf16.mxu0 %v6565
  %7077 = vmatpush1.bf16.msra.mxu0 %v6564
  %7078 = vmatprep.subr.bf16.mxu0 %v6573
  %7079 = vmatpush1.bf16.msra.mxu0 %v6572
  %7080 = vmatprep.subr.bf16.mxu0 %v6581
  %7081 = vmatpush1.bf16.msra.mxu0 %v6580
  %7082 = vmatprep.subr.bf16.mxu0 %v6589
  %7083 = vmatpush1.bf16.msra.mxu0 %v6588
  %7084 = vmatprep.subr.bf16.mxu0 %v6597
  %7085 = vmatpush1.bf16.msra.mxu0 %v6596
  %7086 = vmatprep.subr.bf16.mxu0 %v6605
  %7087 = vmatpush1.bf16.msra.mxu0 %v6604
  %7088 = vmatprep.subr.bf16.mxu0 %v6613
  %7089 = vmatpush1.bf16.msra.mxu0 %v6612
  %7090 = vmatprep.subr.bf16.mxu0 %v6621
  %7091 = vmatpush1.bf16.msra.mxu0 %v6620
  %7092 = vmatprep.subr.bf16.mxu0 %v6629
  %7093 = vmatpush1.bf16.msra.mxu0 %v6628
  %7094 = vmatprep.subr.bf16.mxu0 %v6637
  %7095 = vmatpush1.bf16.msra.mxu0 %v6636
  %7096 = vmatprep.subr.bf16.mxu0 %v6645
  %7097 = vmatpush1.bf16.msra.mxu0 %v6644
  %7098 = vmatprep.subr.bf16.mxu0 %v6653
  %7099 = vmatpush1.bf16.msra.mxu0 %v6652
  %7100 = vmatprep.subr.bf16.mxu0 %v6661
  %7101 = vmatpush1.bf16.msra.mxu0 %v6660
  %7102 = vmatprep.subr.bf16.mxu0 %v6669
  %7103 = vmatpush1.bf16.msra.mxu0 %v6668
  %7104 = vmatprep.subr.bf16.mxu0 %v6677
  %7105 = vmatpush1.bf16.msra.mxu0 %v6676
  %7106 = vmatprep.subr.bf16.mxu0 %v6685
  %7107 = vmatpush1.bf16.msra.mxu0 %v6684
  %7108 = vmatprep.mubr.bf16.mxu0 %v5537
  %7109 = vmatmul.mubr.bf16.gmra.mrb[0].mxu0 %v5536
  %v7110 = vpop.f32.mrb[0].mxu0
  %v7111 = vadd.f32 %v3465, %v7110
  %v7112 = vpop.f32.mrb[0].mxu0
  %v7113 = vadd.f32 %v3469, %v7112
  %v7114 = vpop.f32.mrb[0].mxu0
  %v7115 = vpop.f32.mrb[0].mxu0
  %7116 = vdwg.mxu0
  %7117 = vmatprep.subr.bf16.mxu0 %v6693
  %7118 = vmatpush1.bf16.msra.mxu0 %v6692
  %7119 = vmatprep.subr.bf16.mxu0 %v6701
  %7120 = vmatpush1.bf16.msra.mxu0 %v6700
  %7121 = vmatprep.subr.bf16.mxu0 %v6709
  %7122 = vmatpush1.bf16.msra.mxu0 %v6708
  %7123 = vmatprep.subr.bf16.mxu0 %v6717
  %7124 = vmatpush1.bf16.msra.mxu0 %v6716
  %7125 = vmatprep.subr.bf16.mxu0 %v6725
  %7126 = vmatpush1.bf16.msra.mxu0 %v6724
  %7127 = vmatprep.subr.bf16.mxu0 %v6733
  %7128 = vmatpush1.bf16.msra.mxu0 %v6732
  %7129 = vmatprep.subr.bf16.mxu0 %v6741
  %7130 = vmatpush1.bf16.msra.mxu0 %v6740
  %7131 = vmatprep.subr.bf16.mxu0 %v6749
  %7132 = vmatpush1.bf16.msra.mxu0 %v6748
  %7133 = vmatprep.subr.bf16.mxu0 %v6757
  %7134 = vmatpush1.bf16.msra.mxu0 %v6756
  %7135 = vmatprep.subr.bf16.mxu0 %v6765
  %7136 = vmatpush1.bf16.msra.mxu0 %v6764
  %7137 = vmatprep.subr.bf16.mxu0 %v6773
  %7138 = vmatpush1.bf16.msra.mxu0 %v6772
  %7139 = vmatprep.subr.bf16.mxu0 %v6781
  %7140 = vmatpush1.bf16.msra.mxu0 %v6780
  %7141 = vmatprep.subr.bf16.mxu0 %v6789
  %7142 = vmatpush1.bf16.msra.mxu0 %v6788
  %7143 = vmatprep.subr.bf16.mxu0 %v6797
  %7144 = vmatpush1.bf16.msra.mxu0 %v6796
  %7145 = vmatprep.subr.bf16.mxu0 %v6805
  %7146 = vmatpush1.bf16.msra.mxu0 %v6804
  %7147 = vmatprep.subr.bf16.mxu0 %v6813
  %7148 = vmatpush1.bf16.msra.mxu0 %v6812
  %7149 = vmatprep.mubr.bf16.mxu0 %v5539
  %7150 = vmatmul.mubr.bf16.gmra.mrb[0].mxu0 %v5538
  %v7151 = vpop.f32.mrb[0].mxu0
  %v7152 = vadd.f32 %v7111, %v7151
  %v7153 = vpop.f32.mrb[0].mxu0
  %v7154 = vadd.f32 %v7113, %v7153
  %v7155 = vpop.f32.mrb[0].mxu0
  %v7156 = vpop.f32.mrb[0].mxu0
  %7157 = vdwg.mxu0
  %7158 = vmatprep.subr.bf16.mxu0 %v6567
  %7159 = vmatpush1.bf16.msra.mxu0 %v6566
  %7160 = vmatprep.subr.bf16.mxu0 %v6575
  %7161 = vmatpush1.bf16.msra.mxu0 %v6574
  %7162 = vmatprep.subr.bf16.mxu0 %v6583
  %7163 = vmatpush1.bf16.msra.mxu0 %v6582
  %7164 = vmatprep.subr.bf16.mxu0 %v6591
  %7165 = vmatpush1.bf16.msra.mxu0 %v6590
  %7166 = vmatprep.subr.bf16.mxu0 %v6599
  %7167 = vmatpush1.bf16.msra.mxu0 %v6598
  %7168 = vmatprep.subr.bf16.mxu0 %v6607
  %7169 = vmatpush1.bf16.msra.mxu0 %v6606
  %7170 = vmatprep.subr.bf16.mxu0 %v6615
  %7171 = vmatpush1.bf16.msra.mxu0 %v6614
  %7172 = vmatprep.subr.bf16.mxu0 %v6623
  %7173 = vmatpush1.bf16.msra.mxu0 %v6622
  %7174 = vmatprep.subr.bf16.mxu0 %v6631
  %7175 = vmatpush1.bf16.msra.mxu0 %v6630
  %7176 = vmatprep.subr.bf16.mxu0 %v6639
  %7177 = vmatpush1.bf16.msra.mxu0 %v6638
  %7178 = vmatprep.subr.bf16.mxu0 %v6647
  %7179 = vmatpush1.bf16.msra.mxu0 %v6646
  %7180 = vmatprep.subr.bf16.mxu0 %v6655
  %7181 = vmatpush1.bf16.msra.mxu0 %v6654
  %7182 = vmatprep.subr.bf16.mxu0 %v6663
  %7183 = vmatpush1.bf16.msra.mxu0 %v6662
  %7184 = vmatprep.subr.bf16.mxu0 %v6671
  %7185 = vmatpush1.bf16.msra.mxu0 %v6670
  %7186 = vmatprep.subr.bf16.mxu0 %v6679
  %7187 = vmatpush1.bf16.msra.mxu0 %v6678
  %7188 = vmatprep.subr.bf16.mxu0 %v6687
  %7189 = vmatpush1.bf16.msra.mxu0 %v6686
  %7190 = vmatprep.mubr.bf16.mxu0 %v5537
  %7191 = vmatmul.mubr.bf16.gmra.mrb[0].mxu0 %v5536
  %v7192 = vpop.f32.mrb[0].mxu0
  %v7193 = vadd.f32 %v3473, %v7192
  %v7194 = vpop.f32.mrb[0].mxu0
  %v7195 = vadd.f32 %v3477, %v7194
  %v7196 = vpop.f32.mrb[0].mxu0
  %v7197 = vpop.f32.mrb[0].mxu0
  %7198 = vdwg.mxu0
  %7199 = vmatprep.subr.bf16.mxu0 %v6695
  %7200 = vmatpush1.bf16.msra.mxu0 %v6694
  %7201 = vmatprep.subr.bf16.mxu0 %v6703
  %7202 = vmatpush1.bf16.msra.mxu0 %v6702
  %7203 = vmatprep.subr.bf16.mxu0 %v6711
  %7204 = vmatpush1.bf16.msra.mxu0 %v6710
  %7205 = vmatprep.subr.bf16.mxu0 %v6719
  %7206 = vmatpush1.bf16.msra.mxu0 %v6718
  %7207 = vmatprep.subr.bf16.mxu0 %v6727
  %7208 = vmatpush1.bf16.msra.mxu0 %v6726
  %7209 = vmatprep.subr.bf16.mxu0 %v6735
  %7210 = vmatpush1.bf16.msra.mxu0 %v6734
  %7211 = vmatprep.subr.bf16.mxu0 %v6743
  %7212 = vmatpush1.bf16.msra.mxu0 %v6742
  %7213 = vmatprep.subr.bf16.mxu0 %v6751
  %7214 = vmatpush1.bf16.msra.mxu0 %v6750
  %7215 = vmatprep.subr.bf16.mxu0 %v6759
  %7216 = vmatpush1.bf16.msra.mxu0 %v6758
  %7217 = vmatprep.subr.bf16.mxu0 %v6767
  %7218 = vmatpush1.bf16.msra.mxu0 %v6766
  %7219 = vmatprep.subr.bf16.mxu0 %v6775
  %7220 = vmatpush1.bf16.msra.mxu0 %v6774
  %7221 = vmatprep.subr.bf16.mxu0 %v6783
  %7222 = vmatpush1.bf16.msra.mxu0 %v6782
  %7223 = vmatprep.subr.bf16.mxu0 %v6791
  %7224 = vmatpush1.bf16.msra.mxu0 %v6790
  %7225 = vmatprep.subr.bf16.mxu0 %v6799
  %7226 = vmatpush1.bf16.msra.mxu0 %v6798
  %7227 = vmatprep.subr.bf16.mxu0 %v6807
  %7228 = vmatpush1.bf16.msra.mxu0 %v6806
  %7229 = vmatprep.subr.bf16.mxu0 %v6815
  %7230 = vmatpush1.bf16.msra.mxu0 %v6814
  %7231 = vmatprep.mubr.bf16.mxu0 %v5539
  %7232 = vmatmul.mubr.bf16.gmra.mrb[0].mxu0 %v5538
  %v7233 = vpop.f32.mrb[0].mxu0
  %v7234 = vadd.f32 %v7193, %v7233
  %v7235 = vpop.f32.mrb[0].mxu0
  %v7236 = vadd.f32 %v7195, %v7235
  %v7237 = vpop.f32.mrb[0].mxu0
  %v7238 = vpop.f32.mrb[0].mxu0
  %7239 = vdwg.mxu0
  %7240 = vmatprep.subr.bf16.mxu0 %v6569
  %7241 = vmatpush1.bf16.msra.mxu0 %v6568
  %7242 = vmatprep.subr.bf16.mxu0 %v6577
  %7243 = vmatpush1.bf16.msra.mxu0 %v6576
  %7244 = vmatprep.subr.bf16.mxu0 %v6585
  %7245 = vmatpush1.bf16.msra.mxu0 %v6584
  %7246 = vmatprep.subr.bf16.mxu0 %v6593
  %7247 = vmatpush1.bf16.msra.mxu0 %v6592
  %7248 = vmatprep.subr.bf16.mxu0 %v6601
  %7249 = vmatpush1.bf16.msra.mxu0 %v6600
  %7250 = vmatprep.subr.bf16.mxu0 %v6609
  %7251 = vmatpush1.bf16.msra.mxu0 %v6608
  %7252 = vmatprep.subr.bf16.mxu0 %v6617
  %7253 = vmatpush1.bf16.msra.mxu0 %v6616
  %7254 = vmatprep.subr.bf16.mxu0 %v6625
  %7255 = vmatpush1.bf16.msra.mxu0 %v6624
  %7256 = vmatprep.subr.bf16.mxu0 %v6633
  %7257 = vmatpush1.bf16.msra.mxu0 %v6632
  %7258 = vmatprep.subr.bf16.mxu0 %v6641
  %7259 = vmatpush1.bf16.msra.mxu0 %v6640
  %7260 = vmatprep.subr.bf16.mxu0 %v6649
  %7261 = vmatpush1.bf16.msra.mxu0 %v6648
  %7262 = vmatprep.subr.bf16.mxu0 %v6657
  %7263 = vmatpush1.bf16.msra.mxu0 %v6656
  %7264 = vmatprep.subr.bf16.mxu0 %v6665
  %7265 = vmatpush1.bf16.msra.mxu0 %v6664
  %7266 = vmatprep.subr.bf16.mxu0 %v6673
  %7267 = vmatpush1.bf16.msra.mxu0 %v6672
  %7268 = vmatprep.subr.bf16.mxu0 %v6681
  %7269 = vmatpush1.bf16.msra.mxu0 %v6680
  %7270 = vmatprep.subr.bf16.mxu0 %v6689
  %7271 = vmatpush1.bf16.msra.mxu0 %v6688
  %7272 = vmatprep.mubr.bf16.mxu0 %v5537
  %7273 = vmatmul.mubr.bf16.gmra.mrb[0].mxu0 %v5536
  %v7274 = vpop.f32.mrb[0].mxu0
  %v7275 = vadd.f32 %v3481, %v7274
  %v7276 = vpop.f32.mrb[0].mxu0
  %v7277 = vadd.f32 %v3485, %v7276
  %v7278 = vpop.f32.mrb[0].mxu0
  %v7279 = vpop.f32.mrb[0].mxu0
  %7280 = vdwg.mxu0
  %7281 = vmatprep.subr.bf16.mxu0 %v6697
  %7282 = vmatpush1.bf16.msra.mxu0 %v6696
  %7283 = vmatprep.subr.bf16.mxu0 %v6705
  %7284 = vmatpush1.bf16.msra.mxu0 %v6704
  %7285 = vmatprep.subr.bf16.mxu0 %v6713
  %7286 = vmatpush1.bf16.msra.mxu0 %v6712
  %7287 = vmatprep.subr.bf16.mxu0 %v6721
  %7288 = vmatpush1.bf16.msra.mxu0 %v6720
  %7289 = vmatprep.subr.bf16.mxu0 %v6729
  %7290 = vmatpush1.bf16.msra.mxu0 %v6728
  %7291 = vmatprep.subr.bf16.mxu0 %v6737
  %7292 = vmatpush1.bf16.msra.mxu0 %v6736
  %7293 = vmatprep.subr.bf16.mxu0 %v6745
  %7294 = vmatpush1.bf16.msra.mxu0 %v6744
  %7295 = vmatprep.subr.bf16.mxu0 %v6753
  %7296 = vmatpush1.bf16.msra.mxu0 %v6752
  %7297 = vmatprep.subr.bf16.mxu0 %v6761
  %7298 = vmatpush1.bf16.msra.mxu0 %v6760
  %7299 = vmatprep.subr.bf16.mxu0 %v6769
  %7300 = vmatpush1.bf16.msra.mxu0 %v6768
  %7301 = vmatprep.subr.bf16.mxu0 %v6777
  %7302 = vmatpush1.bf16.msra.mxu0 %v6776
  %7303 = vmatprep.subr.bf16.mxu0 %v6785
  %7304 = vmatpush1.bf16.msra.mxu0 %v6784
  %7305 = vmatprep.subr.bf16.mxu0 %v6793
  %7306 = vmatpush1.bf16.msra.mxu0 %v6792
  %7307 = vmatprep.subr.bf16.mxu0 %v6801
  %7308 = vmatpush1.bf16.msra.mxu0 %v6800
  %7309 = vmatprep.subr.bf16.mxu0 %v6809
  %7310 = vmatpush1.bf16.msra.mxu0 %v6808
  %7311 = vmatprep.subr.bf16.mxu0 %v6817
  %7312 = vmatpush1.bf16.msra.mxu0 %v6816
  %7313 = vmatprep.mubr.bf16.mxu0 %v5539
  %7314 = vmatmul.mubr.bf16.gmra.mrb[0].mxu0 %v5538
  %v7315 = vpop.f32.mrb[0].mxu0
  %v7316 = vadd.f32 %v7275, %v7315
  %v7317 = vpop.f32.mrb[0].mxu0
  %v7318 = vadd.f32 %v7277, %v7317
  %v7319 = vpop.f32.mrb[0].mxu0
  %v7320 = vpop.f32.mrb[0].mxu0
  %7321 = vdwg.mxu0
  %7322 = vmatprep.subr.bf16.mxu0 %v6571
  %7323 = vmatpush1.bf16.msra.mxu0 %v6570
  %7324 = vmatprep.subr.bf16.mxu0 %v6579
  %7325 = vmatpush1.bf16.msra.mxu0 %v6578
  %7326 = vmatprep.subr.bf16.mxu0 %v6587
  %7327 = vmatpush1.bf16.msra.mxu0 %v6586
  %7328 = vmatprep.subr.bf16.mxu0 %v6595
  %7329 = vmatpush1.bf16.msra.mxu0 %v6594
  %7330 = vmatprep.subr.bf16.mxu0 %v6603
  %7331 = vmatpush1.bf16.msra.mxu0 %v6602
  %7332 = vmatprep.subr.bf16.mxu0 %v6611
  %7333 = vmatpush1.bf16.msra.mxu0 %v6610
  %7334 = vmatprep.subr.bf16.mxu0 %v6619
  %7335 = vmatpush1.bf16.msra.mxu0 %v6618
  %7336 = vmatprep.subr.bf16.mxu0 %v6627
  %7337 = vmatpush1.bf16.msra.mxu0 %v6626
  %7338 = vmatprep.subr.bf16.mxu0 %v6635
  %7339 = vmatpush1.bf16.msra.mxu0 %v6634
  %7340 = vmatprep.subr.bf16.mxu0 %v6643
  %7341 = vmatpush1.bf16.msra.mxu0 %v6642
  %7342 = vmatprep.subr.bf16.mxu0 %v6651
  %7343 = vmatpush1.bf16.msra.mxu0 %v6650
  %7344 = vmatprep.subr.bf16.mxu0 %v6659
  %7345 = vmatpush1.bf16.msra.mxu0 %v6658
  %7346 = vmatprep.subr.bf16.mxu0 %v6667
  %7347 = vmatpush1.bf16.msra.mxu0 %v6666
  %7348 = vmatprep.subr.bf16.mxu0 %v6675
  %7349 = vmatpush1.bf16.msra.mxu0 %v6674
  %7350 = vmatprep.subr.bf16.mxu0 %v6683
  %7351 = vmatpush1.bf16.msra.mxu0 %v6682
  %7352 = vmatprep.subr.bf16.mxu0 %v6691
  %7353 = vmatpush1.bf16.msra.mxu0 %v6690
  %7354 = vmatprep.mubr.bf16.mxu0 %v5537
  %7355 = vmatmul.mubr.bf16.gmra.mrb[0].mxu0 %v5536
  %v7356 = vpop.f32.mrb[0].mxu0
  %v7357 = vadd.f32 %v3489, %v7356
  %v7358 = vpop.f32.mrb[0].mxu0
  %v7359 = vadd.f32 %v3493, %v7358
  %v7360 = vpop.f32.mrb[0].mxu0
  %v7361 = vpop.f32.mrb[0].mxu0
  %7362 = vdwg.mxu0
  %7363 = vmatprep.subr.bf16.mxu0 %v6699
  %7364 = vmatpush1.bf16.msra.mxu0 %v6698
  %7365 = vmatprep.subr.bf16.mxu0 %v6707
  %7366 = vmatpush1.bf16.msra.mxu0 %v6706
  %7367 = vmatprep.subr.bf16.mxu0 %v6715
  %7368 = vmatpush1.bf16.msra.mxu0 %v6714
  %7369 = vmatprep.subr.bf16.mxu0 %v6723
  %7370 = vmatpush1.bf16.msra.mxu0 %v6722
  %7371 = vmatprep.subr.bf16.mxu0 %v6731
  %7372 = vmatpush1.bf16.msra.mxu0 %v6730
  %7373 = vmatprep.subr.bf16.mxu0 %v6739
  %7374 = vmatpush1.bf16.msra.mxu0 %v6738
  %7375 = vmatprep.subr.bf16.mxu0 %v6747
  %7376 = vmatpush1.bf16.msra.mxu0 %v6746
  %7377 = vmatprep.subr.bf16.mxu0 %v6755
  %7378 = vmatpush1.bf16.msra.mxu0 %v6754
  %7379 = vmatprep.subr.bf16.mxu0 %v6763
  %7380 = vmatpush1.bf16.msra.mxu0 %v6762
  %7381 = vmatprep.subr.bf16.mxu0 %v6771
  %7382 = vmatpush1.bf16.msra.mxu0 %v6770
  %7383 = vmatprep.subr.bf16.mxu0 %v6779
  %7384 = vmatpush1.bf16.msra.mxu0 %v6778
  %7385 = vmatprep.subr.bf16.mxu0 %v6787
  %7386 = vmatpush1.bf16.msra.mxu0 %v6786
  %7387 = vmatprep.subr.bf16.mxu0 %v6795
  %7388 = vmatpush1.bf16.msra.mxu0 %v6794
  %7389 = vmatprep.subr.bf16.mxu0 %v6803
  %7390 = vmatpush1.bf16.msra.mxu0 %v6802
  %7391 = vmatprep.subr.bf16.mxu0 %v6811
  %7392 = vmatpush1.bf16.msra.mxu0 %v6810
  %7393 = vmatprep.subr.bf16.mxu0 %v6819
  %7394 = vmatpush1.bf16.msra.mxu0 %v6818
  %7395 = vmatprep.mubr.bf16.mxu0 %v5539
  %7396 = vmatmul.mubr.bf16.gmra.mrb[0].mxu0 %v5538
  %v7397 = vpop.f32.mrb[0].mxu0
  %v7398 = vadd.f32 %v7357, %v7397
  %v7399 = vpop.f32.mrb[0].mxu0
  %v7400 = vadd.f32 %v7359, %v7399
  %v7401 = vpop.f32.mrb[0].mxu0
  %v7402 = vpop.f32.mrb[0].mxu0
  %7403 = vdwg.mxu0
  %v7404 = vxor.u32 %v7152, 2147483648
  %v7405 = vxor.u32 %v7154, 2147483648
  %v7406 = vxor.u32 %v7234, 2147483648
  %v7407 = vxor.u32 %v7236, 2147483648
  %v7408 = vxor.u32 %v7316, 2147483648
  %v7409 = vxor.u32 %v7318, 2147483648
  %v7410 = vmul.f32 %v7404, 1.442695
  %v7411 = vpow.pop %v7410
  %v7412 = vmul.f32 %v7405, 1.442695
  %v7413 = vpow.pop %v7412
  %v7414 = vmul.f32 %v7406, 1.442695
  %v7415 = vpow.pop %v7414
  %v7416 = vmul.f32 %v7407, 1.442695
  %v7417 = vpow.pop %v7416
  %v7418 = vmul.f32 %v7408, 1.442695
  %v7419 = vpow.pop %v7418
  %v7420 = vmul.f32 %v7409, 1.442695
  %v7421 = vpow.pop %v7420
  %v7422 = vadd.f32 %v7411, 1.0
  %v7423 = vadd.f32 %v7413, 1.0
  %v7424 = vadd.f32 %v7415, 1.0
  %v7425 = vadd.f32 %v7417, 1.0
  %v7426 = vadd.f32 %v7419, 1.0
  %v7427 = vadd.f32 %v7421, 1.0
  %v7428 = vrcp.pop %v7422
  %v7429 = vmul.f32 1.0, %v7428
  %v7430 = vrcp.pop %v7423
  %v7431 = vmul.f32 1.0, %v7430
  %v7432 = vrcp.pop %v7424
  %v7433 = vmul.f32 1.0, %v7432
  %v7434 = vrcp.pop %v7425
  %v7435 = vmul.f32 1.0, %v7434
  %v7436 = vrcp.pop %v7426
  %v7437 = vmul.f32 1.0, %v7436
  %v7438 = vrcp.pop %v7427
  %v7439 = vmul.f32 1.0, %v7438
  %v7440 = vtanh.pop %v7398
  %v7441 = vtanh.pop %v7400
  %v7442 = vmul.f32 %v7433, %v4534
  %v7443 = vmul.f32 %v7435, %v4535
  %v7444 = vmul.f32 %v7429, %v7440
  %v7445 = vmul.f32 %v7431, %v7441
  %v7446 = vadd.f32 %v7442, %v7444
  %v7447 = vadd.f32 %v7443, %v7445
  %v7448 = vtanh.pop %v7446
  %v7449 = vtanh.pop %v7447
  %v7450 = vmul.f32 %v7437, %v7448
  %v7451 = vmul.f32 %v7439, %v7449
  %v7452 = vld [vmem:[#allocation2 + $0x80] sm:$0xff]
  %v7453 = vld [vmem:[#allocation2 + $0x88] sm:$0xff]
  %v7454 = vld [vmem:[#allocation2 + $0x90] sm:$0xff]
  %v7455 = vld [vmem:[#allocation2 + $0x98] sm:$0xff]
  %v7456 = vld [vmem:[#allocation2 + $0xa0] sm:$0xff]
  %v7457 = vld [vmem:[#allocation2 + $0xa8] sm:$0xff]
  %v7458 = vld [vmem:[#allocation2 + $0xb0] sm:$0xff]
  %v7459 = vld [vmem:[#allocation2 + $0xb8] sm:$0xff]
  %7460 = vmatprep.subr.bf16.mxu0 %v5061
  %7461 = vmatpush1.bf16.msra.mxu0 %v5060
  %7462 = vmatprep.subr.bf16.mxu0 %v5069
  %7463 = vmatpush1.bf16.msra.mxu0 %v5068
  %7464 = vmatprep.subr.bf16.mxu0 %v5077
  %7465 = vmatpush1.bf16.msra.mxu0 %v5076
  %7466 = vmatprep.subr.bf16.mxu0 %v5085
  %7467 = vmatpush1.bf16.msra.mxu0 %v5084
  %7468 = vmatprep.subr.bf16.mxu0 %v5093
  %7469 = vmatpush1.bf16.msra.mxu0 %v5092
  %7470 = vmatprep.subr.bf16.mxu0 %v5101
  %7471 = vmatpush1.bf16.msra.mxu0 %v5100
  %7472 = vmatprep.subr.bf16.mxu0 %v5109
  %7473 = vmatpush1.bf16.msra.mxu0 %v5108
  %7474 = vmatprep.subr.bf16.mxu0 %v5117
  %7475 = vmatpush1.bf16.msra.mxu0 %v5116
  %7476 = vmatprep.subr.bf16.mxu0 %v5125
  %7477 = vmatpush1.bf16.msra.mxu0 %v5124
  %7478 = vmatprep.subr.bf16.mxu0 %v5133
  %7479 = vmatpush1.bf16.msra.mxu0 %v5132
  %7480 = vmatprep.subr.bf16.mxu0 %v5141
  %7481 = vmatpush1.bf16.msra.mxu0 %v5140
  %7482 = vmatprep.subr.bf16.mxu0 %v5149
  %7483 = vmatpush1.bf16.msra.mxu0 %v5148
  %7484 = vmatprep.subr.bf16.mxu0 %v5157
  %7485 = vmatpush1.bf16.msra.mxu0 %v5156
  %7486 = vmatprep.subr.bf16.mxu0 %v5165
  %7487 = vmatpush1.bf16.msra.mxu0 %v5164
  %7488 = vmatprep.subr.bf16.mxu0 %v5173
  %7489 = vmatpush1.bf16.msra.mxu0 %v5172
  %7490 = vmatprep.subr.bf16.mxu0 %v5181
  %7491 = vmatpush1.bf16.msra.mxu0 %v5180
  %7492 = vmatprep.mubr.bf16.mxu0 %v5537
  %7493 = vmatmul.mubr.bf16.gmra.mrb[0].mxu0 %v5536
  %v7494 = vpop.f32.mrb[0].mxu0
  %v7495 = vadd.f32 0.0, %v7494
  %v7496 = vpop.f32.mrb[0].mxu0
  %v7497 = vadd.f32 0.0, %v7496
  %v7498 = vpop.f32.mrb[0].mxu0
  %v7499 = vpop.f32.mrb[0].mxu0
  %7500 = vdwg.mxu0
  %7501 = vmatprep.subr.bf16.mxu0 %v5063
  %7502 = vmatpush1.bf16.msra.mxu0 %v5062
  %7503 = vmatprep.subr.bf16.mxu0 %v5071
  %7504 = vmatpush1.bf16.msra.mxu0 %v5070
  %7505 = vmatprep.subr.bf16.mxu0 %v5079
  %7506 = vmatpush1.bf16.msra.mxu0 %v5078
  %7507 = vmatprep.subr.bf16.mxu0 %v5087
  %7508 = vmatpush1.bf16.msra.mxu0 %v5086
  %7509 = vmatprep.subr.bf16.mxu0 %v5095
  %7510 = vmatpush1.bf16.msra.mxu0 %v5094
  %7511 = vmatprep.subr.bf16.mxu0 %v5103
  %7512 = vmatpush1.bf16.msra.mxu0 %v5102
  %7513 = vmatprep.subr.bf16.mxu0 %v5111
  %7514 = vmatpush1.bf16.msra.mxu0 %v5110
  %7515 = vmatprep.subr.bf16.mxu0 %v5119
  %7516 = vmatpush1.bf16.msra.mxu0 %v5118
  %7517 = vmatprep.subr.bf16.mxu0 %v5127
  %7518 = vmatpush1.bf16.msra.mxu0 %v5126
  %7519 = vmatprep.subr.bf16.mxu0 %v5135
  %7520 = vmatpush1.bf16.msra.mxu0 %v5134
  %7521 = vmatprep.subr.bf16.mxu0 %v5143
  %7522 = vmatpush1.bf16.msra.mxu0 %v5142
  %7523 = vmatprep.subr.bf16.mxu0 %v5151
  %7524 = vmatpush1.bf16.msra.mxu0 %v5150
  %7525 = vmatprep.subr.bf16.mxu0 %v5159
  %7526 = vmatpush1.bf16.msra.mxu0 %v5158
  %7527 = vmatprep.subr.bf16.mxu0 %v5167
  %7528 = vmatpush1.bf16.msra.mxu0 %v5166
  %7529 = vmatprep.subr.bf16.mxu0 %v5175
  %7530 = vmatpush1.bf16.msra.mxu0 %v5174
  %7531 = vmatprep.subr.bf16.mxu0 %v5183
  %7532 = vmatpush1.bf16.msra.mxu0 %v5182
  %7533 = vmatprep.mubr.bf16.mxu0 %v5537
  %7534 = vmatmul.mubr.bf16.gmra.mrb[0].mxu0 %v5536
  %v7535 = vpop.f32.mrb[0].mxu0
  %v7536 = vadd.f32 0.0, %v7535
  %v7537 = vpop.f32.mrb[0].mxu0
  %v7538 = vadd.f32 0.0, %v7537
  %v7539 = vpop.f32.mrb[0].mxu0
  %v7540 = vpop.f32.mrb[0].mxu0
  %7541 = vdwg.mxu0
  %7542 = vmatprep.subr.bf16.mxu0 %v5065
  %7543 = vmatpush1.bf16.msra.mxu0 %v5064
  %7544 = vmatprep.subr.bf16.mxu0 %v5073
  %7545 = vmatpush1.bf16.msra.mxu0 %v5072
  %7546 = vmatprep.subr.bf16.mxu0 %v5081
  %7547 = vmatpush1.bf16.msra.mxu0 %v5080
  %7548 = vmatprep.subr.bf16.mxu0 %v5089
  %7549 = vmatpush1.bf16.msra.mxu0 %v5088
  %7550 = vmatprep.subr.bf16.mxu0 %v5097
  %7551 = vmatpush1.bf16.msra.mxu0 %v5096
  %7552 = vmatprep.subr.bf16.mxu0 %v5105
  %7553 = vmatpush1.bf16.msra.mxu0 %v5104
  %7554 = vmatprep.subr.bf16.mxu0 %v5113
  %7555 = vmatpush1.bf16.msra.mxu0 %v5112
  %7556 = vmatprep.subr.bf16.mxu0 %v5121
  %7557 = vmatpush1.bf16.msra.mxu0 %v5120
  %7558 = vmatprep.subr.bf16.mxu0 %v5129
  %7559 = vmatpush1.bf16.msra.mxu0 %v5128
  %7560 = vmatprep.subr.bf16.mxu0 %v5137
  %7561 = vmatpush1.bf16.msra.mxu0 %v5136
  %7562 = vmatprep.subr.bf16.mxu0 %v5145
  %7563 = vmatpush1.bf16.msra.mxu0 %v5144
  %7564 = vmatprep.subr.bf16.mxu0 %v5153
  %7565 = vmatpush1.bf16.msra.mxu0 %v5152
  %7566 = vmatprep.subr.bf16.mxu0 %v5161
  %7567 = vmatpush1.bf16.msra.mxu0 %v5160
  %7568 = vmatprep.subr.bf16.mxu0 %v5169
  %7569 = vmatpush1.bf16.msra.mxu0 %v5168
  %7570 = vmatprep.subr.bf16.mxu0 %v5177
  %7571 = vmatpush1.bf16.msra.mxu0 %v5176
  %7572 = vmatprep.subr.bf16.mxu0 %v5185
  %7573 = vmatpush1.bf16.msra.mxu0 %v5184
  %7574 = vmatprep.mubr.bf16.mxu0 %v5537
  %7575 = vmatmul.mubr.bf16.gmra.mrb[0].mxu0 %v5536
  %v7576 = vpop.f32.mrb[0].mxu0
  %v7577 = vadd.f32 0.0, %v7576
  %v7578 = vpop.f32.mrb[0].mxu0
  %v7579 = vadd.f32 0.0, %v7578
  %v7580 = vpop.f32.mrb[0].mxu0
  %v7581 = vpop.f32.mrb[0].mxu0
  %7582 = vdwg.mxu0
  %7583 = vmatprep.subr.bf16.mxu0 %v5067
  %7584 = vmatpush1.bf16.msra.mxu0 %v5066
  %7585 = vmatprep.subr.bf16.mxu0 %v5075
  %7586 = vmatpush1.bf16.msra.mxu0 %v5074
  %7587 = vmatprep.subr.bf16.mxu0 %v5083
  %7588 = vmatpush1.bf16.msra.mxu0 %v5082
  %7589 = vmatprep.subr.bf16.mxu0 %v5091
  %7590 = vmatpush1.bf16.msra.mxu0 %v5090
  %7591 = vmatprep.subr.bf16.mxu0 %v5099
  %7592 = vmatpush1.bf16.msra.mxu0 %v5098
  %7593 = vmatprep.subr.bf16.mxu0 %v5107
  %7594 = vmatpush1.bf16.msra.mxu0 %v5106
  %7595 = vmatprep.subr.bf16.mxu0 %v5115
  %7596 = vmatpush1.bf16.msra.mxu0 %v5114
  %7597 = vmatprep.subr.bf16.mxu0 %v5123
  %7598 = vmatpush1.bf16.msra.mxu0 %v5122
  %7599 = vmatprep.subr.bf16.mxu0 %v5131
  %7600 = vmatpush1.bf16.msra.mxu0 %v5130
  %7601 = vmatprep.subr.bf16.mxu0 %v5139
  %7602 = vmatpush1.bf16.msra.mxu0 %v5138
  %7603 = vmatprep.subr.bf16.mxu0 %v5147
  %7604 = vmatpush1.bf16.msra.mxu0 %v5146
  %7605 = vmatprep.subr.bf16.mxu0 %v5155
  %7606 = vmatpush1.bf16.msra.mxu0 %v5154
  %7607 = vmatprep.subr.bf16.mxu0 %v5163
  %7608 = vmatpush1.bf16.msra.mxu0 %v5162
  %7609 = vmatprep.subr.bf16.mxu0 %v5171
  %7610 = vmatpush1.bf16.msra.mxu0 %v5170
  %7611 = vmatprep.subr.bf16.mxu0 %v5179
  %7612 = vmatpush1.bf16.msra.mxu0 %v5178
  %7613 = vmatprep.subr.bf16.mxu0 %v5187
  %7614 = vmatpush1.bf16.msra.mxu0 %v5186
  %7615 = vmatprep.mubr.bf16.mxu0 %v5537
  %7616 = vmatmul.mubr.bf16.gmra.mrb[0].mxu0 %v5536
  %v7617 = vpop.f32.mrb[0].mxu0
  %v7618 = vadd.f32 0.0, %v7617
  %v7619 = vpop.f32.mrb[0].mxu0
  %v7620 = vadd.f32 0.0, %v7619
  %v7621 = vpop.f32.mrb[0].mxu0
  %v7622 = vpop.f32.mrb[0].mxu0
  %7623 = vdwg.mxu0
  %v7624 = vadd.f32 %v7452, %v7495
  %v7625 = vadd.f32 %v7453, %v7497
  %v7626 = vadd.f32 %v7454, %v7536
  %v7627 = vadd.f32 %v7455, %v7538
  %v7628 = vadd.f32 %v7456, %v7577
  %v7629 = vadd.f32 %v7457, %v7579
  %v7630 = vadd.f32 %v7458, %v7618
  %v7631 = vadd.f32 %v7459, %v7620
  %v7632 = vxor.u32 %v7624, 2147483648
  %v7633 = vxor.u32 %v7625, 2147483648
  %v7634 = vxor.u32 %v7626, 2147483648
  %v7635 = vxor.u32 %v7627, 2147483648
  %v7636 = vxor.u32 %v7628, 2147483648
  %v7637 = vxor.u32 %v7629, 2147483648
  %v7638 = vmul.f32 %v7632, 1.442695
  %v7639 = vpow.pop %v7638
  %v7640 = vmul.f32 %v7633, 1.442695
  %v7641 = vpow.pop %v7640
  %v7642 = vmul.f32 %v7634, 1.442695
  %v7643 = vpow.pop %v7642
  %v7644 = vmul.f32 %v7635, 1.442695
  %v7645 = vpow.pop %v7644
  %v7646 = vmul.f32 %v7636, 1.442695
  %v7647 = vpow.pop %v7646
  %v7648 = vmul.f32 %v7637, 1.442695
  %v7649 = vpow.pop %v7648
  %v7650 = vadd.f32 %v7639, 1.0
  %v7651 = vadd.f32 %v7641, 1.0
  %v7652 = vadd.f32 %v7643, 1.0
  %v7653 = vadd.f32 %v7645, 1.0
  %v7654 = vadd.f32 %v7647, 1.0
  %v7655 = vadd.f32 %v7649, 1.0
  %v7656 = vrcp.pop %v7650
  %v7657 = vmul.f32 1.0, %v7656
  %v7658 = vrcp.pop %v7651
  %v7659 = vmul.f32 1.0, %v7658
  %v7660 = vrcp.pop %v7652
  %v7661 = vmul.f32 1.0, %v7660
  %v7662 = vrcp.pop %v7653
  %v7663 = vmul.f32 1.0, %v7662
  %v7664 = vrcp.pop %v7654
  %v7665 = vmul.f32 1.0, %v7664
  %v7666 = vrcp.pop %v7655
  %v7667 = vmul.f32 1.0, %v7666
  %v7668 = vtanh.pop %v7630
  %v7669 = vtanh.pop %v7631
  %v7670 = vmul.f32 %v7661, %v5530
  %v7671 = vmul.f32 %v7663, %v5531
  %v7672 = vmul.f32 %v7657, %v7668
  %v7673 = vmul.f32 %v7659, %v7669
  %v7674 = vadd.f32 %v7670, %v7672
  %v7675 = vadd.f32 %v7671, %v7673
  %v7676 = vtanh.pop %v7674
  %v7677 = vtanh.pop %v7675
  %v7678 = vmul.f32 %v7665, %v7676
  %v7679 = vmul.f32 %v7667, %v7677
  %v7680 = vpack.c.bf16 %v7678, %v7678
  %v7681 = vpack.c.bf16 %v7679, %v7679
  %v7682 = vpack.c.bf16 %v7450, %v7450
  %v7683 = vpack.c.bf16 %v7451, %v7451
  %7684 = vmatprep.subr.bf16.mxu0 %v6565
  %7685 = vmatpush1.bf16.msra.mxu0 %v6564
  %7686 = vmatprep.subr.bf16.mxu0 %v6573
  %7687 = vmatpush1.bf16.msra.mxu0 %v6572
  %7688 = vmatprep.subr.bf16.mxu0 %v6581
  %7689 = vmatpush1.bf16.msra.mxu0 %v6580
  %7690 = vmatprep.subr.bf16.mxu0 %v6589
  %7691 = vmatpush1.bf16.msra.mxu0 %v6588
  %7692 = vmatprep.subr.bf16.mxu0 %v6597
  %7693 = vmatpush1.bf16.msra.mxu0 %v6596
  %7694 = vmatprep.subr.bf16.mxu0 %v6605
  %7695 = vmatpush1.bf16.msra.mxu0 %v6604
  %7696 = vmatprep.subr.bf16.mxu0 %v6613
  %7697 = vmatpush1.bf16.msra.mxu0 %v6612
  %7698 = vmatprep.subr.bf16.mxu0 %v6621
  %7699 = vmatpush1.bf16.msra.mxu0 %v6620
  %7700 = vmatprep.subr.bf16.mxu0 %v6629
  %7701 = vmatpush1.bf16.msra.mxu0 %v6628
  %7702 = vmatprep.subr.bf16.mxu0 %v6637
  %7703 = vmatpush1.bf16.msra.mxu0 %v6636
  %7704 = vmatprep.subr.bf16.mxu0 %v6645
  %7705 = vmatpush1.bf16.msra.mxu0 %v6644
  %7706 = vmatprep.subr.bf16.mxu0 %v6653
  %7707 = vmatpush1.bf16.msra.mxu0 %v6652
  %7708 = vmatprep.subr.bf16.mxu0 %v6661
  %7709 = vmatpush1.bf16.msra.mxu0 %v6660
  %7710 = vmatprep.subr.bf16.mxu0 %v6669
  %7711 = vmatpush1.bf16.msra.mxu0 %v6668
  %7712 = vmatprep.subr.bf16.mxu0 %v6677
  %7713 = vmatpush1.bf16.msra.mxu0 %v6676
  %7714 = vmatprep.subr.bf16.mxu0 %v6685
  %7715 = vmatpush1.bf16.msra.mxu0 %v6684
  %7716 = vmatprep.mubr.bf16.mxu0 %v7681
  %7717 = vmatmul.mubr.bf16.gmra.mrb[0].mxu0 %v7680
  %v7718 = vpop.f32.mrb[0].mxu0
  %v7719 = vadd.f32 %v3465, %v7718
  %v7720 = vpop.f32.mrb[0].mxu0
  %v7721 = vadd.f32 %v3469, %v7720
  %v7722 = vpop.f32.mrb[0].mxu0
  %v7723 = vpop.f32.mrb[0].mxu0
  %7724 = vdwg.mxu0
  %7725 = vmatprep.subr.bf16.mxu0 %v6693
  %7726 = vmatpush1.bf16.msra.mxu0 %v6692
  %7727 = vmatprep.subr.bf16.mxu0 %v6701
  %7728 = vmatpush1.bf16.msra.mxu0 %v6700
  %7729 = vmatprep.subr.bf16.mxu0 %v6709
  %7730 = vmatpush1.bf16.msra.mxu0 %v6708
  %7731 = vmatprep.subr.bf16.mxu0 %v6717
  %7732 = vmatpush1.bf16.msra.mxu0 %v6716
  %7733 = vmatprep.subr.bf16.mxu0 %v6725
  %7734 = vmatpush1.bf16.msra.mxu0 %v6724
  %7735 = vmatprep.subr.bf16.mxu0 %v6733
  %7736 = vmatpush1.bf16.msra.mxu0 %v6732
  %7737 = vmatprep.subr.bf16.mxu0 %v6741
  %7738 = vmatpush1.bf16.msra.mxu0 %v6740
  %7739 = vmatprep.subr.bf16.mxu0 %v6749
  %7740 = vmatpush1.bf16.msra.mxu0 %v6748
  %7741 = vmatprep.subr.bf16.mxu0 %v6757
  %7742 = vmatpush1.bf16.msra.mxu0 %v6756
  %7743 = vmatprep.subr.bf16.mxu0 %v6765
  %7744 = vmatpush1.bf16.msra.mxu0 %v6764
  %7745 = vmatprep.subr.bf16.mxu0 %v6773
  %7746 = vmatpush1.bf16.msra.mxu0 %v6772
  %7747 = vmatprep.subr.bf16.mxu0 %v6781
  %7748 = vmatpush1.bf16.msra.mxu0 %v6780
  %7749 = vmatprep.subr.bf16.mxu0 %v6789
  %7750 = vmatpush1.bf16.msra.mxu0 %v6788
  %7751 = vmatprep.subr.bf16.mxu0 %v6797
  %7752 = vmatpush1.bf16.msra.mxu0 %v6796
  %7753 = vmatprep.subr.bf16.mxu0 %v6805
  %7754 = vmatpush1.bf16.msra.mxu0 %v6804
  %7755 = vmatprep.subr.bf16.mxu0 %v6813
  %7756 = vmatpush1.bf16.msra.mxu0 %v6812
  %7757 = vmatprep.mubr.bf16.mxu0 %v7683
  %7758 = vmatmul.mubr.bf16.gmra.mrb[0].mxu0 %v7682
  %v7759 = vpop.f32.mrb[0].mxu0
  %v7760 = vadd.f32 %v7719, %v7759
  %v7761 = vpop.f32.mrb[0].mxu0
  %v7762 = vadd.f32 %v7721, %v7761
  %v7763 = vpop.f32.mrb[0].mxu0
  %v7764 = vpop.f32.mrb[0].mxu0
  %7765 = vdwg.mxu0
  %7766 = vmatprep.subr.bf16.mxu0 %v6567
  %7767 = vmatpush1.bf16.msra.mxu0 %v6566
  %7768 = vmatprep.subr.bf16.mxu0 %v6575
  %7769 = vmatpush1.bf16.msra.mxu0 %v6574
  %7770 = vmatprep.subr.bf16.mxu0 %v6583
  %7771 = vmatpush1.bf16.msra.mxu0 %v6582
  %7772 = vmatprep.subr.bf16.mxu0 %v6591
  %7773 = vmatpush1.bf16.msra.mxu0 %v6590
  %7774 = vmatprep.subr.bf16.mxu0 %v6599
  %7775 = vmatpush1.bf16.msra.mxu0 %v6598
  %7776 = vmatprep.subr.bf16.mxu0 %v6607
  %7777 = vmatpush1.bf16.msra.mxu0 %v6606
  %7778 = vmatprep.subr.bf16.mxu0 %v6615
  %7779 = vmatpush1.bf16.msra.mxu0 %v6614
  %7780 = vmatprep.subr.bf16.mxu0 %v6623
  %7781 = vmatpush1.bf16.msra.mxu0 %v6622
  %7782 = vmatprep.subr.bf16.mxu0 %v6631
  %7783 = vmatpush1.bf16.msra.mxu0 %v6630
  %7784 = vmatprep.subr.bf16.mxu0 %v6639
  %7785 = vmatpush1.bf16.msra.mxu0 %v6638
  %7786 = vmatprep.subr.bf16.mxu0 %v6647
  %7787 = vmatpush1.bf16.msra.mxu0 %v6646
  %7788 = vmatprep.subr.bf16.mxu0 %v6655
  %7789 = vmatpush1.bf16.msra.mxu0 %v6654
  %7790 = vmatprep.subr.bf16.mxu0 %v6663
  %7791 = vmatpush1.bf16.msra.mxu0 %v6662
  %7792 = vmatprep.subr.bf16.mxu0 %v6671
  %7793 = vmatpush1.bf16.msra.mxu0 %v6670
  %7794 = vmatprep.subr.bf16.mxu0 %v6679
  %7795 = vmatpush1.bf16.msra.mxu0 %v6678
  %7796 = vmatprep.subr.bf16.mxu0 %v6687
  %7797 = vmatpush1.bf16.msra.mxu0 %v6686
  %7798 = vmatprep.mubr.bf16.mxu0 %v7681
  %7799 = vmatmul.mubr.bf16.gmra.mrb[0].mxu0 %v7680
  %v7800 = vpop.f32.mrb[0].mxu0
  %v7801 = vadd.f32 %v3473, %v7800
  %v7802 = vpop.f32.mrb[0].mxu0
  %v7803 = vadd.f32 %v3477, %v7802
  %v7804 = vpop.f32.mrb[0].mxu0
  %v7805 = vpop.f32.mrb[0].mxu0
  %7806 = vdwg.mxu0
  %7807 = vmatprep.subr.bf16.mxu0 %v6695
  %7808 = vmatpush1.bf16.msra.mxu0 %v6694
  %7809 = vmatprep.subr.bf16.mxu0 %v6703
  %7810 = vmatpush1.bf16.msra.mxu0 %v6702
  %7811 = vmatprep.subr.bf16.mxu0 %v6711
  %7812 = vmatpush1.bf16.msra.mxu0 %v6710
  %7813 = vmatprep.subr.bf16.mxu0 %v6719
  %7814 = vmatpush1.bf16.msra.mxu0 %v6718
  %7815 = vmatprep.subr.bf16.mxu0 %v6727
  %7816 = vmatpush1.bf16.msra.mxu0 %v6726
  %7817 = vmatprep.subr.bf16.mxu0 %v6735
  %7818 = vmatpush1.bf16.msra.mxu0 %v6734
  %7819 = vmatprep.subr.bf16.mxu0 %v6743
  %7820 = vmatpush1.bf16.msra.mxu0 %v6742
  %7821 = vmatprep.subr.bf16.mxu0 %v6751
  %7822 = vmatpush1.bf16.msra.mxu0 %v6750
  %7823 = vmatprep.subr.bf16.mxu0 %v6759
  %7824 = vmatpush1.bf16.msra.mxu0 %v6758
  %7825 = vmatprep.subr.bf16.mxu0 %v6767
  %7826 = vmatpush1.bf16.msra.mxu0 %v6766
  %7827 = vmatprep.subr.bf16.mxu0 %v6775
  %7828 = vmatpush1.bf16.msra.mxu0 %v6774
  %7829 = vmatprep.subr.bf16.mxu0 %v6783
  %7830 = vmatpush1.bf16.msra.mxu0 %v6782
  %7831 = vmatprep.subr.bf16.mxu0 %v6791
  %7832 = vmatpush1.bf16.msra.mxu0 %v6790
  %7833 = vmatprep.subr.bf16.mxu0 %v6799
  %7834 = vmatpush1.bf16.msra.mxu0 %v6798
  %7835 = vmatprep.subr.bf16.mxu0 %v6807
  %7836 = vmatpush1.bf16.msra.mxu0 %v6806
  %7837 = vmatprep.subr.bf16.mxu0 %v6815
  %7838 = vmatpush1.bf16.msra.mxu0 %v6814
  %7839 = vmatprep.mubr.bf16.mxu0 %v7683
  %7840 = vmatmul.mubr.bf16.gmra.mrb[0].mxu0 %v7682
  %v7841 = vpop.f32.mrb[0].mxu0
  %v7842 = vadd.f32 %v7801, %v7841
  %v7843 = vpop.f32.mrb[0].mxu0
  %v7844 = vadd.f32 %v7803, %v7843
  %v7845 = vpop.f32.mrb[0].mxu0
  %v7846 = vpop.f32.mrb[0].mxu0
  %7847 = vdwg.mxu0
  %7848 = vmatprep.subr.bf16.mxu0 %v6569
  %7849 = vmatpush1.bf16.msra.mxu0 %v6568
  %7850 = vmatprep.subr.bf16.mxu0 %v6577
  %7851 = vmatpush1.bf16.msra.mxu0 %v6576
  %7852 = vmatprep.subr.bf16.mxu0 %v6585
  %7853 = vmatpush1.bf16.msra.mxu0 %v6584
  %7854 = vmatprep.subr.bf16.mxu0 %v6593
  %7855 = vmatpush1.bf16.msra.mxu0 %v6592
  %7856 = vmatprep.subr.bf16.mxu0 %v6601
  %7857 = vmatpush1.bf16.msra.mxu0 %v6600
  %7858 = vmatprep.subr.bf16.mxu0 %v6609
  %7859 = vmatpush1.bf16.msra.mxu0 %v6608
  %7860 = vmatprep.subr.bf16.mxu0 %v6617
  %7861 = vmatpush1.bf16.msra.mxu0 %v6616
  %7862 = vmatprep.subr.bf16.mxu0 %v6625
  %7863 = vmatpush1.bf16.msra.mxu0 %v6624
  %7864 = vmatprep.subr.bf16.mxu0 %v6633
  %7865 = vmatpush1.bf16.msra.mxu0 %v6632
  %7866 = vmatprep.subr.bf16.mxu0 %v6641
  %7867 = vmatpush1.bf16.msra.mxu0 %v6640
  %7868 = vmatprep.subr.bf16.mxu0 %v6649
  %7869 = vmatpush1.bf16.msra.mxu0 %v6648
  %7870 = vmatprep.subr.bf16.mxu0 %v6657
  %7871 = vmatpush1.bf16.msra.mxu0 %v6656
  %7872 = vmatprep.subr.bf16.mxu0 %v6665
  %7873 = vmatpush1.bf16.msra.mxu0 %v6664
  %7874 = vmatprep.subr.bf16.mxu0 %v6673
  %7875 = vmatpush1.bf16.msra.mxu0 %v6672
  %7876 = vmatprep.subr.bf16.mxu0 %v6681
  %7877 = vmatpush1.bf16.msra.mxu0 %v6680
  %7878 = vmatprep.subr.bf16.mxu0 %v6689
  %7879 = vmatpush1.bf16.msra.mxu0 %v6688
  %7880 = vmatprep.mubr.bf16.mxu0 %v7681
  %7881 = vmatmul.mubr.bf16.gmra.mrb[0].mxu0 %v7680
  %v7882 = vpop.f32.mrb[0].mxu0
  %v7883 = vadd.f32 %v3481, %v7882
  %v7884 = vpop.f32.mrb[0].mxu0
  %v7885 = vadd.f32 %v3485, %v7884
  %v7886 = vpop.f32.mrb[0].mxu0
  %v7887 = vpop.f32.mrb[0].mxu0
  %7888 = vdwg.mxu0
  %7889 = vmatprep.subr.bf16.mxu0 %v6697
  %7890 = vmatpush1.bf16.msra.mxu0 %v6696
  %7891 = vmatprep.subr.bf16.mxu0 %v6705
  %7892 = vmatpush1.bf16.msra.mxu0 %v6704
  %7893 = vmatprep.subr.bf16.mxu0 %v6713
  %7894 = vmatpush1.bf16.msra.mxu0 %v6712
  %7895 = vmatprep.subr.bf16.mxu0 %v6721
  %7896 = vmatpush1.bf16.msra.mxu0 %v6720
  %7897 = vmatprep.subr.bf16.mxu0 %v6729
  %7898 = vmatpush1.bf16.msra.mxu0 %v6728
  %7899 = vmatprep.subr.bf16.mxu0 %v6737
  %7900 = vmatpush1.bf16.msra.mxu0 %v6736
  %7901 = vmatprep.subr.bf16.mxu0 %v6745
  %7902 = vmatpush1.bf16.msra.mxu0 %v6744
  %7903 = vmatprep.subr.bf16.mxu0 %v6753
  %7904 = vmatpush1.bf16.msra.mxu0 %v6752
  %7905 = vmatprep.subr.bf16.mxu0 %v6761
  %7906 = vmatpush1.bf16.msra.mxu0 %v6760
  %7907 = vmatprep.subr.bf16.mxu0 %v6769
  %7908 = vmatpush1.bf16.msra.mxu0 %v6768
  %7909 = vmatprep.subr.bf16.mxu0 %v6777
  %7910 = vmatpush1.bf16.msra.mxu0 %v6776
  %7911 = vmatprep.subr.bf16.mxu0 %v6785
  %7912 = vmatpush1.bf16.msra.mxu0 %v6784
  %7913 = vmatprep.subr.bf16.mxu0 %v6793
  %7914 = vmatpush1.bf16.msra.mxu0 %v6792
  %7915 = vmatprep.subr.bf16.mxu0 %v6801
  %7916 = vmatpush1.bf16.msra.mxu0 %v6800
  %7917 = vmatprep.subr.bf16.mxu0 %v6809
  %7918 = vmatpush1.bf16.msra.mxu0 %v6808
  %7919 = vmatprep.subr.bf16.mxu0 %v6817
  %7920 = vmatpush1.bf16.msra.mxu0 %v6816
  %7921 = vmatprep.mubr.bf16.mxu0 %v7683
  %7922 = vmatmul.mubr.bf16.gmra.mrb[0].mxu0 %v7682
  %v7923 = vpop.f32.mrb[0].mxu0
  %v7924 = vadd.f32 %v7883, %v7923
  %v7925 = vpop.f32.mrb[0].mxu0
  %v7926 = vadd.f32 %v7885, %v7925
  %v7927 = vpop.f32.mrb[0].mxu0
  %v7928 = vpop.f32.mrb[0].mxu0
  %7929 = vdwg.mxu0
  %7930 = vmatprep.subr.bf16.mxu0 %v6571
  %7931 = vmatpush1.bf16.msra.mxu0 %v6570
  %7932 = vmatprep.subr.bf16.mxu0 %v6579
  %7933 = vmatpush1.bf16.msra.mxu0 %v6578
  %7934 = vmatprep.subr.bf16.mxu0 %v6587
  %7935 = vmatpush1.bf16.msra.mxu0 %v6586
  %7936 = vmatprep.subr.bf16.mxu0 %v6595
  %7937 = vmatpush1.bf16.msra.mxu0 %v6594
  %7938 = vmatprep.subr.bf16.mxu0 %v6603
  %7939 = vmatpush1.bf16.msra.mxu0 %v6602
  %7940 = vmatprep.subr.bf16.mxu0 %v6611
  %7941 = vmatpush1.bf16.msra.mxu0 %v6610
  %7942 = vmatprep.subr.bf16.mxu0 %v6619
  %7943 = vmatpush1.bf16.msra.mxu0 %v6618
  %7944 = vmatprep.subr.bf16.mxu0 %v6627
  %7945 = vmatpush1.bf16.msra.mxu0 %v6626
  %7946 = vmatprep.subr.bf16.mxu0 %v6635
  %7947 = vmatpush1.bf16.msra.mxu0 %v6634
  %7948 = vmatprep.subr.bf16.mxu0 %v6643
  %7949 = vmatpush1.bf16.msra.mxu0 %v6642
  %7950 = vmatprep.subr.bf16.mxu0 %v6651
  %7951 = vmatpush1.bf16.msra.mxu0 %v6650
  %7952 = vmatprep.subr.bf16.mxu0 %v6659
  %7953 = vmatpush1.bf16.msra.mxu0 %v6658
  %7954 = vmatprep.subr.bf16.mxu0 %v6667
  %7955 = vmatpush1.bf16.msra.mxu0 %v6666
  %7956 = vmatprep.subr.bf16.mxu0 %v6675
  %7957 = vmatpush1.bf16.msra.mxu0 %v6674
  %7958 = vmatprep.subr.bf16.mxu0 %v6683
  %7959 = vmatpush1.bf16.msra.mxu0 %v6682
  %7960 = vmatprep.subr.bf16.mxu0 %v6691
  %7961 = vmatpush1.bf16.msra.mxu0 %v6690
  %7962 = vmatprep.mubr.bf16.mxu0 %v7681
  %7963 = vmatmul.mubr.bf16.gmra.mrb[0].mxu0 %v7680
  %v7964 = vpop.f32.mrb[0].mxu0
  %v7965 = vadd.f32 %v3489, %v7964
  %v7966 = vpop.f32.mrb[0].mxu0
  %v7967 = vadd.f32 %v3493, %v7966
  %v7968 = vpop.f32.mrb[0].mxu0
  %v7969 = vpop.f32.mrb[0].mxu0
  %7970 = vdwg.mxu0
  %7971 = vmatprep.subr.bf16.mxu0 %v6699
  %7972 = vmatpush1.bf16.msra.mxu0 %v6698
  %7973 = vmatprep.subr.bf16.mxu0 %v6707
  %7974 = vmatpush1.bf16.msra.mxu0 %v6706
  %7975 = vmatprep.subr.bf16.mxu0 %v6715
  %7976 = vmatpush1.bf16.msra.mxu0 %v6714
  %7977 = vmatprep.subr.bf16.mxu0 %v6723
  %7978 = vmatpush1.bf16.msra.mxu0 %v6722
  %7979 = vmatprep.subr.bf16.mxu0 %v6731
  %7980 = vmatpush1.bf16.msra.mxu0 %v6730
  %7981 = vmatprep.subr.bf16.mxu0 %v6739
  %7982 = vmatpush1.bf16.msra.mxu0 %v6738
  %7983 = vmatprep.subr.bf16.mxu0 %v6747
  %7984 = vmatpush1.bf16.msra.mxu0 %v6746
  %7985 = vmatprep.subr.bf16.mxu0 %v6755
  %7986 = vmatpush1.bf16.msra.mxu0 %v6754
  %7987 = vmatprep.subr.bf16.mxu0 %v6763
  %7988 = vmatpush1.bf16.msra.mxu0 %v6762
  %7989 = vmatprep.subr.bf16.mxu0 %v6771
  %7990 = vmatpush1.bf16.msra.mxu0 %v6770
  %7991 = vmatprep.subr.bf16.mxu0 %v6779
  %7992 = vmatpush1.bf16.msra.mxu0 %v6778
  %7993 = vmatprep.subr.bf16.mxu0 %v6787
  %7994 = vmatpush1.bf16.msra.mxu0 %v6786
  %7995 = vmatprep.subr.bf16.mxu0 %v6795
  %7996 = vmatpush1.bf16.msra.mxu0 %v6794
  %7997 = vmatprep.subr.bf16.mxu0 %v6803
  %7998 = vmatpush1.bf16.msra.mxu0 %v6802
  %7999 = vmatprep.subr.bf16.mxu0 %v6811
  %8000 = vmatpush1.bf16.msra.mxu0 %v6810
  %8001 = vmatprep.subr.bf16.mxu0 %v6819
  %8002 = vmatpush1.bf16.msra.mxu0 %v6818
  %8003 = vmatprep.mubr.bf16.mxu0 %v7683
  %8004 = vmatmul.mubr.bf16.gmra.mrb[0].mxu0 %v7682
  %v8005 = vpop.f32.mrb[0].mxu0
  %v8006 = vadd.f32 %v7965, %v8005
  %v8007 = vpop.f32.mrb[0].mxu0
  %v8008 = vadd.f32 %v7967, %v8007
  %v8009 = vpop.f32.mrb[0].mxu0
  %v8010 = vpop.f32.mrb[0].mxu0
  %8011 = vdwg.mxu0
  %v8012 = vxor.u32 %v7760, 2147483648
  %v8013 = vxor.u32 %v7762, 2147483648
  %v8014 = vxor.u32 %v7842, 2147483648
  %v8015 = vxor.u32 %v7844, 2147483648
  %v8016 = vxor.u32 %v7924, 2147483648
  %v8017 = vxor.u32 %v7926, 2147483648
  %v8018 = vmul.f32 %v8012, 1.442695
  %v8019 = vpow.pop %v8018
  %v8020 = vmul.f32 %v8013, 1.442695
  %v8021 = vpow.pop %v8020
  %v8022 = vmul.f32 %v8014, 1.442695
  %v8023 = vpow.pop %v8022
  %v8024 = vmul.f32 %v8015, 1.442695
  %v8025 = vpow.pop %v8024
  %v8026 = vmul.f32 %v8016, 1.442695
  %v8027 = vpow.pop %v8026
  %v8028 = vmul.f32 %v8017, 1.442695
  %v8029 = vpow.pop %v8028
  %v8030 = vadd.f32 %v8019, 1.0
  %v8031 = vadd.f32 %v8021, 1.0
  %v8032 = vadd.f32 %v8023, 1.0
  %v8033 = vadd.f32 %v8025, 1.0
  %v8034 = vadd.f32 %v8027, 1.0
  %v8035 = vadd.f32 %v8029, 1.0
  %v8036 = vrcp.pop %v8030
  %v8037 = vmul.f32 1.0, %v8036
  %v8038 = vrcp.pop %v8031
  %v8039 = vmul.f32 1.0, %v8038
  %v8040 = vrcp.pop %v8032
  %v8041 = vmul.f32 1.0, %v8040
  %v8042 = vrcp.pop %v8033
  %v8043 = vmul.f32 1.0, %v8042
  %v8044 = vrcp.pop %v8034
  %v8045 = vmul.f32 1.0, %v8044
  %v8046 = vrcp.pop %v8035
  %v8047 = vmul.f32 1.0, %v8046
  %v8048 = vtanh.pop %v8006
  %v8049 = vtanh.pop %v8008
  %v8050 = vmul.f32 %v8041, %v7446
  %v8051 = vmul.f32 %v8043, %v7447
  %v8052 = vmul.f32 %v8037, %v8048
  %v8053 = vmul.f32 %v8039, %v8049
  %v8054 = vadd.f32 %v8050, %v8052
  %v8055 = vadd.f32 %v8051, %v8053
  %v8056 = vtanh.pop %v8054
  %v8057 = vtanh.pop %v8055
  %v8058 = vmul.f32 %v8045, %v8056
  %v8059 = vmul.f32 %v8047, %v8057
  %v8060 = vld [vmem:[#allocation2 + $0xc0] sm:$0xff]
  %v8061 = vld [vmem:[#allocation2 + $0xc8] sm:$0xff]
  %v8062 = vld [vmem:[#allocation2 + $0xd0] sm:$0xff]
  %v8063 = vld [vmem:[#allocation2 + $0xd8] sm:$0xff]
  %v8064 = vld [vmem:[#allocation2 + $0xe0] sm:$0xff]
  %v8065 = vld [vmem:[#allocation2 + $0xe8] sm:$0xff]
  %v8066 = vld [vmem:[#allocation2 + $0xf0] sm:$0xff]
  %v8067 = vld [vmem:[#allocation2 + $0xf8] sm:$0xff]
  %8068 = vmatprep.subr.bf16.mxu0 %v5061
  %8069 = vmatpush1.bf16.msra.mxu0 %v5060
  %8070 = vmatprep.subr.bf16.mxu0 %v5069
  %8071 = vmatpush1.bf16.msra.mxu0 %v5068
  %8072 = vmatprep.subr.bf16.mxu0 %v5077
  %8073 = vmatpush1.bf16.msra.mxu0 %v5076
  %8074 = vmatprep.subr.bf16.mxu0 %v5085
  %8075 = vmatpush1.bf16.msra.mxu0 %v5084
  %8076 = vmatprep.subr.bf16.mxu0 %v5093
  %8077 = vmatpush1.bf16.msra.mxu0 %v5092
  %8078 = vmatprep.subr.bf16.mxu0 %v5101
  %8079 = vmatpush1.bf16.msra.mxu0 %v5100
  %8080 = vmatprep.subr.bf16.mxu0 %v5109
  %8081 = vmatpush1.bf16.msra.mxu0 %v5108
  %8082 = vmatprep.subr.bf16.mxu0 %v5117
  %8083 = vmatpush1.bf16.msra.mxu0 %v5116
  %8084 = vmatprep.subr.bf16.mxu0 %v5125
  %8085 = vmatpush1.bf16.msra.mxu0 %v5124
  %8086 = vmatprep.subr.bf16.mxu0 %v5133
  %8087 = vmatpush1.bf16.msra.mxu0 %v5132
  %8088 = vmatprep.subr.bf16.mxu0 %v5141
  %8089 = vmatpush1.bf16.msra.mxu0 %v5140
  %8090 = vmatprep.subr.bf16.mxu0 %v5149
  %8091 = vmatpush1.bf16.msra.mxu0 %v5148
  %8092 = vmatprep.subr.bf16.mxu0 %v5157
  %8093 = vmatpush1.bf16.msra.mxu0 %v5156
  %8094 = vmatprep.subr.bf16.mxu0 %v5165
  %8095 = vmatpush1.bf16.msra.mxu0 %v5164
  %8096 = vmatprep.subr.bf16.mxu0 %v5173
  %8097 = vmatpush1.bf16.msra.mxu0 %v5172
  %8098 = vmatprep.subr.bf16.mxu0 %v5181
  %8099 = vmatpush1.bf16.msra.mxu0 %v5180
  %8100 = vmatprep.mubr.bf16.mxu0 %v7681
  %8101 = vmatmul.mubr.bf16.gmra.mrb[0].mxu0 %v7680
  %v8102 = vpop.f32.mrb[0].mxu0
  %v8103 = vadd.f32 0.0, %v8102
  %v8104 = vpop.f32.mrb[0].mxu0
  %v8105 = vadd.f32 0.0, %v8104
  %v8106 = vpop.f32.mrb[0].mxu0
  %v8107 = vpop.f32.mrb[0].mxu0
  %8108 = vdwg.mxu0
  %8109 = vmatprep.subr.bf16.mxu0 %v5063
  %8110 = vmatpush1.bf16.msra.mxu0 %v5062
  %8111 = vmatprep.subr.bf16.mxu0 %v5071
  %8112 = vmatpush1.bf16.msra.mxu0 %v5070
  %8113 = vmatprep.subr.bf16.mxu0 %v5079
  %8114 = vmatpush1.bf16.msra.mxu0 %v5078
  %8115 = vmatprep.subr.bf16.mxu0 %v5087
  %8116 = vmatpush1.bf16.msra.mxu0 %v5086
  %8117 = vmatprep.subr.bf16.mxu0 %v5095
  %8118 = vmatpush1.bf16.msra.mxu0 %v5094
  %8119 = vmatprep.subr.bf16.mxu0 %v5103
  %8120 = vmatpush1.bf16.msra.mxu0 %v5102
  %8121 = vmatprep.subr.bf16.mxu0 %v5111
  %8122 = vmatpush1.bf16.msra.mxu0 %v5110
  %8123 = vmatprep.subr.bf16.mxu0 %v5119
  %8124 = vmatpush1.bf16.msra.mxu0 %v5118
  %8125 = vmatprep.subr.bf16.mxu0 %v5127
  %8126 = vmatpush1.bf16.msra.mxu0 %v5126
  %8127 = vmatprep.subr.bf16.mxu0 %v5135
  %8128 = vmatpush1.bf16.msra.mxu0 %v5134
  %8129 = vmatprep.subr.bf16.mxu0 %v5143
  %8130 = vmatpush1.bf16.msra.mxu0 %v5142
  %8131 = vmatprep.subr.bf16.mxu0 %v5151
  %8132 = vmatpush1.bf16.msra.mxu0 %v5150
  %8133 = vmatprep.subr.bf16.mxu0 %v5159
  %8134 = vmatpush1.bf16.msra.mxu0 %v5158
  %8135 = vmatprep.subr.bf16.mxu0 %v5167
  %8136 = vmatpush1.bf16.msra.mxu0 %v5166
  %8137 = vmatprep.subr.bf16.mxu0 %v5175
  %8138 = vmatpush1.bf16.msra.mxu0 %v5174
  %8139 = vmatprep.subr.bf16.mxu0 %v5183
  %8140 = vmatpush1.bf16.msra.mxu0 %v5182
  %8141 = vmatprep.mubr.bf16.mxu0 %v7681
  %8142 = vmatmul.mubr.bf16.gmra.mrb[0].mxu0 %v7680
  %v8143 = vpop.f32.mrb[0].mxu0
  %v8144 = vadd.f32 0.0, %v8143
  %v8145 = vpop.f32.mrb[0].mxu0
  %v8146 = vadd.f32 0.0, %v8145
  %v8147 = vpop.f32.mrb[0].mxu0
  %v8148 = vpop.f32.mrb[0].mxu0
  %8149 = vdwg.mxu0
  %8150 = vmatprep.subr.bf16.mxu0 %v5065
  %8151 = vmatpush1.bf16.msra.mxu0 %v5064
  %8152 = vmatprep.subr.bf16.mxu0 %v5073
  %8153 = vmatpush1.bf16.msra.mxu0 %v5072
  %8154 = vmatprep.subr.bf16.mxu0 %v5081
  %8155 = vmatpush1.bf16.msra.mxu0 %v5080
  %8156 = vmatprep.subr.bf16.mxu0 %v5089
  %8157 = vmatpush1.bf16.msra.mxu0 %v5088
  %8158 = vmatprep.subr.bf16.mxu0 %v5097
  %8159 = vmatpush1.bf16.msra.mxu0 %v5096
  %8160 = vmatprep.subr.bf16.mxu0 %v5105
  %8161 = vmatpush1.bf16.msra.mxu0 %v5104
  %8162 = vmatprep.subr.bf16.mxu0 %v5113
  %8163 = vmatpush1.bf16.msra.mxu0 %v5112
  %8164 = vmatprep.subr.bf16.mxu0 %v5121
  %8165 = vmatpush1.bf16.msra.mxu0 %v5120
  %8166 = vmatprep.subr.bf16.mxu0 %v5129
  %8167 = vmatpush1.bf16.msra.mxu0 %v5128
  %8168 = vmatprep.subr.bf16.mxu0 %v5137
  %8169 = vmatpush1.bf16.msra.mxu0 %v5136
  %8170 = vmatprep.subr.bf16.mxu0 %v5145
  %8171 = vmatpush1.bf16.msra.mxu0 %v5144
  %8172 = vmatprep.subr.bf16.mxu0 %v5153
  %8173 = vmatpush1.bf16.msra.mxu0 %v5152
  %8174 = vmatprep.subr.bf16.mxu0 %v5161
  %8175 = vmatpush1.bf16.msra.mxu0 %v5160
  %8176 = vmatprep.subr.bf16.mxu0 %v5169
  %8177 = vmatpush1.bf16.msra.mxu0 %v5168
  %8178 = vmatprep.subr.bf16.mxu0 %v5177
  %8179 = vmatpush1.bf16.msra.mxu0 %v5176
  %8180 = vmatprep.subr.bf16.mxu0 %v5185
  %8181 = vmatpush1.bf16.msra.mxu0 %v5184
  %8182 = vmatprep.mubr.bf16.mxu0 %v7681
  %8183 = vmatmul.mubr.bf16.gmra.mrb[0].mxu0 %v7680
  %v8184 = vpop.f32.mrb[0].mxu0
  %v8185 = vadd.f32 0.0, %v8184
  %v8186 = vpop.f32.mrb[0].mxu0
  %v8187 = vadd.f32 0.0, %v8186
  %v8188 = vpop.f32.mrb[0].mxu0
  %v8189 = vpop.f32.mrb[0].mxu0
  %8190 = vdwg.mxu0
  %8191 = vmatprep.subr.bf16.mxu0 %v5067
  %8192 = vmatpush1.bf16.msra.mxu0 %v5066
  %8193 = vmatprep.subr.bf16.mxu0 %v5075
  %8194 = vmatpush1.bf16.msra.mxu0 %v5074
  %8195 = vmatprep.subr.bf16.mxu0 %v5083
  %8196 = vmatpush1.bf16.msra.mxu0 %v5082
  %8197 = vmatprep.subr.bf16.mxu0 %v5091
  %8198 = vmatpush1.bf16.msra.mxu0 %v5090
  %8199 = vmatprep.subr.bf16.mxu0 %v5099
  %8200 = vmatpush1.bf16.msra.mxu0 %v5098
  %8201 = vmatprep.subr.bf16.mxu0 %v5107
  %8202 = vmatpush1.bf16.msra.mxu0 %v5106
  %8203 = vmatprep.subr.bf16.mxu0 %v5115
  %8204 = vmatpush1.bf16.msra.mxu0 %v5114
  %8205 = vmatprep.subr.bf16.mxu0 %v5123
  %8206 = vmatpush1.bf16.msra.mxu0 %v5122
  %8207 = vmatprep.subr.bf16.mxu0 %v5131
  %8208 = vmatpush1.bf16.msra.mxu0 %v5130
  %8209 = vmatprep.subr.bf16.mxu0 %v5139
  %8210 = vmatpush1.bf16.msra.mxu0 %v5138
  %8211 = vmatprep.subr.bf16.mxu0 %v5147
  %8212 = vmatpush1.bf16.msra.mxu0 %v5146
  %8213 = vmatprep.subr.bf16.mxu0 %v5155
  %8214 = vmatpush1.bf16.msra.mxu0 %v5154
  %8215 = vmatprep.subr.bf16.mxu0 %v5163
  %8216 = vmatpush1.bf16.msra.mxu0 %v5162
  %8217 = vmatprep.subr.bf16.mxu0 %v5171
  %8218 = vmatpush1.bf16.msra.mxu0 %v5170
  %8219 = vmatprep.subr.bf16.mxu0 %v5179
  %8220 = vmatpush1.bf16.msra.mxu0 %v5178
  %8221 = vmatprep.subr.bf16.mxu0 %v5187
  %8222 = vmatpush1.bf16.msra.mxu0 %v5186
  %8223 = vmatprep.mubr.bf16.mxu0 %v7681
  %8224 = vmatmul.mubr.bf16.gmra.mrb[0].mxu0 %v7680
  %v8225 = vpop.f32.mrb[0].mxu0
  %v8226 = vadd.f32 0.0, %v8225
  %v8227 = vpop.f32.mrb[0].mxu0
  %v8228 = vadd.f32 0.0, %v8227
  %v8229 = vpop.f32.mrb[0].mxu0
  %v8230 = vpop.f32.mrb[0].mxu0
  %8231 = vdwg.mxu0
  %v8232 = vadd.f32 %v8060, %v8103
  %v8233 = vadd.f32 %v8061, %v8105
  %v8234 = vadd.f32 %v8062, %v8144
  %v8235 = vadd.f32 %v8063, %v8146
  %v8236 = vadd.f32 %v8064, %v8185
  %v8237 = vadd.f32 %v8065, %v8187
  %v8238 = vadd.f32 %v8066, %v8226
  %v8239 = vadd.f32 %v8067, %v8228
  %v8240 = vxor.u32 %v8232, 2147483648
  %v8241 = vxor.u32 %v8233, 2147483648
  %v8242 = vxor.u32 %v8234, 2147483648
  %v8243 = vxor.u32 %v8235, 2147483648
  %v8244 = vxor.u32 %v8236, 2147483648
  %v8245 = vxor.u32 %v8237, 2147483648
  %v8246 = vmul.f32 %v8240, 1.442695
  %v8247 = vpow.pop %v8246
  %v8248 = vmul.f32 %v8241, 1.442695
  %v8249 = vpow.pop %v8248
  %v8250 = vmul.f32 %v8242, 1.442695
  %v8251 = vpow.pop %v8250
  %v8252 = vmul.f32 %v8243, 1.442695
  %v8253 = vpow.pop %v8252
  %v8254 = vmul.f32 %v8244, 1.442695
  %v8255 = vpow.pop %v8254
  %v8256 = vmul.f32 %v8245, 1.442695
  %v8257 = vpow.pop %v8256
  %v8258 = vadd.f32 %v8247, 1.0
  %v8259 = vadd.f32 %v8249, 1.0
  %v8260 = vadd.f32 %v8251, 1.0
  %v8261 = vadd.f32 %v8253, 1.0
  %v8262 = vadd.f32 %v8255, 1.0
  %v8263 = vadd.f32 %v8257, 1.0
  %v8264 = vrcp.pop %v8258
  %v8265 = vmul.f32 1.0, %v8264
  %v8266 = vrcp.pop %v8259
  %v8267 = vmul.f32 1.0, %v8266
  %v8268 = vrcp.pop %v8260
  %v8269 = vmul.f32 1.0, %v8268
  %v8270 = vrcp.pop %v8261
  %v8271 = vmul.f32 1.0, %v8270
  %v8272 = vrcp.pop %v8262
  %v8273 = vmul.f32 1.0, %v8272
  %v8274 = vrcp.pop %v8263
  %v8275 = vmul.f32 1.0, %v8274
  %v8276 = vtanh.pop %v8238
  %v8277 = vtanh.pop %v8239
  %v8278 = vmul.f32 %v8269, %v7674
  %v8279 = vmul.f32 %v8271, %v7675
  %v8280 = vmul.f32 %v8265, %v8276
  %v8281 = vmul.f32 %v8267, %v8277
  %v8282 = vadd.f32 %v8278, %v8280
  %v8283 = vadd.f32 %v8279, %v8281
  %v8284 = vtanh.pop %v8282
  %v8285 = vtanh.pop %v8283
  %v8286 = vmul.f32 %v8273, %v8284
  %v8287 = vmul.f32 %v8275, %v8285
  %v8288 = vpack.c.bf16 %v8286, %v8286
  %v8289 = vpack.c.bf16 %v8287, %v8287
  %v8290 = vpack.c.bf16 %v8058, %v8058
  %v8291 = vpack.c.bf16 %v8059, %v8059
  %8292 = vmatprep.subr.bf16.mxu0 %v6565
  %8293 = vmatpush1.bf16.msra.mxu0 %v6564
  %8294 = vmatprep.subr.bf16.mxu0 %v6573
  %8295 = vmatpush1.bf16.msra.mxu0 %v6572
  %8296 = vmatprep.subr.bf16.mxu0 %v6581
  %8297 = vmatpush1.bf16.msra.mxu0 %v6580
  %8298 = vmatprep.subr.bf16.mxu0 %v6589
  %8299 = vmatpush1.bf16.msra.mxu0 %v6588
  %8300 = vmatprep.subr.bf16.mxu0 %v6597
  %8301 = vmatpush1.bf16.msra.mxu0 %v6596
  %8302 = vmatprep.subr.bf16.mxu0 %v6605
  %8303 = vmatpush1.bf16.msra.mxu0 %v6604
  %8304 = vmatprep.subr.bf16.mxu0 %v6613
  %8305 = vmatpush1.bf16.msra.mxu0 %v6612
  %8306 = vmatprep.subr.bf16.mxu0 %v6621
  %8307 = vmatpush1.bf16.msra.mxu0 %v6620
  %8308 = vmatprep.subr.bf16.mxu0 %v6629
  %8309 = vmatpush1.bf16.msra.mxu0 %v6628
  %8310 = vmatprep.subr.bf16.mxu0 %v6637
  %8311 = vmatpush1.bf16.msra.mxu0 %v6636
  %8312 = vmatprep.subr.bf16.mxu0 %v6645
  %8313 = vmatpush1.bf16.msra.mxu0 %v6644
  %8314 = vmatprep.subr.bf16.mxu0 %v6653
  %8315 = vmatpush1.bf16.msra.mxu0 %v6652
  %8316 = vmatprep.subr.bf16.mxu0 %v6661
  %8317 = vmatpush1.bf16.msra.mxu0 %v6660
  %8318 = vmatprep.subr.bf16.mxu0 %v6669
  %8319 = vmatpush1.bf16.msra.mxu0 %v6668
  %8320 = vmatprep.subr.bf16.mxu0 %v6677
  %8321 = vmatpush1.bf16.msra.mxu0 %v6676
  %8322 = vmatprep.subr.bf16.mxu0 %v6685
  %8323 = vmatpush1.bf16.msra.mxu0 %v6684
  %8324 = vmatprep.mubr.bf16.mxu0 %v8289
  %8325 = vmatmul.mubr.bf16.gmra.mrb[0].mxu0 %v8288
  %v8326 = vpop.f32.mrb[0].mxu0
  %v8327 = vadd.f32 %v3465, %v8326
  %v8328 = vpop.f32.mrb[0].mxu0
  %v8329 = vadd.f32 %v3469, %v8328
  %v8330 = vpop.f32.mrb[0].mxu0
  %v8331 = vpop.f32.mrb[0].mxu0
  %8332 = vdwg.mxu0
  %8333 = vmatprep.subr.bf16.mxu0 %v6693
  %8334 = vmatpush1.bf16.msra.mxu0 %v6692
  %8335 = vmatprep.subr.bf16.mxu0 %v6701
  %8336 = vmatpush1.bf16.msra.mxu0 %v6700
  %8337 = vmatprep.subr.bf16.mxu0 %v6709
  %8338 = vmatpush1.bf16.msra.mxu0 %v6708
  %8339 = vmatprep.subr.bf16.mxu0 %v6717
  %8340 = vmatpush1.bf16.msra.mxu0 %v6716
  %8341 = vmatprep.subr.bf16.mxu0 %v6725
  %8342 = vmatpush1.bf16.msra.mxu0 %v6724
  %8343 = vmatprep.subr.bf16.mxu0 %v6733
  %8344 = vmatpush1.bf16.msra.mxu0 %v6732
  %8345 = vmatprep.subr.bf16.mxu0 %v6741
  %8346 = vmatpush1.bf16.msra.mxu0 %v6740
  %8347 = vmatprep.subr.bf16.mxu0 %v6749
  %8348 = vmatpush1.bf16.msra.mxu0 %v6748
  %8349 = vmatprep.subr.bf16.mxu0 %v6757
  %8350 = vmatpush1.bf16.msra.mxu0 %v6756
  %8351 = vmatprep.subr.bf16.mxu0 %v6765
  %8352 = vmatpush1.bf16.msra.mxu0 %v6764
  %8353 = vmatprep.subr.bf16.mxu0 %v6773
  %8354 = vmatpush1.bf16.msra.mxu0 %v6772
  %8355 = vmatprep.subr.bf16.mxu0 %v6781
  %8356 = vmatpush1.bf16.msra.mxu0 %v6780
  %8357 = vmatprep.subr.bf16.mxu0 %v6789
  %8358 = vmatpush1.bf16.msra.mxu0 %v6788
  %8359 = vmatprep.subr.bf16.mxu0 %v6797
  %8360 = vmatpush1.bf16.msra.mxu0 %v6796
  %8361 = vmatprep.subr.bf16.mxu0 %v6805
  %8362 = vmatpush1.bf16.msra.mxu0 %v6804
  %8363 = vmatprep.subr.bf16.mxu0 %v6813
  %8364 = vmatpush1.bf16.msra.mxu0 %v6812
  %8365 = vmatprep.mubr.bf16.mxu0 %v8291
  %8366 = vmatmul.mubr.bf16.gmra.mrb[0].mxu0 %v8290
  %v8367 = vpop.f32.mrb[0].mxu0
  %v8368 = vadd.f32 %v8327, %v8367
  %v8369 = vpop.f32.mrb[0].mxu0
  %v8370 = vadd.f32 %v8329, %v8369
  %v8371 = vpop.f32.mrb[0].mxu0
  %v8372 = vpop.f32.mrb[0].mxu0
  %8373 = vdwg.mxu0
  %8374 = vmatprep.subr.bf16.mxu0 %v6567
  %8375 = vmatpush1.bf16.msra.mxu0 %v6566
  %8376 = vmatprep.subr.bf16.mxu0 %v6575
  %8377 = vmatpush1.bf16.msra.mxu0 %v6574
  %8378 = vmatprep.subr.bf16.mxu0 %v6583
  %8379 = vmatpush1.bf16.msra.mxu0 %v6582
  %8380 = vmatprep.subr.bf16.mxu0 %v6591
  %8381 = vmatpush1.bf16.msra.mxu0 %v6590
  %8382 = vmatprep.subr.bf16.mxu0 %v6599
  %8383 = vmatpush1.bf16.msra.mxu0 %v6598
  %8384 = vmatprep.subr.bf16.mxu0 %v6607
  %8385 = vmatpush1.bf16.msra.mxu0 %v6606
  %8386 = vmatprep.subr.bf16.mxu0 %v6615
  %8387 = vmatpush1.bf16.msra.mxu0 %v6614
  %8388 = vmatprep.subr.bf16.mxu0 %v6623
  %8389 = vmatpush1.bf16.msra.mxu0 %v6622
  %8390 = vmatprep.subr.bf16.mxu0 %v6631
  %8391 = vmatpush1.bf16.msra.mxu0 %v6630
  %8392 = vmatprep.subr.bf16.mxu0 %v6639
  %8393 = vmatpush1.bf16.msra.mxu0 %v6638
  %8394 = vmatprep.subr.bf16.mxu0 %v6647
  %8395 = vmatpush1.bf16.msra.mxu0 %v6646
  %8396 = vmatprep.subr.bf16.mxu0 %v6655
  %8397 = vmatpush1.bf16.msra.mxu0 %v6654
  %8398 = vmatprep.subr.bf16.mxu0 %v6663
  %8399 = vmatpush1.bf16.msra.mxu0 %v6662
  %8400 = vmatprep.subr.bf16.mxu0 %v6671
  %8401 = vmatpush1.bf16.msra.mxu0 %v6670
  %8402 = vmatprep.subr.bf16.mxu0 %v6679
  %8403 = vmatpush1.bf16.msra.mxu0 %v6678
  %8404 = vmatprep.subr.bf16.mxu0 %v6687
  %8405 = vmatpush1.bf16.msra.mxu0 %v6686
  %8406 = vmatprep.mubr.bf16.mxu0 %v8289
  %8407 = vmatmul.mubr.bf16.gmra.mrb[0].mxu0 %v8288
  %v8408 = vpop.f32.mrb[0].mxu0
  %v8409 = vadd.f32 %v3473, %v8408
  %v8410 = vpop.f32.mrb[0].mxu0
  %v8411 = vadd.f32 %v3477, %v8410
  %v8412 = vpop.f32.mrb[0].mxu0
  %v8413 = vpop.f32.mrb[0].mxu0
  %8414 = vdwg.mxu0
  %8415 = vmatprep.subr.bf16.mxu0 %v6695
  %8416 = vmatpush1.bf16.msra.mxu0 %v6694
  %8417 = vmatprep.subr.bf16.mxu0 %v6703
  %8418 = vmatpush1.bf16.msra.mxu0 %v6702
  %8419 = vmatprep.subr.bf16.mxu0 %v6711
  %8420 = vmatpush1.bf16.msra.mxu0 %v6710
  %8421 = vmatprep.subr.bf16.mxu0 %v6719
  %8422 = vmatpush1.bf16.msra.mxu0 %v6718
  %8423 = vmatprep.subr.bf16.mxu0 %v6727
  %8424 = vmatpush1.bf16.msra.mxu0 %v6726
  %8425 = vmatprep.subr.bf16.mxu0 %v6735
  %8426 = vmatpush1.bf16.msra.mxu0 %v6734
  %8427 = vmatprep.subr.bf16.mxu0 %v6743
  %8428 = vmatpush1.bf16.msra.mxu0 %v6742
  %8429 = vmatprep.subr.bf16.mxu0 %v6751
  %8430 = vmatpush1.bf16.msra.mxu0 %v6750
  %8431 = vmatprep.subr.bf16.mxu0 %v6759
  %8432 = vmatpush1.bf16.msra.mxu0 %v6758
  %8433 = vmatprep.subr.bf16.mxu0 %v6767
  %8434 = vmatpush1.bf16.msra.mxu0 %v6766
  %8435 = vmatprep.subr.bf16.mxu0 %v6775
  %8436 = vmatpush1.bf16.msra.mxu0 %v6774
  %8437 = vmatprep.subr.bf16.mxu0 %v6783
  %8438 = vmatpush1.bf16.msra.mxu0 %v6782
  %8439 = vmatprep.subr.bf16.mxu0 %v6791
  %8440 = vmatpush1.bf16.msra.mxu0 %v6790
  %8441 = vmatprep.subr.bf16.mxu0 %v6799
  %8442 = vmatpush1.bf16.msra.mxu0 %v6798
  %8443 = vmatprep.subr.bf16.mxu0 %v6807
  %8444 = vmatpush1.bf16.msra.mxu0 %v6806
  %8445 = vmatprep.subr.bf16.mxu0 %v6815
  %8446 = vmatpush1.bf16.msra.mxu0 %v6814
  %8447 = vmatprep.mubr.bf16.mxu0 %v8291
  %8448 = vmatmul.mubr.bf16.gmra.mrb[0].mxu0 %v8290
  %v8449 = vpop.f32.mrb[0].mxu0
  %v8450 = vadd.f32 %v8409, %v8449
  %v8451 = vpop.f32.mrb[0].mxu0
  %v8452 = vadd.f32 %v8411, %v8451
  %v8453 = vpop.f32.mrb[0].mxu0
  %v8454 = vpop.f32.mrb[0].mxu0
  %8455 = vdwg.mxu0
  %8456 = vmatprep.subr.bf16.mxu0 %v6569
  %8457 = vmatpush1.bf16.msra.mxu0 %v6568
  %8458 = vmatprep.subr.bf16.mxu0 %v6577
  %8459 = vmatpush1.bf16.msra.mxu0 %v6576
  %8460 = vmatprep.subr.bf16.mxu0 %v6585
  %8461 = vmatpush1.bf16.msra.mxu0 %v6584
  %8462 = vmatprep.subr.bf16.mxu0 %v6593
  %8463 = vmatpush1.bf16.msra.mxu0 %v6592
  %8464 = vmatprep.subr.bf16.mxu0 %v6601
  %8465 = vmatpush1.bf16.msra.mxu0 %v6600
  %8466 = vmatprep.subr.bf16.mxu0 %v6609
  %8467 = vmatpush1.bf16.msra.mxu0 %v6608
  %8468 = vmatprep.subr.bf16.mxu0 %v6617
  %8469 = vmatpush1.bf16.msra.mxu0 %v6616
  %8470 = vmatprep.subr.bf16.mxu0 %v6625
  %8471 = vmatpush1.bf16.msra.mxu0 %v6624
  %8472 = vmatprep.subr.bf16.mxu0 %v6633
  %8473 = vmatpush1.bf16.msra.mxu0 %v6632
  %8474 = vmatprep.subr.bf16.mxu0 %v6641
  %8475 = vmatpush1.bf16.msra.mxu0 %v6640
  %8476 = vmatprep.subr.bf16.mxu0 %v6649
  %8477 = vmatpush1.bf16.msra.mxu0 %v6648
  %8478 = vmatprep.subr.bf16.mxu0 %v6657
  %8479 = vmatpush1.bf16.msra.mxu0 %v6656
  %8480 = vmatprep.subr.bf16.mxu0 %v6665
  %8481 = vmatpush1.bf16.msra.mxu0 %v6664
  %8482 = vmatprep.subr.bf16.mxu0 %v6673
  %8483 = vmatpush1.bf16.msra.mxu0 %v6672
  %8484 = vmatprep.subr.bf16.mxu0 %v6681
  %8485 = vmatpush1.bf16.msra.mxu0 %v6680
  %8486 = vmatprep.subr.bf16.mxu0 %v6689
  %8487 = vmatpush1.bf16.msra.mxu0 %v6688
  %8488 = vmatprep.mubr.bf16.mxu0 %v8289
  %8489 = vmatmul.mubr.bf16.gmra.mrb[0].mxu0 %v8288
  %v8490 = vpop.f32.mrb[0].mxu0
  %v8491 = vadd.f32 %v3481, %v8490
  %v8492 = vpop.f32.mrb[0].mxu0
  %v8493 = vadd.f32 %v3485, %v8492
  %v8494 = vpop.f32.mrb[0].mxu0
  %v8495 = vpop.f32.mrb[0].mxu0
  %8496 = vdwg.mxu0
  %8497 = vmatprep.subr.bf16.mxu0 %v6697
  %8498 = vmatpush1.bf16.msra.mxu0 %v6696
  %8499 = vmatprep.subr.bf16.mxu0 %v6705
  %8500 = vmatpush1.bf16.msra.mxu0 %v6704
  %8501 = vmatprep.subr.bf16.mxu0 %v6713
  %8502 = vmatpush1.bf16.msra.mxu0 %v6712
  %8503 = vmatprep.subr.bf16.mxu0 %v6721
  %8504 = vmatpush1.bf16.msra.mxu0 %v6720
  %8505 = vmatprep.subr.bf16.mxu0 %v6729
  %8506 = vmatpush1.bf16.msra.mxu0 %v6728
  %8507 = vmatprep.subr.bf16.mxu0 %v6737
  %8508 = vmatpush1.bf16.msra.mxu0 %v6736
  %8509 = vmatprep.subr.bf16.mxu0 %v6745
  %8510 = vmatpush1.bf16.msra.mxu0 %v6744
  %8511 = vmatprep.subr.bf16.mxu0 %v6753
  %8512 = vmatpush1.bf16.msra.mxu0 %v6752
  %8513 = vmatprep.subr.bf16.mxu0 %v6761
  %8514 = vmatpush1.bf16.msra.mxu0 %v6760
  %8515 = vmatprep.subr.bf16.mxu0 %v6769
  %8516 = vmatpush1.bf16.msra.mxu0 %v6768
  %8517 = vmatprep.subr.bf16.mxu0 %v6777
  %8518 = vmatpush1.bf16.msra.mxu0 %v6776
  %8519 = vmatprep.subr.bf16.mxu0 %v6785
  %8520 = vmatpush1.bf16.msra.mxu0 %v6784
  %8521 = vmatprep.subr.bf16.mxu0 %v6793
  %8522 = vmatpush1.bf16.msra.mxu0 %v6792
  %8523 = vmatprep.subr.bf16.mxu0 %v6801
  %8524 = vmatpush1.bf16.msra.mxu0 %v6800
  %8525 = vmatprep.subr.bf16.mxu0 %v6809
  %8526 = vmatpush1.bf16.msra.mxu0 %v6808
  %8527 = vmatprep.subr.bf16.mxu0 %v6817
  %8528 = vmatpush1.bf16.msra.mxu0 %v6816
  %8529 = vmatprep.mubr.bf16.mxu0 %v8291
  %8530 = vmatmul.mubr.bf16.gmra.mrb[0].mxu0 %v8290
  %v8531 = vpop.f32.mrb[0].mxu0
  %v8532 = vadd.f32 %v8491, %v8531
  %v8533 = vpop.f32.mrb[0].mxu0
  %v8534 = vadd.f32 %v8493, %v8533
  %v8535 = vpop.f32.mrb[0].mxu0
  %v8536 = vpop.f32.mrb[0].mxu0
  %8537 = vdwg.mxu0
  %8538 = vmatprep.subr.bf16.mxu0 %v6571
  %8539 = vmatpush1.bf16.msra.mxu0 %v6570
  %8540 = vmatprep.subr.bf16.mxu0 %v6579
  %8541 = vmatpush1.bf16.msra.mxu0 %v6578
  %8542 = vmatprep.subr.bf16.mxu0 %v6587
  %8543 = vmatpush1.bf16.msra.mxu0 %v6586
  %8544 = vmatprep.subr.bf16.mxu0 %v6595
  %8545 = vmatpush1.bf16.msra.mxu0 %v6594
  %8546 = vmatprep.subr.bf16.mxu0 %v6603
  %8547 = vmatpush1.bf16.msra.mxu0 %v6602
  %8548 = vmatprep.subr.bf16.mxu0 %v6611
  %8549 = vmatpush1.bf16.msra.mxu0 %v6610
  %8550 = vmatprep.subr.bf16.mxu0 %v6619
  %8551 = vmatpush1.bf16.msra.mxu0 %v6618
  %8552 = vmatprep.subr.bf16.mxu0 %v6627
  %8553 = vmatpush1.bf16.msra.mxu0 %v6626
  %8554 = vmatprep.subr.bf16.mxu0 %v6635
  %8555 = vmatpush1.bf16.msra.mxu0 %v6634
  %8556 = vmatprep.subr.bf16.mxu0 %v6643
  %8557 = vmatpush1.bf16.msra.mxu0 %v6642
  %8558 = vmatprep.subr.bf16.mxu0 %v6651
  %8559 = vmatpush1.bf16.msra.mxu0 %v6650
  %8560 = vmatprep.subr.bf16.mxu0 %v6659
  %8561 = vmatpush1.bf16.msra.mxu0 %v6658
  %8562 = vmatprep.subr.bf16.mxu0 %v6667
  %8563 = vmatpush1.bf16.msra.mxu0 %v6666
  %8564 = vmatprep.subr.bf16.mxu0 %v6675
  %8565 = vmatpush1.bf16.msra.mxu0 %v6674
  %8566 = vmatprep.subr.bf16.mxu0 %v6683
  %8567 = vmatpush1.bf16.msra.mxu0 %v6682
  %8568 = vmatprep.subr.bf16.mxu0 %v6691
  %8569 = vmatpush1.bf16.msra.mxu0 %v6690
  %8570 = vmatprep.mubr.bf16.mxu0 %v8289
  %8571 = vmatmul.mubr.bf16.gmra.mrb[0].mxu0 %v8288
  %v8572 = vpop.f32.mrb[0].mxu0
  %v8573 = vadd.f32 %v3489, %v8572
  %v8574 = vpop.f32.mrb[0].mxu0
  %v8575 = vadd.f32 %v3493, %v8574
  %v8576 = vpop.f32.mrb[0].mxu0
  %v8577 = vpop.f32.mrb[0].mxu0
  %8578 = vdwg.mxu0
  %8579 = vmatprep.subr.bf16.mxu0 %v6699
  %8580 = vmatpush1.bf16.msra.mxu0 %v6698
  %8581 = vmatprep.subr.bf16.mxu0 %v6707
  %8582 = vmatpush1.bf16.msra.mxu0 %v6706
  %8583 = vmatprep.subr.bf16.mxu0 %v6715
  %8584 = vmatpush1.bf16.msra.mxu0 %v6714
  %8585 = vmatprep.subr.bf16.mxu0 %v6723
  %8586 = vmatpush1.bf16.msra.mxu0 %v6722
  %8587 = vmatprep.subr.bf16.mxu0 %v6731
  %8588 = vmatpush1.bf16.msra.mxu0 %v6730
  %8589 = vmatprep.subr.bf16.mxu0 %v6739
  %8590 = vmatpush1.bf16.msra.mxu0 %v6738
  %8591 = vmatprep.subr.bf16.mxu0 %v6747
  %8592 = vmatpush1.bf16.msra.mxu0 %v6746
  %8593 = vmatprep.subr.bf16.mxu0 %v6755
  %8594 = vmatpush1.bf16.msra.mxu0 %v6754
  %8595 = vmatprep.subr.bf16.mxu0 %v6763
  %8596 = vmatpush1.bf16.msra.mxu0 %v6762
  %8597 = vmatprep.subr.bf16.mxu0 %v6771
  %8598 = vmatpush1.bf16.msra.mxu0 %v6770
  %8599 = vmatprep.subr.bf16.mxu0 %v6779
  %8600 = vmatpush1.bf16.msra.mxu0 %v6778
  %8601 = vmatprep.subr.bf16.mxu0 %v6787
  %8602 = vmatpush1.bf16.msra.mxu0 %v6786
  %8603 = vmatprep.subr.bf16.mxu0 %v6795
  %8604 = vmatpush1.bf16.msra.mxu0 %v6794
  %8605 = vmatprep.subr.bf16.mxu0 %v6803
  %8606 = vmatpush1.bf16.msra.mxu0 %v6802
  %8607 = vmatprep.subr.bf16.mxu0 %v6811
  %8608 = vmatpush1.bf16.msra.mxu0 %v6810
  %8609 = vmatprep.subr.bf16.mxu0 %v6819
  %8610 = vmatpush1.bf16.msra.mxu0 %v6818
  %8611 = vmatprep.mubr.bf16.mxu0 %v8291
  %8612 = vmatmul.mubr.bf16.gmra.mrb[0].mxu0 %v8290
  %v8613 = vpop.f32.mrb[0].mxu0
  %v8614 = vadd.f32 %v8573, %v8613
  %v8615 = vpop.f32.mrb[0].mxu0
  %v8616 = vadd.f32 %v8575, %v8615
  %v8617 = vpop.f32.mrb[0].mxu0
  %v8618 = vpop.f32.mrb[0].mxu0
  %8619 = vdwg.mxu0
  %v8620 = vxor.u32 %v8368, 2147483648
  %v8621 = vxor.u32 %v8370, 2147483648
  %v8622 = vxor.u32 %v8450, 2147483648
  %v8623 = vxor.u32 %v8452, 2147483648
  %v8624 = vxor.u32 %v8532, 2147483648
  %v8625 = vxor.u32 %v8534, 2147483648
  %v8626 = vmul.f32 %v8620, 1.442695
  %v8627 = vpow.pop %v8626
  %v8628 = vmul.f32 %v8621, 1.442695
  %v8629 = vpow.pop %v8628
  %v8630 = vmul.f32 %v8622, 1.442695
  %v8631 = vpow.pop %v8630
  %v8632 = vmul.f32 %v8623, 1.442695
  %v8633 = vpow.pop %v8632
  %v8634 = vmul.f32 %v8624, 1.442695
  %v8635 = vpow.pop %v8634
  %v8636 = vmul.f32 %v8625, 1.442695
  %v8637 = vpow.pop %v8636
  %v8638 = vadd.f32 %v8627, 1.0
  %v8639 = vadd.f32 %v8629, 1.0
  %v8640 = vadd.f32 %v8631, 1.0
  %v8641 = vadd.f32 %v8633, 1.0
  %v8642 = vadd.f32 %v8635, 1.0
  %v8643 = vadd.f32 %v8637, 1.0
  %v8644 = vrcp.pop %v8638
  %v8645 = vmul.f32 1.0, %v8644
  %v8646 = vrcp.pop %v8639
  %v8647 = vmul.f32 1.0, %v8646
  %v8648 = vrcp.pop %v8640
  %v8649 = vmul.f32 1.0, %v8648
  %v8650 = vrcp.pop %v8641
  %v8651 = vmul.f32 1.0, %v8650
  %v8652 = vrcp.pop %v8642
  %v8653 = vmul.f32 1.0, %v8652
  %v8654 = vrcp.pop %v8643
  %v8655 = vmul.f32 1.0, %v8654
  %v8656 = vtanh.pop %v8614
  %v8657 = vtanh.pop %v8616
  %v8658 = vmul.f32 %v8649, %v8054
  %v8659 = vmul.f32 %v8651, %v8055
  %v8660 = vmul.f32 %v8645, %v8656
  %v8661 = vmul.f32 %v8647, %v8657
  %v8662 = vadd.f32 %v8658, %v8660
  %v8663 = vadd.f32 %v8659, %v8661
  %v8664 = vtanh.pop %v8662
  %v8665 = vtanh.pop %v8663
  %v8666 = vmul.f32 %v8653, %v8664
  %v8667 = vmul.f32 %v8655, %v8665
  %v8668 = vld [vmem:[#allocation2 + $0x100] sm:$0xff]
  %v8669 = vld [vmem:[#allocation2 + $0x108] sm:$0xff]
  %v8670 = vld [vmem:[#allocation2 + $0x110] sm:$0xff]
  %v8671 = vld [vmem:[#allocation2 + $0x118] sm:$0xff]
  %v8672 = vld [vmem:[#allocation2 + $0x120] sm:$0xff]
  %v8673 = vld [vmem:[#allocation2 + $0x128] sm:$0xff]
  %v8674 = vld [vmem:[#allocation2 + $0x130] sm:$0xff]
  %v8675 = vld [vmem:[#allocation2 + $0x138] sm:$0xff]
  %8676 = vmatprep.subr.bf16.mxu0 %v5061
  %8677 = vmatpush1.bf16.msra.mxu0 %v5060
  %8678 = vmatprep.subr.bf16.mxu0 %v5069
  %8679 = vmatpush1.bf16.msra.mxu0 %v5068
  %8680 = vmatprep.subr.bf16.mxu0 %v5077
  %8681 = vmatpush1.bf16.msra.mxu0 %v5076
  %8682 = vmatprep.subr.bf16.mxu0 %v5085
  %8683 = vmatpush1.bf16.msra.mxu0 %v5084
  %8684 = vmatprep.subr.bf16.mxu0 %v5093
  %8685 = vmatpush1.bf16.msra.mxu0 %v5092
  %8686 = vmatprep.subr.bf16.mxu0 %v5101
  %8687 = vmatpush1.bf16.msra.mxu0 %v5100
  %8688 = vmatprep.subr.bf16.mxu0 %v5109
  %8689 = vmatpush1.bf16.msra.mxu0 %v5108
  %8690 = vmatprep.subr.bf16.mxu0 %v5117
  %8691 = vmatpush1.bf16.msra.mxu0 %v5116
  %8692 = vmatprep.subr.bf16.mxu0 %v5125
  %8693 = vmatpush1.bf16.msra.mxu0 %v5124
  %8694 = vmatprep.subr.bf16.mxu0 %v5133
  %8695 = vmatpush1.bf16.msra.mxu0 %v5132
  %8696 = vmatprep.subr.bf16.mxu0 %v5141
  %8697 = vmatpush1.bf16.msra.mxu0 %v5140
  %8698 = vmatprep.subr.bf16.mxu0 %v5149
  %8699 = vmatpush1.bf16.msra.mxu0 %v5148
  %8700 = vmatprep.subr.bf16.mxu0 %v5157
  %8701 = vmatpush1.bf16.msra.mxu0 %v5156
  %8702 = vmatprep.subr.bf16.mxu0 %v5165
  %8703 = vmatpush1.bf16.msra.mxu0 %v5164
  %8704 = vmatprep.subr.bf16.mxu0 %v5173
  %8705 = vmatpush1.bf16.msra.mxu0 %v5172
  %8706 = vmatprep.subr.bf16.mxu0 %v5181
  %8707 = vmatpush1.bf16.msra.mxu0 %v5180
  %8708 = vmatprep.mubr.bf16.mxu0 %v8289
  %8709 = vmatmul.mubr.bf16.gmra.mrb[0].mxu0 %v8288
  %v8710 = vpop.f32.mrb[0].mxu0
  %v8711 = vadd.f32 0.0, %v8710
  %v8712 = vpop.f32.mrb[0].mxu0
  %v8713 = vadd.f32 0.0, %v8712
  %v8714 = vpop.f32.mrb[0].mxu0
  %v8715 = vpop.f32.mrb[0].mxu0
  %8716 = vdwg.mxu0
  %8717 = vmatprep.subr.bf16.mxu0 %v5063
  %8718 = vmatpush1.bf16.msra.mxu0 %v5062
  %8719 = vmatprep.subr.bf16.mxu0 %v5071
  %8720 = vmatpush1.bf16.msra.mxu0 %v5070
  %8721 = vmatprep.subr.bf16.mxu0 %v5079
  %8722 = vmatpush1.bf16.msra.mxu0 %v5078
  %8723 = vmatprep.subr.bf16.mxu0 %v5087
  %8724 = vmatpush1.bf16.msra.mxu0 %v5086
  %8725 = vmatprep.subr.bf16.mxu0 %v5095
  %8726 = vmatpush1.bf16.msra.mxu0 %v5094
  %8727 = vmatprep.subr.bf16.mxu0 %v5103
  %8728 = vmatpush1.bf16.msra.mxu0 %v5102
  %8729 = vmatprep.subr.bf16.mxu0 %v5111
  %8730 = vmatpush1.bf16.msra.mxu0 %v5110
  %8731 = vmatprep.subr.bf16.mxu0 %v5119
  %8732 = vmatpush1.bf16.msra.mxu0 %v5118
  %8733 = vmatprep.subr.bf16.mxu0 %v5127
  %8734 = vmatpush1.bf16.msra.mxu0 %v5126
  %8735 = vmatprep.subr.bf16.mxu0 %v5135
  %8736 = vmatpush1.bf16.msra.mxu0 %v5134
  %8737 = vmatprep.subr.bf16.mxu0 %v5143
  %8738 = vmatpush1.bf16.msra.mxu0 %v5142
  %8739 = vmatprep.subr.bf16.mxu0 %v5151
  %8740 = vmatpush1.bf16.msra.mxu0 %v5150
  %8741 = vmatprep.subr.bf16.mxu0 %v5159
  %8742 = vmatpush1.bf16.msra.mxu0 %v5158
  %8743 = vmatprep.subr.bf16.mxu0 %v5167
  %8744 = vmatpush1.bf16.msra.mxu0 %v5166
  %8745 = vmatprep.subr.bf16.mxu0 %v5175
  %8746 = vmatpush1.bf16.msra.mxu0 %v5174
  %8747 = vmatprep.subr.bf16.mxu0 %v5183
  %8748 = vmatpush1.bf16.msra.mxu0 %v5182
  %8749 = vmatprep.mubr.bf16.mxu0 %v8289
  %8750 = vmatmul.mubr.bf16.gmra.mrb[0].mxu0 %v8288
  %v8751 = vpop.f32.mrb[0].mxu0
  %v8752 = vadd.f32 0.0, %v8751
  %v8753 = vpop.f32.mrb[0].mxu0
  %v8754 = vadd.f32 0.0, %v8753
  %v8755 = vpop.f32.mrb[0].mxu0
  %v8756 = vpop.f32.mrb[0].mxu0
  %8757 = vdwg.mxu0
  %8758 = vmatprep.subr.bf16.mxu0 %v5065
  %8759 = vmatpush1.bf16.msra.mxu0 %v5064
  %8760 = vmatprep.subr.bf16.mxu0 %v5073
  %8761 = vmatpush1.bf16.msra.mxu0 %v5072
  %8762 = vmatprep.subr.bf16.mxu0 %v5081
  %8763 = vmatpush1.bf16.msra.mxu0 %v5080
  %8764 = vmatprep.subr.bf16.mxu0 %v5089
  %8765 = vmatpush1.bf16.msra.mxu0 %v5088
  %8766 = vmatprep.subr.bf16.mxu0 %v5097
  %8767 = vmatpush1.bf16.msra.mxu0 %v5096
  %8768 = vmatprep.subr.bf16.mxu0 %v5105
  %8769 = vmatpush1.bf16.msra.mxu0 %v5104
  %8770 = vmatprep.subr.bf16.mxu0 %v5113
  %8771 = vmatpush1.bf16.msra.mxu0 %v5112
  %8772 = vmatprep.subr.bf16.mxu0 %v5121
  %8773 = vmatpush1.bf16.msra.mxu0 %v5120
  %8774 = vmatprep.subr.bf16.mxu0 %v5129
  %8775 = vmatpush1.bf16.msra.mxu0 %v5128
  %8776 = vmatprep.subr.bf16.mxu0 %v5137
  %8777 = vmatpush1.bf16.msra.mxu0 %v5136
  %8778 = vmatprep.subr.bf16.mxu0 %v5145
  %8779 = vmatpush1.bf16.msra.mxu0 %v5144
  %8780 = vmatprep.subr.bf16.mxu0 %v5153
  %8781 = vmatpush1.bf16.msra.mxu0 %v5152
  %8782 = vmatprep.subr.bf16.mxu0 %v5161
  %8783 = vmatpush1.bf16.msra.mxu0 %v5160
  %8784 = vmatprep.subr.bf16.mxu0 %v5169
  %8785 = vmatpush1.bf16.msra.mxu0 %v5168
  %8786 = vmatprep.subr.bf16.mxu0 %v5177
  %8787 = vmatpush1.bf16.msra.mxu0 %v5176
  %8788 = vmatprep.subr.bf16.mxu0 %v5185
  %8789 = vmatpush1.bf16.msra.mxu0 %v5184
  %8790 = vmatprep.mubr.bf16.mxu0 %v8289
  %8791 = vmatmul.mubr.bf16.gmra.mrb[0].mxu0 %v8288
  %v8792 = vpop.f32.mrb[0].mxu0
  %v8793 = vadd.f32 0.0, %v8792
  %v8794 = vpop.f32.mrb[0].mxu0
  %v8795 = vadd.f32 0.0, %v8794
  %v8796 = vpop.f32.mrb[0].mxu0
  %v8797 = vpop.f32.mrb[0].mxu0
  %8798 = vdwg.mxu0
  %8799 = vmatprep.subr.bf16.mxu0 %v5067
  %8800 = vmatpush1.bf16.msra.mxu0 %v5066
  %8801 = vmatprep.subr.bf16.mxu0 %v5075
  %8802 = vmatpush1.bf16.msra.mxu0 %v5074
  %8803 = vmatprep.subr.bf16.mxu0 %v5083
  %8804 = vmatpush1.bf16.msra.mxu0 %v5082
  %8805 = vmatprep.subr.bf16.mxu0 %v5091
  %8806 = vmatpush1.bf16.msra.mxu0 %v5090
  %8807 = vmatprep.subr.bf16.mxu0 %v5099
  %8808 = vmatpush1.bf16.msra.mxu0 %v5098
  %8809 = vmatprep.subr.bf16.mxu0 %v5107
  %8810 = vmatpush1.bf16.msra.mxu0 %v5106
  %8811 = vmatprep.subr.bf16.mxu0 %v5115
  %8812 = vmatpush1.bf16.msra.mxu0 %v5114
  %8813 = vmatprep.subr.bf16.mxu0 %v5123
  %8814 = vmatpush1.bf16.msra.mxu0 %v5122
  %8815 = vmatprep.subr.bf16.mxu0 %v5131
  %8816 = vmatpush1.bf16.msra.mxu0 %v5130
  %8817 = vmatprep.subr.bf16.mxu0 %v5139
  %8818 = vmatpush1.bf16.msra.mxu0 %v5138
  %8819 = vmatprep.subr.bf16.mxu0 %v5147
  %8820 = vmatpush1.bf16.msra.mxu0 %v5146
  %8821 = vmatprep.subr.bf16.mxu0 %v5155
  %8822 = vmatpush1.bf16.msra.mxu0 %v5154
  %8823 = vmatprep.subr.bf16.mxu0 %v5163
  %8824 = vmatpush1.bf16.msra.mxu0 %v5162
  %8825 = vmatprep.subr.bf16.mxu0 %v5171
  %8826 = vmatpush1.bf16.msra.mxu0 %v5170
  %8827 = vmatprep.subr.bf16.mxu0 %v5179
  %8828 = vmatpush1.bf16.msra.mxu0 %v5178
  %8829 = vmatprep.subr.bf16.mxu0 %v5187
  %8830 = vmatpush1.bf16.msra.mxu0 %v5186
  %8831 = vmatprep.mubr.bf16.mxu0 %v8289
  %8832 = vmatmul.mubr.bf16.gmra.mrb[0].mxu0 %v8288
  %v8833 = vpop.f32.mrb[0].mxu0
  %v8834 = vadd.f32 0.0, %v8833
  %v8835 = vpop.f32.mrb[0].mxu0
  %v8836 = vadd.f32 0.0, %v8835
  %v8837 = vpop.f32.mrb[0].mxu0
  %v8838 = vpop.f32.mrb[0].mxu0
  %8839 = vdwg.mxu0
  %v8840 = vadd.f32 %v8668, %v8711
  %v8841 = vadd.f32 %v8669, %v8713
  %v8842 = vadd.f32 %v8670, %v8752
  %v8843 = vadd.f32 %v8671, %v8754
  %v8844 = vadd.f32 %v8672, %v8793
  %v8845 = vadd.f32 %v8673, %v8795
  %v8846 = vadd.f32 %v8674, %v8834
  %v8847 = vadd.f32 %v8675, %v8836
  %v8848 = vxor.u32 %v8840, 2147483648
  %v8849 = vxor.u32 %v8841, 2147483648
  %v8850 = vxor.u32 %v8842, 2147483648
  %v8851 = vxor.u32 %v8843, 2147483648
  %v8852 = vxor.u32 %v8844, 2147483648
  %v8853 = vxor.u32 %v8845, 2147483648
  %v8854 = vmul.f32 %v8848, 1.442695
  %v8855 = vpow.pop %v8854
  %v8856 = vmul.f32 %v8849, 1.442695
  %v8857 = vpow.pop %v8856
  %v8858 = vmul.f32 %v8850, 1.442695
  %v8859 = vpow.pop %v8858
  %v8860 = vmul.f32 %v8851, 1.442695
  %v8861 = vpow.pop %v8860
  %v8862 = vmul.f32 %v8852, 1.442695
  %v8863 = vpow.pop %v8862
  %v8864 = vmul.f32 %v8853, 1.442695
  %v8865 = vpow.pop %v8864
  %v8866 = vadd.f32 %v8855, 1.0
  %v8867 = vadd.f32 %v8857, 1.0
  %v8868 = vadd.f32 %v8859, 1.0
  %v8869 = vadd.f32 %v8861, 1.0
  %v8870 = vadd.f32 %v8863, 1.0
  %v8871 = vadd.f32 %v8865, 1.0
  %v8872 = vrcp.pop %v8866
  %v8873 = vmul.f32 1.0, %v8872
  %v8874 = vrcp.pop %v8867
  %v8875 = vmul.f32 1.0, %v8874
  %v8876 = vrcp.pop %v8868
  %v8877 = vmul.f32 1.0, %v8876
  %v8878 = vrcp.pop %v8869
  %v8879 = vmul.f32 1.0, %v8878
  %v8880 = vrcp.pop %v8870
  %v8881 = vmul.f32 1.0, %v8880
  %v8882 = vrcp.pop %v8871
  %v8883 = vmul.f32 1.0, %v8882
  %v8884 = vtanh.pop %v8846
  %v8885 = vtanh.pop %v8847
  %v8886 = vmul.f32 %v8877, %v8282
  %v8887 = vmul.f32 %v8879, %v8283
  %v8888 = vmul.f32 %v8873, %v8884
  %v8889 = vmul.f32 %v8875, %v8885
  %v8890 = vadd.f32 %v8886, %v8888
  %v8891 = vadd.f32 %v8887, %v8889
  %v8892 = vtanh.pop %v8890
  %v8893 = vtanh.pop %v8891
  %v8894 = vmul.f32 %v8881, %v8892
  %v8895 = vmul.f32 %v8883, %v8893
  %v8896 = vpack.c.bf16 %v8894, %v8894
  %v8897 = vpack.c.bf16 %v8895, %v8895
  %v8898 = vpack.c.bf16 %v8666, %v8666
  %v8899 = vpack.c.bf16 %v8667, %v8667
  %8900 = vmatprep.subr.bf16.mxu0 %v6565
  %8901 = vmatpush1.bf16.msra.mxu0 %v6564
  %8902 = vmatprep.subr.bf16.mxu0 %v6573
  %8903 = vmatpush1.bf16.msra.mxu0 %v6572
  %8904 = vmatprep.subr.bf16.mxu0 %v6581
  %8905 = vmatpush1.bf16.msra.mxu0 %v6580
  %8906 = vmatprep.subr.bf16.mxu0 %v6589
  %8907 = vmatpush1.bf16.msra.mxu0 %v6588
  %8908 = vmatprep.subr.bf16.mxu0 %v6597
  %8909 = vmatpush1.bf16.msra.mxu0 %v6596
  %8910 = vmatprep.subr.bf16.mxu0 %v6605
  %8911 = vmatpush1.bf16.msra.mxu0 %v6604
  %8912 = vmatprep.subr.bf16.mxu0 %v6613
  %8913 = vmatpush1.bf16.msra.mxu0 %v6612
  %8914 = vmatprep.subr.bf16.mxu0 %v6621
  %8915 = vmatpush1.bf16.msra.mxu0 %v6620
  %8916 = vmatprep.subr.bf16.mxu0 %v6629
  %8917 = vmatpush1.bf16.msra.mxu0 %v6628
  %8918 = vmatprep.subr.bf16.mxu0 %v6637
  %8919 = vmatpush1.bf16.msra.mxu0 %v6636
  %8920 = vmatprep.subr.bf16.mxu0 %v6645
  %8921 = vmatpush1.bf16.msra.mxu0 %v6644
  %8922 = vmatprep.subr.bf16.mxu0 %v6653
  %8923 = vmatpush1.bf16.msra.mxu0 %v6652
  %8924 = vmatprep.subr.bf16.mxu0 %v6661
  %8925 = vmatpush1.bf16.msra.mxu0 %v6660
  %8926 = vmatprep.subr.bf16.mxu0 %v6669
  %8927 = vmatpush1.bf16.msra.mxu0 %v6668
  %8928 = vmatprep.subr.bf16.mxu0 %v6677
  %8929 = vmatpush1.bf16.msra.mxu0 %v6676
  %8930 = vmatprep.subr.bf16.mxu0 %v6685
  %8931 = vmatpush1.bf16.msra.mxu0 %v6684
  %8932 = vmatprep.mubr.bf16.mxu0 %v8897
  %8933 = vmatmul.mubr.bf16.gmra.mrb[0].mxu0 %v8896
  %v8934 = vpop.f32.mrb[0].mxu0
  %v8935 = vadd.f32 %v3465, %v8934
  %v8936 = vpop.f32.mrb[0].mxu0
  %v8937 = vadd.f32 %v3469, %v8936
  %v8938 = vpop.f32.mrb[0].mxu0
  %v8939 = vpop.f32.mrb[0].mxu0
  %8940 = vdwg.mxu0
  %8941 = vmatprep.subr.bf16.mxu0 %v6693
  %8942 = vmatpush1.bf16.msra.mxu0 %v6692
  %8943 = vmatprep.subr.bf16.mxu0 %v6701
  %8944 = vmatpush1.bf16.msra.mxu0 %v6700
  %8945 = vmatprep.subr.bf16.mxu0 %v6709
  %8946 = vmatpush1.bf16.msra.mxu0 %v6708
  %8947 = vmatprep.subr.bf16.mxu0 %v6717
  %8948 = vmatpush1.bf16.msra.mxu0 %v6716
  %8949 = vmatprep.subr.bf16.mxu0 %v6725
  %8950 = vmatpush1.bf16.msra.mxu0 %v6724
  %8951 = vmatprep.subr.bf16.mxu0 %v6733
  %8952 = vmatpush1.bf16.msra.mxu0 %v6732
  %8953 = vmatprep.subr.bf16.mxu0 %v6741
  %8954 = vmatpush1.bf16.msra.mxu0 %v6740
  %8955 = vmatprep.subr.bf16.mxu0 %v6749
  %8956 = vmatpush1.bf16.msra.mxu0 %v6748
  %8957 = vmatprep.subr.bf16.mxu0 %v6757
  %8958 = vmatpush1.bf16.msra.mxu0 %v6756
  %8959 = vmatprep.subr.bf16.mxu0 %v6765
  %8960 = vmatpush1.bf16.msra.mxu0 %v6764
  %8961 = vmatprep.subr.bf16.mxu0 %v6773
  %8962 = vmatpush1.bf16.msra.mxu0 %v6772
  %8963 = vmatprep.subr.bf16.mxu0 %v6781
  %8964 = vmatpush1.bf16.msra.mxu0 %v6780
  %8965 = vmatprep.subr.bf16.mxu0 %v6789
  %8966 = vmatpush1.bf16.msra.mxu0 %v6788
  %8967 = vmatprep.subr.bf16.mxu0 %v6797
  %8968 = vmatpush1.bf16.msra.mxu0 %v6796
  %8969 = vmatprep.subr.bf16.mxu0 %v6805
  %8970 = vmatpush1.bf16.msra.mxu0 %v6804
  %8971 = vmatprep.subr.bf16.mxu0 %v6813
  %8972 = vmatpush1.bf16.msra.mxu0 %v6812
  %8973 = vmatprep.mubr.bf16.mxu0 %v8899
  %8974 = vmatmul.mubr.bf16.gmra.mrb[0].mxu0 %v8898
  %v8975 = vpop.f32.mrb[0].mxu0
  %v8976 = vadd.f32 %v8935, %v8975
  %v8977 = vpop.f32.mrb[0].mxu0
  %v8978 = vadd.f32 %v8937, %v8977
  %v8979 = vpop.f32.mrb[0].mxu0
  %v8980 = vpop.f32.mrb[0].mxu0
  %8981 = vdwg.mxu0
  %8982 = vmatprep.subr.bf16.mxu0 %v6567
  %8983 = vmatpush1.bf16.msra.mxu0 %v6566
  %8984 = vmatprep.subr.bf16.mxu0 %v6575
  %8985 = vmatpush1.bf16.msra.mxu0 %v6574
  %8986 = vmatprep.subr.bf16.mxu0 %v6583
  %8987 = vmatpush1.bf16.msra.mxu0 %v6582
  %8988 = vmatprep.subr.bf16.mxu0 %v6591
  %8989 = vmatpush1.bf16.msra.mxu0 %v6590
  %8990 = vmatprep.subr.bf16.mxu0 %v6599
  %8991 = vmatpush1.bf16.msra.mxu0 %v6598
  %8992 = vmatprep.subr.bf16.mxu0 %v6607
  %8993 = vmatpush1.bf16.msra.mxu0 %v6606
  %8994 = vmatprep.subr.bf16.mxu0 %v6615
  %8995 = vmatpush1.bf16.msra.mxu0 %v6614
  %8996 = vmatprep.subr.bf16.mxu0 %v6623
  %8997 = vmatpush1.bf16.msra.mxu0 %v6622
  %8998 = vmatprep.subr.bf16.mxu0 %v6631
  %8999 = vmatpush1.bf16.msra.mxu0 %v6630
  %9000 = vmatprep.subr.bf16.mxu0 %v6639
  %9001 = vmatpush1.bf16.msra.mxu0 %v6638
  %9002 = vmatprep.subr.bf16.mxu0 %v6647
  %9003 = vmatpush1.bf16.msra.mxu0 %v6646
  %9004 = vmatprep.subr.bf16.mxu0 %v6655
  %9005 = vmatpush1.bf16.msra.mxu0 %v6654
  %9006 = vmatprep.subr.bf16.mxu0 %v6663
  %9007 = vmatpush1.bf16.msra.mxu0 %v6662
  %9008 = vmatprep.subr.bf16.mxu0 %v6671
  %9009 = vmatpush1.bf16.msra.mxu0 %v6670
  %9010 = vmatprep.subr.bf16.mxu0 %v6679
  %9011 = vmatpush1.bf16.msra.mxu0 %v6678
  %9012 = vmatprep.subr.bf16.mxu0 %v6687
  %9013 = vmatpush1.bf16.msra.mxu0 %v6686
  %9014 = vmatprep.mubr.bf16.mxu0 %v8897
  %9015 = vmatmul.mubr.bf16.gmra.mrb[0].mxu0 %v8896
  %v9016 = vpop.f32.mrb[0].mxu0
  %v9017 = vadd.f32 %v3473, %v9016
  %v9018 = vpop.f32.mrb[0].mxu0
  %v9019 = vadd.f32 %v3477, %v9018
  %v9020 = vpop.f32.mrb[0].mxu0
  %v9021 = vpop.f32.mrb[0].mxu0
  %9022 = vdwg.mxu0
  %9023 = vmatprep.subr.bf16.mxu0 %v6695
  %9024 = vmatpush1.bf16.msra.mxu0 %v6694
  %9025 = vmatprep.subr.bf16.mxu0 %v6703
  %9026 = vmatpush1.bf16.msra.mxu0 %v6702
  %9027 = vmatprep.subr.bf16.mxu0 %v6711
  %9028 = vmatpush1.bf16.msra.mxu0 %v6710
  %9029 = vmatprep.subr.bf16.mxu0 %v6719
  %9030 = vmatpush1.bf16.msra.mxu0 %v6718
  %9031 = vmatprep.subr.bf16.mxu0 %v6727
  %9032 = vmatpush1.bf16.msra.mxu0 %v6726
  %9033 = vmatprep.subr.bf16.mxu0 %v6735
  %9034 = vmatpush1.bf16.msra.mxu0 %v6734
  %9035 = vmatprep.subr.bf16.mxu0 %v6743
  %9036 = vmatpush1.bf16.msra.mxu0 %v6742
  %9037 = vmatprep.subr.bf16.mxu0 %v6751
  %9038 = vmatpush1.bf16.msra.mxu0 %v6750
  %9039 = vmatprep.subr.bf16.mxu0 %v6759
  %9040 = vmatpush1.bf16.msra.mxu0 %v6758
  %9041 = vmatprep.subr.bf16.mxu0 %v6767
  %9042 = vmatpush1.bf16.msra.mxu0 %v6766
  %9043 = vmatprep.subr.bf16.mxu0 %v6775
  %9044 = vmatpush1.bf16.msra.mxu0 %v6774
  %9045 = vmatprep.subr.bf16.mxu0 %v6783
  %9046 = vmatpush1.bf16.msra.mxu0 %v6782
  %9047 = vmatprep.subr.bf16.mxu0 %v6791
  %9048 = vmatpush1.bf16.msra.mxu0 %v6790
  %9049 = vmatprep.subr.bf16.mxu0 %v6799
  %9050 = vmatpush1.bf16.msra.mxu0 %v6798
  %9051 = vmatprep.subr.bf16.mxu0 %v6807
  %9052 = vmatpush1.bf16.msra.mxu0 %v6806
  %9053 = vmatprep.subr.bf16.mxu0 %v6815
  %9054 = vmatpush1.bf16.msra.mxu0 %v6814
  %9055 = vmatprep.mubr.bf16.mxu0 %v8899
  %9056 = vmatmul.mubr.bf16.gmra.mrb[0].mxu0 %v8898
  %v9057 = vpop.f32.mrb[0].mxu0
  %v9058 = vadd.f32 %v9017, %v9057
  %v9059 = vpop.f32.mrb[0].mxu0
  %v9060 = vadd.f32 %v9019, %v9059
  %v9061 = vpop.f32.mrb[0].mxu0
  %v9062 = vpop.f32.mrb[0].mxu0
  %9063 = vdwg.mxu0
  %9064 = vmatprep.subr.bf16.mxu0 %v6569
  %9065 = vmatpush1.bf16.msra.mxu0 %v6568
  %9066 = vmatprep.subr.bf16.mxu0 %v6577
  %9067 = vmatpush1.bf16.msra.mxu0 %v6576
  %9068 = vmatprep.subr.bf16.mxu0 %v6585
  %9069 = vmatpush1.bf16.msra.mxu0 %v6584
  %9070 = vmatprep.subr.bf16.mxu0 %v6593
  %9071 = vmatpush1.bf16.msra.mxu0 %v6592
  %9072 = vmatprep.subr.bf16.mxu0 %v6601
  %9073 = vmatpush1.bf16.msra.mxu0 %v6600
  %9074 = vmatprep.subr.bf16.mxu0 %v6609
  %9075 = vmatpush1.bf16.msra.mxu0 %v6608
  %9076 = vmatprep.subr.bf16.mxu0 %v6617
  %9077 = vmatpush1.bf16.msra.mxu0 %v6616
  %9078 = vmatprep.subr.bf16.mxu0 %v6625
  %9079 = vmatpush1.bf16.msra.mxu0 %v6624
  %9080 = vmatprep.subr.bf16.mxu0 %v6633
  %9081 = vmatpush1.bf16.msra.mxu0 %v6632
  %9082 = vmatprep.subr.bf16.mxu0 %v6641
  %9083 = vmatpush1.bf16.msra.mxu0 %v6640
  %9084 = vmatprep.subr.bf16.mxu0 %v6649
  %9085 = vmatpush1.bf16.msra.mxu0 %v6648
  %9086 = vmatprep.subr.bf16.mxu0 %v6657
  %9087 = vmatpush1.bf16.msra.mxu0 %v6656
  %9088 = vmatprep.subr.bf16.mxu0 %v6665
  %9089 = vmatpush1.bf16.msra.mxu0 %v6664
  %9090 = vmatprep.subr.bf16.mxu0 %v6673
  %9091 = vmatpush1.bf16.msra.mxu0 %v6672
  %9092 = vmatprep.subr.bf16.mxu0 %v6681
  %9093 = vmatpush1.bf16.msra.mxu0 %v6680
  %9094 = vmatprep.subr.bf16.mxu0 %v6689
  %9095 = vmatpush1.bf16.msra.mxu0 %v6688
  %9096 = vmatprep.mubr.bf16.mxu0 %v8897
  %9097 = vmatmul.mubr.bf16.gmra.mrb[0].mxu0 %v8896
  %v9098 = vpop.f32.mrb[0].mxu0
  %v9099 = vadd.f32 %v3481, %v9098
  %v9100 = vpop.f32.mrb[0].mxu0
  %v9101 = vadd.f32 %v3485, %v9100
  %v9102 = vpop.f32.mrb[0].mxu0
  %v9103 = vpop.f32.mrb[0].mxu0
  %9104 = vdwg.mxu0
  %9105 = vmatprep.subr.bf16.mxu0 %v6697
  %9106 = vmatpush1.bf16.msra.mxu0 %v6696
  %9107 = vmatprep.subr.bf16.mxu0 %v6705
  %9108 = vmatpush1.bf16.msra.mxu0 %v6704
  %9109 = vmatprep.subr.bf16.mxu0 %v6713
  %9110 = vmatpush1.bf16.msra.mxu0 %v6712
  %9111 = vmatprep.subr.bf16.mxu0 %v6721
  %9112 = vmatpush1.bf16.msra.mxu0 %v6720
  %9113 = vmatprep.subr.bf16.mxu0 %v6729
  %9114 = vmatpush1.bf16.msra.mxu0 %v6728
  %9115 = vmatprep.subr.bf16.mxu0 %v6737
  %9116 = vmatpush1.bf16.msra.mxu0 %v6736
  %9117 = vmatprep.subr.bf16.mxu0 %v6745
  %9118 = vmatpush1.bf16.msra.mxu0 %v6744
  %9119 = vmatprep.subr.bf16.mxu0 %v6753
  %9120 = vmatpush1.bf16.msra.mxu0 %v6752
  %9121 = vmatprep.subr.bf16.mxu0 %v6761
  %9122 = vmatpush1.bf16.msra.mxu0 %v6760
  %9123 = vmatprep.subr.bf16.mxu0 %v6769
  %9124 = vmatpush1.bf16.msra.mxu0 %v6768
  %9125 = vmatprep.subr.bf16.mxu0 %v6777
  %9126 = vmatpush1.bf16.msra.mxu0 %v6776
  %9127 = vmatprep.subr.bf16.mxu0 %v6785
  %9128 = vmatpush1.bf16.msra.mxu0 %v6784
  %9129 = vmatprep.subr.bf16.mxu0 %v6793
  %9130 = vmatpush1.bf16.msra.mxu0 %v6792
  %9131 = vmatprep.subr.bf16.mxu0 %v6801
  %9132 = vmatpush1.bf16.msra.mxu0 %v6800
  %9133 = vmatprep.subr.bf16.mxu0 %v6809
  %9134 = vmatpush1.bf16.msra.mxu0 %v6808
  %9135 = vmatprep.subr.bf16.mxu0 %v6817
  %9136 = vmatpush1.bf16.msra.mxu0 %v6816
  %9137 = vmatprep.mubr.bf16.mxu0 %v8899
  %9138 = vmatmul.mubr.bf16.gmra.mrb[0].mxu0 %v8898
  %v9139 = vpop.f32.mrb[0].mxu0
  %v9140 = vadd.f32 %v9099, %v9139
  %v9141 = vpop.f32.mrb[0].mxu0
  %v9142 = vadd.f32 %v9101, %v9141
  %v9143 = vpop.f32.mrb[0].mxu0
  %v9144 = vpop.f32.mrb[0].mxu0
  %9145 = vdwg.mxu0
  %9146 = vmatprep.subr.bf16.mxu0 %v6571
  %9147 = vmatpush1.bf16.msra.mxu0 %v6570
  %9148 = vmatprep.subr.bf16.mxu0 %v6579
  %9149 = vmatpush1.bf16.msra.mxu0 %v6578
  %9150 = vmatprep.subr.bf16.mxu0 %v6587
  %9151 = vmatpush1.bf16.msra.mxu0 %v6586
  %9152 = vmatprep.subr.bf16.mxu0 %v6595
  %9153 = vmatpush1.bf16.msra.mxu0 %v6594
  %9154 = vmatprep.subr.bf16.mxu0 %v6603
  %9155 = vmatpush1.bf16.msra.mxu0 %v6602
  %9156 = vmatprep.subr.bf16.mxu0 %v6611
  %9157 = vmatpush1.bf16.msra.mxu0 %v6610
  %9158 = vmatprep.subr.bf16.mxu0 %v6619
  %9159 = vmatpush1.bf16.msra.mxu0 %v6618
  %9160 = vmatprep.subr.bf16.mxu0 %v6627
  %9161 = vmatpush1.bf16.msra.mxu0 %v6626
  %9162 = vmatprep.subr.bf16.mxu0 %v6635
  %9163 = vmatpush1.bf16.msra.mxu0 %v6634
  %9164 = vmatprep.subr.bf16.mxu0 %v6643
  %9165 = vmatpush1.bf16.msra.mxu0 %v6642
  %9166 = vmatprep.subr.bf16.mxu0 %v6651
  %9167 = vmatpush1.bf16.msra.mxu0 %v6650
  %9168 = vmatprep.subr.bf16.mxu0 %v6659
  %9169 = vmatpush1.bf16.msra.mxu0 %v6658
  %9170 = vmatprep.subr.bf16.mxu0 %v6667
  %9171 = vmatpush1.bf16.msra.mxu0 %v6666
  %9172 = vmatprep.subr.bf16.mxu0 %v6675
  %9173 = vmatpush1.bf16.msra.mxu0 %v6674
  %9174 = vmatprep.subr.bf16.mxu0 %v6683
  %9175 = vmatpush1.bf16.msra.mxu0 %v6682
  %9176 = vmatprep.subr.bf16.mxu0 %v6691
  %9177 = vmatpush1.bf16.msra.mxu0 %v6690
  %9178 = vmatprep.mubr.bf16.mxu0 %v8897
  %9179 = vmatmul.mubr.bf16.gmra.mrb[0].mxu0 %v8896
  %v9180 = vpop.f32.mrb[0].mxu0
  %v9181 = vadd.f32 %v3489, %v9180
  %v9182 = vpop.f32.mrb[0].mxu0
  %v9183 = vadd.f32 %v3493, %v9182
  %v9184 = vpop.f32.mrb[0].mxu0
  %v9185 = vpop.f32.mrb[0].mxu0
  %9186 = vdwg.mxu0
  %9187 = vmatprep.subr.bf16.mxu0 %v6699
  %9188 = vmatpush1.bf16.msra.mxu0 %v6698
  %9189 = vmatprep.subr.bf16.mxu0 %v6707
  %9190 = vmatpush1.bf16.msra.mxu0 %v6706
  %9191 = vmatprep.subr.bf16.mxu0 %v6715
  %9192 = vmatpush1.bf16.msra.mxu0 %v6714
  %9193 = vmatprep.subr.bf16.mxu0 %v6723
  %9194 = vmatpush1.bf16.msra.mxu0 %v6722
  %9195 = vmatprep.subr.bf16.mxu0 %v6731
  %9196 = vmatpush1.bf16.msra.mxu0 %v6730
  %9197 = vmatprep.subr.bf16.mxu0 %v6739
  %9198 = vmatpush1.bf16.msra.mxu0 %v6738
  %9199 = vmatprep.subr.bf16.mxu0 %v6747
  %9200 = vmatpush1.bf16.msra.mxu0 %v6746
  %9201 = vmatprep.subr.bf16.mxu0 %v6755
  %9202 = vmatpush1.bf16.msra.mxu0 %v6754
  %9203 = vmatprep.subr.bf16.mxu0 %v6763
  %9204 = vmatpush1.bf16.msra.mxu0 %v6762
  %9205 = vmatprep.subr.bf16.mxu0 %v6771
  %9206 = vmatpush1.bf16.msra.mxu0 %v6770
  %9207 = vmatprep.subr.bf16.mxu0 %v6779
  %9208 = vmatpush1.bf16.msra.mxu0 %v6778
  %9209 = vmatprep.subr.bf16.mxu0 %v6787
  %9210 = vmatpush1.bf16.msra.mxu0 %v6786
  %9211 = vmatprep.subr.bf16.mxu0 %v6795
  %9212 = vmatpush1.bf16.msra.mxu0 %v6794
  %9213 = vmatprep.subr.bf16.mxu0 %v6803
  %9214 = vmatpush1.bf16.msra.mxu0 %v6802
  %9215 = vmatprep.subr.bf16.mxu0 %v6811
  %9216 = vmatpush1.bf16.msra.mxu0 %v6810
  %9217 = vmatprep.subr.bf16.mxu0 %v6819
  %9218 = vmatpush1.bf16.msra.mxu0 %v6818
  %9219 = vmatprep.mubr.bf16.mxu0 %v8899
  %9220 = vmatmul.mubr.bf16.gmra.mrb[0].mxu0 %v8898
  %v9221 = vpop.f32.mrb[0].mxu0
  %v9222 = vadd.f32 %v9181, %v9221
  %v9223 = vpop.f32.mrb[0].mxu0
  %v9224 = vadd.f32 %v9183, %v9223
  %v9225 = vpop.f32.mrb[0].mxu0
  %v9226 = vpop.f32.mrb[0].mxu0
  %9227 = vdwg.mxu0
  %v9228 = vxor.u32 %v8976, 2147483648
  %v9229 = vxor.u32 %v8978, 2147483648
  %v9230 = vxor.u32 %v9058, 2147483648
  %v9231 = vxor.u32 %v9060, 2147483648
  %v9232 = vxor.u32 %v9140, 2147483648
  %v9233 = vxor.u32 %v9142, 2147483648
  %v9234 = vmul.f32 %v9228, 1.442695
  %v9235 = vpow.pop %v9234
  %v9236 = vmul.f32 %v9229, 1.442695
  %v9237 = vpow.pop %v9236
  %v9238 = vmul.f32 %v9230, 1.442695
  %v9239 = vpow.pop %v9238
  %v9240 = vmul.f32 %v9231, 1.442695
  %v9241 = vpow.pop %v9240
  %v9242 = vmul.f32 %v9232, 1.442695
  %v9243 = vpow.pop %v9242
  %v9244 = vmul.f32 %v9233, 1.442695
  %v9245 = vpow.pop %v9244
  %v9246 = vadd.f32 %v9235, 1.0
  %v9247 = vadd.f32 %v9237, 1.0
  %v9248 = vadd.f32 %v9239, 1.0
  %v9249 = vadd.f32 %v9241, 1.0
  %v9250 = vadd.f32 %v9243, 1.0
  %v9251 = vadd.f32 %v9245, 1.0
  %v9252 = vrcp.pop %v9246
  %v9253 = vmul.f32 1.0, %v9252
  %v9254 = vrcp.pop %v9247
  %v9255 = vmul.f32 1.0, %v9254
  %v9256 = vrcp.pop %v9248
  %v9257 = vmul.f32 1.0, %v9256
  %v9258 = vrcp.pop %v9249
  %v9259 = vmul.f32 1.0, %v9258
  %v9260 = vrcp.pop %v9250
  %v9261 = vmul.f32 1.0, %v9260
  %v9262 = vrcp.pop %v9251
  %v9263 = vmul.f32 1.0, %v9262
  %v9264 = vtanh.pop %v9222
  %v9265 = vtanh.pop %v9224
  %v9266 = vmul.f32 %v9257, %v8662
  %v9267 = vmul.f32 %v9259, %v8663
  %v9268 = vmul.f32 %v9253, %v9264
  %v9269 = vmul.f32 %v9255, %v9265
  %v9270 = vadd.f32 %v9266, %v9268
  %v9271 = vadd.f32 %v9267, %v9269
  %v9272 = vtanh.pop %v9270
  %v9273 = vtanh.pop %v9271
  %v9274 = vmul.f32 %v9261, %v9272
  %v9275 = vmul.f32 %v9263, %v9273
  %v9276 = vld [vmem:[#allocation2 + $0x140] sm:$0xff]
  %v9277 = vld [vmem:[#allocation2 + $0x148] sm:$0xff]
  %v9278 = vld [vmem:[#allocation2 + $0x150] sm:$0xff]
  %v9279 = vld [vmem:[#allocation2 + $0x158] sm:$0xff]
  %v9280 = vld [vmem:[#allocation2 + $0x160] sm:$0xff]
  %v9281 = vld [vmem:[#allocation2 + $0x168] sm:$0xff]
  %v9282 = vld [vmem:[#allocation2 + $0x170] sm:$0xff]
  %v9283 = vld [vmem:[#allocation2 + $0x178] sm:$0xff]
  %9284 = vmatprep.subr.bf16.mxu0 %v5061
  %9285 = vmatpush1.bf16.msra.mxu0 %v5060
  %9286 = vmatprep.subr.bf16.mxu0 %v5069
  %9287 = vmatpush1.bf16.msra.mxu0 %v5068
  %9288 = vmatprep.subr.bf16.mxu0 %v5077
  %9289 = vmatpush1.bf16.msra.mxu0 %v5076
  %9290 = vmatprep.subr.bf16.mxu0 %v5085
  %9291 = vmatpush1.bf16.msra.mxu0 %v5084
  %9292 = vmatprep.subr.bf16.mxu0 %v5093
  %9293 = vmatpush1.bf16.msra.mxu0 %v5092
  %9294 = vmatprep.subr.bf16.mxu0 %v5101
  %9295 = vmatpush1.bf16.msra.mxu0 %v5100
  %9296 = vmatprep.subr.bf16.mxu0 %v5109
  %9297 = vmatpush1.bf16.msra.mxu0 %v5108
  %9298 = vmatprep.subr.bf16.mxu0 %v5117
  %9299 = vmatpush1.bf16.msra.mxu0 %v5116
  %9300 = vmatprep.subr.bf16.mxu0 %v5125
  %9301 = vmatpush1.bf16.msra.mxu0 %v5124
  %9302 = vmatprep.subr.bf16.mxu0 %v5133
  %9303 = vmatpush1.bf16.msra.mxu0 %v5132
  %9304 = vmatprep.subr.bf16.mxu0 %v5141
  %9305 = vmatpush1.bf16.msra.mxu0 %v5140
  %9306 = vmatprep.subr.bf16.mxu0 %v5149
  %9307 = vmatpush1.bf16.msra.mxu0 %v5148
  %9308 = vmatprep.subr.bf16.mxu0 %v5157
  %9309 = vmatpush1.bf16.msra.mxu0 %v5156
  %9310 = vmatprep.subr.bf16.mxu0 %v5165
  %9311 = vmatpush1.bf16.msra.mxu0 %v5164
  %9312 = vmatprep.subr.bf16.mxu0 %v5173
  %9313 = vmatpush1.bf16.msra.mxu0 %v5172
  %9314 = vmatprep.subr.bf16.mxu0 %v5181
  %9315 = vmatpush1.bf16.msra.mxu0 %v5180
  %9316 = vmatprep.mubr.bf16.mxu0 %v8897
  %9317 = vmatmul.mubr.bf16.gmra.mrb[0].mxu0 %v8896
  %v9318 = vpop.f32.mrb[0].mxu0
  %v9319 = vadd.f32 0.0, %v9318
  %v9320 = vpop.f32.mrb[0].mxu0
  %v9321 = vadd.f32 0.0, %v9320
  %v9322 = vpop.f32.mrb[0].mxu0
  %v9323 = vpop.f32.mrb[0].mxu0
  %9324 = vdwg.mxu0
  %9325 = vmatprep.subr.bf16.mxu0 %v5063
  %9326 = vmatpush1.bf16.msra.mxu0 %v5062
  %9327 = vmatprep.subr.bf16.mxu0 %v5071
  %9328 = vmatpush1.bf16.msra.mxu0 %v5070
  %9329 = vmatprep.subr.bf16.mxu0 %v5079
  %9330 = vmatpush1.bf16.msra.mxu0 %v5078
  %9331 = vmatprep.subr.bf16.mxu0 %v5087
  %9332 = vmatpush1.bf16.msra.mxu0 %v5086
  %9333 = vmatprep.subr.bf16.mxu0 %v5095
  %9334 = vmatpush1.bf16.msra.mxu0 %v5094
  %9335 = vmatprep.subr.bf16.mxu0 %v5103
  %9336 = vmatpush1.bf16.msra.mxu0 %v5102
  %9337 = vmatprep.subr.bf16.mxu0 %v5111
  %9338 = vmatpush1.bf16.msra.mxu0 %v5110
  %9339 = vmatprep.subr.bf16.mxu0 %v5119
  %9340 = vmatpush1.bf16.msra.mxu0 %v5118
  %9341 = vmatprep.subr.bf16.mxu0 %v5127
  %9342 = vmatpush1.bf16.msra.mxu0 %v5126
  %9343 = vmatprep.subr.bf16.mxu0 %v5135
  %9344 = vmatpush1.bf16.msra.mxu0 %v5134
  %9345 = vmatprep.subr.bf16.mxu0 %v5143
  %9346 = vmatpush1.bf16.msra.mxu0 %v5142
  %9347 = vmatprep.subr.bf16.mxu0 %v5151
  %9348 = vmatpush1.bf16.msra.mxu0 %v5150
  %9349 = vmatprep.subr.bf16.mxu0 %v5159
  %9350 = vmatpush1.bf16.msra.mxu0 %v5158
  %9351 = vmatprep.subr.bf16.mxu0 %v5167
  %9352 = vmatpush1.bf16.msra.mxu0 %v5166
  %9353 = vmatprep.subr.bf16.mxu0 %v5175
  %9354 = vmatpush1.bf16.msra.mxu0 %v5174
  %9355 = vmatprep.subr.bf16.mxu0 %v5183
  %9356 = vmatpush1.bf16.msra.mxu0 %v5182
  %9357 = vmatprep.mubr.bf16.mxu0 %v8897
  %9358 = vmatmul.mubr.bf16.gmra.mrb[0].mxu0 %v8896
  %v9359 = vpop.f32.mrb[0].mxu0
  %v9360 = vadd.f32 0.0, %v9359
  %v9361 = vpop.f32.mrb[0].mxu0
  %v9362 = vadd.f32 0.0, %v9361
  %v9363 = vpop.f32.mrb[0].mxu0
  %v9364 = vpop.f32.mrb[0].mxu0
  %9365 = vdwg.mxu0
  %9366 = vmatprep.subr.bf16.mxu0 %v5065
  %9367 = vmatpush1.bf16.msra.mxu0 %v5064
  %9368 = vmatprep.subr.bf16.mxu0 %v5073
  %9369 = vmatpush1.bf16.msra.mxu0 %v5072
  %9370 = vmatprep.subr.bf16.mxu0 %v5081
  %9371 = vmatpush1.bf16.msra.mxu0 %v5080
  %9372 = vmatprep.subr.bf16.mxu0 %v5089
  %9373 = vmatpush1.bf16.msra.mxu0 %v5088
  %9374 = vmatprep.subr.bf16.mxu0 %v5097
  %9375 = vmatpush1.bf16.msra.mxu0 %v5096
  %9376 = vmatprep.subr.bf16.mxu0 %v5105
  %9377 = vmatpush1.bf16.msra.mxu0 %v5104
  %9378 = vmatprep.subr.bf16.mxu0 %v5113
  %9379 = vmatpush1.bf16.msra.mxu0 %v5112
  %9380 = vmatprep.subr.bf16.mxu0 %v5121
  %9381 = vmatpush1.bf16.msra.mxu0 %v5120
  %9382 = vmatprep.subr.bf16.mxu0 %v5129
  %9383 = vmatpush1.bf16.msra.mxu0 %v5128
  %9384 = vmatprep.subr.bf16.mxu0 %v5137
  %9385 = vmatpush1.bf16.msra.mxu0 %v5136
  %9386 = vmatprep.subr.bf16.mxu0 %v5145
  %9387 = vmatpush1.bf16.msra.mxu0 %v5144
  %9388 = vmatprep.subr.bf16.mxu0 %v5153
  %9389 = vmatpush1.bf16.msra.mxu0 %v5152
  %9390 = vmatprep.subr.bf16.mxu0 %v5161
  %9391 = vmatpush1.bf16.msra.mxu0 %v5160
  %9392 = vmatprep.subr.bf16.mxu0 %v5169
  %9393 = vmatpush1.bf16.msra.mxu0 %v5168
  %9394 = vmatprep.subr.bf16.mxu0 %v5177
  %9395 = vmatpush1.bf16.msra.mxu0 %v5176
  %9396 = vmatprep.subr.bf16.mxu0 %v5185
  %9397 = vmatpush1.bf16.msra.mxu0 %v5184
  %9398 = vmatprep.mubr.bf16.mxu0 %v8897
  %9399 = vmatmul.mubr.bf16.gmra.mrb[0].mxu0 %v8896
  %v9400 = vpop.f32.mrb[0].mxu0
  %v9401 = vadd.f32 0.0, %v9400
  %v9402 = vpop.f32.mrb[0].mxu0
  %v9403 = vadd.f32 0.0, %v9402
  %v9404 = vpop.f32.mrb[0].mxu0
  %v9405 = vpop.f32.mrb[0].mxu0
  %9406 = vdwg.mxu0
  %9407 = vmatprep.subr.bf16.mxu0 %v5067
  %9408 = vmatpush1.bf16.msra.mxu0 %v5066
  %9409 = vmatprep.subr.bf16.mxu0 %v5075
  %9410 = vmatpush1.bf16.msra.mxu0 %v5074
  %9411 = vmatprep.subr.bf16.mxu0 %v5083
  %9412 = vmatpush1.bf16.msra.mxu0 %v5082
  %9413 = vmatprep.subr.bf16.mxu0 %v5091
  %9414 = vmatpush1.bf16.msra.mxu0 %v5090
  %9415 = vmatprep.subr.bf16.mxu0 %v5099
  %9416 = vmatpush1.bf16.msra.mxu0 %v5098
  %9417 = vmatprep.subr.bf16.mxu0 %v5107
  %9418 = vmatpush1.bf16.msra.mxu0 %v5106
  %9419 = vmatprep.subr.bf16.mxu0 %v5115
  %9420 = vmatpush1.bf16.msra.mxu0 %v5114
  %9421 = vmatprep.subr.bf16.mxu0 %v5123
  %9422 = vmatpush1.bf16.msra.mxu0 %v5122
  %9423 = vmatprep.subr.bf16.mxu0 %v5131
  %9424 = vmatpush1.bf16.msra.mxu0 %v5130
  %9425 = vmatprep.subr.bf16.mxu0 %v5139
  %9426 = vmatpush1.bf16.msra.mxu0 %v5138
  %9427 = vmatprep.subr.bf16.mxu0 %v5147
  %9428 = vmatpush1.bf16.msra.mxu0 %v5146
  %9429 = vmatprep.subr.bf16.mxu0 %v5155
  %9430 = vmatpush1.bf16.msra.mxu0 %v5154
  %9431 = vmatprep.subr.bf16.mxu0 %v5163
  %9432 = vmatpush1.bf16.msra.mxu0 %v5162
  %9433 = vmatprep.subr.bf16.mxu0 %v5171
  %9434 = vmatpush1.bf16.msra.mxu0 %v5170
  %9435 = vmatprep.subr.bf16.mxu0 %v5179
  %9436 = vmatpush1.bf16.msra.mxu0 %v5178
  %9437 = vmatprep.subr.bf16.mxu0 %v5187
  %9438 = vmatpush1.bf16.msra.mxu0 %v5186
  %9439 = vmatprep.mubr.bf16.mxu0 %v8897
  %9440 = vmatmul.mubr.bf16.gmra.mrb[0].mxu0 %v8896
  %v9441 = vpop.f32.mrb[0].mxu0
  %v9442 = vadd.f32 0.0, %v9441
  %v9443 = vpop.f32.mrb[0].mxu0
  %v9444 = vadd.f32 0.0, %v9443
  %v9445 = vpop.f32.mrb[0].mxu0
  %v9446 = vpop.f32.mrb[0].mxu0
  %9447 = vdwg.mxu0
  %v9448 = vadd.f32 %v9276, %v9319
  %v9449 = vadd.f32 %v9277, %v9321
  %v9450 = vadd.f32 %v9278, %v9360
  %v9451 = vadd.f32 %v9279, %v9362
  %v9452 = vadd.f32 %v9280, %v9401
  %v9453 = vadd.f32 %v9281, %v9403
  %v9454 = vadd.f32 %v9282, %v9442
  %v9455 = vadd.f32 %v9283, %v9444
  %v9456 = vxor.u32 %v9448, 2147483648
  %v9457 = vxor.u32 %v9449, 2147483648
  %v9458 = vxor.u32 %v9450, 2147483648
  %v9459 = vxor.u32 %v9451, 2147483648
  %v9460 = vxor.u32 %v9452, 2147483648
  %v9461 = vxor.u32 %v9453, 2147483648
  %v9462 = vmul.f32 %v9456, 1.442695
  %v9463 = vpow.pop %v9462
  %v9464 = vmul.f32 %v9457, 1.442695
  %v9465 = vpow.pop %v9464
  %v9466 = vmul.f32 %v9458, 1.442695
  %v9467 = vpow.pop %v9466
  %v9468 = vmul.f32 %v9459, 1.442695
  %v9469 = vpow.pop %v9468
  %v9470 = vmul.f32 %v9460, 1.442695
  %v9471 = vpow.pop %v9470
  %v9472 = vmul.f32 %v9461, 1.442695
  %v9473 = vpow.pop %v9472
  %v9474 = vadd.f32 %v9463, 1.0
  %v9475 = vadd.f32 %v9465, 1.0
  %v9476 = vadd.f32 %v9467, 1.0
  %v9477 = vadd.f32 %v9469, 1.0
  %v9478 = vadd.f32 %v9471, 1.0
  %v9479 = vadd.f32 %v9473, 1.0
  %v9480 = vrcp.pop %v9474
  %v9481 = vmul.f32 1.0, %v9480
  %v9482 = vrcp.pop %v9475
  %v9483 = vmul.f32 1.0, %v9482
  %v9484 = vrcp.pop %v9476
  %v9485 = vmul.f32 1.0, %v9484
  %v9486 = vrcp.pop %v9477
  %v9487 = vmul.f32 1.0, %v9486
  %v9488 = vrcp.pop %v9478
  %v9489 = vmul.f32 1.0, %v9488
  %v9490 = vrcp.pop %v9479
  %v9491 = vmul.f32 1.0, %v9490
  %v9492 = vtanh.pop %v9454
  %v9493 = vtanh.pop %v9455
  %v9494 = vmul.f32 %v9485, %v8890
  %v9495 = vmul.f32 %v9487, %v8891
  %v9496 = vmul.f32 %v9481, %v9492
  %v9497 = vmul.f32 %v9483, %v9493
  %v9498 = vadd.f32 %v9494, %v9496
  %v9499 = vadd.f32 %v9495, %v9497
  %v9500 = vtanh.pop %v9498
  %v9501 = vtanh.pop %v9499
  %v9502 = vmul.f32 %v9489, %v9500
  %v9503 = vmul.f32 %v9491, %v9501
  %v9504 = vpack.c.bf16 %v9502, %v9502
  %v9505 = vpack.c.bf16 %v9503, %v9503
  %v9506 = vpack.c.bf16 %v9274, %v9274
  %v9507 = vpack.c.bf16 %v9275, %v9275
  %9508 = vmatprep.subr.bf16.mxu0 %v6565
  %9509 = vmatpush1.bf16.msra.mxu0 %v6564
  %9510 = vmatprep.subr.bf16.mxu0 %v6573
  %9511 = vmatpush1.bf16.msra.mxu0 %v6572
  %9512 = vmatprep.subr.bf16.mxu0 %v6581
  %9513 = vmatpush1.bf16.msra.mxu0 %v6580
  %9514 = vmatprep.subr.bf16.mxu0 %v6589
  %9515 = vmatpush1.bf16.msra.mxu0 %v6588
  %9516 = vmatprep.subr.bf16.mxu0 %v6597
  %9517 = vmatpush1.bf16.msra.mxu0 %v6596
  %9518 = vmatprep.subr.bf16.mxu0 %v6605
  %9519 = vmatpush1.bf16.msra.mxu0 %v6604
  %9520 = vmatprep.subr.bf16.mxu0 %v6613
  %9521 = vmatpush1.bf16.msra.mxu0 %v6612
  %9522 = vmatprep.subr.bf16.mxu0 %v6621
  %9523 = vmatpush1.bf16.msra.mxu0 %v6620
  %9524 = vmatprep.subr.bf16.mxu0 %v6629
  %9525 = vmatpush1.bf16.msra.mxu0 %v6628
  %9526 = vmatprep.subr.bf16.mxu0 %v6637
  %9527 = vmatpush1.bf16.msra.mxu0 %v6636
  %9528 = vmatprep.subr.bf16.mxu0 %v6645
  %9529 = vmatpush1.bf16.msra.mxu0 %v6644
  %9530 = vmatprep.subr.bf16.mxu0 %v6653
  %9531 = vmatpush1.bf16.msra.mxu0 %v6652
  %9532 = vmatprep.subr.bf16.mxu0 %v6661
  %9533 = vmatpush1.bf16.msra.mxu0 %v6660
  %9534 = vmatprep.subr.bf16.mxu0 %v6669
  %9535 = vmatpush1.bf16.msra.mxu0 %v6668
  %9536 = vmatprep.subr.bf16.mxu0 %v6677
  %9537 = vmatpush1.bf16.msra.mxu0 %v6676
  %9538 = vmatprep.subr.bf16.mxu0 %v6685
  %9539 = vmatpush1.bf16.msra.mxu0 %v6684
  %9540 = vmatprep.mubr.bf16.mxu0 %v9505
  %9541 = vmatmul.mubr.bf16.gmra.mrb[0].mxu0 %v9504
  %v9542 = vpop.f32.mrb[0].mxu0
  %v9543 = vadd.f32 %v3465, %v9542
  %v9544 = vpop.f32.mrb[0].mxu0
  %v9545 = vadd.f32 %v3469, %v9544
  %v9546 = vpop.f32.mrb[0].mxu0
  %v9547 = vpop.f32.mrb[0].mxu0
  %9548 = vdwg.mxu0
  %9549 = vmatprep.subr.bf16.mxu0 %v6693
  %9550 = vmatpush1.bf16.msra.mxu0 %v6692
  %9551 = vmatprep.subr.bf16.mxu0 %v6701
  %9552 = vmatpush1.bf16.msra.mxu0 %v6700
  %9553 = vmatprep.subr.bf16.mxu0 %v6709
  %9554 = vmatpush1.bf16.msra.mxu0 %v6708
  %9555 = vmatprep.subr.bf16.mxu0 %v6717
  %9556 = vmatpush1.bf16.msra.mxu0 %v6716
  %9557 = vmatprep.subr.bf16.mxu0 %v6725
  %9558 = vmatpush1.bf16.msra.mxu0 %v6724
  %9559 = vmatprep.subr.bf16.mxu0 %v6733
  %9560 = vmatpush1.bf16.msra.mxu0 %v6732
  %9561 = vmatprep.subr.bf16.mxu0 %v6741
  %9562 = vmatpush1.bf16.msra.mxu0 %v6740
  %9563 = vmatprep.subr.bf16.mxu0 %v6749
  %9564 = vmatpush1.bf16.msra.mxu0 %v6748
  %9565 = vmatprep.subr.bf16.mxu0 %v6757
  %9566 = vmatpush1.bf16.msra.mxu0 %v6756
  %9567 = vmatprep.subr.bf16.mxu0 %v6765
  %9568 = vmatpush1.bf16.msra.mxu0 %v6764
  %9569 = vmatprep.subr.bf16.mxu0 %v6773
  %9570 = vmatpush1.bf16.msra.mxu0 %v6772
  %9571 = vmatprep.subr.bf16.mxu0 %v6781
  %9572 = vmatpush1.bf16.msra.mxu0 %v6780
  %9573 = vmatprep.subr.bf16.mxu0 %v6789
  %9574 = vmatpush1.bf16.msra.mxu0 %v6788
  %9575 = vmatprep.subr.bf16.mxu0 %v6797
  %9576 = vmatpush1.bf16.msra.mxu0 %v6796
  %9577 = vmatprep.subr.bf16.mxu0 %v6805
  %9578 = vmatpush1.bf16.msra.mxu0 %v6804
  %9579 = vmatprep.subr.bf16.mxu0 %v6813
  %9580 = vmatpush1.bf16.msra.mxu0 %v6812
  %9581 = vmatprep.mubr.bf16.mxu0 %v9507
  %9582 = vmatmul.mubr.bf16.gmra.mrb[0].mxu0 %v9506
  %v9583 = vpop.f32.mrb[0].mxu0
  %v9584 = vadd.f32 %v9543, %v9583
  %v9585 = vpop.f32.mrb[0].mxu0
  %v9586 = vadd.f32 %v9545, %v9585
  %v9587 = vpop.f32.mrb[0].mxu0
  %v9588 = vpop.f32.mrb[0].mxu0
  %9589 = vdwg.mxu0
  %9590 = vmatprep.subr.bf16.mxu0 %v6567
  %9591 = vmatpush1.bf16.msra.mxu0 %v6566
  %9592 = vmatprep.subr.bf16.mxu0 %v6575
  %9593 = vmatpush1.bf16.msra.mxu0 %v6574
  %9594 = vmatprep.subr.bf16.mxu0 %v6583
  %9595 = vmatpush1.bf16.msra.mxu0 %v6582
  %9596 = vmatprep.subr.bf16.mxu0 %v6591
  %9597 = vmatpush1.bf16.msra.mxu0 %v6590
  %9598 = vmatprep.subr.bf16.mxu0 %v6599
  %9599 = vmatpush1.bf16.msra.mxu0 %v6598
  %9600 = vmatprep.subr.bf16.mxu0 %v6607
  %9601 = vmatpush1.bf16.msra.mxu0 %v6606
  %9602 = vmatprep.subr.bf16.mxu0 %v6615
  %9603 = vmatpush1.bf16.msra.mxu0 %v6614
  %9604 = vmatprep.subr.bf16.mxu0 %v6623
  %9605 = vmatpush1.bf16.msra.mxu0 %v6622
  %9606 = vmatprep.subr.bf16.mxu0 %v6631
  %9607 = vmatpush1.bf16.msra.mxu0 %v6630
  %9608 = vmatprep.subr.bf16.mxu0 %v6639
  %9609 = vmatpush1.bf16.msra.mxu0 %v6638
  %9610 = vmatprep.subr.bf16.mxu0 %v6647
  %9611 = vmatpush1.bf16.msra.mxu0 %v6646
  %9612 = vmatprep.subr.bf16.mxu0 %v6655
  %9613 = vmatpush1.bf16.msra.mxu0 %v6654
  %9614 = vmatprep.subr.bf16.mxu0 %v6663
  %9615 = vmatpush1.bf16.msra.mxu0 %v6662
  %9616 = vmatprep.subr.bf16.mxu0 %v6671
  %9617 = vmatpush1.bf16.msra.mxu0 %v6670
  %9618 = vmatprep.subr.bf16.mxu0 %v6679
  %9619 = vmatpush1.bf16.msra.mxu0 %v6678
  %9620 = vmatprep.subr.bf16.mxu0 %v6687
  %9621 = vmatpush1.bf16.msra.mxu0 %v6686
  %9622 = vmatprep.mubr.bf16.mxu0 %v9505
  %9623 = vmatmul.mubr.bf16.gmra.mrb[0].mxu0 %v9504
  %v9624 = vpop.f32.mrb[0].mxu0
  %v9625 = vadd.f32 %v3473, %v9624
  %v9626 = vpop.f32.mrb[0].mxu0
  %v9627 = vadd.f32 %v3477, %v9626
  %v9628 = vpop.f32.mrb[0].mxu0
  %v9629 = vpop.f32.mrb[0].mxu0
  %9630 = vdwg.mxu0
  %9631 = vmatprep.subr.bf16.mxu0 %v6695
  %9632 = vmatpush1.bf16.msra.mxu0 %v6694
  %9633 = vmatprep.subr.bf16.mxu0 %v6703
  %9634 = vmatpush1.bf16.msra.mxu0 %v6702
  %9635 = vmatprep.subr.bf16.mxu0 %v6711
  %9636 = vmatpush1.bf16.msra.mxu0 %v6710
  %9637 = vmatprep.subr.bf16.mxu0 %v6719
  %9638 = vmatpush1.bf16.msra.mxu0 %v6718
  %9639 = vmatprep.subr.bf16.mxu0 %v6727
  %9640 = vmatpush1.bf16.msra.mxu0 %v6726
  %9641 = vmatprep.subr.bf16.mxu0 %v6735
  %9642 = vmatpush1.bf16.msra.mxu0 %v6734
  %9643 = vmatprep.subr.bf16.mxu0 %v6743
  %9644 = vmatpush1.bf16.msra.mxu0 %v6742
  %9645 = vmatprep.subr.bf16.mxu0 %v6751
  %9646 = vmatpush1.bf16.msra.mxu0 %v6750
  %9647 = vmatprep.subr.bf16.mxu0 %v6759
  %9648 = vmatpush1.bf16.msra.mxu0 %v6758
  %9649 = vmatprep.subr.bf16.mxu0 %v6767
  %9650 = vmatpush1.bf16.msra.mxu0 %v6766
  %9651 = vmatprep.subr.bf16.mxu0 %v6775
  %9652 = vmatpush1.bf16.msra.mxu0 %v6774
  %9653 = vmatprep.subr.bf16.mxu0 %v6783
  %9654 = vmatpush1.bf16.msra.mxu0 %v6782
  %9655 = vmatprep.subr.bf16.mxu0 %v6791
  %9656 = vmatpush1.bf16.msra.mxu0 %v6790
  %9657 = vmatprep.subr.bf16.mxu0 %v6799
  %9658 = vmatpush1.bf16.msra.mxu0 %v6798
  %9659 = vmatprep.subr.bf16.mxu0 %v6807
  %9660 = vmatpush1.bf16.msra.mxu0 %v6806
  %9661 = vmatprep.subr.bf16.mxu0 %v6815
  %9662 = vmatpush1.bf16.msra.mxu0 %v6814
  %9663 = vmatprep.mubr.bf16.mxu0 %v9507
  %9664 = vmatmul.mubr.bf16.gmra.mrb[0].mxu0 %v9506
  %v9665 = vpop.f32.mrb[0].mxu0
  %v9666 = vadd.f32 %v9625, %v9665
  %v9667 = vpop.f32.mrb[0].mxu0
  %v9668 = vadd.f32 %v9627, %v9667
  %v9669 = vpop.f32.mrb[0].mxu0
  %v9670 = vpop.f32.mrb[0].mxu0
  %9671 = vdwg.mxu0
  %9672 = vmatprep.subr.bf16.mxu0 %v6569
  %9673 = vmatpush1.bf16.msra.mxu0 %v6568
  %9674 = vmatprep.subr.bf16.mxu0 %v6577
  %9675 = vmatpush1.bf16.msra.mxu0 %v6576
  %9676 = vmatprep.subr.bf16.mxu0 %v6585
  %9677 = vmatpush1.bf16.msra.mxu0 %v6584
  %9678 = vmatprep.subr.bf16.mxu0 %v6593
  %9679 = vmatpush1.bf16.msra.mxu0 %v6592
  %9680 = vmatprep.subr.bf16.mxu0 %v6601
  %9681 = vmatpush1.bf16.msra.mxu0 %v6600
  %9682 = vmatprep.subr.bf16.mxu0 %v6609
  %9683 = vmatpush1.bf16.msra.mxu0 %v6608
  %9684 = vmatprep.subr.bf16.mxu0 %v6617
  %9685 = vmatpush1.bf16.msra.mxu0 %v6616
  %9686 = vmatprep.subr.bf16.mxu0 %v6625
  %9687 = vmatpush1.bf16.msra.mxu0 %v6624
  %9688 = vmatprep.subr.bf16.mxu0 %v6633
  %9689 = vmatpush1.bf16.msra.mxu0 %v6632
  %9690 = vmatprep.subr.bf16.mxu0 %v6641
  %9691 = vmatpush1.bf16.msra.mxu0 %v6640
  %9692 = vmatprep.subr.bf16.mxu0 %v6649
  %9693 = vmatpush1.bf16.msra.mxu0 %v6648
  %9694 = vmatprep.subr.bf16.mxu0 %v6657
  %9695 = vmatpush1.bf16.msra.mxu0 %v6656
  %9696 = vmatprep.subr.bf16.mxu0 %v6665
  %9697 = vmatpush1.bf16.msra.mxu0 %v6664
  %9698 = vmatprep.subr.bf16.mxu0 %v6673
  %9699 = vmatpush1.bf16.msra.mxu0 %v6672
  %9700 = vmatprep.subr.bf16.mxu0 %v6681
  %9701 = vmatpush1.bf16.msra.mxu0 %v6680
  %9702 = vmatprep.subr.bf16.mxu0 %v6689
  %9703 = vmatpush1.bf16.msra.mxu0 %v6688
  %9704 = vmatprep.mubr.bf16.mxu0 %v9505
  %9705 = vmatmul.mubr.bf16.gmra.mrb[0].mxu0 %v9504
  %v9706 = vpop.f32.mrb[0].mxu0
  %v9707 = vadd.f32 %v3481, %v9706
  %v9708 = vpop.f32.mrb[0].mxu0
  %v9709 = vadd.f32 %v3485, %v9708
  %v9710 = vpop.f32.mrb[0].mxu0
  %v9711 = vpop.f32.mrb[0].mxu0
  %9712 = vdwg.mxu0
  %9713 = vmatprep.subr.bf16.mxu0 %v6697
  %9714 = vmatpush1.bf16.msra.mxu0 %v6696
  %9715 = vmatprep.subr.bf16.mxu0 %v6705
  %9716 = vmatpush1.bf16.msra.mxu0 %v6704
  %9717 = vmatprep.subr.bf16.mxu0 %v6713
  %9718 = vmatpush1.bf16.msra.mxu0 %v6712
  %9719 = vmatprep.subr.bf16.mxu0 %v6721
  %9720 = vmatpush1.bf16.msra.mxu0 %v6720
  %9721 = vmatprep.subr.bf16.mxu0 %v6729
  %9722 = vmatpush1.bf16.msra.mxu0 %v6728
  %9723 = vmatprep.subr.bf16.mxu0 %v6737
  %9724 = vmatpush1.bf16.msra.mxu0 %v6736
  %9725 = vmatprep.subr.bf16.mxu0 %v6745
  %9726 = vmatpush1.bf16.msra.mxu0 %v6744
  %9727 = vmatprep.subr.bf16.mxu0 %v6753
  %9728 = vmatpush1.bf16.msra.mxu0 %v6752
  %9729 = vmatprep.subr.bf16.mxu0 %v6761
  %9730 = vmatpush1.bf16.msra.mxu0 %v6760
  %9731 = vmatprep.subr.bf16.mxu0 %v6769
  %9732 = vmatpush1.bf16.msra.mxu0 %v6768
  %9733 = vmatprep.subr.bf16.mxu0 %v6777
  %9734 = vmatpush1.bf16.msra.mxu0 %v6776
  %9735 = vmatprep.subr.bf16.mxu0 %v6785
  %9736 = vmatpush1.bf16.msra.mxu0 %v6784
  %9737 = vmatprep.subr.bf16.mxu0 %v6793
  %9738 = vmatpush1.bf16.msra.mxu0 %v6792
  %9739 = vmatprep.subr.bf16.mxu0 %v6801
  %9740 = vmatpush1.bf16.msra.mxu0 %v6800
  %9741 = vmatprep.subr.bf16.mxu0 %v6809
  %9742 = vmatpush1.bf16.msra.mxu0 %v6808
  %9743 = vmatprep.subr.bf16.mxu0 %v6817
  %9744 = vmatpush1.bf16.msra.mxu0 %v6816
  %9745 = vmatprep.mubr.bf16.mxu0 %v9507
  %9746 = vmatmul.mubr.bf16.gmra.mrb[0].mxu0 %v9506
  %v9747 = vpop.f32.mrb[0].mxu0
  %v9748 = vadd.f32 %v9707, %v9747
  %v9749 = vpop.f32.mrb[0].mxu0
  %v9750 = vadd.f32 %v9709, %v9749
  %v9751 = vpop.f32.mrb[0].mxu0
  %v9752 = vpop.f32.mrb[0].mxu0
  %9753 = vdwg.mxu0
  %9754 = vmatprep.subr.bf16.mxu0 %v6571
  %9755 = vmatpush1.bf16.msra.mxu0 %v6570
  %9756 = vmatprep.subr.bf16.mxu0 %v6579
  %9757 = vmatpush1.bf16.msra.mxu0 %v6578
  %9758 = vmatprep.subr.bf16.mxu0 %v6587
  %9759 = vmatpush1.bf16.msra.mxu0 %v6586
  %9760 = vmatprep.subr.bf16.mxu0 %v6595
  %9761 = vmatpush1.bf16.msra.mxu0 %v6594
  %9762 = vmatprep.subr.bf16.mxu0 %v6603
  %9763 = vmatpush1.bf16.msra.mxu0 %v6602
  %9764 = vmatprep.subr.bf16.mxu0 %v6611
  %9765 = vmatpush1.bf16.msra.mxu0 %v6610
  %9766 = vmatprep.subr.bf16.mxu0 %v6619
  %9767 = vmatpush1.bf16.msra.mxu0 %v6618
  %9768 = vmatprep.subr.bf16.mxu0 %v6627
  %9769 = vmatpush1.bf16.msra.mxu0 %v6626
  %9770 = vmatprep.subr.bf16.mxu0 %v6635
  %9771 = vmatpush1.bf16.msra.mxu0 %v6634
  %9772 = vmatprep.subr.bf16.mxu0 %v6643
  %9773 = vmatpush1.bf16.msra.mxu0 %v6642
  %9774 = vmatprep.subr.bf16.mxu0 %v6651
  %9775 = vmatpush1.bf16.msra.mxu0 %v6650
  %9776 = vmatprep.subr.bf16.mxu0 %v6659
  %9777 = vmatpush1.bf16.msra.mxu0 %v6658
  %9778 = vmatprep.subr.bf16.mxu0 %v6667
  %9779 = vmatpush1.bf16.msra.mxu0 %v6666
  %9780 = vmatprep.subr.bf16.mxu0 %v6675
  %9781 = vmatpush1.bf16.msra.mxu0 %v6674
  %9782 = vmatprep.subr.bf16.mxu0 %v6683
  %9783 = vmatpush1.bf16.msra.mxu0 %v6682
  %9784 = vmatprep.subr.bf16.mxu0 %v6691
  %9785 = vmatpush1.bf16.msra.mxu0 %v6690
  %9786 = vmatprep.mubr.bf16.mxu0 %v9505
  %9787 = vmatmul.mubr.bf16.gmra.mrb[0].mxu0 %v9504
  %v9788 = vpop.f32.mrb[0].mxu0
  %v9789 = vadd.f32 %v3489, %v9788
  %v9790 = vpop.f32.mrb[0].mxu0
  %v9791 = vadd.f32 %v3493, %v9790
  %v9792 = vpop.f32.mrb[0].mxu0
  %v9793 = vpop.f32.mrb[0].mxu0
  %9794 = vdwg.mxu0
  %9795 = vmatprep.subr.bf16.mxu0 %v6699
  %9796 = vmatpush1.bf16.msra.mxu0 %v6698
  %9797 = vmatprep.subr.bf16.mxu0 %v6707
  %9798 = vmatpush1.bf16.msra.mxu0 %v6706
  %9799 = vmatprep.subr.bf16.mxu0 %v6715
  %9800 = vmatpush1.bf16.msra.mxu0 %v6714
  %9801 = vmatprep.subr.bf16.mxu0 %v6723
  %9802 = vmatpush1.bf16.msra.mxu0 %v6722
  %9803 = vmatprep.subr.bf16.mxu0 %v6731
  %9804 = vmatpush1.bf16.msra.mxu0 %v6730
  %9805 = vmatprep.subr.bf16.mxu0 %v6739
  %9806 = vmatpush1.bf16.msra.mxu0 %v6738
  %9807 = vmatprep.subr.bf16.mxu0 %v6747
  %9808 = vmatpush1.bf16.msra.mxu0 %v6746
  %9809 = vmatprep.subr.bf16.mxu0 %v6755
  %9810 = vmatpush1.bf16.msra.mxu0 %v6754
  %9811 = vmatprep.subr.bf16.mxu0 %v6763
  %9812 = vmatpush1.bf16.msra.mxu0 %v6762
  %9813 = vmatprep.subr.bf16.mxu0 %v6771
  %9814 = vmatpush1.bf16.msra.mxu0 %v6770
  %9815 = vmatprep.subr.bf16.mxu0 %v6779
  %9816 = vmatpush1.bf16.msra.mxu0 %v6778
  %9817 = vmatprep.subr.bf16.mxu0 %v6787
  %9818 = vmatpush1.bf16.msra.mxu0 %v6786
  %9819 = vmatprep.subr.bf16.mxu0 %v6795
  %9820 = vmatpush1.bf16.msra.mxu0 %v6794
  %9821 = vmatprep.subr.bf16.mxu0 %v6803
  %9822 = vmatpush1.bf16.msra.mxu0 %v6802
  %9823 = vmatprep.subr.bf16.mxu0 %v6811
  %9824 = vmatpush1.bf16.msra.mxu0 %v6810
  %9825 = vmatprep.subr.bf16.mxu0 %v6819
  %9826 = vmatpush1.bf16.msra.mxu0 %v6818
  %9827 = vmatprep.mubr.bf16.mxu0 %v9507
  %9828 = vmatmul.mubr.bf16.gmra.mrb[0].mxu0 %v9506
  %v9829 = vpop.f32.mrb[0].mxu0
  %v9830 = vadd.f32 %v9789, %v9829
  %v9831 = vpop.f32.mrb[0].mxu0
  %v9832 = vadd.f32 %v9791, %v9831
  %v9833 = vpop.f32.mrb[0].mxu0
  %v9834 = vpop.f32.mrb[0].mxu0
  %9835 = vdwg.mxu0
  %v9836 = vxor.u32 %v9584, 2147483648
  %v9837 = vxor.u32 %v9586, 2147483648
  %v9838 = vxor.u32 %v9666, 2147483648
  %v9839 = vxor.u32 %v9668, 2147483648
  %v9840 = vxor.u32 %v9748, 2147483648
  %v9841 = vxor.u32 %v9750, 2147483648
  %v9842 = vmul.f32 %v9836, 1.442695
  %v9843 = vpow.pop %v9842
  %v9844 = vmul.f32 %v9837, 1.442695
  %v9845 = vpow.pop %v9844
  %v9846 = vmul.f32 %v9838, 1.442695
  %v9847 = vpow.pop %v9846
  %v9848 = vmul.f32 %v9839, 1.442695
  %v9849 = vpow.pop %v9848
  %v9850 = vmul.f32 %v9840, 1.442695
  %v9851 = vpow.pop %v9850
  %v9852 = vmul.f32 %v9841, 1.442695
  %v9853 = vpow.pop %v9852
  %v9854 = vadd.f32 %v9843, 1.0
  %v9855 = vadd.f32 %v9845, 1.0
  %v9856 = vadd.f32 %v9847, 1.0
  %v9857 = vadd.f32 %v9849, 1.0
  %v9858 = vadd.f32 %v9851, 1.0
  %v9859 = vadd.f32 %v9853, 1.0
  %v9860 = vrcp.pop %v9854
  %v9861 = vmul.f32 1.0, %v9860
  %v9862 = vrcp.pop %v9855
  %v9863 = vmul.f32 1.0, %v9862
  %v9864 = vrcp.pop %v9856
  %v9865 = vmul.f32 1.0, %v9864
  %v9866 = vrcp.pop %v9857
  %v9867 = vmul.f32 1.0, %v9866
  %v9868 = vrcp.pop %v9858
  %v9869 = vmul.f32 1.0, %v9868
  %v9870 = vrcp.pop %v9859
  %v9871 = vmul.f32 1.0, %v9870
  %v9872 = vtanh.pop %v9830
  %v9873 = vtanh.pop %v9832
  %v9874 = vmul.f32 %v9865, %v9270
  %v9875 = vmul.f32 %v9867, %v9271
  %v9876 = vmul.f32 %v9861, %v9872
  %v9877 = vmul.f32 %v9863, %v9873
  %v9878 = vadd.f32 %v9874, %v9876
  %v9879 = vadd.f32 %v9875, %v9877
  %v9880 = vtanh.pop %v9878
  %v9881 = vtanh.pop %v9879
  %v9882 = vmul.f32 %v9869, %v9880
  %v9883 = vmul.f32 %v9871, %v9881
  %v9884 = vld [vmem:[#allocation2 + $0x180] sm:$0xff]
  %v9885 = vld [vmem:[#allocation2 + $0x188] sm:$0xff]
  %v9886 = vld [vmem:[#allocation2 + $0x190] sm:$0xff]
  %v9887 = vld [vmem:[#allocation2 + $0x198] sm:$0xff]
  %v9888 = vld [vmem:[#allocation2 + $0x1a0] sm:$0xff]
  %v9889 = vld [vmem:[#allocation2 + $0x1a8] sm:$0xff]
  %v9890 = vld [vmem:[#allocation2 + $0x1b0] sm:$0xff]
  %v9891 = vld [vmem:[#allocation2 + $0x1b8] sm:$0xff]
  %9892 = vmatprep.subr.bf16.mxu0 %v5061
  %9893 = vmatpush1.bf16.msra.mxu0 %v5060
  %9894 = vmatprep.subr.bf16.mxu0 %v5069
  %9895 = vmatpush1.bf16.msra.mxu0 %v5068
  %9896 = vmatprep.subr.bf16.mxu0 %v5077
  %9897 = vmatpush1.bf16.msra.mxu0 %v5076
  %9898 = vmatprep.subr.bf16.mxu0 %v5085
  %9899 = vmatpush1.bf16.msra.mxu0 %v5084
  %9900 = vmatprep.subr.bf16.mxu0 %v5093
  %9901 = vmatpush1.bf16.msra.mxu0 %v5092
  %9902 = vmatprep.subr.bf16.mxu0 %v5101
  %9903 = vmatpush1.bf16.msra.mxu0 %v5100
  %9904 = vmatprep.subr.bf16.mxu0 %v5109
  %9905 = vmatpush1.bf16.msra.mxu0 %v5108
  %9906 = vmatprep.subr.bf16.mxu0 %v5117
  %9907 = vmatpush1.bf16.msra.mxu0 %v5116
  %9908 = vmatprep.subr.bf16.mxu0 %v5125
  %9909 = vmatpush1.bf16.msra.mxu0 %v5124
  %9910 = vmatprep.subr.bf16.mxu0 %v5133
  %9911 = vmatpush1.bf16.msra.mxu0 %v5132
  %9912 = vmatprep.subr.bf16.mxu0 %v5141
  %9913 = vmatpush1.bf16.msra.mxu0 %v5140
  %9914 = vmatprep.subr.bf16.mxu0 %v5149
  %9915 = vmatpush1.bf16.msra.mxu0 %v5148
  %9916 = vmatprep.subr.bf16.mxu0 %v5157
  %9917 = vmatpush1.bf16.msra.mxu0 %v5156
  %9918 = vmatprep.subr.bf16.mxu0 %v5165
  %9919 = vmatpush1.bf16.msra.mxu0 %v5164
  %9920 = vmatprep.subr.bf16.mxu0 %v5173
  %9921 = vmatpush1.bf16.msra.mxu0 %v5172
  %9922 = vmatprep.subr.bf16.mxu0 %v5181
  %9923 = vmatpush1.bf16.msra.mxu0 %v5180
  %9924 = vmatprep.mubr.bf16.mxu0 %v9505
  %9925 = vmatmul.mubr.bf16.gmra.mrb[0].mxu0 %v9504
  %v9926 = vpop.f32.mrb[0].mxu0
  %v9927 = vadd.f32 0.0, %v9926
  %v9928 = vpop.f32.mrb[0].mxu0
  %v9929 = vadd.f32 0.0, %v9928
  %v9930 = vpop.f32.mrb[0].mxu0
  %v9931 = vpop.f32.mrb[0].mxu0
  %9932 = vdwg.mxu0
  %9933 = vmatprep.subr.bf16.mxu0 %v5063
  %9934 = vmatpush1.bf16.msra.mxu0 %v5062
  %9935 = vmatprep.subr.bf16.mxu0 %v5071
  %9936 = vmatpush1.bf16.msra.mxu0 %v5070
  %9937 = vmatprep.subr.bf16.mxu0 %v5079
  %9938 = vmatpush1.bf16.msra.mxu0 %v5078
  %9939 = vmatprep.subr.bf16.mxu0 %v5087
  %9940 = vmatpush1.bf16.msra.mxu0 %v5086
  %9941 = vmatprep.subr.bf16.mxu0 %v5095
  %9942 = vmatpush1.bf16.msra.mxu0 %v5094
  %9943 = vmatprep.subr.bf16.mxu0 %v5103
  %9944 = vmatpush1.bf16.msra.mxu0 %v5102
  %9945 = vmatprep.subr.bf16.mxu0 %v5111
  %9946 = vmatpush1.bf16.msra.mxu0 %v5110
  %9947 = vmatprep.subr.bf16.mxu0 %v5119
  %9948 = vmatpush1.bf16.msra.mxu0 %v5118
  %9949 = vmatprep.subr.bf16.mxu0 %v5127
  %9950 = vmatpush1.bf16.msra.mxu0 %v5126
  %9951 = vmatprep.subr.bf16.mxu0 %v5135
  %9952 = vmatpush1.bf16.msra.mxu0 %v5134
  %9953 = vmatprep.subr.bf16.mxu0 %v5143
  %9954 = vmatpush1.bf16.msra.mxu0 %v5142
  %9955 = vmatprep.subr.bf16.mxu0 %v5151
  %9956 = vmatpush1.bf16.msra.mxu0 %v5150
  %9957 = vmatprep.subr.bf16.mxu0 %v5159
  %9958 = vmatpush1.bf16.msra.mxu0 %v5158
  %9959 = vmatprep.subr.bf16.mxu0 %v5167
  %9960 = vmatpush1.bf16.msra.mxu0 %v5166
  %9961 = vmatprep.subr.bf16.mxu0 %v5175
  %9962 = vmatpush1.bf16.msra.mxu0 %v5174
  %9963 = vmatprep.subr.bf16.mxu0 %v5183
  %9964 = vmatpush1.bf16.msra.mxu0 %v5182
  %9965 = vmatprep.mubr.bf16.mxu0 %v9505
  %9966 = vmatmul.mubr.bf16.gmra.mrb[0].mxu0 %v9504
  %v9967 = vpop.f32.mrb[0].mxu0
  %v9968 = vadd.f32 0.0, %v9967
  %v9969 = vpop.f32.mrb[0].mxu0
  %v9970 = vadd.f32 0.0, %v9969
  %v9971 = vpop.f32.mrb[0].mxu0
  %v9972 = vpop.f32.mrb[0].mxu0
  %9973 = vdwg.mxu0
  %9974 = vmatprep.subr.bf16.mxu0 %v5065
  %9975 = vmatpush1.bf16.msra.mxu0 %v5064
  %9976 = vmatprep.subr.bf16.mxu0 %v5073
  %9977 = vmatpush1.bf16.msra.mxu0 %v5072
  %9978 = vmatprep.subr.bf16.mxu0 %v5081
  %9979 = vmatpush1.bf16.msra.mxu0 %v5080
  %9980 = vmatprep.subr.bf16.mxu0 %v5089
  %9981 = vmatpush1.bf16.msra.mxu0 %v5088
  %9982 = vmatprep.subr.bf16.mxu0 %v5097
  %9983 = vmatpush1.bf16.msra.mxu0 %v5096
  %9984 = vmatprep.subr.bf16.mxu0 %v5105
  %9985 = vmatpush1.bf16.msra.mxu0 %v5104
  %9986 = vmatprep.subr.bf16.mxu0 %v5113
  %9987 = vmatpush1.bf16.msra.mxu0 %v5112
  %9988 = vmatprep.subr.bf16.mxu0 %v5121
  %9989 = vmatpush1.bf16.msra.mxu0 %v5120
  %9990 = vmatprep.subr.bf16.mxu0 %v5129
  %9991 = vmatpush1.bf16.msra.mxu0 %v5128
  %9992 = vmatprep.subr.bf16.mxu0 %v5137
  %9993 = vmatpush1.bf16.msra.mxu0 %v5136
  %9994 = vmatprep.subr.bf16.mxu0 %v5145
  %9995 = vmatpush1.bf16.msra.mxu0 %v5144
  %9996 = vmatprep.subr.bf16.mxu0 %v5153
  %9997 = vmatpush1.bf16.msra.mxu0 %v5152
  %9998 = vmatprep.subr.bf16.mxu0 %v5161
  %9999 = vmatpush1.bf16.msra.mxu0 %v5160
  %10000 = vmatprep.subr.bf16.mxu0 %v5169
  %10001 = vmatpush1.bf16.msra.mxu0 %v5168
  %10002 = vmatprep.subr.bf16.mxu0 %v5177
  %10003 = vmatpush1.bf16.msra.mxu0 %v5176
  %10004 = vmatprep.subr.bf16.mxu0 %v5185
  %10005 = vmatpush1.bf16.msra.mxu0 %v5184
  %10006 = vmatprep.mubr.bf16.mxu0 %v9505
  %10007 = vmatmul.mubr.bf16.gmra.mrb[0].mxu0 %v9504
  %v10008 = vpop.f32.mrb[0].mxu0
  %v10009 = vadd.f32 0.0, %v10008
  %v10010 = vpop.f32.mrb[0].mxu0
  %v10011 = vadd.f32 0.0, %v10010
  %v10012 = vpop.f32.mrb[0].mxu0
  %v10013 = vpop.f32.mrb[0].mxu0
  %10014 = vdwg.mxu0
  %10015 = vmatprep.subr.bf16.mxu0 %v5067
  %10016 = vmatpush1.bf16.msra.mxu0 %v5066
  %10017 = vmatprep.subr.bf16.mxu0 %v5075
  %10018 = vmatpush1.bf16.msra.mxu0 %v5074
  %10019 = vmatprep.subr.bf16.mxu0 %v5083
  %10020 = vmatpush1.bf16.msra.mxu0 %v5082
  %10021 = vmatprep.subr.bf16.mxu0 %v5091
  %10022 = vmatpush1.bf16.msra.mxu0 %v5090
  %10023 = vmatprep.subr.bf16.mxu0 %v5099
  %10024 = vmatpush1.bf16.msra.mxu0 %v5098
  %10025 = vmatprep.subr.bf16.mxu0 %v5107
  %10026 = vmatpush1.bf16.msra.mxu0 %v5106
  %10027 = vmatprep.subr.bf16.mxu0 %v5115
  %10028 = vmatpush1.bf16.msra.mxu0 %v5114
  %10029 = vmatprep.subr.bf16.mxu0 %v5123
  %10030 = vmatpush1.bf16.msra.mxu0 %v5122
  %10031 = vmatprep.subr.bf16.mxu0 %v5131
  %10032 = vmatpush1.bf16.msra.mxu0 %v5130
  %10033 = vmatprep.subr.bf16.mxu0 %v5139
  %10034 = vmatpush1.bf16.msra.mxu0 %v5138
  %10035 = vmatprep.subr.bf16.mxu0 %v5147
  %10036 = vmatpush1.bf16.msra.mxu0 %v5146
  %10037 = vmatprep.subr.bf16.mxu0 %v5155
  %10038 = vmatpush1.bf16.msra.mxu0 %v5154
  %10039 = vmatprep.subr.bf16.mxu0 %v5163
  %10040 = vmatpush1.bf16.msra.mxu0 %v5162
  %10041 = vmatprep.subr.bf16.mxu0 %v5171
  %10042 = vmatpush1.bf16.msra.mxu0 %v5170
  %10043 = vmatprep.subr.bf16.mxu0 %v5179
  %10044 = vmatpush1.bf16.msra.mxu0 %v5178
  %10045 = vmatprep.subr.bf16.mxu0 %v5187
  %10046 = vmatpush1.bf16.msra.mxu0 %v5186
  %10047 = vmatprep.mubr.bf16.mxu0 %v9505
  %10048 = vmatmul.mubr.bf16.gmra.mrb[0].mxu0 %v9504
  %v10049 = vpop.f32.mrb[0].mxu0
  %v10050 = vadd.f32 0.0, %v10049
  %v10051 = vpop.f32.mrb[0].mxu0
  %v10052 = vadd.f32 0.0, %v10051
  %v10053 = vpop.f32.mrb[0].mxu0
  %v10054 = vpop.f32.mrb[0].mxu0
  %10055 = vdwg.mxu0
  %v10056 = vadd.f32 %v9884, %v9927
  %v10057 = vadd.f32 %v9885, %v9929
  %v10058 = vadd.f32 %v9886, %v9968
  %v10059 = vadd.f32 %v9887, %v9970
  %v10060 = vadd.f32 %v9888, %v10009
  %v10061 = vadd.f32 %v9889, %v10011
  %v10062 = vadd.f32 %v9890, %v10050
  %v10063 = vadd.f32 %v9891, %v10052
  %v10064 = vxor.u32 %v10056, 2147483648
  %v10065 = vxor.u32 %v10057, 2147483648
  %v10066 = vxor.u32 %v10058, 2147483648
  %v10067 = vxor.u32 %v10059, 2147483648
  %v10068 = vxor.u32 %v10060, 2147483648
  %v10069 = vxor.u32 %v10061, 2147483648
  %v10070 = vmul.f32 %v10064, 1.442695
  %v10071 = vpow.pop %v10070
  %v10072 = vmul.f32 %v10065, 1.442695
  %v10073 = vpow.pop %v10072
  %v10074 = vmul.f32 %v10066, 1.442695
  %v10075 = vpow.pop %v10074
  %v10076 = vmul.f32 %v10067, 1.442695
  %v10077 = vpow.pop %v10076
  %v10078 = vmul.f32 %v10068, 1.442695
  %v10079 = vpow.pop %v10078
  %v10080 = vmul.f32 %v10069, 1.442695
  %v10081 = vpow.pop %v10080
  %v10082 = vadd.f32 %v10071, 1.0
  %v10083 = vadd.f32 %v10073, 1.0
  %v10084 = vadd.f32 %v10075, 1.0
  %v10085 = vadd.f32 %v10077, 1.0
  %v10086 = vadd.f32 %v10079, 1.0
  %v10087 = vadd.f32 %v10081, 1.0
  %v10088 = vrcp.pop %v10082
  %v10089 = vmul.f32 1.0, %v10088
  %v10090 = vrcp.pop %v10083
  %v10091 = vmul.f32 1.0, %v10090
  %v10092 = vrcp.pop %v10084
  %v10093 = vmul.f32 1.0, %v10092
  %v10094 = vrcp.pop %v10085
  %v10095 = vmul.f32 1.0, %v10094
  %v10096 = vrcp.pop %v10086
  %v10097 = vmul.f32 1.0, %v10096
  %v10098 = vrcp.pop %v10087
  %v10099 = vmul.f32 1.0, %v10098
  %v10100 = vtanh.pop %v10062
  %v10101 = vtanh.pop %v10063
  %v10102 = vmul.f32 %v10093, %v9498
  %v10103 = vmul.f32 %v10095, %v9499
  %v10104 = vmul.f32 %v10089, %v10100
  %v10105 = vmul.f32 %v10091, %v10101
  %v10106 = vadd.f32 %v10102, %v10104
  %v10107 = vadd.f32 %v10103, %v10105
  %v10108 = vtanh.pop %v10106
  %v10109 = vtanh.pop %v10107
  %v10110 = vmul.f32 %v10097, %v10108
  %v10111 = vmul.f32 %v10099, %v10109
  %v10112 = vpack.c.bf16 %v10110, %v10110
  %v10113 = vpack.c.bf16 %v10111, %v10111
  %v10114 = vpack.c.bf16 %v9882, %v9882
  %v10115 = vpack.c.bf16 %v9883, %v9883
  %10116 = vmatprep.subr.bf16.mxu0 %v6565
  %10117 = vmatpush1.bf16.msra.mxu0 %v6564
  %10118 = vmatprep.subr.bf16.mxu0 %v6573
  %10119 = vmatpush1.bf16.msra.mxu0 %v6572
  %10120 = vmatprep.subr.bf16.mxu0 %v6581
  %10121 = vmatpush1.bf16.msra.mxu0 %v6580
  %10122 = vmatprep.subr.bf16.mxu0 %v6589
  %10123 = vmatpush1.bf16.msra.mxu0 %v6588
  %10124 = vmatprep.subr.bf16.mxu0 %v6597
  %10125 = vmatpush1.bf16.msra.mxu0 %v6596
  %10126 = vmatprep.subr.bf16.mxu0 %v6605
  %10127 = vmatpush1.bf16.msra.mxu0 %v6604
  %10128 = vmatprep.subr.bf16.mxu0 %v6613
  %10129 = vmatpush1.bf16.msra.mxu0 %v6612
  %10130 = vmatprep.subr.bf16.mxu0 %v6621
  %10131 = vmatpush1.bf16.msra.mxu0 %v6620
  %10132 = vmatprep.subr.bf16.mxu0 %v6629
  %10133 = vmatpush1.bf16.msra.mxu0 %v6628
  %10134 = vmatprep.subr.bf16.mxu0 %v6637
  %10135 = vmatpush1.bf16.msra.mxu0 %v6636
  %10136 = vmatprep.subr.bf16.mxu0 %v6645
  %10137 = vmatpush1.bf16.msra.mxu0 %v6644
  %10138 = vmatprep.subr.bf16.mxu0 %v6653
  %10139 = vmatpush1.bf16.msra.mxu0 %v6652
  %10140 = vmatprep.subr.bf16.mxu0 %v6661
  %10141 = vmatpush1.bf16.msra.mxu0 %v6660
  %10142 = vmatprep.subr.bf16.mxu0 %v6669
  %10143 = vmatpush1.bf16.msra.mxu0 %v6668
  %10144 = vmatprep.subr.bf16.mxu0 %v6677
  %10145 = vmatpush1.bf16.msra.mxu0 %v6676
  %10146 = vmatprep.subr.bf16.mxu0 %v6685
  %10147 = vmatpush1.bf16.msra.mxu0 %v6684
  %10148 = vmatprep.mubr.bf16.mxu0 %v10113
  %10149 = vmatmul.mubr.bf16.gmra.mrb[0].mxu0 %v10112
  %v10150 = vpop.f32.mrb[0].mxu0
  %v10151 = vadd.f32 %v3465, %v10150
  %v10152 = vpop.f32.mrb[0].mxu0
  %v10153 = vadd.f32 %v3469, %v10152
  %v10154 = vpop.f32.mrb[0].mxu0
  %v10155 = vpop.f32.mrb[0].mxu0
  %10156 = vdwg.mxu0
  %10157 = vmatprep.subr.bf16.mxu0 %v6693
  %10158 = vmatpush1.bf16.msra.mxu0 %v6692
  %10159 = vmatprep.subr.bf16.mxu0 %v6701
  %10160 = vmatpush1.bf16.msra.mxu0 %v6700
  %10161 = vmatprep.subr.bf16.mxu0 %v6709
  %10162 = vmatpush1.bf16.msra.mxu0 %v6708
  %10163 = vmatprep.subr.bf16.mxu0 %v6717
  %10164 = vmatpush1.bf16.msra.mxu0 %v6716
  %10165 = vmatprep.subr.bf16.mxu0 %v6725
  %10166 = vmatpush1.bf16.msra.mxu0 %v6724
  %10167 = vmatprep.subr.bf16.mxu0 %v6733
  %10168 = vmatpush1.bf16.msra.mxu0 %v6732
  %10169 = vmatprep.subr.bf16.mxu0 %v6741
  %10170 = vmatpush1.bf16.msra.mxu0 %v6740
  %10171 = vmatprep.subr.bf16.mxu0 %v6749
  %10172 = vmatpush1.bf16.msra.mxu0 %v6748
  %10173 = vmatprep.subr.bf16.mxu0 %v6757
  %10174 = vmatpush1.bf16.msra.mxu0 %v6756
  %10175 = vmatprep.subr.bf16.mxu0 %v6765
  %10176 = vmatpush1.bf16.msra.mxu0 %v6764
  %10177 = vmatprep.subr.bf16.mxu0 %v6773
  %10178 = vmatpush1.bf16.msra.mxu0 %v6772
  %10179 = vmatprep.subr.bf16.mxu0 %v6781
  %10180 = vmatpush1.bf16.msra.mxu0 %v6780
  %10181 = vmatprep.subr.bf16.mxu0 %v6789
  %10182 = vmatpush1.bf16.msra.mxu0 %v6788
  %10183 = vmatprep.subr.bf16.mxu0 %v6797
  %10184 = vmatpush1.bf16.msra.mxu0 %v6796
  %10185 = vmatprep.subr.bf16.mxu0 %v6805
  %10186 = vmatpush1.bf16.msra.mxu0 %v6804
  %10187 = vmatprep.subr.bf16.mxu0 %v6813
  %10188 = vmatpush1.bf16.msra.mxu0 %v6812
  %10189 = vmatprep.mubr.bf16.mxu0 %v10115
  %10190 = vmatmul.mubr.bf16.gmra.mrb[0].mxu0 %v10114
  %v10191 = vpop.f32.mrb[0].mxu0
  %v10192 = vadd.f32 %v10151, %v10191
  %v10193 = vpop.f32.mrb[0].mxu0
  %v10194 = vadd.f32 %v10153, %v10193
  %v10195 = vpop.f32.mrb[0].mxu0
  %v10196 = vpop.f32.mrb[0].mxu0
  %10197 = vdwg.mxu0
  %10198 = vmatprep.subr.bf16.mxu0 %v6567
  %10199 = vmatpush1.bf16.msra.mxu0 %v6566
  %10200 = vmatprep.subr.bf16.mxu0 %v6575
  %10201 = vmatpush1.bf16.msra.mxu0 %v6574
  %10202 = vmatprep.subr.bf16.mxu0 %v6583
  %10203 = vmatpush1.bf16.msra.mxu0 %v6582
  %10204 = vmatprep.subr.bf16.mxu0 %v6591
  %10205 = vmatpush1.bf16.msra.mxu0 %v6590
  %10206 = vmatprep.subr.bf16.mxu0 %v6599
  %10207 = vmatpush1.bf16.msra.mxu0 %v6598
  %10208 = vmatprep.subr.bf16.mxu0 %v6607
  %10209 = vmatpush1.bf16.msra.mxu0 %v6606
  %10210 = vmatprep.subr.bf16.mxu0 %v6615
  %10211 = vmatpush1.bf16.msra.mxu0 %v6614
  %10212 = vmatprep.subr.bf16.mxu0 %v6623
  %10213 = vmatpush1.bf16.msra.mxu0 %v6622
  %10214 = vmatprep.subr.bf16.mxu0 %v6631
  %10215 = vmatpush1.bf16.msra.mxu0 %v6630
  %10216 = vmatprep.subr.bf16.mxu0 %v6639
  %10217 = vmatpush1.bf16.msra.mxu0 %v6638
  %10218 = vmatprep.subr.bf16.mxu0 %v6647
  %10219 = vmatpush1.bf16.msra.mxu0 %v6646
  %10220 = vmatprep.subr.bf16.mxu0 %v6655
  %10221 = vmatpush1.bf16.msra.mxu0 %v6654
  %10222 = vmatprep.subr.bf16.mxu0 %v6663
  %10223 = vmatpush1.bf16.msra.mxu0 %v6662
  %10224 = vmatprep.subr.bf16.mxu0 %v6671
  %10225 = vmatpush1.bf16.msra.mxu0 %v6670
  %10226 = vmatprep.subr.bf16.mxu0 %v6679
  %10227 = vmatpush1.bf16.msra.mxu0 %v6678
  %10228 = vmatprep.subr.bf16.mxu0 %v6687
  %10229 = vmatpush1.bf16.msra.mxu0 %v6686
  %10230 = vmatprep.mubr.bf16.mxu0 %v10113
  %10231 = vmatmul.mubr.bf16.gmra.mrb[0].mxu0 %v10112
  %v10232 = vpop.f32.mrb[0].mxu0
  %v10233 = vadd.f32 %v3473, %v10232
  %v10234 = vpop.f32.mrb[0].mxu0
  %v10235 = vadd.f32 %v3477, %v10234
  %v10236 = vpop.f32.mrb[0].mxu0
  %v10237 = vpop.f32.mrb[0].mxu0
  %10238 = vdwg.mxu0
  %10239 = vmatprep.subr.bf16.mxu0 %v6695
  %10240 = vmatpush1.bf16.msra.mxu0 %v6694
  %10241 = vmatprep.subr.bf16.mxu0 %v6703
  %10242 = vmatpush1.bf16.msra.mxu0 %v6702
  %10243 = vmatprep.subr.bf16.mxu0 %v6711
  %10244 = vmatpush1.bf16.msra.mxu0 %v6710
  %10245 = vmatprep.subr.bf16.mxu0 %v6719
  %10246 = vmatpush1.bf16.msra.mxu0 %v6718
  %10247 = vmatprep.subr.bf16.mxu0 %v6727
  %10248 = vmatpush1.bf16.msra.mxu0 %v6726
  %10249 = vmatprep.subr.bf16.mxu0 %v6735
  %10250 = vmatpush1.bf16.msra.mxu0 %v6734
  %10251 = vmatprep.subr.bf16.mxu0 %v6743
  %10252 = vmatpush1.bf16.msra.mxu0 %v6742
  %10253 = vmatprep.subr.bf16.mxu0 %v6751
  %10254 = vmatpush1.bf16.msra.mxu0 %v6750
  %10255 = vmatprep.subr.bf16.mxu0 %v6759
  %10256 = vmatpush1.bf16.msra.mxu0 %v6758
  %10257 = vmatprep.subr.bf16.mxu0 %v6767
  %10258 = vmatpush1.bf16.msra.mxu0 %v6766
  %10259 = vmatprep.subr.bf16.mxu0 %v6775
  %10260 = vmatpush1.bf16.msra.mxu0 %v6774
  %10261 = vmatprep.subr.bf16.mxu0 %v6783
  %10262 = vmatpush1.bf16.msra.mxu0 %v6782
  %10263 = vmatprep.subr.bf16.mxu0 %v6791
  %10264 = vmatpush1.bf16.msra.mxu0 %v6790
  %10265 = vmatprep.subr.bf16.mxu0 %v6799
  %10266 = vmatpush1.bf16.msra.mxu0 %v6798
  %10267 = vmatprep.subr.bf16.mxu0 %v6807
  %10268 = vmatpush1.bf16.msra.mxu0 %v6806
  %10269 = vmatprep.subr.bf16.mxu0 %v6815
  %10270 = vmatpush1.bf16.msra.mxu0 %v6814
  %10271 = vmatprep.mubr.bf16.mxu0 %v10115
  %10272 = vmatmul.mubr.bf16.gmra.mrb[0].mxu0 %v10114
  %v10273 = vpop.f32.mrb[0].mxu0
  %v10274 = vadd.f32 %v10233, %v10273
  %v10275 = vpop.f32.mrb[0].mxu0
  %v10276 = vadd.f32 %v10235, %v10275
  %v10277 = vpop.f32.mrb[0].mxu0
  %v10278 = vpop.f32.mrb[0].mxu0
  %10279 = vdwg.mxu0
  %10280 = vmatprep.subr.bf16.mxu0 %v6569
  %10281 = vmatpush1.bf16.msra.mxu0 %v6568
  %10282 = vmatprep.subr.bf16.mxu0 %v6577
  %10283 = vmatpush1.bf16.msra.mxu0 %v6576
  %10284 = vmatprep.subr.bf16.mxu0 %v6585
  %10285 = vmatpush1.bf16.msra.mxu0 %v6584
  %10286 = vmatprep.subr.bf16.mxu0 %v6593
  %10287 = vmatpush1.bf16.msra.mxu0 %v6592
  %10288 = vmatprep.subr.bf16.mxu0 %v6601
  %10289 = vmatpush1.bf16.msra.mxu0 %v6600
  %10290 = vmatprep.subr.bf16.mxu0 %v6609
  %10291 = vmatpush1.bf16.msra.mxu0 %v6608
  %10292 = vmatprep.subr.bf16.mxu0 %v6617
  %10293 = vmatpush1.bf16.msra.mxu0 %v6616
  %10294 = vmatprep.subr.bf16.mxu0 %v6625
  %10295 = vmatpush1.bf16.msra.mxu0 %v6624
  %10296 = vmatprep.subr.bf16.mxu0 %v6633
  %10297 = vmatpush1.bf16.msra.mxu0 %v6632
  %10298 = vmatprep.subr.bf16.mxu0 %v6641
  %10299 = vmatpush1.bf16.msra.mxu0 %v6640
  %10300 = vmatprep.subr.bf16.mxu0 %v6649
  %10301 = vmatpush1.bf16.msra.mxu0 %v6648
  %10302 = vmatprep.subr.bf16.mxu0 %v6657
  %10303 = vmatpush1.bf16.msra.mxu0 %v6656
  %10304 = vmatprep.subr.bf16.mxu0 %v6665
  %10305 = vmatpush1.bf16.msra.mxu0 %v6664
  %10306 = vmatprep.subr.bf16.mxu0 %v6673
  %10307 = vmatpush1.bf16.msra.mxu0 %v6672
  %10308 = vmatprep.subr.bf16.mxu0 %v6681
  %10309 = vmatpush1.bf16.msra.mxu0 %v6680
  %10310 = vmatprep.subr.bf16.mxu0 %v6689
  %10311 = vmatpush1.bf16.msra.mxu0 %v6688
  %10312 = vmatprep.mubr.bf16.mxu0 %v10113
  %10313 = vmatmul.mubr.bf16.gmra.mrb[0].mxu0 %v10112
  %v10314 = vpop.f32.mrb[0].mxu0
  %v10315 = vadd.f32 %v3481, %v10314
  %v10316 = vpop.f32.mrb[0].mxu0
  %v10317 = vadd.f32 %v3485, %v10316
  %v10318 = vpop.f32.mrb[0].mxu0
  %v10319 = vpop.f32.mrb[0].mxu0
  %10320 = vdwg.mxu0
  %10321 = vmatprep.subr.bf16.mxu0 %v6697
  %10322 = vmatpush1.bf16.msra.mxu0 %v6696
  %10323 = vmatprep.subr.bf16.mxu0 %v6705
  %10324 = vmatpush1.bf16.msra.mxu0 %v6704
  %10325 = vmatprep.subr.bf16.mxu0 %v6713
  %10326 = vmatpush1.bf16.msra.mxu0 %v6712
  %10327 = vmatprep.subr.bf16.mxu0 %v6721
  %10328 = vmatpush1.bf16.msra.mxu0 %v6720
  %10329 = vmatprep.subr.bf16.mxu0 %v6729
  %10330 = vmatpush1.bf16.msra.mxu0 %v6728
  %10331 = vmatprep.subr.bf16.mxu0 %v6737
  %10332 = vmatpush1.bf16.msra.mxu0 %v6736
  %10333 = vmatprep.subr.bf16.mxu0 %v6745
  %10334 = vmatpush1.bf16.msra.mxu0 %v6744
  %10335 = vmatprep.subr.bf16.mxu0 %v6753
  %10336 = vmatpush1.bf16.msra.mxu0 %v6752
  %10337 = vmatprep.subr.bf16.mxu0 %v6761
  %10338 = vmatpush1.bf16.msra.mxu0 %v6760
  %10339 = vmatprep.subr.bf16.mxu0 %v6769
  %10340 = vmatpush1.bf16.msra.mxu0 %v6768
  %10341 = vmatprep.subr.bf16.mxu0 %v6777
  %10342 = vmatpush1.bf16.msra.mxu0 %v6776
  %10343 = vmatprep.subr.bf16.mxu0 %v6785
  %10344 = vmatpush1.bf16.msra.mxu0 %v6784
  %10345 = vmatprep.subr.bf16.mxu0 %v6793
  %10346 = vmatpush1.bf16.msra.mxu0 %v6792
  %10347 = vmatprep.subr.bf16.mxu0 %v6801
  %10348 = vmatpush1.bf16.msra.mxu0 %v6800
  %10349 = vmatprep.subr.bf16.mxu0 %v6809
  %10350 = vmatpush1.bf16.msra.mxu0 %v6808
  %10351 = vmatprep.subr.bf16.mxu0 %v6817
  %10352 = vmatpush1.bf16.msra.mxu0 %v6816
  %10353 = vmatprep.mubr.bf16.mxu0 %v10115
  %10354 = vmatmul.mubr.bf16.gmra.mrb[0].mxu0 %v10114
  %v10355 = vpop.f32.mrb[0].mxu0
  %v10356 = vadd.f32 %v10315, %v10355
  %v10357 = vpop.f32.mrb[0].mxu0
  %v10358 = vadd.f32 %v10317, %v10357
  %v10359 = vpop.f32.mrb[0].mxu0
  %v10360 = vpop.f32.mrb[0].mxu0
  %10361 = vdwg.mxu0
  %10362 = vmatprep.subr.bf16.mxu0 %v6571
  %10363 = vmatpush1.bf16.msra.mxu0 %v6570
  %10364 = vmatprep.subr.bf16.mxu0 %v6579
  %10365 = vmatpush1.bf16.msra.mxu0 %v6578
  %10366 = vmatprep.subr.bf16.mxu0 %v6587
  %10367 = vmatpush1.bf16.msra.mxu0 %v6586
  %10368 = vmatprep.subr.bf16.mxu0 %v6595
  %10369 = vmatpush1.bf16.msra.mxu0 %v6594
  %10370 = vmatprep.subr.bf16.mxu0 %v6603
  %10371 = vmatpush1.bf16.msra.mxu0 %v6602
  %10372 = vmatprep.subr.bf16.mxu0 %v6611
  %10373 = vmatpush1.bf16.msra.mxu0 %v6610
  %10374 = vmatprep.subr.bf16.mxu0 %v6619
  %10375 = vmatpush1.bf16.msra.mxu0 %v6618
  %10376 = vmatprep.subr.bf16.mxu0 %v6627
  %10377 = vmatpush1.bf16.msra.mxu0 %v6626
  %10378 = vmatprep.subr.bf16.mxu0 %v6635
  %10379 = vmatpush1.bf16.msra.mxu0 %v6634
  %10380 = vmatprep.subr.bf16.mxu0 %v6643
  %10381 = vmatpush1.bf16.msra.mxu0 %v6642
  %10382 = vmatprep.subr.bf16.mxu0 %v6651
  %10383 = vmatpush1.bf16.msra.mxu0 %v6650
  %10384 = vmatprep.subr.bf16.mxu0 %v6659
  %10385 = vmatpush1.bf16.msra.mxu0 %v6658
  %10386 = vmatprep.subr.bf16.mxu0 %v6667
  %10387 = vmatpush1.bf16.msra.mxu0 %v6666
  %10388 = vmatprep.subr.bf16.mxu0 %v6675
  %10389 = vmatpush1.bf16.msra.mxu0 %v6674
  %10390 = vmatprep.subr.bf16.mxu0 %v6683
  %10391 = vmatpush1.bf16.msra.mxu0 %v6682
  %10392 = vmatprep.subr.bf16.mxu0 %v6691
  %10393 = vmatpush1.bf16.msra.mxu0 %v6690
  %10394 = vmatprep.mubr.bf16.mxu0 %v10113
  %10395 = vmatmul.mubr.bf16.gmra.mrb[0].mxu0 %v10112
  %v10396 = vpop.f32.mrb[0].mxu0
  %v10397 = vadd.f32 %v3489, %v10396
  %v10398 = vpop.f32.mrb[0].mxu0
  %v10399 = vadd.f32 %v3493, %v10398
  %v10400 = vpop.f32.mrb[0].mxu0
  %v10401 = vpop.f32.mrb[0].mxu0
  %10402 = vdwg.mxu0
  %10403 = vmatprep.subr.bf16.mxu0 %v6699
  %10404 = vmatpush1.bf16.msra.mxu0 %v6698
  %10405 = vmatprep.subr.bf16.mxu0 %v6707
  %10406 = vmatpush1.bf16.msra.mxu0 %v6706
  %10407 = vmatprep.subr.bf16.mxu0 %v6715
  %10408 = vmatpush1.bf16.msra.mxu0 %v6714
  %10409 = vmatprep.subr.bf16.mxu0 %v6723
  %10410 = vmatpush1.bf16.msra.mxu0 %v6722
  %10411 = vmatprep.subr.bf16.mxu0 %v6731
  %10412 = vmatpush1.bf16.msra.mxu0 %v6730
  %10413 = vmatprep.subr.bf16.mxu0 %v6739
  %10414 = vmatpush1.bf16.msra.mxu0 %v6738
  %10415 = vmatprep.subr.bf16.mxu0 %v6747
  %10416 = vmatpush1.bf16.msra.mxu0 %v6746
  %10417 = vmatprep.subr.bf16.mxu0 %v6755
  %10418 = vmatpush1.bf16.msra.mxu0 %v6754
  %10419 = vmatprep.subr.bf16.mxu0 %v6763
  %10420 = vmatpush1.bf16.msra.mxu0 %v6762
  %10421 = vmatprep.subr.bf16.mxu0 %v6771
  %10422 = vmatpush1.bf16.msra.mxu0 %v6770
  %10423 = vmatprep.subr.bf16.mxu0 %v6779
  %10424 = vmatpush1.bf16.msra.mxu0 %v6778
  %10425 = vmatprep.subr.bf16.mxu0 %v6787
  %10426 = vmatpush1.bf16.msra.mxu0 %v6786
  %10427 = vmatprep.subr.bf16.mxu0 %v6795
  %10428 = vmatpush1.bf16.msra.mxu0 %v6794
  %10429 = vmatprep.subr.bf16.mxu0 %v6803
  %10430 = vmatpush1.bf16.msra.mxu0 %v6802
  %10431 = vmatprep.subr.bf16.mxu0 %v6811
  %10432 = vmatpush1.bf16.msra.mxu0 %v6810
  %10433 = vmatprep.subr.bf16.mxu0 %v6819
  %10434 = vmatpush1.bf16.msra.mxu0 %v6818
  %10435 = vmatprep.mubr.bf16.mxu0 %v10115
  %10436 = vmatmul.mubr.bf16.gmra.mrb[0].mxu0 %v10114
  %v10437 = vpop.f32.mrb[0].mxu0
  %v10438 = vadd.f32 %v10397, %v10437
  %v10439 = vpop.f32.mrb[0].mxu0
  %v10440 = vadd.f32 %v10399, %v10439
  %v10441 = vpop.f32.mrb[0].mxu0
  %v10442 = vpop.f32.mrb[0].mxu0
  %10443 = vdwg.mxu0
  %v10444 = vxor.u32 %v10192, 2147483648
  %v10445 = vxor.u32 %v10194, 2147483648
  %v10446 = vxor.u32 %v10274, 2147483648
  %v10447 = vxor.u32 %v10276, 2147483648
  %v10448 = vxor.u32 %v10356, 2147483648
  %v10449 = vxor.u32 %v10358, 2147483648
  %v10450 = vmul.f32 %v10444, 1.442695
  %v10451 = vpow.pop %v10450
  %v10452 = vmul.f32 %v10445, 1.442695
  %v10453 = vpow.pop %v10452
  %v10454 = vmul.f32 %v10446, 1.442695
  %v10455 = vpow.pop %v10454
  %v10456 = vmul.f32 %v10447, 1.442695
  %v10457 = vpow.pop %v10456
  %v10458 = vmul.f32 %v10448, 1.442695
  %v10459 = vpow.pop %v10458
  %v10460 = vmul.f32 %v10449, 1.442695
  %v10461 = vpow.pop %v10460
  %v10462 = vadd.f32 %v10451, 1.0
  %v10463 = vadd.f32 %v10453, 1.0
  %v10464 = vadd.f32 %v10455, 1.0
  %v10465 = vadd.f32 %v10457, 1.0
  %v10466 = vadd.f32 %v10459, 1.0
  %v10467 = vadd.f32 %v10461, 1.0
  %v10468 = vrcp.pop %v10462
  %v10469 = vmul.f32 1.0, %v10468
  %v10470 = vrcp.pop %v10463
  %v10471 = vmul.f32 1.0, %v10470
  %v10472 = vrcp.pop %v10464
  %v10473 = vmul.f32 1.0, %v10472
  %v10474 = vrcp.pop %v10465
  %v10475 = vmul.f32 1.0, %v10474
  %v10476 = vrcp.pop %v10466
  %v10477 = vmul.f32 1.0, %v10476
  %v10478 = vrcp.pop %v10467
  %v10479 = vmul.f32 1.0, %v10478
  %v10480 = vtanh.pop %v10438
  %v10481 = vtanh.pop %v10440
  %v10482 = vmul.f32 %v10473, %v9878
  %v10483 = vmul.f32 %v10475, %v9879
  %v10484 = vmul.f32 %v10469, %v10480
  %v10485 = vmul.f32 %v10471, %v10481
  %v10486 = vadd.f32 %v10482, %v10484
  %v10487 = vadd.f32 %v10483, %v10485
  %v10488 = vtanh.pop %v10486
  %v10489 = vtanh.pop %v10487
  %v10490 = vmul.f32 %v10477, %v10488
  %v10491 = vmul.f32 %v10479, %v10489
  %v10492 = vld [vmem:[#allocation2 + $0x1c0] sm:$0xff]
  %v10493 = vld [vmem:[#allocation2 + $0x1c8] sm:$0xff]
  %v10494 = vld [vmem:[#allocation2 + $0x1d0] sm:$0xff]
  %v10495 = vld [vmem:[#allocation2 + $0x1d8] sm:$0xff]
  %v10496 = vld [vmem:[#allocation2 + $0x1e0] sm:$0xff]
  %v10497 = vld [vmem:[#allocation2 + $0x1e8] sm:$0xff]
  %v10498 = vld [vmem:[#allocation2 + $0x1f0] sm:$0xff]
  %v10499 = vld [vmem:[#allocation2 + $0x1f8] sm:$0xff]
  %10500 = vmatprep.subr.bf16.mxu0 %v5061
  %10501 = vmatpush1.bf16.msra.mxu0 %v5060
  %10502 = vmatprep.subr.bf16.mxu0 %v5069
  %10503 = vmatpush1.bf16.msra.mxu0 %v5068
  %10504 = vmatprep.subr.bf16.mxu0 %v5077
  %10505 = vmatpush1.bf16.msra.mxu0 %v5076
  %10506 = vmatprep.subr.bf16.mxu0 %v5085
  %10507 = vmatpush1.bf16.msra.mxu0 %v5084
  %10508 = vmatprep.subr.bf16.mxu0 %v5093
  %10509 = vmatpush1.bf16.msra.mxu0 %v5092
  %10510 = vmatprep.subr.bf16.mxu0 %v5101
  %10511 = vmatpush1.bf16.msra.mxu0 %v5100
  %10512 = vmatprep.subr.bf16.mxu0 %v5109
  %10513 = vmatpush1.bf16.msra.mxu0 %v5108
  %10514 = vmatprep.subr.bf16.mxu0 %v5117
  %10515 = vmatpush1.bf16.msra.mxu0 %v5116
  %10516 = vmatprep.subr.bf16.mxu0 %v5125
  %10517 = vmatpush1.bf16.msra.mxu0 %v5124
  %10518 = vmatprep.subr.bf16.mxu0 %v5133
  %10519 = vmatpush1.bf16.msra.mxu0 %v5132
  %10520 = vmatprep.subr.bf16.mxu0 %v5141
  %10521 = vmatpush1.bf16.msra.mxu0 %v5140
  %10522 = vmatprep.subr.bf16.mxu0 %v5149
  %10523 = vmatpush1.bf16.msra.mxu0 %v5148
  %10524 = vmatprep.subr.bf16.mxu0 %v5157
  %10525 = vmatpush1.bf16.msra.mxu0 %v5156
  %10526 = vmatprep.subr.bf16.mxu0 %v5165
  %10527 = vmatpush1.bf16.msra.mxu0 %v5164
  %10528 = vmatprep.subr.bf16.mxu0 %v5173
  %10529 = vmatpush1.bf16.msra.mxu0 %v5172
  %10530 = vmatprep.subr.bf16.mxu0 %v5181
  %10531 = vmatpush1.bf16.msra.mxu0 %v5180
  %10532 = vmatprep.mubr.bf16.mxu0 %v10113
  %10533 = vmatmul.mubr.bf16.gmra.mrb[0].mxu0 %v10112
  %v10534 = vpop.f32.mrb[0].mxu0
  %v10535 = vadd.f32 0.0, %v10534
  %v10536 = vpop.f32.mrb[0].mxu0
  %v10537 = vadd.f32 0.0, %v10536
  %v10538 = vpop.f32.mrb[0].mxu0
  %v10539 = vpop.f32.mrb[0].mxu0
  %10540 = vdwg.mxu0
  %10541 = vmatprep.subr.bf16.mxu0 %v5063
  %10542 = vmatpush1.bf16.msra.mxu0 %v5062
  %10543 = vmatprep.subr.bf16.mxu0 %v5071
  %10544 = vmatpush1.bf16.msra.mxu0 %v5070
  %10545 = vmatprep.subr.bf16.mxu0 %v5079
  %10546 = vmatpush1.bf16.msra.mxu0 %v5078
  %10547 = vmatprep.subr.bf16.mxu0 %v5087
  %10548 = vmatpush1.bf16.msra.mxu0 %v5086
  %10549 = vmatprep.subr.bf16.mxu0 %v5095
  %10550 = vmatpush1.bf16.msra.mxu0 %v5094
  %10551 = vmatprep.subr.bf16.mxu0 %v5103
  %10552 = vmatpush1.bf16.msra.mxu0 %v5102
  %10553 = vmatprep.subr.bf16.mxu0 %v5111
  %10554 = vmatpush1.bf16.msra.mxu0 %v5110
  %10555 = vmatprep.subr.bf16.mxu0 %v5119
  %10556 = vmatpush1.bf16.msra.mxu0 %v5118
  %10557 = vmatprep.subr.bf16.mxu0 %v5127
  %10558 = vmatpush1.bf16.msra.mxu0 %v5126
  %10559 = vmatprep.subr.bf16.mxu0 %v5135
  %10560 = vmatpush1.bf16.msra.mxu0 %v5134
  %10561 = vmatprep.subr.bf16.mxu0 %v5143
  %10562 = vmatpush1.bf16.msra.mxu0 %v5142
  %10563 = vmatprep.subr.bf16.mxu0 %v5151
  %10564 = vmatpush1.bf16.msra.mxu0 %v5150
  %10565 = vmatprep.subr.bf16.mxu0 %v5159
  %10566 = vmatpush1.bf16.msra.mxu0 %v5158
  %10567 = vmatprep.subr.bf16.mxu0 %v5167
  %10568 = vmatpush1.bf16.msra.mxu0 %v5166
  %10569 = vmatprep.subr.bf16.mxu0 %v5175
  %10570 = vmatpush1.bf16.msra.mxu0 %v5174
  %10571 = vmatprep.subr.bf16.mxu0 %v5183
  %10572 = vmatpush1.bf16.msra.mxu0 %v5182
  %10573 = vmatprep.mubr.bf16.mxu0 %v10113
  %10574 = vmatmul.mubr.bf16.gmra.mrb[0].mxu0 %v10112
  %v10575 = vpop.f32.mrb[0].mxu0
  %v10576 = vadd.f32 0.0, %v10575
  %v10577 = vpop.f32.mrb[0].mxu0
  %v10578 = vadd.f32 0.0, %v10577
  %v10579 = vpop.f32.mrb[0].mxu0
  %v10580 = vpop.f32.mrb[0].mxu0
  %10581 = vdwg.mxu0
  %10582 = vmatprep.subr.bf16.mxu0 %v5065
  %10583 = vmatpush1.bf16.msra.mxu0 %v5064
  %10584 = vmatprep.subr.bf16.mxu0 %v5073
  %10585 = vmatpush1.bf16.msra.mxu0 %v5072
  %10586 = vmatprep.subr.bf16.mxu0 %v5081
  %10587 = vmatpush1.bf16.msra.mxu0 %v5080
  %10588 = vmatprep.subr.bf16.mxu0 %v5089
  %10589 = vmatpush1.bf16.msra.mxu0 %v5088
  %10590 = vmatprep.subr.bf16.mxu0 %v5097
  %10591 = vmatpush1.bf16.msra.mxu0 %v5096
  %10592 = vmatprep.subr.bf16.mxu0 %v5105
  %10593 = vmatpush1.bf16.msra.mxu0 %v5104
  %10594 = vmatprep.subr.bf16.mxu0 %v5113
  %10595 = vmatpush1.bf16.msra.mxu0 %v5112
  %10596 = vmatprep.subr.bf16.mxu0 %v5121
  %10597 = vmatpush1.bf16.msra.mxu0 %v5120
  %10598 = vmatprep.subr.bf16.mxu0 %v5129
  %10599 = vmatpush1.bf16.msra.mxu0 %v5128
  %10600 = vmatprep.subr.bf16.mxu0 %v5137
  %10601 = vmatpush1.bf16.msra.mxu0 %v5136
  %10602 = vmatprep.subr.bf16.mxu0 %v5145
  %10603 = vmatpush1.bf16.msra.mxu0 %v5144
  %10604 = vmatprep.subr.bf16.mxu0 %v5153
  %10605 = vmatpush1.bf16.msra.mxu0 %v5152
  %10606 = vmatprep.subr.bf16.mxu0 %v5161
  %10607 = vmatpush1.bf16.msra.mxu0 %v5160
  %10608 = vmatprep.subr.bf16.mxu0 %v5169
  %10609 = vmatpush1.bf16.msra.mxu0 %v5168
  %10610 = vmatprep.subr.bf16.mxu0 %v5177
  %10611 = vmatpush1.bf16.msra.mxu0 %v5176
  %10612 = vmatprep.subr.bf16.mxu0 %v5185
  %10613 = vmatpush1.bf16.msra.mxu0 %v5184
  %10614 = vmatprep.mubr.bf16.mxu0 %v10113
  %10615 = vmatmul.mubr.bf16.gmra.mrb[0].mxu0 %v10112
  %v10616 = vpop.f32.mrb[0].mxu0
  %v10617 = vadd.f32 0.0, %v10616
  %v10618 = vpop.f32.mrb[0].mxu0
  %v10619 = vadd.f32 0.0, %v10618
  %v10620 = vpop.f32.mrb[0].mxu0
  %v10621 = vpop.f32.mrb[0].mxu0
  %10622 = vdwg.mxu0
  %10623 = vmatprep.subr.bf16.mxu0 %v5067
  %10624 = vmatpush1.bf16.msra.mxu0 %v5066
  %10625 = vmatprep.subr.bf16.mxu0 %v5075
  %10626 = vmatpush1.bf16.msra.mxu0 %v5074
  %10627 = vmatprep.subr.bf16.mxu0 %v5083
  %10628 = vmatpush1.bf16.msra.mxu0 %v5082
  %10629 = vmatprep.subr.bf16.mxu0 %v5091
  %10630 = vmatpush1.bf16.msra.mxu0 %v5090
  %10631 = vmatprep.subr.bf16.mxu0 %v5099
  %10632 = vmatpush1.bf16.msra.mxu0 %v5098
  %10633 = vmatprep.subr.bf16.mxu0 %v5107
  %10634 = vmatpush1.bf16.msra.mxu0 %v5106
  %10635 = vmatprep.subr.bf16.mxu0 %v5115
  %10636 = vmatpush1.bf16.msra.mxu0 %v5114
  %10637 = vmatprep.subr.bf16.mxu0 %v5123
  %10638 = vmatpush1.bf16.msra.mxu0 %v5122
  %10639 = vmatprep.subr.bf16.mxu0 %v5131
  %10640 = vmatpush1.bf16.msra.mxu0 %v5130
  %10641 = vmatprep.subr.bf16.mxu0 %v5139
  %10642 = vmatpush1.bf16.msra.mxu0 %v5138
  %10643 = vmatprep.subr.bf16.mxu0 %v5147
  %10644 = vmatpush1.bf16.msra.mxu0 %v5146
  %10645 = vmatprep.subr.bf16.mxu0 %v5155
  %10646 = vmatpush1.bf16.msra.mxu0 %v5154
  %10647 = vmatprep.subr.bf16.mxu0 %v5163
  %10648 = vmatpush1.bf16.msra.mxu0 %v5162
  %10649 = vmatprep.subr.bf16.mxu0 %v5171
  %10650 = vmatpush1.bf16.msra.mxu0 %v5170
  %10651 = vmatprep.subr.bf16.mxu0 %v5179
  %10652 = vmatpush1.bf16.msra.mxu0 %v5178
  %10653 = vmatprep.subr.bf16.mxu0 %v5187
  %10654 = vmatpush1.bf16.msra.mxu0 %v5186
  %10655 = vmatprep.mubr.bf16.mxu0 %v10113
  %10656 = vmatmul.mubr.bf16.gmra.mrb[0].mxu0 %v10112
  %v10657 = vpop.f32.mrb[0].mxu0
  %v10658 = vadd.f32 0.0, %v10657
  %v10659 = vpop.f32.mrb[0].mxu0
  %v10660 = vadd.f32 0.0, %v10659
  %v10661 = vpop.f32.mrb[0].mxu0
  %v10662 = vpop.f32.mrb[0].mxu0
  %10663 = vdwg.mxu0
  %v10664 = vadd.f32 %v10492, %v10535
  %v10665 = vadd.f32 %v10493, %v10537
  %v10666 = vadd.f32 %v10494, %v10576
  %v10667 = vadd.f32 %v10495, %v10578
  %v10668 = vadd.f32 %v10496, %v10617
  %v10669 = vadd.f32 %v10497, %v10619
  %v10670 = vadd.f32 %v10498, %v10658
  %v10671 = vadd.f32 %v10499, %v10660
  %v10672 = vxor.u32 %v10664, 2147483648
  %v10673 = vxor.u32 %v10665, 2147483648
  %v10674 = vxor.u32 %v10666, 2147483648
  %v10675 = vxor.u32 %v10667, 2147483648
  %v10676 = vxor.u32 %v10668, 2147483648
  %v10677 = vxor.u32 %v10669, 2147483648
  %v10678 = vmul.f32 %v10672, 1.442695
  %v10679 = vpow.pop %v10678
  %v10680 = vmul.f32 %v10673, 1.442695
  %v10681 = vpow.pop %v10680
  %v10682 = vmul.f32 %v10674, 1.442695
  %v10683 = vpow.pop %v10682
  %v10684 = vmul.f32 %v10675, 1.442695
  %v10685 = vpow.pop %v10684
  %v10686 = vmul.f32 %v10676, 1.442695
  %v10687 = vpow.pop %v10686
  %v10688 = vmul.f32 %v10677, 1.442695
  %v10689 = vpow.pop %v10688
  %v10690 = vadd.f32 %v10679, 1.0
  %v10691 = vadd.f32 %v10681, 1.0
  %v10692 = vadd.f32 %v10683, 1.0
  %v10693 = vadd.f32 %v10685, 1.0
  %v10694 = vadd.f32 %v10687, 1.0
  %v10695 = vadd.f32 %v10689, 1.0
  %v10696 = vrcp.pop %v10690
  %v10697 = vmul.f32 1.0, %v10696
  %v10698 = vrcp.pop %v10691
  %v10699 = vmul.f32 1.0, %v10698
  %v10700 = vrcp.pop %v10692
  %v10701 = vmul.f32 1.0, %v10700
  %v10702 = vrcp.pop %v10693
  %v10703 = vmul.f32 1.0, %v10702
  %v10704 = vrcp.pop %v10694
  %v10705 = vmul.f32 1.0, %v10704
  %v10706 = vrcp.pop %v10695
  %v10707 = vmul.f32 1.0, %v10706
  %v10708 = vtanh.pop %v10670
  %v10709 = vtanh.pop %v10671
  %v10710 = vmul.f32 %v10701, %v10106
  %v10711 = vmul.f32 %v10703, %v10107
  %v10712 = vmul.f32 %v10697, %v10708
  %v10713 = vmul.f32 %v10699, %v10709
  %v10714 = vadd.f32 %v10710, %v10712
  %v10715 = vadd.f32 %v10711, %v10713
  %v10716 = vtanh.pop %v10714
  %v10717 = vtanh.pop %v10715
  %v10718 = vmul.f32 %v10705, %v10716
  %v10719 = vmul.f32 %v10707, %v10717
  %v10720 = vpack.c.bf16 %v10718, %v10718
  %v10721 = vpack.c.bf16 %v10719, %v10719
  %v10722 = vpack.c.bf16 %v10490, %v10490
  %v10723 = vpack.c.bf16 %v10491, %v10491
  %10724 = vmatprep.subr.bf16.mxu0 %v6565
  %10725 = vmatpush1.bf16.msra.mxu0 %v6564
  %10726 = vmatprep.subr.bf16.mxu0 %v6573
  %10727 = vmatpush1.bf16.msra.mxu0 %v6572
  %10728 = vmatprep.subr.bf16.mxu0 %v6581
  %10729 = vmatpush1.bf16.msra.mxu0 %v6580
  %10730 = vmatprep.subr.bf16.mxu0 %v6589
  %10731 = vmatpush1.bf16.msra.mxu0 %v6588
  %10732 = vmatprep.subr.bf16.mxu0 %v6597
  %10733 = vmatpush1.bf16.msra.mxu0 %v6596
  %10734 = vmatprep.subr.bf16.mxu0 %v6605
  %10735 = vmatpush1.bf16.msra.mxu0 %v6604
  %10736 = vmatprep.subr.bf16.mxu0 %v6613
  %10737 = vmatpush1.bf16.msra.mxu0 %v6612
  %10738 = vmatprep.subr.bf16.mxu0 %v6621
  %10739 = vmatpush1.bf16.msra.mxu0 %v6620
  %10740 = vmatprep.subr.bf16.mxu0 %v6629
  %10741 = vmatpush1.bf16.msra.mxu0 %v6628
  %10742 = vmatprep.subr.bf16.mxu0 %v6637
  %10743 = vmatpush1.bf16.msra.mxu0 %v6636
  %10744 = vmatprep.subr.bf16.mxu0 %v6645
  %10745 = vmatpush1.bf16.msra.mxu0 %v6644
  %10746 = vmatprep.subr.bf16.mxu0 %v6653
  %10747 = vmatpush1.bf16.msra.mxu0 %v6652
  %10748 = vmatprep.subr.bf16.mxu0 %v6661
  %10749 = vmatpush1.bf16.msra.mxu0 %v6660
  %10750 = vmatprep.subr.bf16.mxu0 %v6669
  %10751 = vmatpush1.bf16.msra.mxu0 %v6668
  %10752 = vmatprep.subr.bf16.mxu0 %v6677
  %10753 = vmatpush1.bf16.msra.mxu0 %v6676
  %10754 = vmatprep.subr.bf16.mxu0 %v6685
  %10755 = vmatpush1.bf16.msra.mxu0 %v6684
  %10756 = vmatprep.mubr.bf16.mxu0 %v10721
  %10757 = vmatmul.mubr.bf16.gmra.mrb[0].mxu0 %v10720
  %v10758 = vpop.f32.mrb[0].mxu0
  %v10759 = vadd.f32 %v3465, %v10758
  %v10760 = vpop.f32.mrb[0].mxu0
  %v10761 = vadd.f32 %v3469, %v10760
  %v10762 = vpop.f32.mrb[0].mxu0
  %v10763 = vpop.f32.mrb[0].mxu0
  %10764 = vdwg.mxu0
  %10765 = vmatprep.subr.bf16.mxu0 %v6693
  %10766 = vmatpush1.bf16.msra.mxu0 %v6692
  %10767 = vmatprep.subr.bf16.mxu0 %v6701
  %10768 = vmatpush1.bf16.msra.mxu0 %v6700
  %10769 = vmatprep.subr.bf16.mxu0 %v6709
  %10770 = vmatpush1.bf16.msra.mxu0 %v6708
  %10771 = vmatprep.subr.bf16.mxu0 %v6717
  %10772 = vmatpush1.bf16.msra.mxu0 %v6716
  %10773 = vmatprep.subr.bf16.mxu0 %v6725
  %10774 = vmatpush1.bf16.msra.mxu0 %v6724
  %10775 = vmatprep.subr.bf16.mxu0 %v6733
  %10776 = vmatpush1.bf16.msra.mxu0 %v6732
  %10777 = vmatprep.subr.bf16.mxu0 %v6741
  %10778 = vmatpush1.bf16.msra.mxu0 %v6740
  %10779 = vmatprep.subr.bf16.mxu0 %v6749
  %10780 = vmatpush1.bf16.msra.mxu0 %v6748
  %10781 = vmatprep.subr.bf16.mxu0 %v6757
  %10782 = vmatpush1.bf16.msra.mxu0 %v6756
  %10783 = vmatprep.subr.bf16.mxu0 %v6765
  %10784 = vmatpush1.bf16.msra.mxu0 %v6764
  %10785 = vmatprep.subr.bf16.mxu0 %v6773
  %10786 = vmatpush1.bf16.msra.mxu0 %v6772
  %10787 = vmatprep.subr.bf16.mxu0 %v6781
  %10788 = vmatpush1.bf16.msra.mxu0 %v6780
  %10789 = vmatprep.subr.bf16.mxu0 %v6789
  %10790 = vmatpush1.bf16.msra.mxu0 %v6788
  %10791 = vmatprep.subr.bf16.mxu0 %v6797
  %10792 = vmatpush1.bf16.msra.mxu0 %v6796
  %10793 = vmatprep.subr.bf16.mxu0 %v6805
  %10794 = vmatpush1.bf16.msra.mxu0 %v6804
  %10795 = vmatprep.subr.bf16.mxu0 %v6813
  %10796 = vmatpush1.bf16.msra.mxu0 %v6812
  %10797 = vmatprep.mubr.bf16.mxu0 %v10723
  %10798 = vmatmul.mubr.bf16.gmra.mrb[0].mxu0 %v10722
  %v10799 = vpop.f32.mrb[0].mxu0
  %v10800 = vadd.f32 %v10759, %v10799
  %v10801 = vpop.f32.mrb[0].mxu0
  %v10802 = vadd.f32 %v10761, %v10801
  %v10803 = vpop.f32.mrb[0].mxu0
  %v10804 = vpop.f32.mrb[0].mxu0
  %10805 = vdwg.mxu0
  %10806 = vmatprep.subr.bf16.mxu0 %v6567
  %10807 = vmatpush1.bf16.msra.mxu0 %v6566
  %10808 = vmatprep.subr.bf16.mxu0 %v6575
  %10809 = vmatpush1.bf16.msra.mxu0 %v6574
  %10810 = vmatprep.subr.bf16.mxu0 %v6583
  %10811 = vmatpush1.bf16.msra.mxu0 %v6582
  %10812 = vmatprep.subr.bf16.mxu0 %v6591
  %10813 = vmatpush1.bf16.msra.mxu0 %v6590
  %10814 = vmatprep.subr.bf16.mxu0 %v6599
  %10815 = vmatpush1.bf16.msra.mxu0 %v6598
  %10816 = vmatprep.subr.bf16.mxu0 %v6607
  %10817 = vmatpush1.bf16.msra.mxu0 %v6606
  %10818 = vmatprep.subr.bf16.mxu0 %v6615
  %10819 = vmatpush1.bf16.msra.mxu0 %v6614
  %10820 = vmatprep.subr.bf16.mxu0 %v6623
  %10821 = vmatpush1.bf16.msra.mxu0 %v6622
  %10822 = vmatprep.subr.bf16.mxu0 %v6631
  %10823 = vmatpush1.bf16.msra.mxu0 %v6630
  %10824 = vmatprep.subr.bf16.mxu0 %v6639
  %10825 = vmatpush1.bf16.msra.mxu0 %v6638
  %10826 = vmatprep.subr.bf16.mxu0 %v6647
  %10827 = vmatpush1.bf16.msra.mxu0 %v6646
  %10828 = vmatprep.subr.bf16.mxu0 %v6655
  %10829 = vmatpush1.bf16.msra.mxu0 %v6654
  %10830 = vmatprep.subr.bf16.mxu0 %v6663
  %10831 = vmatpush1.bf16.msra.mxu0 %v6662
  %10832 = vmatprep.subr.bf16.mxu0 %v6671
  %10833 = vmatpush1.bf16.msra.mxu0 %v6670
  %10834 = vmatprep.subr.bf16.mxu0 %v6679
  %10835 = vmatpush1.bf16.msra.mxu0 %v6678
  %10836 = vmatprep.subr.bf16.mxu0 %v6687
  %10837 = vmatpush1.bf16.msra.mxu0 %v6686
  %10838 = vmatprep.mubr.bf16.mxu0 %v10721
  %10839 = vmatmul.mubr.bf16.gmra.mrb[0].mxu0 %v10720
  %v10840 = vpop.f32.mrb[0].mxu0
  %v10841 = vadd.f32 %v3473, %v10840
  %v10842 = vpop.f32.mrb[0].mxu0
  %v10843 = vadd.f32 %v3477, %v10842
  %v10844 = vpop.f32.mrb[0].mxu0
  %v10845 = vpop.f32.mrb[0].mxu0
  %10846 = vdwg.mxu0
  %10847 = vmatprep.subr.bf16.mxu0 %v6695
  %10848 = vmatpush1.bf16.msra.mxu0 %v6694
  %10849 = vmatprep.subr.bf16.mxu0 %v6703
  %10850 = vmatpush1.bf16.msra.mxu0 %v6702
  %10851 = vmatprep.subr.bf16.mxu0 %v6711
  %10852 = vmatpush1.bf16.msra.mxu0 %v6710
  %10853 = vmatprep.subr.bf16.mxu0 %v6719
  %10854 = vmatpush1.bf16.msra.mxu0 %v6718
  %10855 = vmatprep.subr.bf16.mxu0 %v6727
  %10856 = vmatpush1.bf16.msra.mxu0 %v6726
  %10857 = vmatprep.subr.bf16.mxu0 %v6735
  %10858 = vmatpush1.bf16.msra.mxu0 %v6734
  %10859 = vmatprep.subr.bf16.mxu0 %v6743
  %10860 = vmatpush1.bf16.msra.mxu0 %v6742
  %10861 = vmatprep.subr.bf16.mxu0 %v6751
  %10862 = vmatpush1.bf16.msra.mxu0 %v6750
  %10863 = vmatprep.subr.bf16.mxu0 %v6759
  %10864 = vmatpush1.bf16.msra.mxu0 %v6758
  %10865 = vmatprep.subr.bf16.mxu0 %v6767
  %10866 = vmatpush1.bf16.msra.mxu0 %v6766
  %10867 = vmatprep.subr.bf16.mxu0 %v6775
  %10868 = vmatpush1.bf16.msra.mxu0 %v6774
  %10869 = vmatprep.subr.bf16.mxu0 %v6783
  %10870 = vmatpush1.bf16.msra.mxu0 %v6782
  %10871 = vmatprep.subr.bf16.mxu0 %v6791
  %10872 = vmatpush1.bf16.msra.mxu0 %v6790
  %10873 = vmatprep.subr.bf16.mxu0 %v6799
  %10874 = vmatpush1.bf16.msra.mxu0 %v6798
  %10875 = vmatprep.subr.bf16.mxu0 %v6807
  %10876 = vmatpush1.bf16.msra.mxu0 %v6806
  %10877 = vmatprep.subr.bf16.mxu0 %v6815
  %10878 = vmatpush1.bf16.msra.mxu0 %v6814
  %10879 = vmatprep.mubr.bf16.mxu0 %v10723
  %10880 = vmatmul.mubr.bf16.gmra.mrb[0].mxu0 %v10722
  %v10881 = vpop.f32.mrb[0].mxu0
  %v10882 = vadd.f32 %v10841, %v10881
  %v10883 = vpop.f32.mrb[0].mxu0
  %v10884 = vadd.f32 %v10843, %v10883
  %v10885 = vpop.f32.mrb[0].mxu0
  %v10886 = vpop.f32.mrb[0].mxu0
  %10887 = vdwg.mxu0
  %10888 = vmatprep.subr.bf16.mxu0 %v6569
  %10889 = vmatpush1.bf16.msra.mxu0 %v6568
  %10890 = vmatprep.subr.bf16.mxu0 %v6577
  %10891 = vmatpush1.bf16.msra.mxu0 %v6576
  %10892 = vmatprep.subr.bf16.mxu0 %v6585
  %10893 = vmatpush1.bf16.msra.mxu0 %v6584
  %10894 = vmatprep.subr.bf16.mxu0 %v6593
  %10895 = vmatpush1.bf16.msra.mxu0 %v6592
  %10896 = vmatprep.subr.bf16.mxu0 %v6601
  %10897 = vmatpush1.bf16.msra.mxu0 %v6600
  %10898 = vmatprep.subr.bf16.mxu0 %v6609
  %10899 = vmatpush1.bf16.msra.mxu0 %v6608
  %10900 = vmatprep.subr.bf16.mxu0 %v6617
  %10901 = vmatpush1.bf16.msra.mxu0 %v6616
  %10902 = vmatprep.subr.bf16.mxu0 %v6625
  %10903 = vmatpush1.bf16.msra.mxu0 %v6624
  %10904 = vmatprep.subr.bf16.mxu0 %v6633
  %10905 = vmatpush1.bf16.msra.mxu0 %v6632
  %10906 = vmatprep.subr.bf16.mxu0 %v6641
  %10907 = vmatpush1.bf16.msra.mxu0 %v6640
  %10908 = vmatprep.subr.bf16.mxu0 %v6649
  %10909 = vmatpush1.bf16.msra.mxu0 %v6648
  %10910 = vmatprep.subr.bf16.mxu0 %v6657
  %10911 = vmatpush1.bf16.msra.mxu0 %v6656
  %10912 = vmatprep.subr.bf16.mxu0 %v6665
  %10913 = vmatpush1.bf16.msra.mxu0 %v6664
  %10914 = vmatprep.subr.bf16.mxu0 %v6673
  %10915 = vmatpush1.bf16.msra.mxu0 %v6672
  %10916 = vmatprep.subr.bf16.mxu0 %v6681
  %10917 = vmatpush1.bf16.msra.mxu0 %v6680
  %10918 = vmatprep.subr.bf16.mxu0 %v6689
  %10919 = vmatpush1.bf16.msra.mxu0 %v6688
  %10920 = vmatprep.mubr.bf16.mxu0 %v10721
  %10921 = vmatmul.mubr.bf16.gmra.mrb[0].mxu0 %v10720
  %v10922 = vpop.f32.mrb[0].mxu0
  %v10923 = vadd.f32 %v3481, %v10922
  %v10924 = vpop.f32.mrb[0].mxu0
  %v10925 = vadd.f32 %v3485, %v10924
  %v10926 = vpop.f32.mrb[0].mxu0
  %v10927 = vpop.f32.mrb[0].mxu0
  %10928 = vdwg.mxu0
  %10929 = vmatprep.subr.bf16.mxu0 %v6697
  %10930 = vmatpush1.bf16.msra.mxu0 %v6696
  %10931 = vmatprep.subr.bf16.mxu0 %v6705
  %10932 = vmatpush1.bf16.msra.mxu0 %v6704
  %10933 = vmatprep.subr.bf16.mxu0 %v6713
  %10934 = vmatpush1.bf16.msra.mxu0 %v6712
  %10935 = vmatprep.subr.bf16.mxu0 %v6721
  %10936 = vmatpush1.bf16.msra.mxu0 %v6720
  %10937 = vmatprep.subr.bf16.mxu0 %v6729
  %10938 = vmatpush1.bf16.msra.mxu0 %v6728
  %10939 = vmatprep.subr.bf16.mxu0 %v6737
  %10940 = vmatpush1.bf16.msra.mxu0 %v6736
  %10941 = vmatprep.subr.bf16.mxu0 %v6745
  %10942 = vmatpush1.bf16.msra.mxu0 %v6744
  %10943 = vmatprep.subr.bf16.mxu0 %v6753
  %10944 = vmatpush1.bf16.msra.mxu0 %v6752
  %10945 = vmatprep.subr.bf16.mxu0 %v6761
  %10946 = vmatpush1.bf16.msra.mxu0 %v6760
  %10947 = vmatprep.subr.bf16.mxu0 %v6769
  %10948 = vmatpush1.bf16.msra.mxu0 %v6768
  %10949 = vmatprep.subr.bf16.mxu0 %v6777
  %10950 = vmatpush1.bf16.msra.mxu0 %v6776
  %10951 = vmatprep.subr.bf16.mxu0 %v6785
  %10952 = vmatpush1.bf16.msra.mxu0 %v6784
  %10953 = vmatprep.subr.bf16.mxu0 %v6793
  %10954 = vmatpush1.bf16.msra.mxu0 %v6792
  %10955 = vmatprep.subr.bf16.mxu0 %v6801
  %10956 = vmatpush1.bf16.msra.mxu0 %v6800
  %10957 = vmatprep.subr.bf16.mxu0 %v6809
  %10958 = vmatpush1.bf16.msra.mxu0 %v6808
  %10959 = vmatprep.subr.bf16.mxu0 %v6817
  %10960 = vmatpush1.bf16.msra.mxu0 %v6816
  %10961 = vmatprep.mubr.bf16.mxu0 %v10723
  %10962 = vmatmul.mubr.bf16.gmra.mrb[0].mxu0 %v10722
  %v10963 = vpop.f32.mrb[0].mxu0
  %v10964 = vadd.f32 %v10923, %v10963
  %v10965 = vpop.f32.mrb[0].mxu0
  %v10966 = vadd.f32 %v10925, %v10965
  %v10967 = vpop.f32.mrb[0].mxu0
  %v10968 = vpop.f32.mrb[0].mxu0
  %10969 = vdwg.mxu0
  %10970 = vmatprep.subr.bf16.mxu0 %v6571
  %10971 = vmatpush1.bf16.msra.mxu0 %v6570
  %10972 = vmatprep.subr.bf16.mxu0 %v6579
  %10973 = vmatpush1.bf16.msra.mxu0 %v6578
  %10974 = vmatprep.subr.bf16.mxu0 %v6587
  %10975 = vmatpush1.bf16.msra.mxu0 %v6586
  %10976 = vmatprep.subr.bf16.mxu0 %v6595
  %10977 = vmatpush1.bf16.msra.mxu0 %v6594
  %10978 = vmatprep.subr.bf16.mxu0 %v6603
  %10979 = vmatpush1.bf16.msra.mxu0 %v6602
  %10980 = vmatprep.subr.bf16.mxu0 %v6611
  %10981 = vmatpush1.bf16.msra.mxu0 %v6610
  %10982 = vmatprep.subr.bf16.mxu0 %v6619
  %10983 = vmatpush1.bf16.msra.mxu0 %v6618
  %10984 = vmatprep.subr.bf16.mxu0 %v6627
  %10985 = vmatpush1.bf16.msra.mxu0 %v6626
  %10986 = vmatprep.subr.bf16.mxu0 %v6635
  %10987 = vmatpush1.bf16.msra.mxu0 %v6634
  %10988 = vmatprep.subr.bf16.mxu0 %v6643
  %10989 = vmatpush1.bf16.msra.mxu0 %v6642
  %10990 = vmatprep.subr.bf16.mxu0 %v6651
  %10991 = vmatpush1.bf16.msra.mxu0 %v6650
  %10992 = vmatprep.subr.bf16.mxu0 %v6659
  %10993 = vmatpush1.bf16.msra.mxu0 %v6658
  %10994 = vmatprep.subr.bf16.mxu0 %v6667
  %10995 = vmatpush1.bf16.msra.mxu0 %v6666
  %10996 = vmatprep.subr.bf16.mxu0 %v6675
  %10997 = vmatpush1.bf16.msra.mxu0 %v6674
  %10998 = vmatprep.subr.bf16.mxu0 %v6683
  %10999 = vmatpush1.bf16.msra.mxu0 %v6682
  %11000 = vmatprep.subr.bf16.mxu0 %v6691
  %11001 = vmatpush1.bf16.msra.mxu0 %v6690
  %11002 = vmatprep.mubr.bf16.mxu0 %v10721
  %11003 = vmatmul.mubr.bf16.gmra.mrb[0].mxu0 %v10720
  %v11004 = vpop.f32.mrb[0].mxu0
  %v11005 = vadd.f32 %v3489, %v11004
  %v11006 = vpop.f32.mrb[0].mxu0
  %v11007 = vadd.f32 %v3493, %v11006
  %v11008 = vpop.f32.mrb[0].mxu0
  %v11009 = vpop.f32.mrb[0].mxu0
  %11010 = vdwg.mxu0
  %11011 = vmatprep.subr.bf16.mxu0 %v6699
  %11012 = vmatpush1.bf16.msra.mxu0 %v6698
  %11013 = vmatprep.subr.bf16.mxu0 %v6707
  %11014 = vmatpush1.bf16.msra.mxu0 %v6706
  %11015 = vmatprep.subr.bf16.mxu0 %v6715
  %11016 = vmatpush1.bf16.msra.mxu0 %v6714
  %11017 = vmatprep.subr.bf16.mxu0 %v6723
  %11018 = vmatpush1.bf16.msra.mxu0 %v6722
  %11019 = vmatprep.subr.bf16.mxu0 %v6731
  %11020 = vmatpush1.bf16.msra.mxu0 %v6730
  %11021 = vmatprep.subr.bf16.mxu0 %v6739
  %11022 = vmatpush1.bf16.msra.mxu0 %v6738
  %11023 = vmatprep.subr.bf16.mxu0 %v6747
  %11024 = vmatpush1.bf16.msra.mxu0 %v6746
  %11025 = vmatprep.subr.bf16.mxu0 %v6755
  %11026 = vmatpush1.bf16.msra.mxu0 %v6754
  %11027 = vmatprep.subr.bf16.mxu0 %v6763
  %11028 = vmatpush1.bf16.msra.mxu0 %v6762
  %11029 = vmatprep.subr.bf16.mxu0 %v6771
  %11030 = vmatpush1.bf16.msra.mxu0 %v6770
  %11031 = vmatprep.subr.bf16.mxu0 %v6779
  %11032 = vmatpush1.bf16.msra.mxu0 %v6778
  %11033 = vmatprep.subr.bf16.mxu0 %v6787
  %11034 = vmatpush1.bf16.msra.mxu0 %v6786
  %11035 = vmatprep.subr.bf16.mxu0 %v6795
  %11036 = vmatpush1.bf16.msra.mxu0 %v6794
  %11037 = vmatprep.subr.bf16.mxu0 %v6803
  %11038 = vmatpush1.bf16.msra.mxu0 %v6802
  %11039 = vmatprep.subr.bf16.mxu0 %v6811
  %11040 = vmatpush1.bf16.msra.mxu0 %v6810
  %11041 = vmatprep.subr.bf16.mxu0 %v6819
  %11042 = vmatpush1.bf16.msra.mxu0 %v6818
  %11043 = vmatprep.mubr.bf16.mxu0 %v10723
  %11044 = vmatmul.mubr.bf16.gmra.mrb[0].mxu0 %v10722
  %v11045 = vpop.f32.mrb[0].mxu0
  %v11046 = vadd.f32 %v11005, %v11045
  %v11047 = vpop.f32.mrb[0].mxu0
  %v11048 = vadd.f32 %v11007, %v11047
  %v11049 = vpop.f32.mrb[0].mxu0
  %v11050 = vpop.f32.mrb[0].mxu0
  %11051 = vdwg.mxu0
  %v11052 = vxor.u32 %v10800, 2147483648
  %v11053 = vxor.u32 %v10802, 2147483648
  %v11054 = vxor.u32 %v10882, 2147483648
  %v11055 = vxor.u32 %v10884, 2147483648
  %v11056 = vxor.u32 %v10964, 2147483648
  %v11057 = vxor.u32 %v10966, 2147483648
  %v11058 = vmul.f32 %v11052, 1.442695
  %v11059 = vpow.pop %v11058
  %v11060 = vmul.f32 %v11053, 1.442695
  %v11061 = vpow.pop %v11060
  %v11062 = vmul.f32 %v11054, 1.442695
  %v11063 = vpow.pop %v11062
  %v11064 = vmul.f32 %v11055, 1.442695
  %v11065 = vpow.pop %v11064
  %v11066 = vmul.f32 %v11056, 1.442695
  %v11067 = vpow.pop %v11066
  %v11068 = vmul.f32 %v11057, 1.442695
  %v11069 = vpow.pop %v11068
  %v11070 = vadd.f32 %v11059, 1.0
  %v11071 = vadd.f32 %v11061, 1.0
  %v11072 = vadd.f32 %v11063, 1.0
  %v11073 = vadd.f32 %v11065, 1.0
  %v11074 = vadd.f32 %v11067, 1.0
  %v11075 = vadd.f32 %v11069, 1.0
  %v11076 = vrcp.pop %v11070
  %v11077 = vmul.f32 1.0, %v11076
  %v11078 = vrcp.pop %v11071
  %v11079 = vmul.f32 1.0, %v11078
  %v11080 = vrcp.pop %v11072
  %v11081 = vmul.f32 1.0, %v11080
  %v11082 = vrcp.pop %v11073
  %v11083 = vmul.f32 1.0, %v11082
  %v11084 = vrcp.pop %v11074
  %v11085 = vmul.f32 1.0, %v11084
  %v11086 = vrcp.pop %v11075
  %v11087 = vmul.f32 1.0, %v11086
  %v11088 = vtanh.pop %v11046
  %v11089 = vtanh.pop %v11048
  %v11090 = vmul.f32 %v11081, %v10486
  %v11091 = vmul.f32 %v11083, %v10487
  %v11092 = vmul.f32 %v11077, %v11088
  %v11093 = vmul.f32 %v11079, %v11089
  %v11094 = vadd.f32 %v11090, %v11092
  %v11095 = vadd.f32 %v11091, %v11093
  %v11096 = vtanh.pop %v11094
  %v11097 = vtanh.pop %v11095
  %v11098 = vmul.f32 %v11085, %v11096
  %v11099 = vmul.f32 %v11087, %v11097
  %v11100 = vpack.c.bf16 %v11098, %v11098
  %v11101 = vpack.c.bf16 %v11099, %v11099
  %v11102 = vld [vmem:[%s6] sm:$0xf]
  %v11103 = vld [vmem:[%s6 + $0x4] sm:$0xf]
  %v11104 = vld [vmem:[%s6 + $0x8] sm:$0xf]
  %v11105 = vld [vmem:[%s6 + $0xc] sm:$0xf]
  %v11106 = vld [vmem:[%s6 + $0x10] sm:$0xf]
  %v11107 = vld [vmem:[%s6 + $0x14] sm:$0xf]
  %v11108 = vld [vmem:[%s6 + $0x18] sm:$0xf]
  %v11109 = vld [vmem:[%s6 + $0x1c] sm:$0xf]
  %v11110 = vld [vmem:[%s6 + $0x20] sm:$0xf]
  %v11111 = vld [vmem:[%s6 + $0x24] sm:$0xf]
  %v11112 = vld [vmem:[%s6 + $0x28] sm:$0xf]
  %v11113 = vld [vmem:[%s6 + $0x2c] sm:$0xf]
  %v11114 = vld [vmem:[%s6 + $0x30] sm:$0xf]
  %v11115 = vld [vmem:[%s6 + $0x34] sm:$0xf]
  %v11116 = vld [vmem:[%s6 + $0x38] sm:$0xf]
  %v11117 = vld [vmem:[%s6 + $0x3c] sm:$0xf]
  %v11118 = vld [vmem:[%s6 + $0x40] sm:$0xf]
  %v11119 = vld [vmem:[%s6 + $0x44] sm:$0xf]
  %v11120 = vld [vmem:[%s6 + $0x48] sm:$0xf]
  %v11121 = vld [vmem:[%s6 + $0x4c] sm:$0xf]
  %v11122 = vld [vmem:[%s6 + $0x50] sm:$0xf]
  %v11123 = vld [vmem:[%s6 + $0x54] sm:$0xf]
  %v11124 = vld [vmem:[%s6 + $0x58] sm:$0xf]
  %v11125 = vld [vmem:[%s6 + $0x5c] sm:$0xf]
  %v11126 = vld [vmem:[%s6 + $0x60] sm:$0xf]
  %v11127 = vld [vmem:[%s6 + $0x64] sm:$0xf]
  %v11128 = vld [vmem:[%s6 + $0x68] sm:$0xf]
  %v11129 = vld [vmem:[%s6 + $0x6c] sm:$0xf]
  %v11130 = vld [vmem:[%s6 + $0x70] sm:$0xf]
  %v11131 = vld [vmem:[%s6 + $0x74] sm:$0xf]
  %v11132 = vld [vmem:[%s6 + $0x78] sm:$0xf]
  %v11133 = vld [vmem:[%s6 + $0x7c] sm:$0xf]
  %v11134 = vld [vmem:[%s7] sm:$0x1]
  %v11136 = vlaneseq
  %v11137 = vshrl.u32 %v11136, 7
  %v11138 = vsub.s32 0, %v11137
  %v11139 = vrot.slane %v11134, %v11138
  %v11173 = vunpack.c.l.b16 %v11102
  %v11174 = vunpack.c.l.b16 %v11103
  %v11175 = vunpack.c.l.b16 %v11104
  %v11176 = vunpack.c.l.b16 %v11105
  %v11177 = vunpack.c.l.b16 %v11106
  %v11178 = vunpack.c.l.b16 %v11107
  %v11179 = vunpack.c.l.b16 %v11108
  %v11180 = vunpack.c.l.b16 %v11109
  %v11181 = vunpack.c.l.b16 %v11110
  %v11182 = vunpack.c.l.b16 %v11111
  %v11183 = vunpack.c.l.b16 %v11112
  %v11184 = vunpack.c.l.b16 %v11113
  %v11185 = vunpack.c.l.b16 %v11114
  %v11186 = vunpack.c.l.b16 %v11115
  %v11187 = vunpack.c.l.b16 %v11116
  %v11188 = vunpack.c.l.b16 %v11117
  %v11189 = vunpack.c.l.b16 %v11118
  %v11190 = vunpack.c.l.b16 %v11119
  %v11191 = vunpack.c.l.b16 %v11120
  %v11192 = vunpack.c.l.b16 %v11121
  %v11193 = vunpack.c.l.b16 %v11122
  %v11194 = vunpack.c.l.b16 %v11123
  %v11195 = vunpack.c.l.b16 %v11124
  %v11196 = vunpack.c.l.b16 %v11125
  %v11197 = vunpack.c.l.b16 %v11126
  %v11198 = vunpack.c.l.b16 %v11127
  %v11199 = vunpack.c.l.b16 %v11128
  %v11200 = vunpack.c.l.b16 %v11129
  %v11201 = vunpack.c.l.b16 %v11130
  %v11202 = vunpack.c.l.b16 %v11131
  %v11203 = vunpack.c.l.b16 %v11132
  %v11204 = vunpack.c.l.b16 %v11133
  %v11205 = vpack.c.b16 %v11174, %v11173
  %v11206 = vpack.c.b16 %v11176, %v11175
  %v11207 = vpack.c.b16 %v11178, %v11177
  %v11208 = vpack.c.b16 %v11180, %v11179
  %v11209 = vpack.c.b16 %v11182, %v11181
  %v11210 = vpack.c.b16 %v11184, %v11183
  %v11211 = vpack.c.b16 %v11186, %v11185
  %v11212 = vpack.c.b16 %v11188, %v11187
  %v11213 = vpack.c.b16 %v11190, %v11189
  %v11214 = vpack.c.b16 %v11192, %v11191
  %v11215 = vpack.c.b16 %v11194, %v11193
  %v11216 = vpack.c.b16 %v11196, %v11195
  %v11217 = vpack.c.b16 %v11198, %v11197
  %v11218 = vpack.c.b16 %v11200, %v11199
  %v11219 = vpack.c.b16 %v11202, %v11201
  %v11220 = vpack.c.b16 %v11204, %v11203
  %11237 = vmatprep.subr.bf16.mxu0 0
  %11238 = vmatpush1.bf16.msra.mxu0 %v11205
  %11239 = vmatprep.subr.bf16.mxu0 0
  %11240 = vmatpush1.bf16.msra.mxu0 %v11206
  %11241 = vmatprep.subr.bf16.mxu0 0
  %11242 = vmatpush1.bf16.msra.mxu0 %v11207
  %11243 = vmatprep.subr.bf16.mxu0 0
  %11244 = vmatpush1.bf16.msra.mxu0 %v11208
  %11245 = vmatprep.subr.bf16.mxu0 0
  %11246 = vmatpush1.bf16.msra.mxu0 %v11209
  %11247 = vmatprep.subr.bf16.mxu0 0
  %11248 = vmatpush1.bf16.msra.mxu0 %v11210
  %11249 = vmatprep.subr.bf16.mxu0 0
  %11250 = vmatpush1.bf16.msra.mxu0 %v11211
  %11251 = vmatprep.subr.bf16.mxu0 0
  %11252 = vmatpush1.bf16.msra.mxu0 %v11212
  %11253 = vmatprep.subr.bf16.mxu0 0
  %11254 = vmatpush1.bf16.msra.mxu0 %v11213
  %11255 = vmatprep.subr.bf16.mxu0 0
  %11256 = vmatpush1.bf16.msra.mxu0 %v11214
  %11257 = vmatprep.subr.bf16.mxu0 0
  %11258 = vmatpush1.bf16.msra.mxu0 %v11215
  %11259 = vmatprep.subr.bf16.mxu0 0
  %11260 = vmatpush1.bf16.msra.mxu0 %v11216
  %11261 = vmatprep.subr.bf16.mxu0 0
  %11262 = vmatpush1.bf16.msra.mxu0 %v11217
  %11263 = vmatprep.subr.bf16.mxu0 0
  %11264 = vmatpush1.bf16.msra.mxu0 %v11218
  %11265 = vmatprep.subr.bf16.mxu0 0
  %11266 = vmatpush1.bf16.msra.mxu0 %v11219
  %11267 = vmatprep.subr.bf16.mxu0 0
  %11268 = vmatpush1.bf16.msra.mxu0 %v11220
  %11269 = vmatprep.mubr.bf16.mxu0 %v11101
  %11270 = vmatmul.mubr.bf16.gmra.mrb[0].mxu0 %v11100
  %v11271 = vpop.f32.mrb[0].mxu0
  %v11272 = vadd.f32 %v11139, %v11271
  %v11273 = vpop.f32.mrb[0].mxu0
  %v11274 = vpop.f32.mrb[0].mxu0
  %v11275 = vpop.f32.mrb[0].mxu0
  %11276 = vdwg.mxu0
  %11277 = vst [vmem:[%s8] sm:$0xff] %v11272
  // Predicated region
  $region34: #{lstm_student_forward.1} parent=0 // pred_check
    _
  $region35: #{lstm_student_forward.1} parent=0 // pred_check_branch
    %11279 = sbr.rel (0) target = $region37
  $region36: #{lstm_student_forward.1} parent=0 // pred_region
    _
  $region37: #{lstm_student_forward.1} parent=0 // pred_fallthru
    _
  // Predicated region
  $region38: #{lstm_student_forward.1} parent=0 // pred_check
    _
  $region39: #{lstm_student_forward.1} parent=0 // pred_check_branch
    %11281 = sbr.rel (0) target = $region41
  $region40: #{lstm_student_forward.1} parent=0 // pred_region
    _
  $region41: #{lstm_student_forward.1} parent=0 // pred_fallthru
    _

</llo_original>
